<compile_context>
chip_gen: v7x
topology: tpu7x:2x2x1
jax: 0.10.0
libtpu: 0.0.40
codegen_flags: <defaults>
</compile_context>

<pallas_src>
import functools

import numpy as np
import jax
import jax.numpy as jnp
from jax.experimental import pallas as pl
from jax.experimental.pallas import tpu as pltpu


_CIN_PAD = 8  # conv1's 3 input channels zero-padded to 8 (sublane alignment)


# ----------------------------------------------------------------------------
# Host-side constant matrices / masks (numpy, built at trace time).
# ----------------------------------------------------------------------------
def _bilinear_matrix(n_in, scale=2):
    """(n_out, n_in) 1-D bilinear interp matrix, PyTorch align_corners=False."""
    n_out = n_in * scale
    M = np.zeros((n_out, n_in), np.float32)
    for o in range(n_out):
        src = (o + 0.5) / scale - 0.5
        src = max(src, 0.0)                       # PyTorch clamps negative src
        i0 = min(int(np.floor(src)), n_in - 1)
        frac = src - i0
        i1 = min(i0 + 1, n_in - 1)
        M[o, i0] += 1.0 - frac
        M[o, i1] += frac
    return M


def _upsample_matrix(H, W):
    """(H*W, 4*H*W): flat_x @ U == bilinear x2 upsample of an (H, W) image."""
    Mh = _bilinear_matrix(H)                       # (2H, H)
    Mw = _bilinear_matrix(W)                       # (2W, W)
    return np.ascontiguousarray(np.kron(Mh, Mw).T)  # (H*W, 2H*2W)


def _pool_select_matrix(H, W):
    """(H*W, H*W/4) 0/1 matrix selecting the even-row/even-col window anchors."""
    Ho, Wo = H // 2, W // 2
    S = np.zeros((H * W, Ho * Wo), np.float32)
    for oy in range(Ho):
        for ox in range(Wo):
            S[(2 * oy) * W + (2 * ox), oy * Wo + ox] = 1.0
    return S


def _tap_masks(H, W, KH, KW):
    """(KH*KW, H*W) 0/1 masks: tap t is in-bounds at flat pixel p (per image)."""
    ph, pw = KH // 2, KW // 2
    hw = H * W
    row = np.arange(hw) // W
    col = np.arange(hw) % W
    M = np.zeros((KH * KW, hw), np.float32)
    t = 0
    for dy in range(KH):
        for dx in range(KW):
            dyo, dxo = dy - ph, dx - pw
            valid = ((row + dyo >= 0) & (row + dyo < H) &
                     (col + dxo >= 0) & (col + dxo < W))
            M[t] = valid.astype(np.float32)
            t += 1
    return M


# ----------------------------------------------------------------------------
# In-kernel building blocks (all shapes / shifts are static Python ints).
# ----------------------------------------------------------------------------
def _shift(x, s, n):
    """result[..., p] = x[..., (p + s) % n]  (static s; cyclic lane shift)."""
    s = s % n
    if s == 0:
        return x
    if n % 128 == 0:
        # pltpu.roll(x, k): result[p] = x[(p - k) % n]; roll by n - s == by -s.
        return pltpu.roll(x, n - s, x.ndim - 1)
    # Sub-128-lane axis (half-res stage with B == 1): proven concat fallback.
    return jnp.concatenate([x[..., s:], x[..., :s]], axis=-1)


def _conv_taps(x, w_ref, b_ref, mask_ref, *, W, KH, KW, relu):
    """'same' conv in channel-major / flat-(batch*spatial) layout.

    x: (Cin, L) f32 with L = B*H*W; w_ref: (KH*KW, Cout, Cin) bf16;
    b_ref: (Cout, 1) f32; mask_ref: (KH*KW, L) f32  ->  (Cout, L) f32.
    One small MXU matmul per tap, streamed into an f32 accumulator (no im2col
    patch materialization).  Cross-image / out-of-image taps are killed by the
    precomputed per-tap mask, so the cyclic shift wrap-around is harmless.
    """
    Cin, L = x.shape
    Cout = w_ref.shape[1]
    ph, pw = KH // 2, KW // 2
    acc = jnp.broadcast_to(b_ref[...], (Cout, L))     # bias folded into init
    t = 0
    for dy in range(KH):
        for dx in range(KW):
            dyo, dxo = dy - ph, dx - pw
            tap = _shift(x, dyo * W + dxo, L)
            if dyo != 0 or dxo != 0:                  # center tap: all-ones mask
                tap = tap * mask_ref[t:t + 1, :]
            acc = acc + jnp.dot(w_ref[t], tap.astype(jnp.bfloat16),
                                preferred_element_type=jnp.float32)
            t += 1
    if relu:
        acc = jnp.maximum(acc, 0.0)
    return acc


def _maxpool_2x2(x, sel_ref, *, W):
    """2x2/stride-2 maxpool: VPU max of 4 shifted views + compaction matmul."""
    L = x.shape[-1]
    m = jnp.maximum(jnp.maximum(x, _shift(x, 1, L)),
                    jnp.maximum(_shift(x, W, L), _shift(x, W + 1, L)))
    return jnp.dot(m.astype(jnp.bfloat16), sel_ref[...],
                   preferred_element_type=jnp.float32)


def _net_kernel(x_ref, w1, b1, w2, b2, w3, b3, w4, b4,
                m3f, m3h, m5f, sel, up, o_ref, *, W):
    Wh = W // 2
    x0 = x_ref[0]                                                     # (8, L)
    a1 = _conv_taps(x0, w1, b1, m3f, W=W, KH=3, KW=3, relu=True)      # (16, L)
    a2 = _conv_taps(a1, w2, b2, m3f, W=W, KH=3, KW=3, relu=True)      # (32, L)
    p2 = _maxpool_2x2(a2, sel, W=W)                                   # (32, L/4)
    a3 = _conv_taps(p2, w3, b3, m3h, W=Wh, KH=3, KW=3, relu=True)     # (16, L/4)
    u3 = jnp.dot(a3.astype(jnp.bfloat16), up[...],
                 preferred_element_type=jnp.float32)                  # (16, L)
    z = _conv_taps(u3, w4, b4, m5f, W=W, KH=5, KW=5, relu=False)      # (2, L)
    # 2-channel Softmax2d == sigmoid of the logit difference; single store.
    d = z[0:1, :] - z[1:2, :]
    p0 = pl.reciprocal(1.0 + jnp.exp(-d), approx=True)
    o_ref[0] = jnp.concatenate([p0, 1.0 - p0], axis=0)


# ----------------------------------------------------------------------------
# Wrapper.
# ----------------------------------------------------------------------------
def _tap_weights(w, cin_pad=None):
    """HWIO (KH,KW,Cin,Cout) -> (KH*KW, Cout, Cin) bf16 per-tap weight tiles."""
    KH, KW, Cin, Cout = w.shape
    if cin_pad is not None and cin_pad > Cin:
        w = jnp.pad(w, ((0, 0), (0, 0), (0, cin_pad - Cin), (0, 0)))
        Cin = cin_pad
    w = jnp.transpose(w, (0, 1, 3, 2)).reshape(KH * KW, Cout, Cin)
    return w.astype(jnp.bfloat16)


def _images_per_step(N):
    """Largest divisor of N that keeps >= 2 grid steps (v7x: both TCs busy)."""
    best = 1
    for d in range(1, N // 2 + 1):
        if N % d == 0:
            best = d
    return best


@jax.jit
def net_forward(x_nchw, params):
    N, Cin, H, W = x_nchw.shape
    HW = H * W
    B = _images_per_step(N)          # images folded onto the lane axis per step
    G = N // B                       # grid length
    L = B * HW

    # Channel-major, batch-folded flat layout; pad 3 input channels to 8.
    x = (x_nchw.reshape(G, B, Cin, HW).transpose(0, 2, 1, 3)
         .reshape(G, Cin, L))
    x = jnp.pad(x, ((0, 0), (0, _CIN_PAD - Cin), (0, 0)))

    w1 = _tap_weights(params["w1"], cin_pad=_CIN_PAD)
    w2 = _tap_weights(params["w2"])
    w3 = _tap_weights(params["w3"])
    w4 = _tap_weights(params["w4"])
    b1 = params["b1"].reshape(-1, 1)
    b2 = params["b2"].reshape(-1, 1)
    b3 = params["b3"].reshape(-1, 1)
    b4 = params["b4"].reshape(-1, 1)

    # Host-precomputed per-tap boundary masks (tiled over the folded batch) and
    # block-diagonal pool-select / upsample matrices.
    m3f = jnp.asarray(np.tile(_tap_masks(H, W, 3, 3), (1, B)))
    m3h = jnp.asarray(np.tile(_tap_masks(H // 2, W // 2, 3, 3), (1, B)))
    m5f = jnp.asarray(np.tile(_tap_masks(H, W, 5, 5), (1, B)))
    eye = np.eye(B, dtype=np.float32)
    sel = jnp.asarray(np.kron(eye, _pool_select_matrix(H, W))).astype(jnp.bfloat16)
    up = jnp.asarray(np.kron(eye, _upsample_matrix(H // 2, W // 2))).astype(jnp.bfloat16)

    def const(a):
        nd = a.ndim
        return pl.BlockSpec(a.shape, lambda n, nd=nd: (0,) * nd)

    out = pl.pallas_call(
        functools.partial(_net_kernel, W=W),
        out_shape=jax.ShapeDtypeStruct((G, 2, L), jnp.float32),
        grid=(G,),
        in_specs=[
            pl.BlockSpec((1, _CIN_PAD, L), lambda n: (n, 0, 0)),
            const(w1), const(b1), const(w2), const(b2),
            const(w3), const(b3), const(w4), const(b4),
            const(m3f), const(m3h), const(m5f), const(sel), const(up),
        ],
        out_specs=pl.BlockSpec((1, 2, L), lambda n: (n, 0, 0)),
        compiler_params=pltpu.CompilerParams(
            dimension_semantics=("parallel",)),
    )(x, w1, b1, w2, b2, w3, b3, w4, b4, m3f, m3h, m5f, sel, up)

    return (out.reshape(G, 2, B, HW).transpose(0, 2, 1, 3)
            .reshape(N, 2, H, W))


# ----------------------------------------------------------------------------
# Pure-XLA reference (for correctness checking only).
# ----------------------------------------------------------------------------
@jax.jit
def _reference_forward(x, params):
    dn = ("NCHW", "HWIO", "NCHW")
    hi = jax.lax.Precision.HIGHEST

    def conv(h, w, b):
        y = jax.lax.conv_general_dilated(h, w, (1, 1), "SAME",
                                         dimension_numbers=dn, precision=hi)
        return y + b.reshape(1, -1, 1, 1)

    h = jax.nn.relu(conv(x, params["w1"], params["b1"]))
    h = jax.nn.relu(conv(h, params["w2"], params["b2"]))
    h = jax.lax.reduce_window(h, -jnp.inf, jax.lax.max,
                              (1, 1, 2, 2), (1, 1, 2, 2), "VALID")
    h = jax.nn.relu(conv(h, params["w3"], params["b3"]))
    Mh = jnp.asarray(_bilinear_matrix(h.shape[2]))
    Mw = jnp.asarray(_bilinear_matrix(h.shape[3]))
    h = jnp.einsum("ai,bj,ncij->ncab", Mh, Mw, h, precision=hi)
    h = conv(h, params["w4"], params["b4"])
    return jax.nn.softmax(h, axis=1)


# ----------------------------------------------------------------------------
# Parameters (deterministic synthetic init; weight layout is HWIO).
# ----------------------------------------------------------------------------
def init_params(key):
    shapes = {
        "w1": (3, 3, 3, 16), "b1": (16,),
        "w2": (3, 3, 16, 32), "b2": (32,),
        "w3": (3, 3, 32, 16), "b3": (16,),
        "w4": (5, 5, 16, 2), "b4": (2,),
    }
    names = sorted(shapes)
    keys = jax.random.split(key, len(names))
    params = {}
    for k, name in zip(keys, names):
        shp = shapes[name]
        if name.startswith("w"):
            fan_in = shp[0] * shp[1] * shp[2]
            params[name] = (jax.random.normal(k, shp, jnp.float32)
                            / np.sqrt(fan_in))
        else:
            params[name] = 0.01 * jax.random.normal(k, shp, jnp.float32)
    return params


if __name__ == "__main__":
    key = jax.random.PRNGKey(0)
    kx, kp = jax.random.split(key)
    x = jax.random.normal(kx, (2, 3, 16, 16), jnp.float32)   # NCHW, as PyTorch
    params = init_params(kp)

    out = jax.block_until_ready(net_forward(x, params))

    assert out.shape == (2, 2, 16, 16), out.shape
    assert bool(jnp.all(jnp.isfinite(out)))
    # Softmax2d property: per-pixel channel probabilities sum to 1.
    assert bool(jnp.allclose(jnp.sum(out, axis=1), 1.0, atol=1e-4))

    # Check against a pure-XLA reference (tol covers bf16 MXU operands).
    ref = jax.block_until_ready(_reference_forward(x, params))
    max_err = float(jnp.max(jnp.abs(out - ref)))
    assert max_err < 5e-2, f"max abs diff vs XLA reference: {max_err}"

    print("KERNEL_OK")
</pallas_src>

<mosaic_0001>
module attributes {stable_mosaic.version = 11 : i64} {
  func.func @_net_kernel(%arg0: i32, %arg1: memref<1x8x256xf32, #tpu.memory_space<vmem>>, %arg2: memref<9x16x8xbf16, #tpu.memory_space<vmem>>, %arg3: memref<16x1xf32, #tpu.memory_space<vmem>>, %arg4: memref<9x32x16xbf16, #tpu.memory_space<vmem>>, %arg5: memref<32x1xf32, #tpu.memory_space<vmem>>, %arg6: memref<9x16x32xbf16, #tpu.memory_space<vmem>>, %arg7: memref<16x1xf32, #tpu.memory_space<vmem>>, %arg8: memref<25x2x16xbf16, #tpu.memory_space<vmem>>, %arg9: memref<2x1xf32, #tpu.memory_space<vmem>>, %arg10: memref<9x256xf32, #tpu.memory_space<vmem>>, %arg11: memref<9x64xf32, #tpu.memory_space<vmem>>, %arg12: memref<25x256xf32, #tpu.memory_space<vmem>>, %arg13: memref<256x64xbf16, #tpu.memory_space<vmem>>, %arg14: memref<64x256xbf16, #tpu.memory_space<vmem>>, %arg15: memref<1x2x256xf32, #tpu.memory_space<vmem>>) attributes {dimension_semantics = [#tpu.dimension_semantics<parallel>], iteration_bounds = array<i64: 2>, scalar_prefetch = 0 : i64, scratch_operands = 0 : i64, tpu.core_type = #tpu.core_type<tc>, window_params = [{transform_indices = @transform_0, window_bounds = array<i64: 1, 8, 256>}, {pipeline_mode = #tpu.pipeline_mode<synchronous>, transform_indices = @transform_1, window_bounds = array<i64: 9, 16, 8>}, {pipeline_mode = #tpu.pipeline_mode<synchronous>, transform_indices = @transform_2, window_bounds = array<i64: 16, 1>}, {pipeline_mode = #tpu.pipeline_mode<synchronous>, transform_indices = @transform_3, window_bounds = array<i64: 9, 32, 16>}, {pipeline_mode = #tpu.pipeline_mode<synchronous>, transform_indices = @transform_4, window_bounds = array<i64: 32, 1>}, {pipeline_mode = #tpu.pipeline_mode<synchronous>, transform_indices = @transform_5, window_bounds = array<i64: 9, 16, 32>}, {pipeline_mode = #tpu.pipeline_mode<synchronous>, transform_indices = @transform_6, window_bounds = array<i64: 16, 1>}, {pipeline_mode = #tpu.pipeline_mode<synchronous>, transform_indices = @transform_7, window_bounds = array<i64: 25, 2, 16>}, {pipeline_mode = #tpu.pipeline_mode<synchronous>, transform_indices = @transform_8, window_bounds = array<i64: 2, 1>}, {pipeline_mode = #tpu.pipeline_mode<synchronous>, transform_indices = @transform_9, window_bounds = array<i64: 9, 256>}, {pipeline_mode = #tpu.pipeline_mode<synchronous>, transform_indices = @transform_10, window_bounds = array<i64: 9, 64>}, {pipeline_mode = #tpu.pipeline_mode<synchronous>, transform_indices = @transform_11, window_bounds = array<i64: 25, 256>}, {pipeline_mode = #tpu.pipeline_mode<synchronous>, transform_indices = @transform_12, window_bounds = array<i64: 256, 64>}, {pipeline_mode = #tpu.pipeline_mode<synchronous>, transform_indices = @transform_13, window_bounds = array<i64: 64, 256>}, {transform_indices = @transform_14, window_bounds = array<i64: 1, 2, 256>}]} {
    %c0 = arith.constant 0 : index
    %c0_0 = arith.constant 0 : index
    %c0_1 = arith.constant 0 : index
    %0 = vector.load %arg1[%c0, %c0_0, %c0_1] : memref<1x8x256xf32, #tpu.memory_space<vmem>>, vector<1x8x256xf32>
    %1 = vector.shape_cast %0 : vector<1x8x256xf32> to vector<8x256xf32>
    %c0_2 = arith.constant 0 : index
    %c0_3 = arith.constant 0 : index
    %2 = vector.load %arg3[%c0_2, %c0_3] : memref<16x1xf32, #tpu.memory_space<vmem>>, vector<16x1xf32>
    %3 = vector.shape_cast %2 : vector<16x1xf32> to vector<16x1xf32>
    %4 = vector.broadcast %3 : vector<16x1xf32> to vector<16x256xf32>
    %c17_i32 = arith.constant 17 : i32
    %5 = tpu.dynamic_rotate %1 by %c17_i32 dim 1 : vector<8x256xf32>, i32 -> vector<8x256xf32>
    %c0_4 = arith.constant 0 : index
    %c0_5 = arith.constant 0 : index
    %6 = vector.load %arg10[%c0_4, %c0_5] : memref<9x256xf32, #tpu.memory_space<vmem>>, vector<1x256xf32>
    %7 = vector.broadcast %6 : vector<1x256xf32> to vector<8x256xf32>
    %8 = arith.mulf %5, %7 : vector<8x256xf32>
    %c0_6 = arith.constant 0 : index
    %c0_7 = arith.constant 0 : index
    %c0_8 = arith.constant 0 : index
    %9 = vector.load %arg2[%c0_6, %c0_7, %c0_8] : memref<9x16x8xbf16, #tpu.memory_space<vmem>>, vector<1x16x8xbf16>
    %10 = vector.shape_cast %9 : vector<1x16x8xbf16> to vector<16x8xbf16>
    %11 = arith.truncf %8 : vector<8x256xf32> to vector<8x256xbf16>
    %cst = arith.constant dense<0.000000e+00> : vector<16x256xf32>
    %12 = tpu.matmul %10, %11, %cst {dimension_numbers = #tpu.dot_dimension_numbers<[1], [0], [0], [1], [0, 0, 1, 1], [], []>} : vector<16x8xbf16>, vector<8x256xbf16>, vector<16x256xf32> -> vector<16x256xf32>
    %13 = arith.addf %4, %12 : vector<16x256xf32>
    %c16_i32 = arith.constant 16 : i32
    %14 = tpu.dynamic_rotate %1 by %c16_i32 dim 1 : vector<8x256xf32>, i32 -> vector<8x256xf32>
    %c1 = arith.constant 1 : index
    %c0_9 = arith.constant 0 : index
    %15 = vector.load %arg10[%c1, %c0_9] : memref<9x256xf32, #tpu.memory_space<vmem>>, vector<1x256xf32>
    %16 = vector.broadcast %15 : vector<1x256xf32> to vector<8x256xf32>
    %17 = arith.mulf %14, %16 : vector<8x256xf32>
    %c1_10 = arith.constant 1 : index
    %c0_11 = arith.constant 0 : index
    %c0_12 = arith.constant 0 : index
    %18 = vector.load %arg2[%c1_10, %c0_11, %c0_12] : memref<9x16x8xbf16, #tpu.memory_space<vmem>>, vector<1x16x8xbf16>
    %19 = vector.shape_cast %18 : vector<1x16x8xbf16> to vector<16x8xbf16>
    %20 = arith.truncf %17 : vector<8x256xf32> to vector<8x256xbf16>
    %cst_13 = arith.constant dense<0.000000e+00> : vector<16x256xf32>
    %21 = tpu.matmul %19, %20, %cst_13 {dimension_numbers = #tpu.dot_dimension_numbers<[1], [0], [0], [1], [0, 0, 1, 1], [], []>} : vector<16x8xbf16>, vector<8x256xbf16>, vector<16x256xf32> -> vector<16x256xf32>
    %22 = arith.addf %13, %21 : vector<16x256xf32>
    %c15_i32 = arith.constant 15 : i32
    %23 = tpu.dynamic_rotate %1 by %c15_i32 dim 1 : vector<8x256xf32>, i32 -> vector<8x256xf32>
    %c2 = arith.constant 2 : index
    %c0_14 = arith.constant 0 : index
    %24 = vector.load %arg10[%c2, %c0_14] : memref<9x256xf32, #tpu.memory_space<vmem>>, vector<1x256xf32>
    %25 = vector.broadcast %24 : vector<1x256xf32> to vector<8x256xf32>
    %26 = arith.mulf %23, %25 : vector<8x256xf32>
    %c2_15 = arith.constant 2 : index
    %c0_16 = arith.constant 0 : index
    %c0_17 = arith.constant 0 : index
    %27 = vector.load %arg2[%c2_15, %c0_16, %c0_17] : memref<9x16x8xbf16, #tpu.memory_space<vmem>>, vector<1x16x8xbf16>
    %28 = vector.shape_cast %27 : vector<1x16x8xbf16> to vector<16x8xbf16>
    %29 = arith.truncf %26 : vector<8x256xf32> to vector<8x256xbf16>
    %cst_18 = arith.constant dense<0.000000e+00> : vector<16x256xf32>
    %30 = tpu.matmul %28, %29, %cst_18 {dimension_numbers = #tpu.dot_dimension_numbers<[1], [0], [0], [1], [0, 0, 1, 1], [], []>} : vector<16x8xbf16>, vector<8x256xbf16>, vector<16x256xf32> -> vector<16x256xf32>
    %31 = arith.addf %22, %30 : vector<16x256xf32>
    %c1_i32 = arith.constant 1 : i32
    %32 = tpu.dynamic_rotate %1 by %c1_i32 dim 1 : vector<8x256xf32>, i32 -> vector<8x256xf32>
    %c3 = arith.constant 3 : index
    %c0_19 = arith.constant 0 : index
    %33 = vector.load %arg10[%c3, %c0_19] : memref<9x256xf32, #tpu.memory_space<vmem>>, vector<1x256xf32>
    %34 = vector.broadcast %33 : vector<1x256xf32> to vector<8x256xf32>
    %35 = arith.mulf %32, %34 : vector<8x256xf32>
    %c3_20 = arith.constant 3 : index
    %c0_21 = arith.constant 0 : index
    %c0_22 = arith.constant 0 : index
    %36 = vector.load %arg2[%c3_20, %c0_21, %c0_22] : memref<9x16x8xbf16, #tpu.memory_space<vmem>>, vector<1x16x8xbf16>
    %37 = vector.shape_cast %36 : vector<1x16x8xbf16> to vector<16x8xbf16>
    %38 = arith.truncf %35 : vector<8x256xf32> to vector<8x256xbf16>
    %cst_23 = arith.constant dense<0.000000e+00> : vector<16x256xf32>
    %39 = tpu.matmul %37, %38, %cst_23 {dimension_numbers = #tpu.dot_dimension_numbers<[1], [0], [0], [1], [0, 0, 1, 1], [], []>} : vector<16x8xbf16>, vector<8x256xbf16>, vector<16x256xf32> -> vector<16x256xf32>
    %40 = arith.addf %31, %39 : vector<16x256xf32>
    %c4 = arith.constant 4 : index
    %c0_24 = arith.constant 0 : index
    %c0_25 = arith.constant 0 : index
    %41 = vector.load %arg2[%c4, %c0_24, %c0_25] : memref<9x16x8xbf16, #tpu.memory_space<vmem>>, vector<1x16x8xbf16>
    %42 = vector.shape_cast %41 : vector<1x16x8xbf16> to vector<16x8xbf16>
    %43 = arith.truncf %1 : vector<8x256xf32> to vector<8x256xbf16>
    %cst_26 = arith.constant dense<0.000000e+00> : vector<16x256xf32>
    %44 = tpu.matmul %42, %43, %cst_26 {dimension_numbers = #tpu.dot_dimension_numbers<[1], [0], [0], [1], [0, 0, 1, 1], [], []>} : vector<16x8xbf16>, vector<8x256xbf16>, vector<16x256xf32> -> vector<16x256xf32>
    %45 = arith.addf %40, %44 : vector<16x256xf32>
    %c255_i32 = arith.constant 255 : i32
    %46 = tpu.dynamic_rotate %1 by %c255_i32 dim 1 : vector<8x256xf32>, i32 -> vector<8x256xf32>
    %c5 = arith.constant 5 : index
    %c0_27 = arith.constant 0 : index
    %47 = vector.load %arg10[%c5, %c0_27] : memref<9x256xf32, #tpu.memory_space<vmem>>, vector<1x256xf32>
    %48 = vector.broadcast %47 : vector<1x256xf32> to vector<8x256xf32>
    %49 = arith.mulf %46, %48 : vector<8x256xf32>
    %c5_28 = arith.constant 5 : index
    %c0_29 = arith.constant 0 : index
    %c0_30 = arith.constant 0 : index
    %50 = vector.load %arg2[%c5_28, %c0_29, %c0_30] : memref<9x16x8xbf16, #tpu.memory_space<vmem>>, vector<1x16x8xbf16>
    %51 = vector.shape_cast %50 : vector<1x16x8xbf16> to vector<16x8xbf16>
    %52 = arith.truncf %49 : vector<8x256xf32> to vector<8x256xbf16>
    %cst_31 = arith.constant dense<0.000000e+00> : vector<16x256xf32>
    %53 = tpu.matmul %51, %52, %cst_31 {dimension_numbers = #tpu.dot_dimension_numbers<[1], [0], [0], [1], [0, 0, 1, 1], [], []>} : vector<16x8xbf16>, vector<8x256xbf16>, vector<16x256xf32> -> vector<16x256xf32>
    %54 = arith.addf %45, %53 : vector<16x256xf32>
    %c241_i32 = arith.constant 241 : i32
    %55 = tpu.dynamic_rotate %1 by %c241_i32 dim 1 : vector<8x256xf32>, i32 -> vector<8x256xf32>
    %c6 = arith.constant 6 : index
    %c0_32 = arith.constant 0 : index
    %56 = vector.load %arg10[%c6, %c0_32] : memref<9x256xf32, #tpu.memory_space<vmem>>, vector<1x256xf32>
    %57 = vector.broadcast %56 : vector<1x256xf32> to vector<8x256xf32>
    %58 = arith.mulf %55, %57 : vector<8x256xf32>
    %c6_33 = arith.constant 6 : index
    %c0_34 = arith.constant 0 : index
    %c0_35 = arith.constant 0 : index
    %59 = vector.load %arg2[%c6_33, %c0_34, %c0_35] : memref<9x16x8xbf16, #tpu.memory_space<vmem>>, vector<1x16x8xbf16>
    %60 = vector.shape_cast %59 : vector<1x16x8xbf16> to vector<16x8xbf16>
    %61 = arith.truncf %58 : vector<8x256xf32> to vector<8x256xbf16>
    %cst_36 = arith.constant dense<0.000000e+00> : vector<16x256xf32>
    %62 = tpu.matmul %60, %61, %cst_36 {dimension_numbers = #tpu.dot_dimension_numbers<[1], [0], [0], [1], [0, 0, 1, 1], [], []>} : vector<16x8xbf16>, vector<8x256xbf16>, vector<16x256xf32> -> vector<16x256xf32>
    %63 = arith.addf %54, %62 : vector<16x256xf32>
    %c240_i32 = arith.constant 240 : i32
    %64 = tpu.dynamic_rotate %1 by %c240_i32 dim 1 : vector<8x256xf32>, i32 -> vector<8x256xf32>
    %c7 = arith.constant 7 : index
    %c0_37 = arith.constant 0 : index
    %65 = vector.load %arg10[%c7, %c0_37] : memref<9x256xf32, #tpu.memory_space<vmem>>, vector<1x256xf32>
    %66 = vector.broadcast %65 : vector<1x256xf32> to vector<8x256xf32>
    %67 = arith.mulf %64, %66 : vector<8x256xf32>
    %c7_38 = arith.constant 7 : index
    %c0_39 = arith.constant 0 : index
    %c0_40 = arith.constant 0 : index
    %68 = vector.load %arg2[%c7_38, %c0_39, %c0_40] : memref<9x16x8xbf16, #tpu.memory_space<vmem>>, vector<1x16x8xbf16>
    %69 = vector.shape_cast %68 : vector<1x16x8xbf16> to vector<16x8xbf16>
    %70 = arith.truncf %67 : vector<8x256xf32> to vector<8x256xbf16>
    %cst_41 = arith.constant dense<0.000000e+00> : vector<16x256xf32>
    %71 = tpu.matmul %69, %70, %cst_41 {dimension_numbers = #tpu.dot_dimension_numbers<[1], [0], [0], [1], [0, 0, 1, 1], [], []>} : vector<16x8xbf16>, vector<8x256xbf16>, vector<16x256xf32> -> vector<16x256xf32>
    %72 = arith.addf %63, %71 : vector<16x256xf32>
    %c239_i32 = arith.constant 239 : i32
    %73 = tpu.dynamic_rotate %1 by %c239_i32 dim 1 : vector<8x256xf32>, i32 -> vector<8x256xf32>
    %c8 = arith.constant 8 : index
    %c0_42 = arith.constant 0 : index
    %74 = vector.load %arg10[%c8, %c0_42] : memref<9x256xf32, #tpu.memory_space<vmem>>, vector<1x256xf32>
    %75 = vector.broadcast %74 : vector<1x256xf32> to vector<8x256xf32>
    %76 = arith.mulf %73, %75 : vector<8x256xf32>
    %c8_43 = arith.constant 8 : index
    %c0_44 = arith.constant 0 : index
    %c0_45 = arith.constant 0 : index
    %77 = vector.load %arg2[%c8_43, %c0_44, %c0_45] : memref<9x16x8xbf16, #tpu.memory_space<vmem>>, vector<1x16x8xbf16>
    %78 = vector.shape_cast %77 : vector<1x16x8xbf16> to vector<16x8xbf16>
    %79 = arith.truncf %76 : vector<8x256xf32> to vector<8x256xbf16>
    %cst_46 = arith.constant dense<0.000000e+00> : vector<16x256xf32>
    %80 = tpu.matmul %78, %79, %cst_46 {dimension_numbers = #tpu.dot_dimension_numbers<[1], [0], [0], [1], [0, 0, 1, 1], [], []>} : vector<16x8xbf16>, vector<8x256xbf16>, vector<16x256xf32> -> vector<16x256xf32>
    %81 = arith.addf %72, %80 : vector<16x256xf32>
    %cst_47 = arith.constant 0.000000e+00 : f32
    %82 = vector.broadcast %cst_47 : f32 to vector<16x256xf32>
    %83 = arith.maximumf %81, %82 : vector<16x256xf32>
    %c0_48 = arith.constant 0 : index
    %c0_49 = arith.constant 0 : index
    %84 = vector.load %arg5[%c0_48, %c0_49] : memref<32x1xf32, #tpu.memory_space<vmem>>, vector<32x1xf32>
    %85 = vector.shape_cast %84 : vector<32x1xf32> to vector<32x1xf32>
    %86 = vector.broadcast %85 : vector<32x1xf32> to vector<32x256xf32>
    %c17_i32_50 = arith.constant 17 : i32
    %87 = tpu.dynamic_rotate %83 by %c17_i32_50 dim 1 : vector<16x256xf32>, i32 -> vector<16x256xf32>
    %c0_51 = arith.constant 0 : index
    %c0_52 = arith.constant 0 : index
    %88 = vector.load %arg10[%c0_51, %c0_52] : memref<9x256xf32, #tpu.memory_space<vmem>>, vector<1x256xf32>
    %89 = vector.broadcast %88 : vector<1x256xf32> to vector<16x256xf32>
    %90 = arith.mulf %87, %89 : vector<16x256xf32>
    %c0_53 = arith.constant 0 : index
    %c0_54 = arith.constant 0 : index
    %c0_55 = arith.constant 0 : index
    %91 = vector.load %arg4[%c0_53, %c0_54, %c0_55] : memref<9x32x16xbf16, #tpu.memory_space<vmem>>, vector<1x32x16xbf16>
    %92 = vector.shape_cast %91 : vector<1x32x16xbf16> to vector<32x16xbf16>
    %93 = arith.truncf %90 : vector<16x256xf32> to vector<16x256xbf16>
    %cst_56 = arith.constant dense<0.000000e+00> : vector<32x256xf32>
    %94 = tpu.matmul %92, %93, %cst_56 {dimension_numbers = #tpu.dot_dimension_numbers<[1], [0], [0], [1], [0, 0, 1, 1], [], []>} : vector<32x16xbf16>, vector<16x256xbf16>, vector<32x256xf32> -> vector<32x256xf32>
    %95 = arith.addf %86, %94 : vector<32x256xf32>
    %c16_i32_57 = arith.constant 16 : i32
    %96 = tpu.dynamic_rotate %83 by %c16_i32_57 dim 1 : vector<16x256xf32>, i32 -> vector<16x256xf32>
    %c1_58 = arith.constant 1 : index
    %c0_59 = arith.constant 0 : index
    %97 = vector.load %arg10[%c1_58, %c0_59] : memref<9x256xf32, #tpu.memory_space<vmem>>, vector<1x256xf32>
    %98 = vector.broadcast %97 : vector<1x256xf32> to vector<16x256xf32>
    %99 = arith.mulf %96, %98 : vector<16x256xf32>
    %c1_60 = arith.constant 1 : index
    %c0_61 = arith.constant 0 : index
    %c0_62 = arith.constant 0 : index
    %100 = vector.load %arg4[%c1_60, %c0_61, %c0_62] : memref<9x32x16xbf16, #tpu.memory_space<vmem>>, vector<1x32x16xbf16>
    %101 = vector.shape_cast %100 : vector<1x32x16xbf16> to vector<32x16xbf16>
    %102 = arith.truncf %99 : vector<16x256xf32> to vector<16x256xbf16>
    %cst_63 = arith.constant dense<0.000000e+00> : vector<32x256xf32>
    %103 = tpu.matmul %101, %102, %cst_63 {dimension_numbers = #tpu.dot_dimension_numbers<[1], [0], [0], [1], [0, 0, 1, 1], [], []>} : vector<32x16xbf16>, vector<16x256xbf16>, vector<32x256xf32> -> vector<32x256xf32>
    %104 = arith.addf %95, %103 : vector<32x256xf32>
    %c15_i32_64 = arith.constant 15 : i32
    %105 = tpu.dynamic_rotate %83 by %c15_i32_64 dim 1 : vector<16x256xf32>, i32 -> vector<16x256xf32>
    %c2_65 = arith.constant 2 : index
    %c0_66 = arith.constant 0 : index
    %106 = vector.load %arg10[%c2_65, %c0_66] : memref<9x256xf32, #tpu.memory_space<vmem>>, vector<1x256xf32>
    %107 = vector.broadcast %106 : vector<1x256xf32> to vector<16x256xf32>
    %108 = arith.mulf %105, %107 : vector<16x256xf32>
    %c2_67 = arith.constant 2 : index
    %c0_68 = arith.constant 0 : index
    %c0_69 = arith.constant 0 : index
    %109 = vector.load %arg4[%c2_67, %c0_68, %c0_69] : memref<9x32x16xbf16, #tpu.memory_space<vmem>>, vector<1x32x16xbf16>
    %110 = vector.shape_cast %109 : vector<1x32x16xbf16> to vector<32x16xbf16>
    %111 = arith.truncf %108 : vector<16x256xf32> to vector<16x256xbf16>
    %cst_70 = arith.constant dense<0.000000e+00> : vector<32x256xf32>
    %112 = tpu.matmul %110, %111, %cst_70 {dimension_numbers = #tpu.dot_dimension_numbers<[1], [0], [0], [1], [0, 0, 1, 1], [], []>} : vector<32x16xbf16>, vector<16x256xbf16>, vector<32x256xf32> -> vector<32x256xf32>
    %113 = arith.addf %104, %112 : vector<32x256xf32>
    %c1_i32_71 = arith.constant 1 : i32
    %114 = tpu.dynamic_rotate %83 by %c1_i32_71 dim 1 : vector<16x256xf32>, i32 -> vector<16x256xf32>
    %c3_72 = arith.constant 3 : index
    %c0_73 = arith.constant 0 : index
    %115 = vector.load %arg10[%c3_72, %c0_73] : memref<9x256xf32, #tpu.memory_space<vmem>>, vector<1x256xf32>
    %116 = vector.broadcast %115 : vector<1x256xf32> to vector<16x256xf32>
    %117 = arith.mulf %114, %116 : vector<16x256xf32>
    %c3_74 = arith.constant 3 : index
    %c0_75 = arith.constant 0 : index
    %c0_76 = arith.constant 0 : index
    %118 = vector.load %arg4[%c3_74, %c0_75, %c0_76] : memref<9x32x16xbf16, #tpu.memory_space<vmem>>, vector<1x32x16xbf16>
    %119 = vector.shape_cast %118 : vector<1x32x16xbf16> to vector<32x16xbf16>
    %120 = arith.truncf %117 : vector<16x256xf32> to vector<16x256xbf16>
    %cst_77 = arith.constant dense<0.000000e+00> : vector<32x256xf32>
    %121 = tpu.matmul %119, %120, %cst_77 {dimension_numbers = #tpu.dot_dimension_numbers<[1], [0], [0], [1], [0, 0, 1, 1], [], []>} : vector<32x16xbf16>, vector<16x256xbf16>, vector<32x256xf32> -> vector<32x256xf32>
    %122 = arith.addf %113, %121 : vector<32x256xf32>
    %c4_78 = arith.constant 4 : index
    %c0_79 = arith.constant 0 : index
    %c0_80 = arith.constant 0 : index
    %123 = vector.load %arg4[%c4_78, %c0_79, %c0_80] : memref<9x32x16xbf16, #tpu.memory_space<vmem>>, vector<1x32x16xbf16>
    %124 = vector.shape_cast %123 : vector<1x32x16xbf16> to vector<32x16xbf16>
    %125 = arith.truncf %83 : vector<16x256xf32> to vector<16x256xbf16>
    %cst_81 = arith.constant dense<0.000000e+00> : vector<32x256xf32>
    %126 = tpu.matmul %124, %125, %cst_81 {dimension_numbers = #tpu.dot_dimension_numbers<[1], [0], [0], [1], [0, 0, 1, 1], [], []>} : vector<32x16xbf16>, vector<16x256xbf16>, vector<32x256xf32> -> vector<32x256xf32>
    %127 = arith.addf %122, %126 : vector<32x256xf32>
    %c255_i32_82 = arith.constant 255 : i32
    %128 = tpu.dynamic_rotate %83 by %c255_i32_82 dim 1 : vector<16x256xf32>, i32 -> vector<16x256xf32>
    %c5_83 = arith.constant 5 : index
    %c0_84 = arith.constant 0 : index
    %129 = vector.load %arg10[%c5_83, %c0_84] : memref<9x256xf32, #tpu.memory_space<vmem>>, vector<1x256xf32>
    %130 = vector.broadcast %129 : vector<1x256xf32> to vector<16x256xf32>
    %131 = arith.mulf %128, %130 : vector<16x256xf32>
    %c5_85 = arith.constant 5 : index
    %c0_86 = arith.constant 0 : index
    %c0_87 = arith.constant 0 : index
    %132 = vector.load %arg4[%c5_85, %c0_86, %c0_87] : memref<9x32x16xbf16, #tpu.memory_space<vmem>>, vector<1x32x16xbf16>
    %133 = vector.shape_cast %132 : vector<1x32x16xbf16> to vector<32x16xbf16>
    %134 = arith.truncf %131 : vector<16x256xf32> to vector<16x256xbf16>
    %cst_88 = arith.constant dense<0.000000e+00> : vector<32x256xf32>
    %135 = tpu.matmul %133, %134, %cst_88 {dimension_numbers = #tpu.dot_dimension_numbers<[1], [0], [0], [1], [0, 0, 1, 1], [], []>} : vector<32x16xbf16>, vector<16x256xbf16>, vector<32x256xf32> -> vector<32x256xf32>
    %136 = arith.addf %127, %135 : vector<32x256xf32>
    %c241_i32_89 = arith.constant 241 : i32
    %137 = tpu.dynamic_rotate %83 by %c241_i32_89 dim 1 : vector<16x256xf32>, i32 -> vector<16x256xf32>
    %c6_90 = arith.constant 6 : index
    %c0_91 = arith.constant 0 : index
    %138 = vector.load %arg10[%c6_90, %c0_91] : memref<9x256xf32, #tpu.memory_space<vmem>>, vector<1x256xf32>
    %139 = vector.broadcast %138 : vector<1x256xf32> to vector<16x256xf32>
    %140 = arith.mulf %137, %139 : vector<16x256xf32>
    %c6_92 = arith.constant 6 : index
    %c0_93 = arith.constant 0 : index
    %c0_94 = arith.constant 0 : index
    %141 = vector.load %arg4[%c6_92, %c0_93, %c0_94] : memref<9x32x16xbf16, #tpu.memory_space<vmem>>, vector<1x32x16xbf16>
    %142 = vector.shape_cast %141 : vector<1x32x16xbf16> to vector<32x16xbf16>
    %143 = arith.truncf %140 : vector<16x256xf32> to vector<16x256xbf16>
    %cst_95 = arith.constant dense<0.000000e+00> : vector<32x256xf32>
    %144 = tpu.matmul %142, %143, %cst_95 {dimension_numbers = #tpu.dot_dimension_numbers<[1], [0], [0], [1], [0, 0, 1, 1], [], []>} : vector<32x16xbf16>, vector<16x256xbf16>, vector<32x256xf32> -> vector<32x256xf32>
    %145 = arith.addf %136, %144 : vector<32x256xf32>
    %c240_i32_96 = arith.constant 240 : i32
    %146 = tpu.dynamic_rotate %83 by %c240_i32_96 dim 1 : vector<16x256xf32>, i32 -> vector<16x256xf32>
    %c7_97 = arith.constant 7 : index
    %c0_98 = arith.constant 0 : index
    %147 = vector.load %arg10[%c7_97, %c0_98] : memref<9x256xf32, #tpu.memory_space<vmem>>, vector<1x256xf32>
    %148 = vector.broadcast %147 : vector<1x256xf32> to vector<16x256xf32>
    %149 = arith.mulf %146, %148 : vector<16x256xf32>
    %c7_99 = arith.constant 7 : index
    %c0_100 = arith.constant 0 : index
    %c0_101 = arith.constant 0 : index
    %150 = vector.load %arg4[%c7_99, %c0_100, %c0_101] : memref<9x32x16xbf16, #tpu.memory_space<vmem>>, vector<1x32x16xbf16>
    %151 = vector.shape_cast %150 : vector<1x32x16xbf16> to vector<32x16xbf16>
    %152 = arith.truncf %149 : vector<16x256xf32> to vector<16x256xbf16>
    %cst_102 = arith.constant dense<0.000000e+00> : vector<32x256xf32>
    %153 = tpu.matmul %151, %152, %cst_102 {dimension_numbers = #tpu.dot_dimension_numbers<[1], [0], [0], [1], [0, 0, 1, 1], [], []>} : vector<32x16xbf16>, vector<16x256xbf16>, vector<32x256xf32> -> vector<32x256xf32>
    %154 = arith.addf %145, %153 : vector<32x256xf32>
    %c239_i32_103 = arith.constant 239 : i32
    %155 = tpu.dynamic_rotate %83 by %c239_i32_103 dim 1 : vector<16x256xf32>, i32 -> vector<16x256xf32>
    %c8_104 = arith.constant 8 : index
    %c0_105 = arith.constant 0 : index
    %156 = vector.load %arg10[%c8_104, %c0_105] : memref<9x256xf32, #tpu.memory_space<vmem>>, vector<1x256xf32>
    %157 = vector.broadcast %156 : vector<1x256xf32> to vector<16x256xf32>
    %158 = arith.mulf %155, %157 : vector<16x256xf32>
    %c8_106 = arith.constant 8 : index
    %c0_107 = arith.constant 0 : index
    %c0_108 = arith.constant 0 : index
    %159 = vector.load %arg4[%c8_106, %c0_107, %c0_108] : memref<9x32x16xbf16, #tpu.memory_space<vmem>>, vector<1x32x16xbf16>
    %160 = vector.shape_cast %159 : vector<1x32x16xbf16> to vector<32x16xbf16>
    %161 = arith.truncf %158 : vector<16x256xf32> to vector<16x256xbf16>
    %cst_109 = arith.constant dense<0.000000e+00> : vector<32x256xf32>
    %162 = tpu.matmul %160, %161, %cst_109 {dimension_numbers = #tpu.dot_dimension_numbers<[1], [0], [0], [1], [0, 0, 1, 1], [], []>} : vector<32x16xbf16>, vector<16x256xbf16>, vector<32x256xf32> -> vector<32x256xf32>
    %163 = arith.addf %154, %162 : vector<32x256xf32>
    %cst_110 = arith.constant 0.000000e+00 : f32
    %164 = vector.broadcast %cst_110 : f32 to vector<32x256xf32>
    %165 = arith.maximumf %163, %164 : vector<32x256xf32>
    %c255_i32_111 = arith.constant 255 : i32
    %166 = tpu.dynamic_rotate %165 by %c255_i32_111 dim 1 : vector<32x256xf32>, i32 -> vector<32x256xf32>
    %167 = arith.maximumf %165, %166 : vector<32x256xf32>
    %c240_i32_112 = arith.constant 240 : i32
    %168 = tpu.dynamic_rotate %165 by %c240_i32_112 dim 1 : vector<32x256xf32>, i32 -> vector<32x256xf32>
    %c239_i32_113 = arith.constant 239 : i32
    %169 = tpu.dynamic_rotate %165 by %c239_i32_113 dim 1 : vector<32x256xf32>, i32 -> vector<32x256xf32>
    %170 = arith.maximumf %168, %169 : vector<32x256xf32>
    %171 = arith.maximumf %167, %170 : vector<32x256xf32>
    %172 = arith.truncf %171 : vector<32x256xf32> to vector<32x256xbf16>
    %c0_114 = arith.constant 0 : index
    %c0_115 = arith.constant 0 : index
    %173 = vector.load %arg13[%c0_114, %c0_115] : memref<256x64xbf16, #tpu.memory_space<vmem>>, vector<256x64xbf16>
    %cst_116 = arith.constant dense<0.000000e+00> : vector<32x64xf32>
    %174 = tpu.matmul %172, %173, %cst_116 {dimension_numbers = #tpu.dot_dimension_numbers<[1], [0], [0], [1], [0, 0, 1, 1], [], []>} : vector<32x256xbf16>, vector<256x64xbf16>, vector<32x64xf32> -> vector<32x64xf32>
    %c0_117 = arith.constant 0 : index
    %c0_118 = arith.constant 0 : index
    %175 = vector.load %arg7[%c0_117, %c0_118] : memref<16x1xf32, #tpu.memory_space<vmem>>, vector<16x1xf32>
    %176 = vector.shape_cast %175 : vector<16x1xf32> to vector<16x1xf32>
    %177 = vector.broadcast %176 : vector<16x1xf32> to vector<16x64xf32>
    %178 = vector.extract_strided_slice %174 {offsets = [0, 55], sizes = [32, 9], strides = [1, 1]} : vector<32x64xf32> to vector<32x9xf32>
    %179 = vector.extract_strided_slice %174 {offsets = [0, 0], sizes = [32, 55], strides = [1, 1]} : vector<32x64xf32> to vector<32x55xf32>
    %180 = tpu.concatenate %178, %179 in 1 : vector<32x9xf32>, vector<32x55xf32> -> vector<32x64xf32>
    %c0_119 = arith.constant 0 : index
    %c0_120 = arith.constant 0 : index
    %181 = vector.load %arg11[%c0_119, %c0_120] : memref<9x64xf32, #tpu.memory_space<vmem>>, vector<1x64xf32>
    %182 = vector.broadcast %181 : vector<1x64xf32> to vector<32x64xf32>
    %183 = arith.mulf %180, %182 : vector<32x64xf32>
    %c0_121 = arith.constant 0 : index
    %c0_122 = arith.constant 0 : index
    %c0_123 = arith.constant 0 : index
    %184 = vector.load %arg6[%c0_121, %c0_122, %c0_123] : memref<9x16x32xbf16, #tpu.memory_space<vmem>>, vector<1x16x32xbf16>
    %185 = vector.shape_cast %184 : vector<1x16x32xbf16> to vector<16x32xbf16>
    %186 = arith.truncf %183 : vector<32x64xf32> to vector<32x64xbf16>
    %cst_124 = arith.constant dense<0.000000e+00> : vector<16x64xf32>
    %187 = tpu.matmul %185, %186, %cst_124 {dimension_numbers = #tpu.dot_dimension_numbers<[1], [0], [0], [1], [0, 0, 1, 1], [], []>} : vector<16x32xbf16>, vector<32x64xbf16>, vector<16x64xf32> -> vector<16x64xf32>
    %188 = arith.addf %177, %187 : vector<16x64xf32>
    %189 = vector.extract_strided_slice %174 {offsets = [0, 56], sizes = [32, 8], strides = [1, 1]} : vector<32x64xf32> to vector<32x8xf32>
    %190 = vector.extract_strided_slice %174 {offsets = [0, 0], sizes = [32, 56], strides = [1, 1]} : vector<32x64xf32> to vector<32x56xf32>
    %191 = tpu.concatenate %189, %190 in 1 : vector<32x8xf32>, vector<32x56xf32> -> vector<32x64xf32>
    %c1_125 = arith.constant 1 : index
    %c0_126 = arith.constant 0 : index
    %192 = vector.load %arg11[%c1_125, %c0_126] : memref<9x64xf32, #tpu.memory_space<vmem>>, vector<1x64xf32>
    %193 = vector.broadcast %192 : vector<1x64xf32> to vector<32x64xf32>
    %194 = arith.mulf %191, %193 : vector<32x64xf32>
    %c1_127 = arith.constant 1 : index
    %c0_128 = arith.constant 0 : index
    %c0_129 = arith.constant 0 : index
    %195 = vector.load %arg6[%c1_127, %c0_128, %c0_129] : memref<9x16x32xbf16, #tpu.memory_space<vmem>>, vector<1x16x32xbf16>
    %196 = vector.shape_cast %195 : vector<1x16x32xbf16> to vector<16x32xbf16>
    %197 = arith.truncf %194 : vector<32x64xf32> to vector<32x64xbf16>
    %cst_130 = arith.constant dense<0.000000e+00> : vector<16x64xf32>
    %198 = tpu.matmul %196, %197, %cst_130 {dimension_numbers = #tpu.dot_dimension_numbers<[1], [0], [0], [1], [0, 0, 1, 1], [], []>} : vector<16x32xbf16>, vector<32x64xbf16>, vector<16x64xf32> -> vector<16x64xf32>
    %199 = arith.addf %188, %198 : vector<16x64xf32>
    %200 = vector.extract_strided_slice %174 {offsets = [0, 57], sizes = [32, 7], strides = [1, 1]} : vector<32x64xf32> to vector<32x7xf32>
    %201 = vector.extract_strided_slice %174 {offsets = [0, 0], sizes = [32, 57], strides = [1, 1]} : vector<32x64xf32> to vector<32x57xf32>
    %202 = tpu.concatenate %200, %201 in 1 : vector<32x7xf32>, vector<32x57xf32> -> vector<32x64xf32>
    %c2_131 = arith.constant 2 : index
    %c0_132 = arith.constant 0 : index
    %203 = vector.load %arg11[%c2_131, %c0_132] : memref<9x64xf32, #tpu.memory_space<vmem>>, vector<1x64xf32>
    %204 = vector.broadcast %203 : vector<1x64xf32> to vector<32x64xf32>
    %205 = arith.mulf %202, %204 : vector<32x64xf32>
    %c2_133 = arith.constant 2 : index
    %c0_134 = arith.constant 0 : index
    %c0_135 = arith.constant 0 : index
    %206 = vector.load %arg6[%c2_133, %c0_134, %c0_135] : memref<9x16x32xbf16, #tpu.memory_space<vmem>>, vector<1x16x32xbf16>
    %207 = vector.shape_cast %206 : vector<1x16x32xbf16> to vector<16x32xbf16>
    %208 = arith.truncf %205 : vector<32x64xf32> to vector<32x64xbf16>
    %cst_136 = arith.constant dense<0.000000e+00> : vector<16x64xf32>
    %209 = tpu.matmul %207, %208, %cst_136 {dimension_numbers = #tpu.dot_dimension_numbers<[1], [0], [0], [1], [0, 0, 1, 1], [], []>} : vector<16x32xbf16>, vector<32x64xbf16>, vector<16x64xf32> -> vector<16x64xf32>
    %210 = arith.addf %199, %209 : vector<16x64xf32>
    %211 = vector.extract_strided_slice %174 {offsets = [0, 63], sizes = [32, 1], strides = [1, 1]} : vector<32x64xf32> to vector<32x1xf32>
    %212 = vector.extract_strided_slice %174 {offsets = [0, 0], sizes = [32, 63], strides = [1, 1]} : vector<32x64xf32> to vector<32x63xf32>
    %213 = tpu.concatenate %211, %212 in 1 : vector<32x1xf32>, vector<32x63xf32> -> vector<32x64xf32>
    %c3_137 = arith.constant 3 : index
    %c0_138 = arith.constant 0 : index
    %214 = vector.load %arg11[%c3_137, %c0_138] : memref<9x64xf32, #tpu.memory_space<vmem>>, vector<1x64xf32>
    %215 = vector.broadcast %214 : vector<1x64xf32> to vector<32x64xf32>
    %216 = arith.mulf %213, %215 : vector<32x64xf32>
    %c3_139 = arith.constant 3 : index
    %c0_140 = arith.constant 0 : index
    %c0_141 = arith.constant 0 : index
    %217 = vector.load %arg6[%c3_139, %c0_140, %c0_141] : memref<9x16x32xbf16, #tpu.memory_space<vmem>>, vector<1x16x32xbf16>
    %218 = vector.shape_cast %217 : vector<1x16x32xbf16> to vector<16x32xbf16>
    %219 = arith.truncf %216 : vector<32x64xf32> to vector<32x64xbf16>
    %cst_142 = arith.constant dense<0.000000e+00> : vector<16x64xf32>
    %220 = tpu.matmul %218, %219, %cst_142 {dimension_numbers = #tpu.dot_dimension_numbers<[1], [0], [0], [1], [0, 0, 1, 1], [], []>} : vector<16x32xbf16>, vector<32x64xbf16>, vector<16x64xf32> -> vector<16x64xf32>
    %221 = arith.addf %210, %220 : vector<16x64xf32>
    %c4_143 = arith.constant 4 : index
    %c0_144 = arith.constant 0 : index
    %c0_145 = arith.constant 0 : index
    %222 = vector.load %arg6[%c4_143, %c0_144, %c0_145] : memref<9x16x32xbf16, #tpu.memory_space<vmem>>, vector<1x16x32xbf16>
    %223 = vector.shape_cast %222 : vector<1x16x32xbf16> to vector<16x32xbf16>
    %224 = arith.truncf %174 : vector<32x64xf32> to vector<32x64xbf16>
    %cst_146 = arith.constant dense<0.000000e+00> : vector<16x64xf32>
    %225 = tpu.matmul %223, %224, %cst_146 {dimension_numbers = #tpu.dot_dimension_numbers<[1], [0], [0], [1], [0, 0, 1, 1], [], []>} : vector<16x32xbf16>, vector<32x64xbf16>, vector<16x64xf32> -> vector<16x64xf32>
    %226 = arith.addf %221, %225 : vector<16x64xf32>
    %227 = vector.extract_strided_slice %174 {offsets = [0, 1], sizes = [32, 63], strides = [1, 1]} : vector<32x64xf32> to vector<32x63xf32>
    %228 = vector.extract_strided_slice %174 {offsets = [0, 0], sizes = [32, 1], strides = [1, 1]} : vector<32x64xf32> to vector<32x1xf32>
    %229 = tpu.concatenate %227, %228 in 1 : vector<32x63xf32>, vector<32x1xf32> -> vector<32x64xf32>
    %c5_147 = arith.constant 5 : index
    %c0_148 = arith.constant 0 : index
    %230 = vector.load %arg11[%c5_147, %c0_148] : memref<9x64xf32, #tpu.memory_space<vmem>>, vector<1x64xf32>
    %231 = vector.broadcast %230 : vector<1x64xf32> to vector<32x64xf32>
    %232 = arith.mulf %229, %231 : vector<32x64xf32>
    %c5_149 = arith.constant 5 : index
    %c0_150 = arith.constant 0 : index
    %c0_151 = arith.constant 0 : index
    %233 = vector.load %arg6[%c5_149, %c0_150, %c0_151] : memref<9x16x32xbf16, #tpu.memory_space<vmem>>, vector<1x16x32xbf16>
    %234 = vector.shape_cast %233 : vector<1x16x32xbf16> to vector<16x32xbf16>
    %235 = arith.truncf %232 : vector<32x64xf32> to vector<32x64xbf16>
    %cst_152 = arith.constant dense<0.000000e+00> : vector<16x64xf32>
    %236 = tpu.matmul %234, %235, %cst_152 {dimension_numbers = #tpu.dot_dimension_numbers<[1], [0], [0], [1], [0, 0, 1, 1], [], []>} : vector<16x32xbf16>, vector<32x64xbf16>, vector<16x64xf32> -> vector<16x64xf32>
    %237 = arith.addf %226, %236 : vector<16x64xf32>
    %238 = vector.extract_strided_slice %174 {offsets = [0, 7], sizes = [32, 57], strides = [1, 1]} : vector<32x64xf32> to vector<32x57xf32>
    %239 = vector.extract_strided_slice %174 {offsets = [0, 0], sizes = [32, 7], strides = [1, 1]} : vector<32x64xf32> to vector<32x7xf32>
    %240 = tpu.concatenate %238, %239 in 1 : vector<32x57xf32>, vector<32x7xf32> -> vector<32x64xf32>
    %c6_153 = arith.constant 6 : index
    %c0_154 = arith.constant 0 : index
    %241 = vector.load %arg11[%c6_153, %c0_154] : memref<9x64xf32, #tpu.memory_space<vmem>>, vector<1x64xf32>
    %242 = vector.broadcast %241 : vector<1x64xf32> to vector<32x64xf32>
    %243 = arith.mulf %240, %242 : vector<32x64xf32>
    %c6_155 = arith.constant 6 : index
    %c0_156 = arith.constant 0 : index
    %c0_157 = arith.constant 0 : index
    %244 = vector.load %arg6[%c6_155, %c0_156, %c0_157] : memref<9x16x32xbf16, #tpu.memory_space<vmem>>, vector<1x16x32xbf16>
    %245 = vector.shape_cast %244 : vector<1x16x32xbf16> to vector<16x32xbf16>
    %246 = arith.truncf %243 : vector<32x64xf32> to vector<32x64xbf16>
    %cst_158 = arith.constant dense<0.000000e+00> : vector<16x64xf32>
    %247 = tpu.matmul %245, %246, %cst_158 {dimension_numbers = #tpu.dot_dimension_numbers<[1], [0], [0], [1], [0, 0, 1, 1], [], []>} : vector<16x32xbf16>, vector<32x64xbf16>, vector<16x64xf32> -> vector<16x64xf32>
    %248 = arith.addf %237, %247 : vector<16x64xf32>
    %249 = vector.extract_strided_slice %174 {offsets = [0, 8], sizes = [32, 56], strides = [1, 1]} : vector<32x64xf32> to vector<32x56xf32>
    %250 = vector.extract_strided_slice %174 {offsets = [0, 0], sizes = [32, 8], strides = [1, 1]} : vector<32x64xf32> to vector<32x8xf32>
    %251 = tpu.concatenate %249, %250 in 1 : vector<32x56xf32>, vector<32x8xf32> -> vector<32x64xf32>
    %c7_159 = arith.constant 7 : index
    %c0_160 = arith.constant 0 : index
    %252 = vector.load %arg11[%c7_159, %c0_160] : memref<9x64xf32, #tpu.memory_space<vmem>>, vector<1x64xf32>
    %253 = vector.broadcast %252 : vector<1x64xf32> to vector<32x64xf32>
    %254 = arith.mulf %251, %253 : vector<32x64xf32>
    %c7_161 = arith.constant 7 : index
    %c0_162 = arith.constant 0 : index
    %c0_163 = arith.constant 0 : index
    %255 = vector.load %arg6[%c7_161, %c0_162, %c0_163] : memref<9x16x32xbf16, #tpu.memory_space<vmem>>, vector<1x16x32xbf16>
    %256 = vector.shape_cast %255 : vector<1x16x32xbf16> to vector<16x32xbf16>
    %257 = arith.truncf %254 : vector<32x64xf32> to vector<32x64xbf16>
    %cst_164 = arith.constant dense<0.000000e+00> : vector<16x64xf32>
    %258 = tpu.matmul %256, %257, %cst_164 {dimension_numbers = #tpu.dot_dimension_numbers<[1], [0], [0], [1], [0, 0, 1, 1], [], []>} : vector<16x32xbf16>, vector<32x64xbf16>, vector<16x64xf32> -> vector<16x64xf32>
    %259 = arith.addf %248, %258 : vector<16x64xf32>
    %260 = vector.extract_strided_slice %174 {offsets = [0, 9], sizes = [32, 55], strides = [1, 1]} : vector<32x64xf32> to vector<32x55xf32>
    %261 = vector.extract_strided_slice %174 {offsets = [0, 0], sizes = [32, 9], strides = [1, 1]} : vector<32x64xf32> to vector<32x9xf32>
    %262 = tpu.concatenate %260, %261 in 1 : vector<32x55xf32>, vector<32x9xf32> -> vector<32x64xf32>
    %c8_165 = arith.constant 8 : index
    %c0_166 = arith.constant 0 : index
    %263 = vector.load %arg11[%c8_165, %c0_166] : memref<9x64xf32, #tpu.memory_space<vmem>>, vector<1x64xf32>
    %264 = vector.broadcast %263 : vector<1x64xf32> to vector<32x64xf32>
    %265 = arith.mulf %262, %264 : vector<32x64xf32>
    %c8_167 = arith.constant 8 : index
    %c0_168 = arith.constant 0 : index
    %c0_169 = arith.constant 0 : index
    %266 = vector.load %arg6[%c8_167, %c0_168, %c0_169] : memref<9x16x32xbf16, #tpu.memory_space<vmem>>, vector<1x16x32xbf16>
    %267 = vector.shape_cast %266 : vector<1x16x32xbf16> to vector<16x32xbf16>
    %268 = arith.truncf %265 : vector<32x64xf32> to vector<32x64xbf16>
    %cst_170 = arith.constant dense<0.000000e+00> : vector<16x64xf32>
    %269 = tpu.matmul %267, %268, %cst_170 {dimension_numbers = #tpu.dot_dimension_numbers<[1], [0], [0], [1], [0, 0, 1, 1], [], []>} : vector<16x32xbf16>, vector<32x64xbf16>, vector<16x64xf32> -> vector<16x64xf32>
    %270 = arith.addf %259, %269 : vector<16x64xf32>
    %cst_171 = arith.constant 0.000000e+00 : f32
    %271 = vector.broadcast %cst_171 : f32 to vector<16x64xf32>
    %272 = arith.maximumf %270, %271 : vector<16x64xf32>
    %273 = arith.truncf %272 : vector<16x64xf32> to vector<16x64xbf16>
    %c0_172 = arith.constant 0 : index
    %c0_173 = arith.constant 0 : index
    %274 = vector.load %arg14[%c0_172, %c0_173] : memref<64x256xbf16, #tpu.memory_space<vmem>>, vector<64x256xbf16>
    %cst_174 = arith.constant dense<0.000000e+00> : vector<16x256xf32>
    %275 = tpu.matmul %273, %274, %cst_174 {dimension_numbers = #tpu.dot_dimension_numbers<[1], [0], [0], [1], [0, 0, 1, 1], [], []>} : vector<16x64xbf16>, vector<64x256xbf16>, vector<16x256xf32> -> vector<16x256xf32>
    %c0_175 = arith.constant 0 : index
    %c0_176 = arith.constant 0 : index
    %276 = vector.load %arg9[%c0_175, %c0_176] : memref<2x1xf32, #tpu.memory_space<vmem>>, vector<2x1xf32>
    %277 = vector.shape_cast %276 : vector<2x1xf32> to vector<2x1xf32>
    %278 = vector.broadcast %277 : vector<2x1xf32> to vector<2x256xf32>
    %c34_i32 = arith.constant 34 : i32
    %279 = tpu.dynamic_rotate %275 by %c34_i32 dim 1 : vector<16x256xf32>, i32 -> vector<16x256xf32>
    %c0_177 = arith.constant 0 : index
    %c0_178 = arith.constant 0 : index
    %280 = vector.load %arg12[%c0_177, %c0_178] : memref<25x256xf32, #tpu.memory_space<vmem>>, vector<1x256xf32>
    %281 = vector.broadcast %280 : vector<1x256xf32> to vector<16x256xf32>
    %282 = arith.mulf %279, %281 : vector<16x256xf32>
    %c0_179 = arith.constant 0 : index
    %c0_180 = arith.constant 0 : index
    %c0_181 = arith.constant 0 : index
    %283 = vector.load %arg8[%c0_179, %c0_180, %c0_181] : memref<25x2x16xbf16, #tpu.memory_space<vmem>>, vector<1x2x16xbf16>
    %284 = vector.shape_cast %283 : vector<1x2x16xbf16> to vector<2x16xbf16>
    %285 = arith.truncf %282 : vector<16x256xf32> to vector<16x256xbf16>
    %cst_182 = arith.constant dense<0.000000e+00> : vector<2x256xf32>
    %286 = tpu.matmul %284, %285, %cst_182 {dimension_numbers = #tpu.dot_dimension_numbers<[1], [0], [0], [1], [0, 0, 1, 1], [], []>} : vector<2x16xbf16>, vector<16x256xbf16>, vector<2x256xf32> -> vector<2x256xf32>
    %287 = arith.addf %278, %286 : vector<2x256xf32>
    %c33_i32 = arith.constant 33 : i32
    %288 = tpu.dynamic_rotate %275 by %c33_i32 dim 1 : vector<16x256xf32>, i32 -> vector<16x256xf32>
    %c1_183 = arith.constant 1 : index
    %c0_184 = arith.constant 0 : index
    %289 = vector.load %arg12[%c1_183, %c0_184] : memref<25x256xf32, #tpu.memory_space<vmem>>, vector<1x256xf32>
    %290 = vector.broadcast %289 : vector<1x256xf32> to vector<16x256xf32>
    %291 = arith.mulf %288, %290 : vector<16x256xf32>
    %c1_185 = arith.constant 1 : index
    %c0_186 = arith.constant 0 : index
    %c0_187 = arith.constant 0 : index
    %292 = vector.load %arg8[%c1_185, %c0_186, %c0_187] : memref<25x2x16xbf16, #tpu.memory_space<vmem>>, vector<1x2x16xbf16>
    %293 = vector.shape_cast %292 : vector<1x2x16xbf16> to vector<2x16xbf16>
    %294 = arith.truncf %291 : vector<16x256xf32> to vector<16x256xbf16>
    %cst_188 = arith.constant dense<0.000000e+00> : vector<2x256xf32>
    %295 = tpu.matmul %293, %294, %cst_188 {dimension_numbers = #tpu.dot_dimension_numbers<[1], [0], [0], [1], [0, 0, 1, 1], [], []>} : vector<2x16xbf16>, vector<16x256xbf16>, vector<2x256xf32> -> vector<2x256xf32>
    %296 = arith.addf %287, %295 : vector<2x256xf32>
    %c32_i32 = arith.constant 32 : i32
    %297 = tpu.dynamic_rotate %275 by %c32_i32 dim 1 : vector<16x256xf32>, i32 -> vector<16x256xf32>
    %c2_189 = arith.constant 2 : index
    %c0_190 = arith.constant 0 : index
    %298 = vector.load %arg12[%c2_189, %c0_190] : memref<25x256xf32, #tpu.memory_space<vmem>>, vector<1x256xf32>
    %299 = vector.broadcast %298 : vector<1x256xf32> to vector<16x256xf32>
    %300 = arith.mulf %297, %299 : vector<16x256xf32>
    %c2_191 = arith.constant 2 : index
    %c0_192 = arith.constant 0 : index
    %c0_193 = arith.constant 0 : index
    %301 = vector.load %arg8[%c2_191, %c0_192, %c0_193] : memref<25x2x16xbf16, #tpu.memory_space<vmem>>, vector<1x2x16xbf16>
    %302 = vector.shape_cast %301 : vector<1x2x16xbf16> to vector<2x16xbf16>
    %303 = arith.truncf %300 : vector<16x256xf32> to vector<16x256xbf16>
    %cst_194 = arith.constant dense<0.000000e+00> : vector<2x256xf32>
    %304 = tpu.matmul %302, %303, %cst_194 {dimension_numbers = #tpu.dot_dimension_numbers<[1], [0], [0], [1], [0, 0, 1, 1], [], []>} : vector<2x16xbf16>, vector<16x256xbf16>, vector<2x256xf32> -> vector<2x256xf32>
    %305 = arith.addf %296, %304 : vector<2x256xf32>
    %c31_i32 = arith.constant 31 : i32
    %306 = tpu.dynamic_rotate %275 by %c31_i32 dim 1 : vector<16x256xf32>, i32 -> vector<16x256xf32>
    %c3_195 = arith.constant 3 : index
    %c0_196 = arith.constant 0 : index
    %307 = vector.load %arg12[%c3_195, %c0_196] : memref<25x256xf32, #tpu.memory_space<vmem>>, vector<1x256xf32>
    %308 = vector.broadcast %307 : vector<1x256xf32> to vector<16x256xf32>
    %309 = arith.mulf %306, %308 : vector<16x256xf32>
    %c3_197 = arith.constant 3 : index
    %c0_198 = arith.constant 0 : index
    %c0_199 = arith.constant 0 : index
    %310 = vector.load %arg8[%c3_197, %c0_198, %c0_199] : memref<25x2x16xbf16, #tpu.memory_space<vmem>>, vector<1x2x16xbf16>
    %311 = vector.shape_cast %310 : vector<1x2x16xbf16> to vector<2x16xbf16>
    %312 = arith.truncf %309 : vector<16x256xf32> to vector<16x256xbf16>
    %cst_200 = arith.constant dense<0.000000e+00> : vector<2x256xf32>
    %313 = tpu.matmul %311, %312, %cst_200 {dimension_numbers = #tpu.dot_dimension_numbers<[1], [0], [0], [1], [0, 0, 1, 1], [], []>} : vector<2x16xbf16>, vector<16x256xbf16>, vector<2x256xf32> -> vector<2x256xf32>
    %314 = arith.addf %305, %313 : vector<2x256xf32>
    %c30_i32 = arith.constant 30 : i32
    %315 = tpu.dynamic_rotate %275 by %c30_i32 dim 1 : vector<16x256xf32>, i32 -> vector<16x256xf32>
    %c4_201 = arith.constant 4 : index
    %c0_202 = arith.constant 0 : index
    %316 = vector.load %arg12[%c4_201, %c0_202] : memref<25x256xf32, #tpu.memory_space<vmem>>, vector<1x256xf32>
    %317 = vector.broadcast %316 : vector<1x256xf32> to vector<16x256xf32>
    %318 = arith.mulf %315, %317 : vector<16x256xf32>
    %c4_203 = arith.constant 4 : index
    %c0_204 = arith.constant 0 : index
    %c0_205 = arith.constant 0 : index
    %319 = vector.load %arg8[%c4_203, %c0_204, %c0_205] : memref<25x2x16xbf16, #tpu.memory_space<vmem>>, vector<1x2x16xbf16>
    %320 = vector.shape_cast %319 : vector<1x2x16xbf16> to vector<2x16xbf16>
    %321 = arith.truncf %318 : vector<16x256xf32> to vector<16x256xbf16>
    %cst_206 = arith.constant dense<0.000000e+00> : vector<2x256xf32>
    %322 = tpu.matmul %320, %321, %cst_206 {dimension_numbers = #tpu.dot_dimension_numbers<[1], [0], [0], [1], [0, 0, 1, 1], [], []>} : vector<2x16xbf16>, vector<16x256xbf16>, vector<2x256xf32> -> vector<2x256xf32>
    %323 = arith.addf %314, %322 : vector<2x256xf32>
    %c18_i32 = arith.constant 18 : i32
    %324 = tpu.dynamic_rotate %275 by %c18_i32 dim 1 : vector<16x256xf32>, i32 -> vector<16x256xf32>
    %c5_207 = arith.constant 5 : index
    %c0_208 = arith.constant 0 : index
    %325 = vector.load %arg12[%c5_207, %c0_208] : memref<25x256xf32, #tpu.memory_space<vmem>>, vector<1x256xf32>
    %326 = vector.broadcast %325 : vector<1x256xf32> to vector<16x256xf32>
    %327 = arith.mulf %324, %326 : vector<16x256xf32>
    %c5_209 = arith.constant 5 : index
    %c0_210 = arith.constant 0 : index
    %c0_211 = arith.constant 0 : index
    %328 = vector.load %arg8[%c5_209, %c0_210, %c0_211] : memref<25x2x16xbf16, #tpu.memory_space<vmem>>, vector<1x2x16xbf16>
    %329 = vector.shape_cast %328 : vector<1x2x16xbf16> to vector<2x16xbf16>
    %330 = arith.truncf %327 : vector<16x256xf32> to vector<16x256xbf16>
    %cst_212 = arith.constant dense<0.000000e+00> : vector<2x256xf32>
    %331 = tpu.matmul %329, %330, %cst_212 {dimension_numbers = #tpu.dot_dimension_numbers<[1], [0], [0], [1], [0, 0, 1, 1], [], []>} : vector<2x16xbf16>, vector<16x256xbf16>, vector<2x256xf32> -> vector<2x256xf32>
    %332 = arith.addf %323, %331 : vector<2x256xf32>
    %c17_i32_213 = arith.constant 17 : i32
    %333 = tpu.dynamic_rotate %275 by %c17_i32_213 dim 1 : vector<16x256xf32>, i32 -> vector<16x256xf32>
    %c6_214 = arith.constant 6 : index
    %c0_215 = arith.constant 0 : index
    %334 = vector.load %arg12[%c6_214, %c0_215] : memref<25x256xf32, #tpu.memory_space<vmem>>, vector<1x256xf32>
    %335 = vector.broadcast %334 : vector<1x256xf32> to vector<16x256xf32>
    %336 = arith.mulf %333, %335 : vector<16x256xf32>
    %c6_216 = arith.constant 6 : index
    %c0_217 = arith.constant 0 : index
    %c0_218 = arith.constant 0 : index
    %337 = vector.load %arg8[%c6_216, %c0_217, %c0_218] : memref<25x2x16xbf16, #tpu.memory_space<vmem>>, vector<1x2x16xbf16>
    %338 = vector.shape_cast %337 : vector<1x2x16xbf16> to vector<2x16xbf16>
    %339 = arith.truncf %336 : vector<16x256xf32> to vector<16x256xbf16>
    %cst_219 = arith.constant dense<0.000000e+00> : vector<2x256xf32>
    %340 = tpu.matmul %338, %339, %cst_219 {dimension_numbers = #tpu.dot_dimension_numbers<[1], [0], [0], [1], [0, 0, 1, 1], [], []>} : vector<2x16xbf16>, vector<16x256xbf16>, vector<2x256xf32> -> vector<2x256xf32>
    %341 = arith.addf %332, %340 : vector<2x256xf32>
    %c16_i32_220 = arith.constant 16 : i32
    %342 = tpu.dynamic_rotate %275 by %c16_i32_220 dim 1 : vector<16x256xf32>, i32 -> vector<16x256xf32>
    %c7_221 = arith.constant 7 : index
    %c0_222 = arith.constant 0 : index
    %343 = vector.load %arg12[%c7_221, %c0_222] : memref<25x256xf32, #tpu.memory_space<vmem>>, vector<1x256xf32>
    %344 = vector.broadcast %343 : vector<1x256xf32> to vector<16x256xf32>
    %345 = arith.mulf %342, %344 : vector<16x256xf32>
    %c7_223 = arith.constant 7 : index
    %c0_224 = arith.constant 0 : index
    %c0_225 = arith.constant 0 : index
    %346 = vector.load %arg8[%c7_223, %c0_224, %c0_225] : memref<25x2x16xbf16, #tpu.memory_space<vmem>>, vector<1x2x16xbf16>
    %347 = vector.shape_cast %346 : vector<1x2x16xbf16> to vector<2x16xbf16>
    %348 = arith.truncf %345 : vector<16x256xf32> to vector<16x256xbf16>
    %cst_226 = arith.constant dense<0.000000e+00> : vector<2x256xf32>
    %349 = tpu.matmul %347, %348, %cst_226 {dimension_numbers = #tpu.dot_dimension_numbers<[1], [0], [0], [1], [0, 0, 1, 1], [], []>} : vector<2x16xbf16>, vector<16x256xbf16>, vector<2x256xf32> -> vector<2x256xf32>
    %350 = arith.addf %341, %349 : vector<2x256xf32>
    %c15_i32_227 = arith.constant 15 : i32
    %351 = tpu.dynamic_rotate %275 by %c15_i32_227 dim 1 : vector<16x256xf32>, i32 -> vector<16x256xf32>
    %c8_228 = arith.constant 8 : index
    %c0_229 = arith.constant 0 : index
    %352 = vector.load %arg12[%c8_228, %c0_229] : memref<25x256xf32, #tpu.memory_space<vmem>>, vector<1x256xf32>
    %353 = vector.broadcast %352 : vector<1x256xf32> to vector<16x256xf32>
    %354 = arith.mulf %351, %353 : vector<16x256xf32>
    %c8_230 = arith.constant 8 : index
    %c0_231 = arith.constant 0 : index
    %c0_232 = arith.constant 0 : index
    %355 = vector.load %arg8[%c8_230, %c0_231, %c0_232] : memref<25x2x16xbf16, #tpu.memory_space<vmem>>, vector<1x2x16xbf16>
    %356 = vector.shape_cast %355 : vector<1x2x16xbf16> to vector<2x16xbf16>
    %357 = arith.truncf %354 : vector<16x256xf32> to vector<16x256xbf16>
    %cst_233 = arith.constant dense<0.000000e+00> : vector<2x256xf32>
    %358 = tpu.matmul %356, %357, %cst_233 {dimension_numbers = #tpu.dot_dimension_numbers<[1], [0], [0], [1], [0, 0, 1, 1], [], []>} : vector<2x16xbf16>, vector<16x256xbf16>, vector<2x256xf32> -> vector<2x256xf32>
    %359 = arith.addf %350, %358 : vector<2x256xf32>
    %c14_i32 = arith.constant 14 : i32
    %360 = tpu.dynamic_rotate %275 by %c14_i32 dim 1 : vector<16x256xf32>, i32 -> vector<16x256xf32>
    %c9 = arith.constant 9 : index
    %c0_234 = arith.constant 0 : index
    %361 = vector.load %arg12[%c9, %c0_234] : memref<25x256xf32, #tpu.memory_space<vmem>>, vector<1x256xf32>
    %362 = vector.broadcast %361 : vector<1x256xf32> to vector<16x256xf32>
    %363 = arith.mulf %360, %362 : vector<16x256xf32>
    %c9_235 = arith.constant 9 : index
    %c0_236 = arith.constant 0 : index
    %c0_237 = arith.constant 0 : index
    %364 = vector.load %arg8[%c9_235, %c0_236, %c0_237] : memref<25x2x16xbf16, #tpu.memory_space<vmem>>, vector<1x2x16xbf16>
    %365 = vector.shape_cast %364 : vector<1x2x16xbf16> to vector<2x16xbf16>
    %366 = arith.truncf %363 : vector<16x256xf32> to vector<16x256xbf16>
    %cst_238 = arith.constant dense<0.000000e+00> : vector<2x256xf32>
    %367 = tpu.matmul %365, %366, %cst_238 {dimension_numbers = #tpu.dot_dimension_numbers<[1], [0], [0], [1], [0, 0, 1, 1], [], []>} : vector<2x16xbf16>, vector<16x256xbf16>, vector<2x256xf32> -> vector<2x256xf32>
    %368 = arith.addf %359, %367 : vector<2x256xf32>
    %c2_i32 = arith.constant 2 : i32
    %369 = tpu.dynamic_rotate %275 by %c2_i32 dim 1 : vector<16x256xf32>, i32 -> vector<16x256xf32>
    %c10 = arith.constant 10 : index
    %c0_239 = arith.constant 0 : index
    %370 = vector.load %arg12[%c10, %c0_239] : memref<25x256xf32, #tpu.memory_space<vmem>>, vector<1x256xf32>
    %371 = vector.broadcast %370 : vector<1x256xf32> to vector<16x256xf32>
    %372 = arith.mulf %369, %371 : vector<16x256xf32>
    %c10_240 = arith.constant 10 : index
    %c0_241 = arith.constant 0 : index
    %c0_242 = arith.constant 0 : index
    %373 = vector.load %arg8[%c10_240, %c0_241, %c0_242] : memref<25x2x16xbf16, #tpu.memory_space<vmem>>, vector<1x2x16xbf16>
    %374 = vector.shape_cast %373 : vector<1x2x16xbf16> to vector<2x16xbf16>
    %375 = arith.truncf %372 : vector<16x256xf32> to vector<16x256xbf16>
    %cst_243 = arith.constant dense<0.000000e+00> : vector<2x256xf32>
    %376 = tpu.matmul %374, %375, %cst_243 {dimension_numbers = #tpu.dot_dimension_numbers<[1], [0], [0], [1], [0, 0, 1, 1], [], []>} : vector<2x16xbf16>, vector<16x256xbf16>, vector<2x256xf32> -> vector<2x256xf32>
    %377 = arith.addf %368, %376 : vector<2x256xf32>
    %c1_i32_244 = arith.constant 1 : i32
    %378 = tpu.dynamic_rotate %275 by %c1_i32_244 dim 1 : vector<16x256xf32>, i32 -> vector<16x256xf32>
    %c11 = arith.constant 11 : index
    %c0_245 = arith.constant 0 : index
    %379 = vector.load %arg12[%c11, %c0_245] : memref<25x256xf32, #tpu.memory_space<vmem>>, vector<1x256xf32>
    %380 = vector.broadcast %379 : vector<1x256xf32> to vector<16x256xf32>
    %381 = arith.mulf %378, %380 : vector<16x256xf32>
    %c11_246 = arith.constant 11 : index
    %c0_247 = arith.constant 0 : index
    %c0_248 = arith.constant 0 : index
    %382 = vector.load %arg8[%c11_246, %c0_247, %c0_248] : memref<25x2x16xbf16, #tpu.memory_space<vmem>>, vector<1x2x16xbf16>
    %383 = vector.shape_cast %382 : vector<1x2x16xbf16> to vector<2x16xbf16>
    %384 = arith.truncf %381 : vector<16x256xf32> to vector<16x256xbf16>
    %cst_249 = arith.constant dense<0.000000e+00> : vector<2x256xf32>
    %385 = tpu.matmul %383, %384, %cst_249 {dimension_numbers = #tpu.dot_dimension_numbers<[1], [0], [0], [1], [0, 0, 1, 1], [], []>} : vector<2x16xbf16>, vector<16x256xbf16>, vector<2x256xf32> -> vector<2x256xf32>
    %386 = arith.addf %377, %385 : vector<2x256xf32>
    %c12 = arith.constant 12 : index
    %c0_250 = arith.constant 0 : index
    %c0_251 = arith.constant 0 : index
    %387 = vector.load %arg8[%c12, %c0_250, %c0_251] : memref<25x2x16xbf16, #tpu.memory_space<vmem>>, vector<1x2x16xbf16>
    %388 = vector.shape_cast %387 : vector<1x2x16xbf16> to vector<2x16xbf16>
    %389 = arith.truncf %275 : vector<16x256xf32> to vector<16x256xbf16>
    %cst_252 = arith.constant dense<0.000000e+00> : vector<2x256xf32>
    %390 = tpu.matmul %388, %389, %cst_252 {dimension_numbers = #tpu.dot_dimension_numbers<[1], [0], [0], [1], [0, 0, 1, 1], [], []>} : vector<2x16xbf16>, vector<16x256xbf16>, vector<2x256xf32> -> vector<2x256xf32>
    %391 = arith.addf %386, %390 : vector<2x256xf32>
    %c255_i32_253 = arith.constant 255 : i32
    %392 = tpu.dynamic_rotate %275 by %c255_i32_253 dim 1 : vector<16x256xf32>, i32 -> vector<16x256xf32>
    %c13 = arith.constant 13 : index
    %c0_254 = arith.constant 0 : index
    %393 = vector.load %arg12[%c13, %c0_254] : memref<25x256xf32, #tpu.memory_space<vmem>>, vector<1x256xf32>
    %394 = vector.broadcast %393 : vector<1x256xf32> to vector<16x256xf32>
    %395 = arith.mulf %392, %394 : vector<16x256xf32>
    %c13_255 = arith.constant 13 : index
    %c0_256 = arith.constant 0 : index
    %c0_257 = arith.constant 0 : index
    %396 = vector.load %arg8[%c13_255, %c0_256, %c0_257] : memref<25x2x16xbf16, #tpu.memory_space<vmem>>, vector<1x2x16xbf16>
    %397 = vector.shape_cast %396 : vector<1x2x16xbf16> to vector<2x16xbf16>
    %398 = arith.truncf %395 : vector<16x256xf32> to vector<16x256xbf16>
    %cst_258 = arith.constant dense<0.000000e+00> : vector<2x256xf32>
    %399 = tpu.matmul %397, %398, %cst_258 {dimension_numbers = #tpu.dot_dimension_numbers<[1], [0], [0], [1], [0, 0, 1, 1], [], []>} : vector<2x16xbf16>, vector<16x256xbf16>, vector<2x256xf32> -> vector<2x256xf32>
    %400 = arith.addf %391, %399 : vector<2x256xf32>
    %c254_i32 = arith.constant 254 : i32
    %401 = tpu.dynamic_rotate %275 by %c254_i32 dim 1 : vector<16x256xf32>, i32 -> vector<16x256xf32>
    %c14 = arith.constant 14 : index
    %c0_259 = arith.constant 0 : index
    %402 = vector.load %arg12[%c14, %c0_259] : memref<25x256xf32, #tpu.memory_space<vmem>>, vector<1x256xf32>
    %403 = vector.broadcast %402 : vector<1x256xf32> to vector<16x256xf32>
    %404 = arith.mulf %401, %403 : vector<16x256xf32>
    %c14_260 = arith.constant 14 : index
    %c0_261 = arith.constant 0 : index
    %c0_262 = arith.constant 0 : index
    %405 = vector.load %arg8[%c14_260, %c0_261, %c0_262] : memref<25x2x16xbf16, #tpu.memory_space<vmem>>, vector<1x2x16xbf16>
    %406 = vector.shape_cast %405 : vector<1x2x16xbf16> to vector<2x16xbf16>
    %407 = arith.truncf %404 : vector<16x256xf32> to vector<16x256xbf16>
    %cst_263 = arith.constant dense<0.000000e+00> : vector<2x256xf32>
    %408 = tpu.matmul %406, %407, %cst_263 {dimension_numbers = #tpu.dot_dimension_numbers<[1], [0], [0], [1], [0, 0, 1, 1], [], []>} : vector<2x16xbf16>, vector<16x256xbf16>, vector<2x256xf32> -> vector<2x256xf32>
    %409 = arith.addf %400, %408 : vector<2x256xf32>
    %c242_i32 = arith.constant 242 : i32
    %410 = tpu.dynamic_rotate %275 by %c242_i32 dim 1 : vector<16x256xf32>, i32 -> vector<16x256xf32>
    %c15 = arith.constant 15 : index
    %c0_264 = arith.constant 0 : index
    %411 = vector.load %arg12[%c15, %c0_264] : memref<25x256xf32, #tpu.memory_space<vmem>>, vector<1x256xf32>
    %412 = vector.broadcast %411 : vector<1x256xf32> to vector<16x256xf32>
    %413 = arith.mulf %410, %412 : vector<16x256xf32>
    %c15_265 = arith.constant 15 : index
    %c0_266 = arith.constant 0 : index
    %c0_267 = arith.constant 0 : index
    %414 = vector.load %arg8[%c15_265, %c0_266, %c0_267] : memref<25x2x16xbf16, #tpu.memory_space<vmem>>, vector<1x2x16xbf16>
    %415 = vector.shape_cast %414 : vector<1x2x16xbf16> to vector<2x16xbf16>
    %416 = arith.truncf %413 : vector<16x256xf32> to vector<16x256xbf16>
    %cst_268 = arith.constant dense<0.000000e+00> : vector<2x256xf32>
    %417 = tpu.matmul %415, %416, %cst_268 {dimension_numbers = #tpu.dot_dimension_numbers<[1], [0], [0], [1], [0, 0, 1, 1], [], []>} : vector<2x16xbf16>, vector<16x256xbf16>, vector<2x256xf32> -> vector<2x256xf32>
    %418 = arith.addf %409, %417 : vector<2x256xf32>
    %c241_i32_269 = arith.constant 241 : i32
    %419 = tpu.dynamic_rotate %275 by %c241_i32_269 dim 1 : vector<16x256xf32>, i32 -> vector<16x256xf32>
    %c16 = arith.constant 16 : index
    %c0_270 = arith.constant 0 : index
    %420 = vector.load %arg12[%c16, %c0_270] : memref<25x256xf32, #tpu.memory_space<vmem>>, vector<1x256xf32>
    %421 = vector.broadcast %420 : vector<1x256xf32> to vector<16x256xf32>
    %422 = arith.mulf %419, %421 : vector<16x256xf32>
    %c16_271 = arith.constant 16 : index
    %c0_272 = arith.constant 0 : index
    %c0_273 = arith.constant 0 : index
    %423 = vector.load %arg8[%c16_271, %c0_272, %c0_273] : memref<25x2x16xbf16, #tpu.memory_space<vmem>>, vector<1x2x16xbf16>
    %424 = vector.shape_cast %423 : vector<1x2x16xbf16> to vector<2x16xbf16>
    %425 = arith.truncf %422 : vector<16x256xf32> to vector<16x256xbf16>
    %cst_274 = arith.constant dense<0.000000e+00> : vector<2x256xf32>
    %426 = tpu.matmul %424, %425, %cst_274 {dimension_numbers = #tpu.dot_dimension_numbers<[1], [0], [0], [1], [0, 0, 1, 1], [], []>} : vector<2x16xbf16>, vector<16x256xbf16>, vector<2x256xf32> -> vector<2x256xf32>
    %427 = arith.addf %418, %426 : vector<2x256xf32>
    %c240_i32_275 = arith.constant 240 : i32
    %428 = tpu.dynamic_rotate %275 by %c240_i32_275 dim 1 : vector<16x256xf32>, i32 -> vector<16x256xf32>
    %c17 = arith.constant 17 : index
    %c0_276 = arith.constant 0 : index
    %429 = vector.load %arg12[%c17, %c0_276] : memref<25x256xf32, #tpu.memory_space<vmem>>, vector<1x256xf32>
    %430 = vector.broadcast %429 : vector<1x256xf32> to vector<16x256xf32>
    %431 = arith.mulf %428, %430 : vector<16x256xf32>
    %c17_277 = arith.constant 17 : index
    %c0_278 = arith.constant 0 : index
    %c0_279 = arith.constant 0 : index
    %432 = vector.load %arg8[%c17_277, %c0_278, %c0_279] : memref<25x2x16xbf16, #tpu.memory_space<vmem>>, vector<1x2x16xbf16>
    %433 = vector.shape_cast %432 : vector<1x2x16xbf16> to vector<2x16xbf16>
    %434 = arith.truncf %431 : vector<16x256xf32> to vector<16x256xbf16>
    %cst_280 = arith.constant dense<0.000000e+00> : vector<2x256xf32>
    %435 = tpu.matmul %433, %434, %cst_280 {dimension_numbers = #tpu.dot_dimension_numbers<[1], [0], [0], [1], [0, 0, 1, 1], [], []>} : vector<2x16xbf16>, vector<16x256xbf16>, vector<2x256xf32> -> vector<2x256xf32>
    %436 = arith.addf %427, %435 : vector<2x256xf32>
    %c239_i32_281 = arith.constant 239 : i32
    %437 = tpu.dynamic_rotate %275 by %c239_i32_281 dim 1 : vector<16x256xf32>, i32 -> vector<16x256xf32>
    %c18 = arith.constant 18 : index
    %c0_282 = arith.constant 0 : index
    %438 = vector.load %arg12[%c18, %c0_282] : memref<25x256xf32, #tpu.memory_space<vmem>>, vector<1x256xf32>
    %439 = vector.broadcast %438 : vector<1x256xf32> to vector<16x256xf32>
    %440 = arith.mulf %437, %439 : vector<16x256xf32>
    %c18_283 = arith.constant 18 : index
    %c0_284 = arith.constant 0 : index
    %c0_285 = arith.constant 0 : index
    %441 = vector.load %arg8[%c18_283, %c0_284, %c0_285] : memref<25x2x16xbf16, #tpu.memory_space<vmem>>, vector<1x2x16xbf16>
    %442 = vector.shape_cast %441 : vector<1x2x16xbf16> to vector<2x16xbf16>
    %443 = arith.truncf %440 : vector<16x256xf32> to vector<16x256xbf16>
    %cst_286 = arith.constant dense<0.000000e+00> : vector<2x256xf32>
    %444 = tpu.matmul %442, %443, %cst_286 {dimension_numbers = #tpu.dot_dimension_numbers<[1], [0], [0], [1], [0, 0, 1, 1], [], []>} : vector<2x16xbf16>, vector<16x256xbf16>, vector<2x256xf32> -> vector<2x256xf32>
    %445 = arith.addf %436, %444 : vector<2x256xf32>
    %c238_i32 = arith.constant 238 : i32
    %446 = tpu.dynamic_rotate %275 by %c238_i32 dim 1 : vector<16x256xf32>, i32 -> vector<16x256xf32>
    %c19 = arith.constant 19 : index
    %c0_287 = arith.constant 0 : index
    %447 = vector.load %arg12[%c19, %c0_287] : memref<25x256xf32, #tpu.memory_space<vmem>>, vector<1x256xf32>
    %448 = vector.broadcast %447 : vector<1x256xf32> to vector<16x256xf32>
    %449 = arith.mulf %446, %448 : vector<16x256xf32>
    %c19_288 = arith.constant 19 : index
    %c0_289 = arith.constant 0 : index
    %c0_290 = arith.constant 0 : index
    %450 = vector.load %arg8[%c19_288, %c0_289, %c0_290] : memref<25x2x16xbf16, #tpu.memory_space<vmem>>, vector<1x2x16xbf16>
    %451 = vector.shape_cast %450 : vector<1x2x16xbf16> to vector<2x16xbf16>
    %452 = arith.truncf %449 : vector<16x256xf32> to vector<16x256xbf16>
    %cst_291 = arith.constant dense<0.000000e+00> : vector<2x256xf32>
    %453 = tpu.matmul %451, %452, %cst_291 {dimension_numbers = #tpu.dot_dimension_numbers<[1], [0], [0], [1], [0, 0, 1, 1], [], []>} : vector<2x16xbf16>, vector<16x256xbf16>, vector<2x256xf32> -> vector<2x256xf32>
    %454 = arith.addf %445, %453 : vector<2x256xf32>
    %c226_i32 = arith.constant 226 : i32
    %455 = tpu.dynamic_rotate %275 by %c226_i32 dim 1 : vector<16x256xf32>, i32 -> vector<16x256xf32>
    %c20 = arith.constant 20 : index
    %c0_292 = arith.constant 0 : index
    %456 = vector.load %arg12[%c20, %c0_292] : memref<25x256xf32, #tpu.memory_space<vmem>>, vector<1x256xf32>
    %457 = vector.broadcast %456 : vector<1x256xf32> to vector<16x256xf32>
    %458 = arith.mulf %455, %457 : vector<16x256xf32>
    %c20_293 = arith.constant 20 : index
    %c0_294 = arith.constant 0 : index
    %c0_295 = arith.constant 0 : index
    %459 = vector.load %arg8[%c20_293, %c0_294, %c0_295] : memref<25x2x16xbf16, #tpu.memory_space<vmem>>, vector<1x2x16xbf16>
    %460 = vector.shape_cast %459 : vector<1x2x16xbf16> to vector<2x16xbf16>
    %461 = arith.truncf %458 : vector<16x256xf32> to vector<16x256xbf16>
    %cst_296 = arith.constant dense<0.000000e+00> : vector<2x256xf32>
    %462 = tpu.matmul %460, %461, %cst_296 {dimension_numbers = #tpu.dot_dimension_numbers<[1], [0], [0], [1], [0, 0, 1, 1], [], []>} : vector<2x16xbf16>, vector<16x256xbf16>, vector<2x256xf32> -> vector<2x256xf32>
    %463 = arith.addf %454, %462 : vector<2x256xf32>
    %c225_i32 = arith.constant 225 : i32
    %464 = tpu.dynamic_rotate %275 by %c225_i32 dim 1 : vector<16x256xf32>, i32 -> vector<16x256xf32>
    %c21 = arith.constant 21 : index
    %c0_297 = arith.constant 0 : index
    %465 = vector.load %arg12[%c21, %c0_297] : memref<25x256xf32, #tpu.memory_space<vmem>>, vector<1x256xf32>
    %466 = vector.broadcast %465 : vector<1x256xf32> to vector<16x256xf32>
    %467 = arith.mulf %464, %466 : vector<16x256xf32>
    %c21_298 = arith.constant 21 : index
    %c0_299 = arith.constant 0 : index
    %c0_300 = arith.constant 0 : index
    %468 = vector.load %arg8[%c21_298, %c0_299, %c0_300] : memref<25x2x16xbf16, #tpu.memory_space<vmem>>, vector<1x2x16xbf16>
    %469 = vector.shape_cast %468 : vector<1x2x16xbf16> to vector<2x16xbf16>
    %470 = arith.truncf %467 : vector<16x256xf32> to vector<16x256xbf16>
    %cst_301 = arith.constant dense<0.000000e+00> : vector<2x256xf32>
    %471 = tpu.matmul %469, %470, %cst_301 {dimension_numbers = #tpu.dot_dimension_numbers<[1], [0], [0], [1], [0, 0, 1, 1], [], []>} : vector<2x16xbf16>, vector<16x256xbf16>, vector<2x256xf32> -> vector<2x256xf32>
    %472 = arith.addf %463, %471 : vector<2x256xf32>
    %c224_i32 = arith.constant 224 : i32
    %473 = tpu.dynamic_rotate %275 by %c224_i32 dim 1 : vector<16x256xf32>, i32 -> vector<16x256xf32>
    %c22 = arith.constant 22 : index
    %c0_302 = arith.constant 0 : index
    %474 = vector.load %arg12[%c22, %c0_302] : memref<25x256xf32, #tpu.memory_space<vmem>>, vector<1x256xf32>
    %475 = vector.broadcast %474 : vector<1x256xf32> to vector<16x256xf32>
    %476 = arith.mulf %473, %475 : vector<16x256xf32>
    %c22_303 = arith.constant 22 : index
    %c0_304 = arith.constant 0 : index
    %c0_305 = arith.constant 0 : index
    %477 = vector.load %arg8[%c22_303, %c0_304, %c0_305] : memref<25x2x16xbf16, #tpu.memory_space<vmem>>, vector<1x2x16xbf16>
    %478 = vector.shape_cast %477 : vector<1x2x16xbf16> to vector<2x16xbf16>
    %479 = arith.truncf %476 : vector<16x256xf32> to vector<16x256xbf16>
    %cst_306 = arith.constant dense<0.000000e+00> : vector<2x256xf32>
    %480 = tpu.matmul %478, %479, %cst_306 {dimension_numbers = #tpu.dot_dimension_numbers<[1], [0], [0], [1], [0, 0, 1, 1], [], []>} : vector<2x16xbf16>, vector<16x256xbf16>, vector<2x256xf32> -> vector<2x256xf32>
    %481 = arith.addf %472, %480 : vector<2x256xf32>
    %c223_i32 = arith.constant 223 : i32
    %482 = tpu.dynamic_rotate %275 by %c223_i32 dim 1 : vector<16x256xf32>, i32 -> vector<16x256xf32>
    %c23 = arith.constant 23 : index
    %c0_307 = arith.constant 0 : index
    %483 = vector.load %arg12[%c23, %c0_307] : memref<25x256xf32, #tpu.memory_space<vmem>>, vector<1x256xf32>
    %484 = vector.broadcast %483 : vector<1x256xf32> to vector<16x256xf32>
    %485 = arith.mulf %482, %484 : vector<16x256xf32>
    %c23_308 = arith.constant 23 : index
    %c0_309 = arith.constant 0 : index
    %c0_310 = arith.constant 0 : index
    %486 = vector.load %arg8[%c23_308, %c0_309, %c0_310] : memref<25x2x16xbf16, #tpu.memory_space<vmem>>, vector<1x2x16xbf16>
    %487 = vector.shape_cast %486 : vector<1x2x16xbf16> to vector<2x16xbf16>
    %488 = arith.truncf %485 : vector<16x256xf32> to vector<16x256xbf16>
    %cst_311 = arith.constant dense<0.000000e+00> : vector<2x256xf32>
    %489 = tpu.matmul %487, %488, %cst_311 {dimension_numbers = #tpu.dot_dimension_numbers<[1], [0], [0], [1], [0, 0, 1, 1], [], []>} : vector<2x16xbf16>, vector<16x256xbf16>, vector<2x256xf32> -> vector<2x256xf32>
    %490 = arith.addf %481, %489 : vector<2x256xf32>
    %c222_i32 = arith.constant 222 : i32
    %491 = tpu.dynamic_rotate %275 by %c222_i32 dim 1 : vector<16x256xf32>, i32 -> vector<16x256xf32>
    %c24 = arith.constant 24 : index
    %c0_312 = arith.constant 0 : index
    %492 = vector.load %arg12[%c24, %c0_312] : memref<25x256xf32, #tpu.memory_space<vmem>>, vector<1x256xf32>
    %493 = vector.broadcast %492 : vector<1x256xf32> to vector<16x256xf32>
    %494 = arith.mulf %491, %493 : vector<16x256xf32>
    %c24_313 = arith.constant 24 : index
    %c0_314 = arith.constant 0 : index
    %c0_315 = arith.constant 0 : index
    %495 = vector.load %arg8[%c24_313, %c0_314, %c0_315] : memref<25x2x16xbf16, #tpu.memory_space<vmem>>, vector<1x2x16xbf16>
    %496 = vector.shape_cast %495 : vector<1x2x16xbf16> to vector<2x16xbf16>
    %497 = arith.truncf %494 : vector<16x256xf32> to vector<16x256xbf16>
    %cst_316 = arith.constant dense<0.000000e+00> : vector<2x256xf32>
    %498 = tpu.matmul %496, %497, %cst_316 {dimension_numbers = #tpu.dot_dimension_numbers<[1], [0], [0], [1], [0, 0, 1, 1], [], []>} : vector<2x16xbf16>, vector<16x256xbf16>, vector<2x256xf32> -> vector<2x256xf32>
    %499 = arith.addf %490, %498 : vector<2x256xf32>
    %500 = vector.extract_strided_slice %499 {offsets = [0, 0], sizes = [1, 256], strides = [1, 1]} : vector<2x256xf32> to vector<1x256xf32>
    %501 = vector.extract_strided_slice %499 {offsets = [1, 0], sizes = [1, 256], strides = [1, 1]} : vector<2x256xf32> to vector<1x256xf32>
    %502 = arith.subf %500, %501 : vector<1x256xf32>
    %cst_317 = arith.constant 0.000000e+00 : f32
    %503 = vector.broadcast %cst_317 : f32 to vector<1x256xf32>
    %504 = arith.subf %503, %502 : vector<1x256xf32>
    %505 = math.exp %504 : vector<1x256xf32>
    %cst_318 = arith.constant 1.000000e+00 : f32
    %506 = vector.broadcast %cst_318 : f32 to vector<1x256xf32>
    %507 = arith.addf %506, %505 : vector<1x256xf32>
    %508 = tpu.reciprocal %507 {approx = true} : vector<1x256xf32> -> vector<1x256xf32>
    %cst_319 = arith.constant 1.000000e+00 : f32
    %509 = vector.broadcast %cst_319 : f32 to vector<1x256xf32>
    %510 = arith.subf %509, %508 : vector<1x256xf32>
    %511 = tpu.concatenate %508, %510 in 0 : vector<1x256xf32>, vector<1x256xf32> -> vector<2x256xf32>
    %c0_320 = arith.constant 0 : index
    %c0_321 = arith.constant 0 : index
    %c0_322 = arith.constant 0 : index
    %512 = vector.load %arg15[%c0_320, %c0_321, %c0_322] : memref<1x2x256xf32, #tpu.memory_space<vmem>>, vector<1x2x256xf32>
    %513 = vector.shape_cast %512 : vector<1x2x256xf32> to vector<2x256xf32>
    %514 = vector.shape_cast %511 : vector<2x256xf32> to vector<1x2x256xf32>
    tpu.vector_store %arg15[%c0_320, %c0_321, %c0_322], %514 {strides = array<i32>} : memref<1x2x256xf32, #tpu.memory_space<vmem>>, vector<1x2x256xf32>,
    return
  }
  func.func @transform_0(%arg0: i32) -> (i32, i32, i32) {
    %c0_i32 = arith.constant 0 : i32
    %c0_i32_0 = arith.constant 0 : i32
    %c0_i32_1 = arith.constant 0 : i32
    return %arg0, %c0_i32, %c0_i32_0 : i32, i32, i32
  }
  func.func @transform_1(%arg0: i32) -> (i32, i32, i32) {
    %c0_i32 = arith.constant 0 : i32
    %c0_i32_0 = arith.constant 0 : i32
    %c0_i32_1 = arith.constant 0 : i32
    %c0_i32_2 = arith.constant 0 : i32
    return %c0_i32, %c0_i32_0, %c0_i32_1 : i32, i32, i32
  }
  func.func @transform_2(%arg0: i32) -> (i32, i32) {
    %c0_i32 = arith.constant 0 : i32
    %c0_i32_0 = arith.constant 0 : i32
    %c0_i32_1 = arith.constant 0 : i32
    return %c0_i32, %c0_i32_0 : i32, i32
  }
  func.func @transform_3(%arg0: i32) -> (i32, i32, i32) {
    %c0_i32 = arith.constant 0 : i32
    %c0_i32_0 = arith.constant 0 : i32
    %c0_i32_1 = arith.constant 0 : i32
    %c0_i32_2 = arith.constant 0 : i32
    return %c0_i32, %c0_i32_0, %c0_i32_1 : i32, i32, i32
  }
  func.func @transform_4(%arg0: i32) -> (i32, i32) {
    %c0_i32 = arith.constant 0 : i32
    %c0_i32_0 = arith.constant 0 : i32
    %c0_i32_1 = arith.constant 0 : i32
    return %c0_i32, %c0_i32_0 : i32, i32
  }
  func.func @transform_5(%arg0: i32) -> (i32, i32, i32) {
    %c0_i32 = arith.constant 0 : i32
    %c0_i32_0 = arith.constant 0 : i32
    %c0_i32_1 = arith.constant 0 : i32
    %c0_i32_2 = arith.constant 0 : i32
    return %c0_i32, %c0_i32_0, %c0_i32_1 : i32, i32, i32
  }
  func.func @transform_6(%arg0: i32) -> (i32, i32) {
    %c0_i32 = arith.constant 0 : i32
    %c0_i32_0 = arith.constant 0 : i32
    %c0_i32_1 = arith.constant 0 : i32
    return %c0_i32, %c0_i32_0 : i32, i32
  }
  func.func @transform_7(%arg0: i32) -> (i32, i32, i32) {
    %c0_i32 = arith.constant 0 : i32
    %c0_i32_0 = arith.constant 0 : i32
    %c0_i32_1 = arith.constant 0 : i32
    %c0_i32_2 = arith.constant 0 : i32
    return %c0_i32, %c0_i32_0, %c0_i32_1 : i32, i32, i32
  }
  func.func @transform_8(%arg0: i32) -> (i32, i32) {
    %c0_i32 = arith.constant 0 : i32
    %c0_i32_0 = arith.constant 0 : i32
    %c0_i32_1 = arith.constant 0 : i32
    return %c0_i32, %c0_i32_0 : i32, i32
  }
  func.func @transform_9(%arg0: i32) -> (i32, i32) {
    %c0_i32 = arith.constant 0 : i32
    %c0_i32_0 = arith.constant 0 : i32
    %c0_i32_1 = arith.constant 0 : i32
    return %c0_i32, %c0_i32_0 : i32, i32
  }
  func.func @transform_10(%arg0: i32) -> (i32, i32) {
    %c0_i32 = arith.constant 0 : i32
    %c0_i32_0 = arith.constant 0 : i32
    %c0_i32_1 = arith.constant 0 : i32
    return %c0_i32, %c0_i32_0 : i32, i32
  }
  func.func @transform_11(%arg0: i32) -> (i32, i32) {
    %c0_i32 = arith.constant 0 : i32
    %c0_i32_0 = arith.constant 0 : i32
    %c0_i32_1 = arith.constant 0 : i32
    return %c0_i32, %c0_i32_0 : i32, i32
  }
  func.func @transform_12(%arg0: i32) -> (i32, i32) {
    %c0_i32 = arith.constant 0 : i32
    %c0_i32_0 = arith.constant 0 : i32
    %c0_i32_1 = arith.constant 0 : i32
    return %c0_i32, %c0_i32_0 : i32, i32
  }
  func.func @transform_13(%arg0: i32) -> (i32, i32) {
    %c0_i32 = arith.constant 0 : i32
    %c0_i32_0 = arith.constant 0 : i32
    %c0_i32_1 = arith.constant 0 : i32
    return %c0_i32, %c0_i32_0 : i32, i32
  }
  func.func @transform_14(%arg0: i32) -> (i32, i32, i32) {
    %c0_i32 = arith.constant 0 : i32
    %c0_i32_0 = arith.constant 0 : i32
    %c0_i32_1 = arith.constant 0 : i32
    return %arg0, %c0_i32, %c0_i32_0 : i32, i32, i32
  }
}

</mosaic_0001>

<llo_original>
// kernel: net_forward.1
$region0: #{net_forward.1}
  #allocation0 [shape = 'u32[]', space=smem, size = 0x4, offset = 0x4, fixed_abs, tag = 'smem constant byte address 0x4 - core index']
  #allocation1 [shape = 'u32[144,128]{1,0:T(1,128)}', space=vmem, size = 0x12000, scoped, tag = 'internal scratch']
  %s0 = inlined_call_operand.vmem [shape: f32[2,8,256], index: 0, kind: input, shape index: {}]
  %s1 = inlined_call_operand.vmem [shape: bf16[9,16,8], index: 1, kind: input, shape index: {}]
  %s2 = inlined_call_operand.vmem [shape: f32[16,1], index: 2, kind: input, shape index: {}]
  %s3 = inlined_call_operand.vmem [shape: bf16[9,32,16], index: 3, kind: input, shape index: {}]
  %s4 = inlined_call_operand.vmem [shape: f32[32,1], index: 4, kind: input, shape index: {}]
  %s5 = inlined_call_operand.vmem [shape: bf16[9,16,32], index: 5, kind: input, shape index: {}]
  %s6 = inlined_call_operand.vmem [shape: f32[16,1], index: 6, kind: input, shape index: {}]
  %s7 = inlined_call_operand.vmem [shape: bf16[25,2,16], index: 7, kind: input, shape index: {}]
  %s8 = inlined_call_operand.vmem [shape: f32[2,1], index: 8, kind: input, shape index: {}]
  %s9 = inlined_call_operand.vmem [shape: f32[9,256], index: 9, kind: input, shape index: {}]
  %s10 = inlined_call_operand.vmem [shape: f32[9,64], index: 10, kind: input, shape index: {}]
  %s11 = inlined_call_operand.vmem [shape: f32[25,256], index: 11, kind: input, shape index: {}]
  %s12 = inlined_call_operand.vmem [shape: bf16[256,64], index: 12, kind: input, shape index: {}]
  %s13 = inlined_call_operand.vmem [shape: bf16[64,256], index: 13, kind: input, shape index: {}]
  %s14 = inlined_call_operand.vmem [shape: f32[2,2,256], index: 14, kind: output, shape index: {}]
  %s15 = sld [smem:[#allocation0]]
  $region89: #{net_forward.1} parent=0
    _
  %s17 = ssub.s32 1, %s15
  %s18 = scalar_select 0, %s17, %s15
  loop: start=0, step=1, limit=4
  $region2: #{net_forward.1} parent=0 // loop_pre_header
    _
  $region3: #{net_forward.1} parent=0 // loop_header
    %s20 = sphi 0, %s24
    %p21 = scmp.ge.s32.totalorder %s20, 4
    %s30 = sphi 0, %s32
    %s33 = sphi 0, %s30
    %s34 = sphi 0, %s33
    %s50 = sphi 0, %s34
    %s54 = sphi 0, %s54
    %s56 = sphi 0, %s54
    %s57 = sphi 0, %s56
    %s71 = sphi 0, %s57
    %s75 = sphi 0, %s75
    %s77 = sphi 0, %s75
    %s78 = sphi 0, %s77
    %s92 = sphi 0, %s78
    %s96 = sphi 0, %s96
    %s98 = sphi 0, %s96
    %s99 = sphi 0, %s98
    %s113 = sphi 0, %s99
    %s117 = sphi 0, %s117
    %s119 = sphi 0, %s117
    %s120 = sphi 0, %s119
    %s134 = sphi 0, %s120
    %s138 = sphi 0, %s138
    %s140 = sphi 0, %s138
    %s141 = sphi 0, %s140
    %s155 = sphi 0, %s141
    %s159 = sphi 0, %s159
    %s161 = sphi 0, %s159
    %s162 = sphi 0, %s161
    %s176 = sphi 0, %s162
    %s180 = sphi 0, %s180
    %s182 = sphi 0, %s180
    %s183 = sphi 0, %s182
    %s197 = sphi 0, %s183
    %s201 = sphi 0, %s201
    %s203 = sphi 0, %s201
    %s204 = sphi 0, %s203
    %s218 = sphi 0, %s204
    %s222 = sphi 0, %s222
    %s224 = sphi 0, %s222
    %s225 = sphi 0, %s224
    %s239 = sphi 0, %s225
    %s243 = sphi 0, %s243
    %s245 = sphi 0, %s243
    %s246 = sphi 0, %s245
    %s260 = sphi 0, %s246
    %s264 = sphi 0, %s264
    %s266 = sphi 0, %s264
    %s267 = sphi 0, %s266
    %s281 = sphi 0, %s267
    %s285 = sphi 0, %s285
    %s287 = sphi 0, %s285
    %s288 = sphi 0, %s287
    %s302 = sphi 0, %s288
    %s306 = sphi 0, %s306
    %s308 = sphi 0, %s306
    %s309 = sphi 0, %s308
    %s323 = sphi 0, %s309
    %s329 = sphi 0, %s331
    %s332 = sphi 0, %s329
    %s333 = sphi 0, %s332
    %s349 = sphi 0, %s333
  $region4: #{net_forward.1} parent=0 // loop_header_branch
    %23 = sbr.rel (%p21) target = $region8
  $region5: #{net_forward.1} parent=0 // loop_body
    %s25 = ssub.s32 %s20, 1
    %s26 = ssub.s32 %s20, 2
    %s27 = sadd.s32 %s20, 1
    %s28 = ssub.s32 %s20, %s27
    %p29 = scmp.eq.s32.totalorder %s28, 0
    %s31 = sadd.s32 %s30, 1
    %s32 = scalar_select %p29, %s30, %s31
    %p35 = pneg %p29
    %p36 = scmp.eq.s32.totalorder %s20, 1
    %p37 = por %p35, %p36
    %p38 = scmp.ne.s32.totalorder %s30, %s33
    %p39 = scmp.eq.s32.totalorder %s20, 0
    %p40 = por %p38, %p39
    %p41 = scmp.ne.s32.totalorder %s30, %s33
    %p42 = scmp.eq.s32.totalorder %s25, 1
    %p43 = por %p41, %p42
    %p44 = scmp.ne.s32.totalorder %s33, %s34
    %p45 = scmp.eq.s32.totalorder %s25, 0
    %p46 = por %p44, %p45
    %p47 = scmp.ne.s32.totalorder %s33, %s34
    %p48 = scmp.eq.s32.totalorder %s26, 1
    %p49 = por %p47, %p48
    %p51 = scmp.ne.s32.totalorder %s34, %s50
    %p52 = scmp.eq.s32.totalorder %s26, 0
    %p53 = por %p51, %p52
    %s55 = sadd.s32 %s54, 1
    %p58 = scmp.eq.s32.totalorder %s20, 1
    %p59 = scmp.ne.s32.totalorder %s54, %s56
    %p60 = scmp.eq.s32.totalorder %s20, 0
    %p61 = por %p59, %p60
    %p62 = scmp.ne.s32.totalorder %s54, %s56
    %p63 = scmp.eq.s32.totalorder %s25, 1
    %p64 = por %p62, %p63
    %p65 = scmp.ne.s32.totalorder %s56, %s57
    %p66 = scmp.eq.s32.totalorder %s25, 0
    %p67 = por %p65, %p66
    %p68 = scmp.ne.s32.totalorder %s56, %s57
    %p69 = scmp.eq.s32.totalorder %s26, 1
    %p70 = por %p68, %p69
    %p72 = scmp.ne.s32.totalorder %s57, %s71
    %p73 = scmp.eq.s32.totalorder %s26, 0
    %p74 = por %p72, %p73
    %s76 = sadd.s32 %s75, 1
    %p79 = scmp.eq.s32.totalorder %s20, 1
    %p80 = scmp.ne.s32.totalorder %s75, %s77
    %p81 = scmp.eq.s32.totalorder %s20, 0
    %p82 = por %p80, %p81
    %p83 = scmp.ne.s32.totalorder %s75, %s77
    %p84 = scmp.eq.s32.totalorder %s25, 1
    %p85 = por %p83, %p84
    %p86 = scmp.ne.s32.totalorder %s77, %s78
    %p87 = scmp.eq.s32.totalorder %s25, 0
    %p88 = por %p86, %p87
    %p89 = scmp.ne.s32.totalorder %s77, %s78
    %p90 = scmp.eq.s32.totalorder %s26, 1
    %p91 = por %p89, %p90
    %p93 = scmp.ne.s32.totalorder %s78, %s92
    %p94 = scmp.eq.s32.totalorder %s26, 0
    %p95 = por %p93, %p94
    %s97 = sadd.s32 %s96, 1
    %p100 = scmp.eq.s32.totalorder %s20, 1
    %p101 = scmp.ne.s32.totalorder %s96, %s98
    %p102 = scmp.eq.s32.totalorder %s20, 0
    %p103 = por %p101, %p102
    %p104 = scmp.ne.s32.totalorder %s96, %s98
    %p105 = scmp.eq.s32.totalorder %s25, 1
    %p106 = por %p104, %p105
    %p107 = scmp.ne.s32.totalorder %s98, %s99
    %p108 = scmp.eq.s32.totalorder %s25, 0
    %p109 = por %p107, %p108
    %p110 = scmp.ne.s32.totalorder %s98, %s99
    %p111 = scmp.eq.s32.totalorder %s26, 1
    %p112 = por %p110, %p111
    %p114 = scmp.ne.s32.totalorder %s99, %s113
    %p115 = scmp.eq.s32.totalorder %s26, 0
    %p116 = por %p114, %p115
    %s118 = sadd.s32 %s117, 1
    %p121 = scmp.eq.s32.totalorder %s20, 1
    %p122 = scmp.ne.s32.totalorder %s117, %s119
    %p123 = scmp.eq.s32.totalorder %s20, 0
    %p124 = por %p122, %p123
    %p125 = scmp.ne.s32.totalorder %s117, %s119
    %p126 = scmp.eq.s32.totalorder %s25, 1
    %p127 = por %p125, %p126
    %p128 = scmp.ne.s32.totalorder %s119, %s120
    %p129 = scmp.eq.s32.totalorder %s25, 0
    %p130 = por %p128, %p129
    %p131 = scmp.ne.s32.totalorder %s119, %s120
    %p132 = scmp.eq.s32.totalorder %s26, 1
    %p133 = por %p131, %p132
    %p135 = scmp.ne.s32.totalorder %s120, %s134
    %p136 = scmp.eq.s32.totalorder %s26, 0
    %p137 = por %p135, %p136
    %s139 = sadd.s32 %s138, 1
    %p142 = scmp.eq.s32.totalorder %s20, 1
    %p143 = scmp.ne.s32.totalorder %s138, %s140
    %p144 = scmp.eq.s32.totalorder %s20, 0
    %p145 = por %p143, %p144
    %p146 = scmp.ne.s32.totalorder %s138, %s140
    %p147 = scmp.eq.s32.totalorder %s25, 1
    %p148 = por %p146, %p147
    %p149 = scmp.ne.s32.totalorder %s140, %s141
    %p150 = scmp.eq.s32.totalorder %s25, 0
    %p151 = por %p149, %p150
    %p152 = scmp.ne.s32.totalorder %s140, %s141
    %p153 = scmp.eq.s32.totalorder %s26, 1
    %p154 = por %p152, %p153
    %p156 = scmp.ne.s32.totalorder %s141, %s155
    %p157 = scmp.eq.s32.totalorder %s26, 0
    %p158 = por %p156, %p157
    %s160 = sadd.s32 %s159, 1
    %p163 = scmp.eq.s32.totalorder %s20, 1
    %p164 = scmp.ne.s32.totalorder %s159, %s161
    %p165 = scmp.eq.s32.totalorder %s20, 0
    %p166 = por %p164, %p165
    %p167 = scmp.ne.s32.totalorder %s159, %s161
    %p168 = scmp.eq.s32.totalorder %s25, 1
    %p169 = por %p167, %p168
    %p170 = scmp.ne.s32.totalorder %s161, %s162
    %p171 = scmp.eq.s32.totalorder %s25, 0
    %p172 = por %p170, %p171
    %p173 = scmp.ne.s32.totalorder %s161, %s162
    %p174 = scmp.eq.s32.totalorder %s26, 1
    %p175 = por %p173, %p174
    %p177 = scmp.ne.s32.totalorder %s162, %s176
    %p178 = scmp.eq.s32.totalorder %s26, 0
    %p179 = por %p177, %p178
    %s181 = sadd.s32 %s180, 1
    %p184 = scmp.eq.s32.totalorder %s20, 1
    %p185 = scmp.ne.s32.totalorder %s180, %s182
    %p186 = scmp.eq.s32.totalorder %s20, 0
    %p187 = por %p185, %p186
    %p188 = scmp.ne.s32.totalorder %s180, %s182
    %p189 = scmp.eq.s32.totalorder %s25, 1
    %p190 = por %p188, %p189
    %p191 = scmp.ne.s32.totalorder %s182, %s183
    %p192 = scmp.eq.s32.totalorder %s25, 0
    %p193 = por %p191, %p192
    %p194 = scmp.ne.s32.totalorder %s182, %s183
    %p195 = scmp.eq.s32.totalorder %s26, 1
    %p196 = por %p194, %p195
    %p198 = scmp.ne.s32.totalorder %s183, %s197
    %p199 = scmp.eq.s32.totalorder %s26, 0
    %p200 = por %p198, %p199
    %s202 = sadd.s32 %s201, 1
    %p205 = scmp.eq.s32.totalorder %s20, 1
    %p206 = scmp.ne.s32.totalorder %s201, %s203
    %p207 = scmp.eq.s32.totalorder %s20, 0
    %p208 = por %p206, %p207
    %p209 = scmp.ne.s32.totalorder %s201, %s203
    %p210 = scmp.eq.s32.totalorder %s25, 1
    %p211 = por %p209, %p210
    %p212 = scmp.ne.s32.totalorder %s203, %s204
    %p213 = scmp.eq.s32.totalorder %s25, 0
    %p214 = por %p212, %p213
    %p215 = scmp.ne.s32.totalorder %s203, %s204
    %p216 = scmp.eq.s32.totalorder %s26, 1
    %p217 = por %p215, %p216
    %p219 = scmp.ne.s32.totalorder %s204, %s218
    %p220 = scmp.eq.s32.totalorder %s26, 0
    %p221 = por %p219, %p220
    %s223 = sadd.s32 %s222, 1
    %p226 = scmp.eq.s32.totalorder %s20, 1
    %p227 = scmp.ne.s32.totalorder %s222, %s224
    %p228 = scmp.eq.s32.totalorder %s20, 0
    %p229 = por %p227, %p228
    %p230 = scmp.ne.s32.totalorder %s222, %s224
    %p231 = scmp.eq.s32.totalorder %s25, 1
    %p232 = por %p230, %p231
    %p233 = scmp.ne.s32.totalorder %s224, %s225
    %p234 = scmp.eq.s32.totalorder %s25, 0
    %p235 = por %p233, %p234
    %p236 = scmp.ne.s32.totalorder %s224, %s225
    %p237 = scmp.eq.s32.totalorder %s26, 1
    %p238 = por %p236, %p237
    %p240 = scmp.ne.s32.totalorder %s225, %s239
    %p241 = scmp.eq.s32.totalorder %s26, 0
    %p242 = por %p240, %p241
    %s244 = sadd.s32 %s243, 1
    %p247 = scmp.eq.s32.totalorder %s20, 1
    %p248 = scmp.ne.s32.totalorder %s243, %s245
    %p249 = scmp.eq.s32.totalorder %s20, 0
    %p250 = por %p248, %p249
    %p251 = scmp.ne.s32.totalorder %s243, %s245
    %p252 = scmp.eq.s32.totalorder %s25, 1
    %p253 = por %p251, %p252
    %p254 = scmp.ne.s32.totalorder %s245, %s246
    %p255 = scmp.eq.s32.totalorder %s25, 0
    %p256 = por %p254, %p255
    %p257 = scmp.ne.s32.totalorder %s245, %s246
    %p258 = scmp.eq.s32.totalorder %s26, 1
    %p259 = por %p257, %p258
    %p261 = scmp.ne.s32.totalorder %s246, %s260
    %p262 = scmp.eq.s32.totalorder %s26, 0
    %p263 = por %p261, %p262
    %s265 = sadd.s32 %s264, 1
    %p268 = scmp.eq.s32.totalorder %s20, 1
    %p269 = scmp.ne.s32.totalorder %s264, %s266
    %p270 = scmp.eq.s32.totalorder %s20, 0
    %p271 = por %p269, %p270
    %p272 = scmp.ne.s32.totalorder %s264, %s266
    %p273 = scmp.eq.s32.totalorder %s25, 1
    %p274 = por %p272, %p273
    %p275 = scmp.ne.s32.totalorder %s266, %s267
    %p276 = scmp.eq.s32.totalorder %s25, 0
    %p277 = por %p275, %p276
    %p278 = scmp.ne.s32.totalorder %s266, %s267
    %p279 = scmp.eq.s32.totalorder %s26, 1
    %p280 = por %p278, %p279
    %p282 = scmp.ne.s32.totalorder %s267, %s281
    %p283 = scmp.eq.s32.totalorder %s26, 0
    %p284 = por %p282, %p283
    %s286 = sadd.s32 %s285, 1
    %p289 = scmp.eq.s32.totalorder %s20, 1
    %p290 = scmp.ne.s32.totalorder %s285, %s287
    %p291 = scmp.eq.s32.totalorder %s20, 0
    %p292 = por %p290, %p291
    %p293 = scmp.ne.s32.totalorder %s285, %s287
    %p294 = scmp.eq.s32.totalorder %s25, 1
    %p295 = por %p293, %p294
    %p296 = scmp.ne.s32.totalorder %s287, %s288
    %p297 = scmp.eq.s32.totalorder %s25, 0
    %p298 = por %p296, %p297
    %p299 = scmp.ne.s32.totalorder %s287, %s288
    %p300 = scmp.eq.s32.totalorder %s26, 1
    %p301 = por %p299, %p300
    %p303 = scmp.ne.s32.totalorder %s288, %s302
    %p304 = scmp.eq.s32.totalorder %s26, 0
    %p305 = por %p303, %p304
    %s307 = sadd.s32 %s306, 1
    %p310 = scmp.eq.s32.totalorder %s20, 1
    %p311 = scmp.ne.s32.totalorder %s306, %s308
    %p312 = scmp.eq.s32.totalorder %s20, 0
    %p313 = por %p311, %p312
    %p314 = scmp.ne.s32.totalorder %s306, %s308
    %p315 = scmp.eq.s32.totalorder %s25, 1
    %p316 = por %p314, %p315
    %p317 = scmp.ne.s32.totalorder %s308, %s309
    %p318 = scmp.eq.s32.totalorder %s25, 0
    %p319 = por %p317, %p318
    %p320 = scmp.ne.s32.totalorder %s308, %s309
    %p321 = scmp.eq.s32.totalorder %s26, 1
    %p322 = por %p320, %p321
    %p324 = scmp.ne.s32.totalorder %s309, %s323
    %p325 = scmp.eq.s32.totalorder %s26, 0
    %p326 = por %p324, %p325
    %s327 = ssub.s32 %s20, %s27
    %p328 = scmp.eq.s32.totalorder %s327, 0
    %s330 = sadd.s32 %s329, 1
    %s331 = scalar_select %p328, %s329, %s330
    %p334 = pneg %p328
    %p335 = scmp.eq.s32.totalorder %s20, 1
    %p336 = por %p334, %p335
    %p337 = scmp.ne.s32.totalorder %s329, %s332
    %p338 = scmp.eq.s32.totalorder %s20, 0
    %p339 = por %p337, %p338
    %p340 = scmp.ne.s32.totalorder %s329, %s332
    %p341 = scmp.eq.s32.totalorder %s25, 1
    %p342 = por %p340, %p341
    %p343 = scmp.ne.s32.totalorder %s332, %s333
    %p344 = scmp.eq.s32.totalorder %s25, 0
    %p345 = por %p343, %p344
    %p346 = scmp.ne.s32.totalorder %s332, %s333
    %p347 = scmp.eq.s32.totalorder %s26, 1
    %p348 = por %p346, %p347
    %p350 = scmp.ne.s32.totalorder %s333, %s349
    %p351 = scmp.eq.s32.totalorder %s26, 0
    %p352 = por %p350, %p351
    %p353 = scmp.le.s32.totalorder 1, %s20
    %p354 = scmp.lt.s32.totalorder %s20, 3
    %p355 = pnand %p353, %p354
    %p356 = pneg %p355
    // Predicated region
    $region9: #{net_forward.1} parent=5 // pred_check
      _
    $region10: #{net_forward.1} parent=5 // pred_check_branch
      %358 = sbr.rel (%p355) target = $region12
    $region11: #{net_forward.1} parent=5 // pred_region
      %s359 = ssub.s32 %s20, 1
      // Predicated region
      $region13: #{net_forward.1} parent=11 // pred_check
        %p360 = pneg %p67
      $region14: #{net_forward.1} parent=11 // pred_check_branch
        %362 = sbr.rel (%p360) target = $region16
      $region15: #{net_forward.1} parent=11 // pred_region
        _
      $region16: #{net_forward.1} parent=11 // pred_fallthru
        _
      // Predicated region
      $region17: #{net_forward.1} parent=11 // pred_check
        %p363 = pneg %p88
      $region18: #{net_forward.1} parent=11 // pred_check_branch
        %365 = sbr.rel (%p363) target = $region20
      $region19: #{net_forward.1} parent=11 // pred_region
        _
      $region20: #{net_forward.1} parent=11 // pred_fallthru
        _
      // Predicated region
      $region21: #{net_forward.1} parent=11 // pred_check
        %p366 = pneg %p109
      $region22: #{net_forward.1} parent=11 // pred_check_branch
        %368 = sbr.rel (%p366) target = $region24
      $region23: #{net_forward.1} parent=11 // pred_region
        _
      $region24: #{net_forward.1} parent=11 // pred_fallthru
        _
      // Predicated region
      $region25: #{net_forward.1} parent=11 // pred_check
        %p369 = pneg %p130
      $region26: #{net_forward.1} parent=11 // pred_check_branch
        %371 = sbr.rel (%p369) target = $region28
      $region27: #{net_forward.1} parent=11 // pred_region
        _
      $region28: #{net_forward.1} parent=11 // pred_fallthru
        _
      // Predicated region
      $region29: #{net_forward.1} parent=11 // pred_check
        %p372 = pneg %p151
      $region30: #{net_forward.1} parent=11 // pred_check_branch
        %374 = sbr.rel (%p372) target = $region32
      $region31: #{net_forward.1} parent=11 // pred_region
        _
      $region32: #{net_forward.1} parent=11 // pred_fallthru
        _
      // Predicated region
      $region33: #{net_forward.1} parent=11 // pred_check
        %p375 = pneg %p172
      $region34: #{net_forward.1} parent=11 // pred_check_branch
        %377 = sbr.rel (%p375) target = $region36
      $region35: #{net_forward.1} parent=11 // pred_region
        _
      $region36: #{net_forward.1} parent=11 // pred_fallthru
        _
      // Predicated region
      $region37: #{net_forward.1} parent=11 // pred_check
        %p378 = pneg %p193
      $region38: #{net_forward.1} parent=11 // pred_check_branch
        %380 = sbr.rel (%p378) target = $region40
      $region39: #{net_forward.1} parent=11 // pred_region
        _
      $region40: #{net_forward.1} parent=11 // pred_fallthru
        _
      // Predicated region
      $region41: #{net_forward.1} parent=11 // pred_check
        %p381 = pneg %p214
      $region42: #{net_forward.1} parent=11 // pred_check_branch
        %383 = sbr.rel (%p381) target = $region44
      $region43: #{net_forward.1} parent=11 // pred_region
        _
      $region44: #{net_forward.1} parent=11 // pred_fallthru
        _
      // Predicated region
      $region45: #{net_forward.1} parent=11 // pred_check
        %p384 = pneg %p235
      $region46: #{net_forward.1} parent=11 // pred_check_branch
        %386 = sbr.rel (%p384) target = $region48
      $region47: #{net_forward.1} parent=11 // pred_region
        _
      $region48: #{net_forward.1} parent=11 // pred_fallthru
        _
      // Predicated region
      $region49: #{net_forward.1} parent=11 // pred_check
        %p387 = pneg %p256
      $region50: #{net_forward.1} parent=11 // pred_check_branch
        %389 = sbr.rel (%p387) target = $region52
      $region51: #{net_forward.1} parent=11 // pred_region
        _
      $region52: #{net_forward.1} parent=11 // pred_fallthru
        _
      // Predicated region
      $region53: #{net_forward.1} parent=11 // pred_check
        %p390 = pneg %p277
      $region54: #{net_forward.1} parent=11 // pred_check_branch
        %392 = sbr.rel (%p390) target = $region56
      $region55: #{net_forward.1} parent=11 // pred_region
        _
      $region56: #{net_forward.1} parent=11 // pred_fallthru
        _
      // Predicated region
      $region57: #{net_forward.1} parent=11 // pred_check
        %p393 = pneg %p298
      $region58: #{net_forward.1} parent=11 // pred_check_branch
        %395 = sbr.rel (%p393) target = $region60
      $region59: #{net_forward.1} parent=11 // pred_region
        _
      $region60: #{net_forward.1} parent=11 // pred_fallthru
        _
      // Predicated region
      $region61: #{net_forward.1} parent=11 // pred_check
        %p396 = pneg %p319
      $region62: #{net_forward.1} parent=11 // pred_check_branch
        %398 = sbr.rel (%p396) target = $region64
      $region63: #{net_forward.1} parent=11 // pred_region
        _
      $region64: #{net_forward.1} parent=11 // pred_fallthru
        _
    $region12: #{net_forward.1} parent=5 // pred_fallthru
      _
    %p399 = scmp.lt.s32.totalorder %s20, 2
    // Predicated region
    $region65: #{net_forward.1} parent=5 // pred_check
      %p400 = pneg %p399
    $region66: #{net_forward.1} parent=5 // pred_check_branch
      %402 = sbr.rel (%p400) target = $region68
    $region67: #{net_forward.1} parent=5 // pred_region
      // Predicated region
      $region69: #{net_forward.1} parent=67 // pred_check
        %p403 = pneg %p40
      $region70: #{net_forward.1} parent=67 // pred_check_branch
        %405 = sbr.rel (%p403) target = $region72
      $region71: #{net_forward.1} parent=67 // pred_region
        %p406 = scmp.lt.s32.totalorder %s20, 1
        %s407 = scalar_select %p406, %s20, 1
        %s408 = smul.addr %s407, 2
        %s409 = smul.addr %s408, 8
        %s410 = scalar_lea.vmem %s0, %s409
      $region72: #{net_forward.1} parent=67 // pred_fallthru
        _
    $region68: #{net_forward.1} parent=5 // pred_fallthru
      _
    %p411 = scmp.le.s32.totalorder 1, %s20
    %p412 = scmp.lt.s32.totalorder %s20, 3
    %p413 = pnand %p411, %p412
    %p414 = pneg %p413
    // Predicated region
    $region73: #{net_forward.1} parent=5 // pred_check
      _
    $region74: #{net_forward.1} parent=5 // pred_check_branch
      %416 = sbr.rel (%p413) target = $region76
    $region75: #{net_forward.1} parent=5 // pred_region
      %s417 = ssub.s32 %s20, 1
      %p418 = scmp.lt.s32.totalorder %s25, 1
      %s419 = scalar_select %p418, %s25, 1
      %s420 = smul.addr %s419, 2
      %s421 = smul.addr %s420, 8
      %s422 = scalar_lea.vmem %s0, %s421
      %p423 = pneg %p46
      %p424 = pneg %p43
      %p425 = pneg %p67
      %p426 = pneg %p64
      %p427 = pneg %p88
      %p428 = pneg %p85
      %p429 = pneg %p109
      %p430 = pneg %p106
      %p431 = pneg %p130
      %p432 = pneg %p127
      %p433 = pneg %p151
      %p434 = pneg %p148
      %p435 = pneg %p172
      %p436 = pneg %p169
      %p437 = pneg %p193
      %p438 = pneg %p190
      %p439 = pneg %p214
      %p440 = pneg %p211
      %p441 = pneg %p235
      %p442 = pneg %p232
      %p443 = pneg %p256
      %p444 = pneg %p253
      %p445 = pneg %p277
      %p446 = pneg %p274
      %p447 = pneg %p298
      %p448 = pneg %p295
      %p449 = pneg %p319
      %p450 = pneg %p316
      %p451 = pneg %p345
      %p452 = pneg %p342
      %p453 = scmp.lt.s32.totalorder %s25, 1
      %s454 = scalar_select %p453, %s25, 1
      %s455 = smul.addr %s454, 2
      %s456 = smul.addr %s455, 2
      %s457 = scalar_lea.vmem %s14, %s456
      %p458 = scmp.lt.s32.totalorder %s25, 1
      %s459 = scalar_select %p458, %s25, 1
      %s460 = smul.addr %s459, 2
      %s461 = smul.addr %s460, 8
      %s462 = scalar_lea.vmem %s0, %s461
      %p463 = scmp.lt.s32.totalorder %s25, 1
      %s464 = scalar_select %p463, %s25, 1
      %s465 = smul.addr %s464, 2
      %s466 = smul.addr %s465, 2
      %s467 = scalar_lea.vmem %s14, %s466
      %v469 = vld [vmem:[%s462] sm:$0xff]
      %v470 = vld [vmem:[%s462 + $0x8] sm:$0xff]
      %v471 = vld [vmem:[%s2] sm:$0xff]
      %v472 = vld [vmem:[%s2 + $0x8] sm:$0xff]
      %474 = vset.pattern.permute.xlu0 0
      %475 = vperm.xlu0 %474, %v471
      %v476 = vpop.permute.xlu0 %475
      %479 = vset.pattern.permute.xlu0 0
      %480 = vperm.xlu0 %479, %v472
      %v481 = vpop.permute.xlu0 %480
      %483 = vrot.lane.b32.xlu0 %v469, 17
      %v484 = vpop.permute.xlu0 %483
      %485 = vrot.lane.b32.xlu0 %v470, 17
      %v486 = vpop.permute.xlu0 %485
      %v487 = vlaneseq
      %v488 = vand.u32 %v487, 127
      %vm489 = vcmp.lt.s32.totalorder %v488, 17
      %v490 = vsel %vm489, %v484, %v486
      %v491 = vsel %vm489, %v486, %v484
      %v492 = vld [vmem:[%s9] ss:$8 sm:$0x3]
      %v494 = vlaneseq
      %v495 = vshrl.u32 %v494, 7
      %v496 = vsub.s32 0, %v495
      %v497 = vrot.slane %v492, %v496
      %v498 = vlaneseq
      %v499 = vshrl.u32 %v498, 7
      %v500 = vsub.s32 1, %v499
      %v501 = vrot.slane %v492, %v500
      %v504 = vmul.f32 %v491, %v497
      %v505 = vmul.f32 %v490, %v501
      %v506 = vld [vmem:[%s1] sm:$0xf]
      %v507 = vld [vmem:[%s1 + $0x4] sm:$0xf]
      %v508 = vpack.c.bf16 %v504, %v504
      %v509 = vpack.c.bf16 %v505, %v505
      %v512 = vunpack.c.l.b16 %v506
      %v513 = vunpack.c.l.b16 %v507
      %v514 = vpack.c.b16 %v513, %v512
      %vm515 = vcmask 64512
      %v517 = vsel %vm515, %v514, 0
      %vm519 = vcmask 1043456
      %v521 = vsel %vm519, %v508, 0
      %v524 = vsel %vm519, %v509, 0
      %526 = vmatprep.subr.bf16.mxu0 %v524
      %527 = vmatpush1.bf16.msra.mxu0 %v521
      %528 = vmatprep.subr.bf16.mxu0 0
      %529 = vmatpush1.bf16.msra.mxu0 0
      %530 = vmatprep.subr.bf16.mxu0 0
      %531 = vmatpush1.bf16.msra.mxu0 0
      %532 = vmatprep.subr.bf16.mxu0 0
      %533 = vmatpush1.bf16.msra.mxu0 0
      %534 = vmatprep.subr.bf16.mxu0 0
      %535 = vmatpush1.bf16.msra.mxu0 0
      %536 = vmatprep.subr.bf16.mxu0 0
      %537 = vmatpush1.bf16.msra.mxu0 0
      %538 = vmatprep.subr.bf16.mxu0 0
      %539 = vmatpush1.bf16.msra.mxu0 0
      %540 = vmatprep.subr.bf16.mxu0 0
      %541 = vmatpush1.bf16.msra.mxu0 0
      %542 = vmatprep.subr.bf16.mxu0 0
      %543 = vmatpush1.bf16.msra.mxu0 0
      %544 = vmatprep.subr.bf16.mxu0 0
      %545 = vmatpush1.bf16.msra.mxu0 0
      %546 = vmatprep.subr.bf16.mxu0 0
      %547 = vmatpush1.bf16.msra.mxu0 0
      %548 = vmatprep.subr.bf16.mxu0 0
      %549 = vmatpush1.bf16.msra.mxu0 0
      %550 = vmatprep.subr.bf16.mxu0 0
      %551 = vmatpush1.bf16.msra.mxu0 0
      %552 = vmatprep.subr.bf16.mxu0 0
      %553 = vmatpush1.bf16.msra.mxu0 0
      %554 = vmatprep.subr.bf16.mxu0 0
      %555 = vmatpush1.bf16.msra.mxu0 0
      %556 = vmatprep.subr.bf16.mxu0 0
      %557 = vmatpush1.bf16.msra.mxu0 0
      %558 = vmatprep.mubr.bf16.mxu0 0
      %559 = vmatmul.mubr.bf16.gmra.mrb[0].mxu0 %v517
      %v560 = vpop.f32.mrb[0].mxu0
      %v561 = vadd.f32 0.0, %v560
      %v562 = vpop.f32.mrb[0].mxu0
      %v563 = vadd.f32 0.0, %v562
      %v564 = vpop.f32.mrb[0].mxu0
      %v565 = vadd.f32 0.0, %v564
      %v566 = vpop.f32.mrb[0].mxu0
      %v567 = vadd.f32 0.0, %v566
      %568 = vdwg.mxu0
      %v569 = vadd.f32 %v476, %v561
      %v570 = vadd.f32 %v476, %v563
      %v571 = vadd.f32 %v481, %v565
      %v572 = vadd.f32 %v481, %v567
      %573 = vrot.lane.b32.xlu0 %v469, 16
      %v574 = vpop.permute.xlu0 %573
      %575 = vrot.lane.b32.xlu0 %v470, 16
      %v576 = vpop.permute.xlu0 %575
      %vm577 = vcmp.lt.s32.totalorder %v488, 16
      %v578 = vsel %vm577, %v574, %v576
      %v579 = vsel %vm577, %v576, %v574
      %s580 = scalar_lea.vmem %s9, 1
      %v581 = vld [vmem:[%s580] ss:$8 sm:$0x3]
      %v583 = vlaneseq
      %v584 = vshrl.u32 %v583, 7
      %v585 = vsub.s32 0, %v584
      %v586 = vrot.slane %v581, %v585
      %v587 = vlaneseq
      %v588 = vshrl.u32 %v587, 7
      %v589 = vsub.s32 1, %v588
      %v590 = vrot.slane %v581, %v589
      %v593 = vmul.f32 %v579, %v586
      %v594 = vmul.f32 %v578, %v590
      %s595 = scalar_lea.vmem %s1, 8
      %v596 = vld [vmem:[%s595] sm:$0xf]
      %v597 = vld [vmem:[%s595 + $0x4] sm:$0xf]
      %v598 = vpack.c.bf16 %v593, %v593
      %v599 = vpack.c.bf16 %v594, %v594
      %v602 = vunpack.c.l.b16 %v596
      %v603 = vunpack.c.l.b16 %v597
      %v604 = vpack.c.b16 %v603, %v602
      %v606 = vsel %vm515, %v604, 0
      %v609 = vsel %vm519, %v598, 0
      %v612 = vsel %vm519, %v599, 0
      %614 = vmatprep.subr.bf16.mxu0 %v612
      %615 = vmatpush1.bf16.msra.mxu0 %v609
      %616 = vmatprep.subr.bf16.mxu0 0
      %617 = vmatpush1.bf16.msra.mxu0 0
      %618 = vmatprep.subr.bf16.mxu0 0
      %619 = vmatpush1.bf16.msra.mxu0 0
      %620 = vmatprep.subr.bf16.mxu0 0
      %621 = vmatpush1.bf16.msra.mxu0 0
      %622 = vmatprep.subr.bf16.mxu0 0
      %623 = vmatpush1.bf16.msra.mxu0 0
      %624 = vmatprep.subr.bf16.mxu0 0
      %625 = vmatpush1.bf16.msra.mxu0 0
      %626 = vmatprep.subr.bf16.mxu0 0
      %627 = vmatpush1.bf16.msra.mxu0 0
      %628 = vmatprep.subr.bf16.mxu0 0
      %629 = vmatpush1.bf16.msra.mxu0 0
      %630 = vmatprep.subr.bf16.mxu0 0
      %631 = vmatpush1.bf16.msra.mxu0 0
      %632 = vmatprep.subr.bf16.mxu0 0
      %633 = vmatpush1.bf16.msra.mxu0 0
      %634 = vmatprep.subr.bf16.mxu0 0
      %635 = vmatpush1.bf16.msra.mxu0 0
      %636 = vmatprep.subr.bf16.mxu0 0
      %637 = vmatpush1.bf16.msra.mxu0 0
      %638 = vmatprep.subr.bf16.mxu0 0
      %639 = vmatpush1.bf16.msra.mxu0 0
      %640 = vmatprep.subr.bf16.mxu0 0
      %641 = vmatpush1.bf16.msra.mxu0 0
      %642 = vmatprep.subr.bf16.mxu0 0
      %643 = vmatpush1.bf16.msra.mxu0 0
      %644 = vmatprep.subr.bf16.mxu0 0
      %645 = vmatpush1.bf16.msra.mxu0 0
      %646 = vmatprep.mubr.bf16.mxu0 0
      %647 = vmatmul.mubr.bf16.gmra.mrb[0].mxu0 %v606
      %v648 = vpop.f32.mrb[0].mxu0
      %v649 = vadd.f32 0.0, %v648
      %v650 = vpop.f32.mrb[0].mxu0
      %v651 = vadd.f32 0.0, %v650
      %v652 = vpop.f32.mrb[0].mxu0
      %v653 = vadd.f32 0.0, %v652
      %v654 = vpop.f32.mrb[0].mxu0
      %v655 = vadd.f32 0.0, %v654
      %656 = vdwg.mxu0
      %v657 = vadd.f32 %v569, %v649
      %v658 = vadd.f32 %v570, %v651
      %v659 = vadd.f32 %v571, %v653
      %v660 = vadd.f32 %v572, %v655
      %661 = vrot.lane.b32.xlu0 %v469, 15
      %v662 = vpop.permute.xlu0 %661
      %663 = vrot.lane.b32.xlu0 %v470, 15
      %v664 = vpop.permute.xlu0 %663
      %vm665 = vcmp.lt.s32.totalorder %v488, 15
      %v666 = vsel %vm665, %v662, %v664
      %v667 = vsel %vm665, %v664, %v662
      %s668 = scalar_lea.vmem %s9, 2
      %v669 = vld [vmem:[%s668] ss:$8 sm:$0x3]
      %v671 = vlaneseq
      %v672 = vshrl.u32 %v671, 7
      %v673 = vsub.s32 0, %v672
      %v674 = vrot.slane %v669, %v673
      %v675 = vlaneseq
      %v676 = vshrl.u32 %v675, 7
      %v677 = vsub.s32 1, %v676
      %v678 = vrot.slane %v669, %v677
      %v681 = vmul.f32 %v667, %v674
      %v682 = vmul.f32 %v666, %v678
      %s683 = scalar_lea.vmem %s1, 16
      %v684 = vld [vmem:[%s683] sm:$0xf]
      %v685 = vld [vmem:[%s683 + $0x4] sm:$0xf]
      %v686 = vpack.c.bf16 %v681, %v681
      %v687 = vpack.c.bf16 %v682, %v682
      %v690 = vunpack.c.l.b16 %v684
      %v691 = vunpack.c.l.b16 %v685
      %v692 = vpack.c.b16 %v691, %v690
      %v694 = vsel %vm515, %v692, 0
      %v697 = vsel %vm519, %v686, 0
      %v700 = vsel %vm519, %v687, 0
      %702 = vmatprep.subr.bf16.mxu0 %v700
      %703 = vmatpush1.bf16.msra.mxu0 %v697
      %704 = vmatprep.subr.bf16.mxu0 0
      %705 = vmatpush1.bf16.msra.mxu0 0
      %706 = vmatprep.subr.bf16.mxu0 0
      %707 = vmatpush1.bf16.msra.mxu0 0
      %708 = vmatprep.subr.bf16.mxu0 0
      %709 = vmatpush1.bf16.msra.mxu0 0
      %710 = vmatprep.subr.bf16.mxu0 0
      %711 = vmatpush1.bf16.msra.mxu0 0
      %712 = vmatprep.subr.bf16.mxu0 0
      %713 = vmatpush1.bf16.msra.mxu0 0
      %714 = vmatprep.subr.bf16.mxu0 0
      %715 = vmatpush1.bf16.msra.mxu0 0
      %716 = vmatprep.subr.bf16.mxu0 0
      %717 = vmatpush1.bf16.msra.mxu0 0
      %718 = vmatprep.subr.bf16.mxu0 0
      %719 = vmatpush1.bf16.msra.mxu0 0
      %720 = vmatprep.subr.bf16.mxu0 0
      %721 = vmatpush1.bf16.msra.mxu0 0
      %722 = vmatprep.subr.bf16.mxu0 0
      %723 = vmatpush1.bf16.msra.mxu0 0
      %724 = vmatprep.subr.bf16.mxu0 0
      %725 = vmatpush1.bf16.msra.mxu0 0
      %726 = vmatprep.subr.bf16.mxu0 0
      %727 = vmatpush1.bf16.msra.mxu0 0
      %728 = vmatprep.subr.bf16.mxu0 0
      %729 = vmatpush1.bf16.msra.mxu0 0
      %730 = vmatprep.subr.bf16.mxu0 0
      %731 = vmatpush1.bf16.msra.mxu0 0
      %732 = vmatprep.subr.bf16.mxu0 0
      %733 = vmatpush1.bf16.msra.mxu0 0
      %734 = vmatprep.mubr.bf16.mxu0 0
      %735 = vmatmul.mubr.bf16.gmra.mrb[0].mxu0 %v694
      %v736 = vpop.f32.mrb[0].mxu0
      %v737 = vadd.f32 0.0, %v736
      %v738 = vpop.f32.mrb[0].mxu0
      %v739 = vadd.f32 0.0, %v738
      %v740 = vpop.f32.mrb[0].mxu0
      %v741 = vadd.f32 0.0, %v740
      %v742 = vpop.f32.mrb[0].mxu0
      %v743 = vadd.f32 0.0, %v742
      %744 = vdwg.mxu0
      %v745 = vadd.f32 %v657, %v737
      %v746 = vadd.f32 %v658, %v739
      %v747 = vadd.f32 %v659, %v741
      %v748 = vadd.f32 %v660, %v743
      %749 = vrot.lane.b32.xlu0 %v469, 1
      %v750 = vpop.permute.xlu0 %749
      %751 = vrot.lane.b32.xlu0 %v470, 1
      %v752 = vpop.permute.xlu0 %751
      %vm753 = vcmp.lt.s32.totalorder %v488, 1
      %v754 = vsel %vm753, %v750, %v752
      %v755 = vsel %vm753, %v752, %v750
      %s756 = scalar_lea.vmem %s9, 3
      %v757 = vld [vmem:[%s756] ss:$8 sm:$0x3]
      %v759 = vlaneseq
      %v760 = vshrl.u32 %v759, 7
      %v761 = vsub.s32 0, %v760
      %v762 = vrot.slane %v757, %v761
      %v763 = vlaneseq
      %v764 = vshrl.u32 %v763, 7
      %v765 = vsub.s32 1, %v764
      %v766 = vrot.slane %v757, %v765
      %v769 = vmul.f32 %v755, %v762
      %v770 = vmul.f32 %v754, %v766
      %s771 = scalar_lea.vmem %s1, 24
      %v772 = vld [vmem:[%s771] sm:$0xf]
      %v773 = vld [vmem:[%s771 + $0x4] sm:$0xf]
      %v774 = vpack.c.bf16 %v769, %v769
      %v775 = vpack.c.bf16 %v770, %v770
      %v778 = vunpack.c.l.b16 %v772
      %v779 = vunpack.c.l.b16 %v773
      %v780 = vpack.c.b16 %v779, %v778
      %v782 = vsel %vm515, %v780, 0
      %v785 = vsel %vm519, %v774, 0
      %v788 = vsel %vm519, %v775, 0
      %790 = vmatprep.subr.bf16.mxu0 %v788
      %791 = vmatpush1.bf16.msra.mxu0 %v785
      %792 = vmatprep.subr.bf16.mxu0 0
      %793 = vmatpush1.bf16.msra.mxu0 0
      %794 = vmatprep.subr.bf16.mxu0 0
      %795 = vmatpush1.bf16.msra.mxu0 0
      %796 = vmatprep.subr.bf16.mxu0 0
      %797 = vmatpush1.bf16.msra.mxu0 0
      %798 = vmatprep.subr.bf16.mxu0 0
      %799 = vmatpush1.bf16.msra.mxu0 0
      %800 = vmatprep.subr.bf16.mxu0 0
      %801 = vmatpush1.bf16.msra.mxu0 0
      %802 = vmatprep.subr.bf16.mxu0 0
      %803 = vmatpush1.bf16.msra.mxu0 0
      %804 = vmatprep.subr.bf16.mxu0 0
      %805 = vmatpush1.bf16.msra.mxu0 0
      %806 = vmatprep.subr.bf16.mxu0 0
      %807 = vmatpush1.bf16.msra.mxu0 0
      %808 = vmatprep.subr.bf16.mxu0 0
      %809 = vmatpush1.bf16.msra.mxu0 0
      %810 = vmatprep.subr.bf16.mxu0 0
      %811 = vmatpush1.bf16.msra.mxu0 0
      %812 = vmatprep.subr.bf16.mxu0 0
      %813 = vmatpush1.bf16.msra.mxu0 0
      %814 = vmatprep.subr.bf16.mxu0 0
      %815 = vmatpush1.bf16.msra.mxu0 0
      %816 = vmatprep.subr.bf16.mxu0 0
      %817 = vmatpush1.bf16.msra.mxu0 0
      %818 = vmatprep.subr.bf16.mxu0 0
      %819 = vmatpush1.bf16.msra.mxu0 0
      %820 = vmatprep.subr.bf16.mxu0 0
      %821 = vmatpush1.bf16.msra.mxu0 0
      %822 = vmatprep.mubr.bf16.mxu0 0
      %823 = vmatmul.mubr.bf16.gmra.mrb[0].mxu0 %v782
      %v824 = vpop.f32.mrb[0].mxu0
      %v825 = vadd.f32 0.0, %v824
      %v826 = vpop.f32.mrb[0].mxu0
      %v827 = vadd.f32 0.0, %v826
      %v828 = vpop.f32.mrb[0].mxu0
      %v829 = vadd.f32 0.0, %v828
      %v830 = vpop.f32.mrb[0].mxu0
      %v831 = vadd.f32 0.0, %v830
      %832 = vdwg.mxu0
      %v833 = vadd.f32 %v745, %v825
      %v834 = vadd.f32 %v746, %v827
      %v835 = vadd.f32 %v747, %v829
      %v836 = vadd.f32 %v748, %v831
      %s837 = scalar_lea.vmem %s1, 32
      %v838 = vld [vmem:[%s837] sm:$0xf]
      %v839 = vld [vmem:[%s837 + $0x4] sm:$0xf]
      %v840 = vpack.c.bf16 %v469, %v469
      %v841 = vpack.c.bf16 %v470, %v470
      %v844 = vunpack.c.l.b16 %v838
      %v845 = vunpack.c.l.b16 %v839
      %v846 = vpack.c.b16 %v845, %v844
      %v848 = vsel %vm515, %v846, 0
      %v851 = vsel %vm519, %v840, 0
      %v854 = vsel %vm519, %v841, 0
      %856 = vmatprep.subr.bf16.mxu0 %v854
      %857 = vmatpush1.bf16.msra.mxu0 %v851
      %858 = vmatprep.subr.bf16.mxu0 0
      %859 = vmatpush1.bf16.msra.mxu0 0
      %860 = vmatprep.subr.bf16.mxu0 0
      %861 = vmatpush1.bf16.msra.mxu0 0
      %862 = vmatprep.subr.bf16.mxu0 0
      %863 = vmatpush1.bf16.msra.mxu0 0
      %864 = vmatprep.subr.bf16.mxu0 0
      %865 = vmatpush1.bf16.msra.mxu0 0
      %866 = vmatprep.subr.bf16.mxu0 0
      %867 = vmatpush1.bf16.msra.mxu0 0
      %868 = vmatprep.subr.bf16.mxu0 0
      %869 = vmatpush1.bf16.msra.mxu0 0
      %870 = vmatprep.subr.bf16.mxu0 0
      %871 = vmatpush1.bf16.msra.mxu0 0
      %872 = vmatprep.subr.bf16.mxu0 0
      %873 = vmatpush1.bf16.msra.mxu0 0
      %874 = vmatprep.subr.bf16.mxu0 0
      %875 = vmatpush1.bf16.msra.mxu0 0
      %876 = vmatprep.subr.bf16.mxu0 0
      %877 = vmatpush1.bf16.msra.mxu0 0
      %878 = vmatprep.subr.bf16.mxu0 0
      %879 = vmatpush1.bf16.msra.mxu0 0
      %880 = vmatprep.subr.bf16.mxu0 0
      %881 = vmatpush1.bf16.msra.mxu0 0
      %882 = vmatprep.subr.bf16.mxu0 0
      %883 = vmatpush1.bf16.msra.mxu0 0
      %884 = vmatprep.subr.bf16.mxu0 0
      %885 = vmatpush1.bf16.msra.mxu0 0
      %886 = vmatprep.subr.bf16.mxu0 0
      %887 = vmatpush1.bf16.msra.mxu0 0
      %888 = vmatprep.mubr.bf16.mxu0 0
      %889 = vmatmul.mubr.bf16.gmra.mrb[0].mxu0 %v848
      %v890 = vpop.f32.mrb[0].mxu0
      %v891 = vadd.f32 0.0, %v890
      %v892 = vpop.f32.mrb[0].mxu0
      %v893 = vadd.f32 0.0, %v892
      %v894 = vpop.f32.mrb[0].mxu0
      %v895 = vadd.f32 0.0, %v894
      %v896 = vpop.f32.mrb[0].mxu0
      %v897 = vadd.f32 0.0, %v896
      %898 = vdwg.mxu0
      %v899 = vadd.f32 %v833, %v891
      %v900 = vadd.f32 %v834, %v893
      %v901 = vadd.f32 %v835, %v895
      %v902 = vadd.f32 %v836, %v897
      %903 = vrot.lane.b32.xlu0 %v469, 127
      %v904 = vpop.permute.xlu0 %903
      %905 = vrot.lane.b32.xlu0 %v470, 127
      %v906 = vpop.permute.xlu0 %905
      %vm907 = vcmp.lt.s32.totalorder %v488, 127
      %v908 = vsel %vm907, %v904, %v906
      %v909 = vsel %vm907, %v906, %v904
      %s910 = scalar_lea.vmem %s9, 5
      %v911 = vld [vmem:[%s910] ss:$8 sm:$0x3]
      %v913 = vlaneseq
      %v914 = vshrl.u32 %v913, 7
      %v915 = vsub.s32 0, %v914
      %v916 = vrot.slane %v911, %v915
      %v917 = vlaneseq
      %v918 = vshrl.u32 %v917, 7
      %v919 = vsub.s32 1, %v918
      %v920 = vrot.slane %v911, %v919
      %v923 = vmul.f32 %v908, %v916
      %v924 = vmul.f32 %v909, %v920
      %s925 = scalar_lea.vmem %s1, 40
      %v926 = vld [vmem:[%s925] sm:$0xf]
      %v927 = vld [vmem:[%s925 + $0x4] sm:$0xf]
      %v928 = vpack.c.bf16 %v923, %v923
      %v929 = vpack.c.bf16 %v924, %v924
      %v932 = vunpack.c.l.b16 %v926
      %v933 = vunpack.c.l.b16 %v927
      %v934 = vpack.c.b16 %v933, %v932
      %v936 = vsel %vm515, %v934, 0
      %v939 = vsel %vm519, %v928, 0
      %v942 = vsel %vm519, %v929, 0
      %944 = vmatprep.subr.bf16.mxu0 %v942
      %945 = vmatpush1.bf16.msra.mxu0 %v939
      %946 = vmatprep.subr.bf16.mxu0 0
      %947 = vmatpush1.bf16.msra.mxu0 0
      %948 = vmatprep.subr.bf16.mxu0 0
      %949 = vmatpush1.bf16.msra.mxu0 0
      %950 = vmatprep.subr.bf16.mxu0 0
      %951 = vmatpush1.bf16.msra.mxu0 0
      %952 = vmatprep.subr.bf16.mxu0 0
      %953 = vmatpush1.bf16.msra.mxu0 0
      %954 = vmatprep.subr.bf16.mxu0 0
      %955 = vmatpush1.bf16.msra.mxu0 0
      %956 = vmatprep.subr.bf16.mxu0 0
      %957 = vmatpush1.bf16.msra.mxu0 0
      %958 = vmatprep.subr.bf16.mxu0 0
      %959 = vmatpush1.bf16.msra.mxu0 0
      %960 = vmatprep.subr.bf16.mxu0 0
      %961 = vmatpush1.bf16.msra.mxu0 0
      %962 = vmatprep.subr.bf16.mxu0 0
      %963 = vmatpush1.bf16.msra.mxu0 0
      %964 = vmatprep.subr.bf16.mxu0 0
      %965 = vmatpush1.bf16.msra.mxu0 0
      %966 = vmatprep.subr.bf16.mxu0 0
      %967 = vmatpush1.bf16.msra.mxu0 0
      %968 = vmatprep.subr.bf16.mxu0 0
      %969 = vmatpush1.bf16.msra.mxu0 0
      %970 = vmatprep.subr.bf16.mxu0 0
      %971 = vmatpush1.bf16.msra.mxu0 0
      %972 = vmatprep.subr.bf16.mxu0 0
      %973 = vmatpush1.bf16.msra.mxu0 0
      %974 = vmatprep.subr.bf16.mxu0 0
      %975 = vmatpush1.bf16.msra.mxu0 0
      %976 = vmatprep.mubr.bf16.mxu0 0
      %977 = vmatmul.mubr.bf16.gmra.mrb[0].mxu0 %v936
      %v978 = vpop.f32.mrb[0].mxu0
      %v979 = vadd.f32 0.0, %v978
      %v980 = vpop.f32.mrb[0].mxu0
      %v981 = vadd.f32 0.0, %v980
      %v982 = vpop.f32.mrb[0].mxu0
      %v983 = vadd.f32 0.0, %v982
      %v984 = vpop.f32.mrb[0].mxu0
      %v985 = vadd.f32 0.0, %v984
      %986 = vdwg.mxu0
      %v987 = vadd.f32 %v899, %v979
      %v988 = vadd.f32 %v900, %v981
      %v989 = vadd.f32 %v901, %v983
      %v990 = vadd.f32 %v902, %v985
      %991 = vrot.lane.b32.xlu0 %v469, 113
      %v992 = vpop.permute.xlu0 %991
      %993 = vrot.lane.b32.xlu0 %v470, 113
      %v994 = vpop.permute.xlu0 %993
      %vm995 = vcmp.lt.s32.totalorder %v488, 113
      %v996 = vsel %vm995, %v992, %v994
      %v997 = vsel %vm995, %v994, %v992
      %s998 = scalar_lea.vmem %s9, 6
      %v999 = vld [vmem:[%s998] ss:$8 sm:$0x3]
      %v1001 = vlaneseq
      %v1002 = vshrl.u32 %v1001, 7
      %v1003 = vsub.s32 0, %v1002
      %v1004 = vrot.slane %v999, %v1003
      %v1005 = vlaneseq
      %v1006 = vshrl.u32 %v1005, 7
      %v1007 = vsub.s32 1, %v1006
      %v1008 = vrot.slane %v999, %v1007
      %v1011 = vmul.f32 %v996, %v1004
      %v1012 = vmul.f32 %v997, %v1008
      %s1013 = scalar_lea.vmem %s1, 48
      %v1014 = vld [vmem:[%s1013] sm:$0xf]
      %v1015 = vld [vmem:[%s1013 + $0x4] sm:$0xf]
      %v1016 = vpack.c.bf16 %v1011, %v1011
      %v1017 = vpack.c.bf16 %v1012, %v1012
      %v1020 = vunpack.c.l.b16 %v1014
      %v1021 = vunpack.c.l.b16 %v1015
      %v1022 = vpack.c.b16 %v1021, %v1020
      %v1024 = vsel %vm515, %v1022, 0
      %v1027 = vsel %vm519, %v1016, 0
      %v1030 = vsel %vm519, %v1017, 0
      %1032 = vmatprep.subr.bf16.mxu0 %v1030
      %1033 = vmatpush1.bf16.msra.mxu0 %v1027
      %1034 = vmatprep.subr.bf16.mxu0 0
      %1035 = vmatpush1.bf16.msra.mxu0 0
      %1036 = vmatprep.subr.bf16.mxu0 0
      %1037 = vmatpush1.bf16.msra.mxu0 0
      %1038 = vmatprep.subr.bf16.mxu0 0
      %1039 = vmatpush1.bf16.msra.mxu0 0
      %1040 = vmatprep.subr.bf16.mxu0 0
      %1041 = vmatpush1.bf16.msra.mxu0 0
      %1042 = vmatprep.subr.bf16.mxu0 0
      %1043 = vmatpush1.bf16.msra.mxu0 0
      %1044 = vmatprep.subr.bf16.mxu0 0
      %1045 = vmatpush1.bf16.msra.mxu0 0
      %1046 = vmatprep.subr.bf16.mxu0 0
      %1047 = vmatpush1.bf16.msra.mxu0 0
      %1048 = vmatprep.subr.bf16.mxu0 0
      %1049 = vmatpush1.bf16.msra.mxu0 0
      %1050 = vmatprep.subr.bf16.mxu0 0
      %1051 = vmatpush1.bf16.msra.mxu0 0
      %1052 = vmatprep.subr.bf16.mxu0 0
      %1053 = vmatpush1.bf16.msra.mxu0 0
      %1054 = vmatprep.subr.bf16.mxu0 0
      %1055 = vmatpush1.bf16.msra.mxu0 0
      %1056 = vmatprep.subr.bf16.mxu0 0
      %1057 = vmatpush1.bf16.msra.mxu0 0
      %1058 = vmatprep.subr.bf16.mxu0 0
      %1059 = vmatpush1.bf16.msra.mxu0 0
      %1060 = vmatprep.subr.bf16.mxu0 0
      %1061 = vmatpush1.bf16.msra.mxu0 0
      %1062 = vmatprep.subr.bf16.mxu0 0
      %1063 = vmatpush1.bf16.msra.mxu0 0
      %1064 = vmatprep.mubr.bf16.mxu0 0
      %1065 = vmatmul.mubr.bf16.gmra.mrb[0].mxu0 %v1024
      %v1066 = vpop.f32.mrb[0].mxu0
      %v1067 = vadd.f32 0.0, %v1066
      %v1068 = vpop.f32.mrb[0].mxu0
      %v1069 = vadd.f32 0.0, %v1068
      %v1070 = vpop.f32.mrb[0].mxu0
      %v1071 = vadd.f32 0.0, %v1070
      %v1072 = vpop.f32.mrb[0].mxu0
      %v1073 = vadd.f32 0.0, %v1072
      %1074 = vdwg.mxu0
      %v1075 = vadd.f32 %v987, %v1067
      %v1076 = vadd.f32 %v988, %v1069
      %v1077 = vadd.f32 %v989, %v1071
      %v1078 = vadd.f32 %v990, %v1073
      %1079 = vrot.lane.b32.xlu0 %v469, 112
      %v1080 = vpop.permute.xlu0 %1079
      %1081 = vrot.lane.b32.xlu0 %v470, 112
      %v1082 = vpop.permute.xlu0 %1081
      %vm1083 = vcmp.lt.s32.totalorder %v488, 112
      %v1084 = vsel %vm1083, %v1080, %v1082
      %v1085 = vsel %vm1083, %v1082, %v1080
      %s1086 = scalar_lea.vmem %s9, 7
      %v1087 = vld [vmem:[%s1086] ss:$8 sm:$0x3]
      %v1089 = vlaneseq
      %v1090 = vshrl.u32 %v1089, 7
      %v1091 = vsub.s32 0, %v1090
      %v1092 = vrot.slane %v1087, %v1091
      %v1093 = vlaneseq
      %v1094 = vshrl.u32 %v1093, 7
      %v1095 = vsub.s32 1, %v1094
      %v1096 = vrot.slane %v1087, %v1095
      %v1099 = vmul.f32 %v1084, %v1092
      %v1100 = vmul.f32 %v1085, %v1096
      %s1101 = scalar_lea.vmem %s1, 56
      %v1102 = vld [vmem:[%s1101] sm:$0xf]
      %v1103 = vld [vmem:[%s1101 + $0x4] sm:$0xf]
      %v1104 = vpack.c.bf16 %v1099, %v1099
      %v1105 = vpack.c.bf16 %v1100, %v1100
      %v1108 = vunpack.c.l.b16 %v1102
      %v1109 = vunpack.c.l.b16 %v1103
      %v1110 = vpack.c.b16 %v1109, %v1108
      %v1112 = vsel %vm515, %v1110, 0
      %v1115 = vsel %vm519, %v1104, 0
      %v1118 = vsel %vm519, %v1105, 0
      %1120 = vmatprep.subr.bf16.mxu0 %v1118
      %1121 = vmatpush1.bf16.msra.mxu0 %v1115
      %1122 = vmatprep.subr.bf16.mxu0 0
      %1123 = vmatpush1.bf16.msra.mxu0 0
      %1124 = vmatprep.subr.bf16.mxu0 0
      %1125 = vmatpush1.bf16.msra.mxu0 0
      %1126 = vmatprep.subr.bf16.mxu0 0
      %1127 = vmatpush1.bf16.msra.mxu0 0
      %1128 = vmatprep.subr.bf16.mxu0 0
      %1129 = vmatpush1.bf16.msra.mxu0 0
      %1130 = vmatprep.subr.bf16.mxu0 0
      %1131 = vmatpush1.bf16.msra.mxu0 0
      %1132 = vmatprep.subr.bf16.mxu0 0
      %1133 = vmatpush1.bf16.msra.mxu0 0
      %1134 = vmatprep.subr.bf16.mxu0 0
      %1135 = vmatpush1.bf16.msra.mxu0 0
      %1136 = vmatprep.subr.bf16.mxu0 0
      %1137 = vmatpush1.bf16.msra.mxu0 0
      %1138 = vmatprep.subr.bf16.mxu0 0
      %1139 = vmatpush1.bf16.msra.mxu0 0
      %1140 = vmatprep.subr.bf16.mxu0 0
      %1141 = vmatpush1.bf16.msra.mxu0 0
      %1142 = vmatprep.subr.bf16.mxu0 0
      %1143 = vmatpush1.bf16.msra.mxu0 0
      %1144 = vmatprep.subr.bf16.mxu0 0
      %1145 = vmatpush1.bf16.msra.mxu0 0
      %1146 = vmatprep.subr.bf16.mxu0 0
      %1147 = vmatpush1.bf16.msra.mxu0 0
      %1148 = vmatprep.subr.bf16.mxu0 0
      %1149 = vmatpush1.bf16.msra.mxu0 0
      %1150 = vmatprep.subr.bf16.mxu0 0
      %1151 = vmatpush1.bf16.msra.mxu0 0
      %1152 = vmatprep.mubr.bf16.mxu0 0
      %1153 = vmatmul.mubr.bf16.gmra.mrb[0].mxu0 %v1112
      %v1154 = vpop.f32.mrb[0].mxu0
      %v1155 = vadd.f32 0.0, %v1154
      %v1156 = vpop.f32.mrb[0].mxu0
      %v1157 = vadd.f32 0.0, %v1156
      %v1158 = vpop.f32.mrb[0].mxu0
      %v1159 = vadd.f32 0.0, %v1158
      %v1160 = vpop.f32.mrb[0].mxu0
      %v1161 = vadd.f32 0.0, %v1160
      %1162 = vdwg.mxu0
      %v1163 = vadd.f32 %v1075, %v1155
      %v1164 = vadd.f32 %v1076, %v1157
      %v1165 = vadd.f32 %v1077, %v1159
      %v1166 = vadd.f32 %v1078, %v1161
      %1167 = vrot.lane.b32.xlu0 %v469, 111
      %v1168 = vpop.permute.xlu0 %1167
      %1169 = vrot.lane.b32.xlu0 %v470, 111
      %v1170 = vpop.permute.xlu0 %1169
      %vm1171 = vcmp.lt.s32.totalorder %v488, 111
      %v1172 = vsel %vm1171, %v1168, %v1170
      %v1173 = vsel %vm1171, %v1170, %v1168
      %s1174 = scalar_lea.vmem %s9, 16
      %v1175 = vld [vmem:[%s1174] ss:$8 sm:$0x3]
      %v1177 = vlaneseq
      %v1178 = vshrl.u32 %v1177, 7
      %v1179 = vsub.s32 0, %v1178
      %v1180 = vrot.slane %v1175, %v1179
      %v1181 = vlaneseq
      %v1182 = vshrl.u32 %v1181, 7
      %v1183 = vsub.s32 1, %v1182
      %v1184 = vrot.slane %v1175, %v1183
      %v1187 = vmul.f32 %v1172, %v1180
      %v1188 = vmul.f32 %v1173, %v1184
      %s1189 = scalar_lea.vmem %s1, 64
      %v1190 = vld [vmem:[%s1189] sm:$0xf]
      %v1191 = vld [vmem:[%s1189 + $0x4] sm:$0xf]
      %v1192 = vpack.c.bf16 %v1187, %v1187
      %v1193 = vpack.c.bf16 %v1188, %v1188
      %v1196 = vunpack.c.l.b16 %v1190
      %v1197 = vunpack.c.l.b16 %v1191
      %v1198 = vpack.c.b16 %v1197, %v1196
      %v1200 = vsel %vm515, %v1198, 0
      %v1203 = vsel %vm519, %v1192, 0
      %v1206 = vsel %vm519, %v1193, 0
      %1208 = vmatprep.subr.bf16.mxu0 %v1206
      %1209 = vmatpush1.bf16.msra.mxu0 %v1203
      %1210 = vmatprep.subr.bf16.mxu0 0
      %1211 = vmatpush1.bf16.msra.mxu0 0
      %1212 = vmatprep.subr.bf16.mxu0 0
      %1213 = vmatpush1.bf16.msra.mxu0 0
      %1214 = vmatprep.subr.bf16.mxu0 0
      %1215 = vmatpush1.bf16.msra.mxu0 0
      %1216 = vmatprep.subr.bf16.mxu0 0
      %1217 = vmatpush1.bf16.msra.mxu0 0
      %1218 = vmatprep.subr.bf16.mxu0 0
      %1219 = vmatpush1.bf16.msra.mxu0 0
      %1220 = vmatprep.subr.bf16.mxu0 0
      %1221 = vmatpush1.bf16.msra.mxu0 0
      %1222 = vmatprep.subr.bf16.mxu0 0
      %1223 = vmatpush1.bf16.msra.mxu0 0
      %1224 = vmatprep.subr.bf16.mxu0 0
      %1225 = vmatpush1.bf16.msra.mxu0 0
      %1226 = vmatprep.subr.bf16.mxu0 0
      %1227 = vmatpush1.bf16.msra.mxu0 0
      %1228 = vmatprep.subr.bf16.mxu0 0
      %1229 = vmatpush1.bf16.msra.mxu0 0
      %1230 = vmatprep.subr.bf16.mxu0 0
      %1231 = vmatpush1.bf16.msra.mxu0 0
      %1232 = vmatprep.subr.bf16.mxu0 0
      %1233 = vmatpush1.bf16.msra.mxu0 0
      %1234 = vmatprep.subr.bf16.mxu0 0
      %1235 = vmatpush1.bf16.msra.mxu0 0
      %1236 = vmatprep.subr.bf16.mxu0 0
      %1237 = vmatpush1.bf16.msra.mxu0 0
      %1238 = vmatprep.subr.bf16.mxu0 0
      %1239 = vmatpush1.bf16.msra.mxu0 0
      %1240 = vmatprep.mubr.bf16.mxu0 0
      %1241 = vmatmul.mubr.bf16.gmra.mrb[0].mxu0 %v1200
      %v1242 = vpop.f32.mrb[0].mxu0
      %v1243 = vadd.f32 0.0, %v1242
      %v1244 = vpop.f32.mrb[0].mxu0
      %v1245 = vadd.f32 0.0, %v1244
      %v1246 = vpop.f32.mrb[0].mxu0
      %v1247 = vadd.f32 0.0, %v1246
      %v1248 = vpop.f32.mrb[0].mxu0
      %v1249 = vadd.f32 0.0, %v1248
      %1250 = vdwg.mxu0
      %v1251 = vadd.f32 %v1163, %v1243
      %v1252 = vadd.f32 %v1164, %v1245
      %v1253 = vadd.f32 %v1165, %v1247
      %v1254 = vadd.f32 %v1166, %v1249
      %v1255 = vmax.f32 %v1251, 0.0
      %v1256 = vmax.f32 %v1252, 0.0
      %v1257 = vmax.f32 %v1253, 0.0
      %v1258 = vmax.f32 %v1254, 0.0
      %v1259 = vld [vmem:[%s4] sm:$0xff]
      %v1260 = vld [vmem:[%s4 + $0x8] sm:$0xff]
      %v1261 = vld [vmem:[%s4 + $0x10] sm:$0xff]
      %v1262 = vld [vmem:[%s4 + $0x18] sm:$0xff]
      %1264 = vset.pattern.permute.xlu0 0
      %1265 = vperm.xlu0 %1264, %v1259
      %v1266 = vpop.permute.xlu0 %1265
      %1269 = vset.pattern.permute.xlu0 0
      %1270 = vperm.xlu0 %1269, %v1260
      %v1271 = vpop.permute.xlu0 %1270
      %1274 = vset.pattern.permute.xlu0 0
      %1275 = vperm.xlu0 %1274, %v1261
      %v1276 = vpop.permute.xlu0 %1275
      %1279 = vset.pattern.permute.xlu0 0
      %1280 = vperm.xlu0 %1279, %v1262
      %v1281 = vpop.permute.xlu0 %1280
      %1283 = vrot.lane.b32.xlu0 %v1255, 17
      %v1284 = vpop.permute.xlu0 %1283
      %1285 = vrot.lane.b32.xlu0 %v1257, 17
      %v1286 = vpop.permute.xlu0 %1285
      %1287 = vrot.lane.b32.xlu0 %v1256, 17
      %v1288 = vpop.permute.xlu0 %1287
      %1289 = vrot.lane.b32.xlu0 %v1258, 17
      %v1290 = vpop.permute.xlu0 %1289
      %v1291 = vsel %vm489, %v1284, %v1288
      %v1292 = vsel %vm489, %v1286, %v1290
      %v1293 = vsel %vm489, %v1288, %v1284
      %v1294 = vsel %vm489, %v1290, %v1286
      %v1295 = vmul.f32 %v1293, %v497
      %v1296 = vmul.f32 %v1291, %v501
      %v1297 = vmul.f32 %v1294, %v497
      %v1298 = vmul.f32 %v1292, %v501
      %v1299 = vld [vmem:[%s3] sm:$0xf]
      %v1300 = vld [vmem:[%s3 + $0x4] sm:$0xf]
      %v1301 = vld [vmem:[%s3 + $0x8] sm:$0xf]
      %v1302 = vld [vmem:[%s3 + $0xc] sm:$0xf]
      %v1303 = vpack.c.bf16 %v1297, %v1295
      %v1304 = vpack.c.bf16 %v1298, %v1296
      %v1309 = vunpack.c.l.b16 %v1299
      %v1310 = vunpack.c.l.b16 %v1300
      %v1311 = vunpack.c.l.b16 %v1301
      %v1312 = vunpack.c.l.b16 %v1302
      %v1313 = vpack.c.b16 %v1310, %v1309
      %v1314 = vpack.c.b16 %v1312, %v1311
      %vm1315 = vcmask 130048
      %v1317 = vsel %vm1315, %v1313, 0
      %v1320 = vsel %vm1315, %v1314, 0
      %1322 = vmatprep.subr.bf16.mxu0 %v1304
      %1323 = vmatpush1.bf16.msra.mxu0 %v1303
      %1324 = vmatprep.subr.bf16.mxu0 0
      %1325 = vmatpush1.bf16.msra.mxu0 0
      %1326 = vmatprep.subr.bf16.mxu0 0
      %1327 = vmatpush1.bf16.msra.mxu0 0
      %1328 = vmatprep.subr.bf16.mxu0 0
      %1329 = vmatpush1.bf16.msra.mxu0 0
      %1330 = vmatprep.subr.bf16.mxu0 0
      %1331 = vmatpush1.bf16.msra.mxu0 0
      %1332 = vmatprep.subr.bf16.mxu0 0
      %1333 = vmatpush1.bf16.msra.mxu0 0
      %1334 = vmatprep.subr.bf16.mxu0 0
      %1335 = vmatpush1.bf16.msra.mxu0 0
      %1336 = vmatprep.subr.bf16.mxu0 0
      %1337 = vmatpush1.bf16.msra.mxu0 0
      %1338 = vmatprep.subr.bf16.mxu0 0
      %1339 = vmatpush1.bf16.msra.mxu0 0
      %1340 = vmatprep.subr.bf16.mxu0 0
      %1341 = vmatpush1.bf16.msra.mxu0 0
      %1342 = vmatprep.subr.bf16.mxu0 0
      %1343 = vmatpush1.bf16.msra.mxu0 0
      %1344 = vmatprep.subr.bf16.mxu0 0
      %1345 = vmatpush1.bf16.msra.mxu0 0
      %1346 = vmatprep.subr.bf16.mxu0 0
      %1347 = vmatpush1.bf16.msra.mxu0 0
      %1348 = vmatprep.subr.bf16.mxu0 0
      %1349 = vmatpush1.bf16.msra.mxu0 0
      %1350 = vmatprep.subr.bf16.mxu0 0
      %1351 = vmatpush1.bf16.msra.mxu0 0
      %1352 = vmatprep.subr.bf16.mxu0 0
      %1353 = vmatpush1.bf16.msra.mxu0 0
      %1354 = vmatprep.mubr.bf16.mxu0 0
      %1355 = vmatmul.mubr.bf16.gmra.mrb[0].mxu0 %v1317
      %v1356 = vpop.f32.mrb[0].mxu0
      %v1357 = vadd.f32 0.0, %v1356
      %v1358 = vpop.f32.mrb[0].mxu0
      %v1359 = vadd.f32 0.0, %v1358
      %v1360 = vpop.f32.mrb[0].mxu0
      %v1361 = vadd.f32 0.0, %v1360
      %v1362 = vpop.f32.mrb[0].mxu0
      %v1363 = vadd.f32 0.0, %v1362
      %1364 = vmatprep.mubr.bf16.mxu0 0
      %1365 = vmatmul.mubr.bf16.gmra.mrb[0].mxu0 %v1320
      %v1366 = vpop.f32.mrb[0].mxu0
      %v1367 = vadd.f32 0.0, %v1366
      %v1368 = vpop.f32.mrb[0].mxu0
      %v1369 = vadd.f32 0.0, %v1368
      %v1370 = vpop.f32.mrb[0].mxu0
      %v1371 = vadd.f32 0.0, %v1370
      %v1372 = vpop.f32.mrb[0].mxu0
      %v1373 = vadd.f32 0.0, %v1372
      %1374 = vdwg.mxu0
      %v1375 = vadd.f32 %v1266, %v1357
      %v1376 = vadd.f32 %v1266, %v1359
      %v1377 = vadd.f32 %v1271, %v1361
      %v1378 = vadd.f32 %v1271, %v1363
      %v1379 = vadd.f32 %v1276, %v1367
      %v1380 = vadd.f32 %v1276, %v1369
      %v1381 = vadd.f32 %v1281, %v1371
      %v1382 = vadd.f32 %v1281, %v1373
      %1383 = vrot.lane.b32.xlu0 %v1255, 16
      %v1384 = vpop.permute.xlu0 %1383
      %1385 = vrot.lane.b32.xlu0 %v1257, 16
      %v1386 = vpop.permute.xlu0 %1385
      %1387 = vrot.lane.b32.xlu0 %v1256, 16
      %v1388 = vpop.permute.xlu0 %1387
      %1389 = vrot.lane.b32.xlu0 %v1258, 16
      %v1390 = vpop.permute.xlu0 %1389
      %v1391 = vsel %vm577, %v1384, %v1388
      %v1392 = vsel %vm577, %v1386, %v1390
      %v1393 = vsel %vm577, %v1388, %v1384
      %v1394 = vsel %vm577, %v1390, %v1386
      %v1395 = vmul.f32 %v1393, %v586
      %v1396 = vmul.f32 %v1391, %v590
      %v1397 = vmul.f32 %v1394, %v586
      %v1398 = vmul.f32 %v1392, %v590
      %s1399 = scalar_lea.vmem %s3, 16
      %v1400 = vld [vmem:[%s1399] sm:$0xf]
      %v1401 = vld [vmem:[%s1399 + $0x4] sm:$0xf]
      %v1402 = vld [vmem:[%s1399 + $0x8] sm:$0xf]
      %v1403 = vld [vmem:[%s1399 + $0xc] sm:$0xf]
      %v1404 = vpack.c.bf16 %v1397, %v1395
      %v1405 = vpack.c.bf16 %v1398, %v1396
      %v1410 = vunpack.c.l.b16 %v1400
      %v1411 = vunpack.c.l.b16 %v1401
      %v1412 = vunpack.c.l.b16 %v1402
      %v1413 = vunpack.c.l.b16 %v1403
      %v1414 = vpack.c.b16 %v1411, %v1410
      %v1415 = vpack.c.b16 %v1413, %v1412
      %v1417 = vsel %vm1315, %v1414, 0
      %v1420 = vsel %vm1315, %v1415, 0
      %1422 = vmatprep.subr.bf16.mxu0 %v1405
      %1423 = vmatpush1.bf16.msra.mxu0 %v1404
      %1424 = vmatprep.subr.bf16.mxu0 0
      %1425 = vmatpush1.bf16.msra.mxu0 0
      %1426 = vmatprep.subr.bf16.mxu0 0
      %1427 = vmatpush1.bf16.msra.mxu0 0
      %1428 = vmatprep.subr.bf16.mxu0 0
      %1429 = vmatpush1.bf16.msra.mxu0 0
      %1430 = vmatprep.subr.bf16.mxu0 0
      %1431 = vmatpush1.bf16.msra.mxu0 0
      %1432 = vmatprep.subr.bf16.mxu0 0
      %1433 = vmatpush1.bf16.msra.mxu0 0
      %1434 = vmatprep.subr.bf16.mxu0 0
      %1435 = vmatpush1.bf16.msra.mxu0 0
      %1436 = vmatprep.subr.bf16.mxu0 0
      %1437 = vmatpush1.bf16.msra.mxu0 0
      %1438 = vmatprep.subr.bf16.mxu0 0
      %1439 = vmatpush1.bf16.msra.mxu0 0
      %1440 = vmatprep.subr.bf16.mxu0 0
      %1441 = vmatpush1.bf16.msra.mxu0 0
      %1442 = vmatprep.subr.bf16.mxu0 0
      %1443 = vmatpush1.bf16.msra.mxu0 0
      %1444 = vmatprep.subr.bf16.mxu0 0
      %1445 = vmatpush1.bf16.msra.mxu0 0
      %1446 = vmatprep.subr.bf16.mxu0 0
      %1447 = vmatpush1.bf16.msra.mxu0 0
      %1448 = vmatprep.subr.bf16.mxu0 0
      %1449 = vmatpush1.bf16.msra.mxu0 0
      %1450 = vmatprep.subr.bf16.mxu0 0
      %1451 = vmatpush1.bf16.msra.mxu0 0
      %1452 = vmatprep.subr.bf16.mxu0 0
      %1453 = vmatpush1.bf16.msra.mxu0 0
      %1454 = vmatprep.mubr.bf16.mxu0 0
      %1455 = vmatmul.mubr.bf16.gmra.mrb[0].mxu0 %v1417
      %v1456 = vpop.f32.mrb[0].mxu0
      %v1457 = vadd.f32 0.0, %v1456
      %v1458 = vpop.f32.mrb[0].mxu0
      %v1459 = vadd.f32 0.0, %v1458
      %v1460 = vpop.f32.mrb[0].mxu0
      %v1461 = vadd.f32 0.0, %v1460
      %v1462 = vpop.f32.mrb[0].mxu0
      %v1463 = vadd.f32 0.0, %v1462
      %1464 = vmatprep.mubr.bf16.mxu0 0
      %1465 = vmatmul.mubr.bf16.gmra.mrb[0].mxu0 %v1420
      %v1466 = vpop.f32.mrb[0].mxu0
      %v1467 = vadd.f32 0.0, %v1466
      %v1468 = vpop.f32.mrb[0].mxu0
      %v1469 = vadd.f32 0.0, %v1468
      %v1470 = vpop.f32.mrb[0].mxu0
      %v1471 = vadd.f32 0.0, %v1470
      %v1472 = vpop.f32.mrb[0].mxu0
      %v1473 = vadd.f32 0.0, %v1472
      %1474 = vdwg.mxu0
      %v1475 = vadd.f32 %v1375, %v1457
      %v1476 = vadd.f32 %v1376, %v1459
      %v1477 = vadd.f32 %v1377, %v1461
      %v1478 = vadd.f32 %v1378, %v1463
      %v1479 = vadd.f32 %v1379, %v1467
      %v1480 = vadd.f32 %v1380, %v1469
      %v1481 = vadd.f32 %v1381, %v1471
      %v1482 = vadd.f32 %v1382, %v1473
      %1483 = vrot.lane.b32.xlu0 %v1255, 15
      %v1484 = vpop.permute.xlu0 %1483
      %1485 = vrot.lane.b32.xlu0 %v1257, 15
      %v1486 = vpop.permute.xlu0 %1485
      %1487 = vrot.lane.b32.xlu0 %v1256, 15
      %v1488 = vpop.permute.xlu0 %1487
      %1489 = vrot.lane.b32.xlu0 %v1258, 15
      %v1490 = vpop.permute.xlu0 %1489
      %v1491 = vsel %vm665, %v1484, %v1488
      %v1492 = vsel %vm665, %v1486, %v1490
      %v1493 = vsel %vm665, %v1488, %v1484
      %v1494 = vsel %vm665, %v1490, %v1486
      %v1495 = vmul.f32 %v1493, %v674
      %v1496 = vmul.f32 %v1491, %v678
      %v1497 = vmul.f32 %v1494, %v674
      %v1498 = vmul.f32 %v1492, %v678
      %s1499 = scalar_lea.vmem %s3, 32
      %v1500 = vld [vmem:[%s1499] sm:$0xf]
      %v1501 = vld [vmem:[%s1499 + $0x4] sm:$0xf]
      %v1502 = vld [vmem:[%s1499 + $0x8] sm:$0xf]
      %v1503 = vld [vmem:[%s1499 + $0xc] sm:$0xf]
      %v1504 = vpack.c.bf16 %v1497, %v1495
      %v1505 = vpack.c.bf16 %v1498, %v1496
      %v1510 = vunpack.c.l.b16 %v1500
      %v1511 = vunpack.c.l.b16 %v1501
      %v1512 = vunpack.c.l.b16 %v1502
      %v1513 = vunpack.c.l.b16 %v1503
      %v1514 = vpack.c.b16 %v1511, %v1510
      %v1515 = vpack.c.b16 %v1513, %v1512
      %v1517 = vsel %vm1315, %v1514, 0
      %v1520 = vsel %vm1315, %v1515, 0
      %1522 = vmatprep.subr.bf16.mxu0 %v1505
      %1523 = vmatpush1.bf16.msra.mxu0 %v1504
      %1524 = vmatprep.subr.bf16.mxu0 0
      %1525 = vmatpush1.bf16.msra.mxu0 0
      %1526 = vmatprep.subr.bf16.mxu0 0
      %1527 = vmatpush1.bf16.msra.mxu0 0
      %1528 = vmatprep.subr.bf16.mxu0 0
      %1529 = vmatpush1.bf16.msra.mxu0 0
      %1530 = vmatprep.subr.bf16.mxu0 0
      %1531 = vmatpush1.bf16.msra.mxu0 0
      %1532 = vmatprep.subr.bf16.mxu0 0
      %1533 = vmatpush1.bf16.msra.mxu0 0
      %1534 = vmatprep.subr.bf16.mxu0 0
      %1535 = vmatpush1.bf16.msra.mxu0 0
      %1536 = vmatprep.subr.bf16.mxu0 0
      %1537 = vmatpush1.bf16.msra.mxu0 0
      %1538 = vmatprep.subr.bf16.mxu0 0
      %1539 = vmatpush1.bf16.msra.mxu0 0
      %1540 = vmatprep.subr.bf16.mxu0 0
      %1541 = vmatpush1.bf16.msra.mxu0 0
      %1542 = vmatprep.subr.bf16.mxu0 0
      %1543 = vmatpush1.bf16.msra.mxu0 0
      %1544 = vmatprep.subr.bf16.mxu0 0
      %1545 = vmatpush1.bf16.msra.mxu0 0
      %1546 = vmatprep.subr.bf16.mxu0 0
      %1547 = vmatpush1.bf16.msra.mxu0 0
      %1548 = vmatprep.subr.bf16.mxu0 0
      %1549 = vmatpush1.bf16.msra.mxu0 0
      %1550 = vmatprep.subr.bf16.mxu0 0
      %1551 = vmatpush1.bf16.msra.mxu0 0
      %1552 = vmatprep.subr.bf16.mxu0 0
      %1553 = vmatpush1.bf16.msra.mxu0 0
      %1554 = vmatprep.mubr.bf16.mxu0 0
      %1555 = vmatmul.mubr.bf16.gmra.mrb[0].mxu0 %v1517
      %v1556 = vpop.f32.mrb[0].mxu0
      %v1557 = vadd.f32 0.0, %v1556
      %v1558 = vpop.f32.mrb[0].mxu0
      %v1559 = vadd.f32 0.0, %v1558
      %v1560 = vpop.f32.mrb[0].mxu0
      %v1561 = vadd.f32 0.0, %v1560
      %v1562 = vpop.f32.mrb[0].mxu0
      %v1563 = vadd.f32 0.0, %v1562
      %1564 = vmatprep.mubr.bf16.mxu0 0
      %1565 = vmatmul.mubr.bf16.gmra.mrb[0].mxu0 %v1520
      %v1566 = vpop.f32.mrb[0].mxu0
      %v1567 = vadd.f32 0.0, %v1566
      %v1568 = vpop.f32.mrb[0].mxu0
      %v1569 = vadd.f32 0.0, %v1568
      %v1570 = vpop.f32.mrb[0].mxu0
      %v1571 = vadd.f32 0.0, %v1570
      %v1572 = vpop.f32.mrb[0].mxu0
      %v1573 = vadd.f32 0.0, %v1572
      %1574 = vdwg.mxu0
      %v1575 = vadd.f32 %v1475, %v1557
      %v1576 = vadd.f32 %v1476, %v1559
      %v1577 = vadd.f32 %v1477, %v1561
      %v1578 = vadd.f32 %v1478, %v1563
      %v1579 = vadd.f32 %v1479, %v1567
      %v1580 = vadd.f32 %v1480, %v1569
      %v1581 = vadd.f32 %v1481, %v1571
      %v1582 = vadd.f32 %v1482, %v1573
      %1583 = vrot.lane.b32.xlu0 %v1255, 1
      %v1584 = vpop.permute.xlu0 %1583
      %1585 = vrot.lane.b32.xlu0 %v1257, 1
      %v1586 = vpop.permute.xlu0 %1585
      %1587 = vrot.lane.b32.xlu0 %v1256, 1
      %v1588 = vpop.permute.xlu0 %1587
      %1589 = vrot.lane.b32.xlu0 %v1258, 1
      %v1590 = vpop.permute.xlu0 %1589
      %v1591 = vsel %vm753, %v1584, %v1588
      %v1592 = vsel %vm753, %v1586, %v1590
      %v1593 = vsel %vm753, %v1588, %v1584
      %v1594 = vsel %vm753, %v1590, %v1586
      %v1595 = vmul.f32 %v1593, %v762
      %v1596 = vmul.f32 %v1591, %v766
      %v1597 = vmul.f32 %v1594, %v762
      %v1598 = vmul.f32 %v1592, %v766
      %s1599 = scalar_lea.vmem %s3, 48
      %v1600 = vld [vmem:[%s1599] sm:$0xf]
      %v1601 = vld [vmem:[%s1599 + $0x4] sm:$0xf]
      %v1602 = vld [vmem:[%s1599 + $0x8] sm:$0xf]
      %v1603 = vld [vmem:[%s1599 + $0xc] sm:$0xf]
      %v1604 = vpack.c.bf16 %v1597, %v1595
      %v1605 = vpack.c.bf16 %v1598, %v1596
      %v1610 = vunpack.c.l.b16 %v1600
      %v1611 = vunpack.c.l.b16 %v1601
      %v1612 = vunpack.c.l.b16 %v1602
      %v1613 = vunpack.c.l.b16 %v1603
      %v1614 = vpack.c.b16 %v1611, %v1610
      %v1615 = vpack.c.b16 %v1613, %v1612
      %v1617 = vsel %vm1315, %v1614, 0
      %v1620 = vsel %vm1315, %v1615, 0
      %1622 = vmatprep.subr.bf16.mxu0 %v1605
      %1623 = vmatpush1.bf16.msra.mxu0 %v1604
      %1624 = vmatprep.subr.bf16.mxu0 0
      %1625 = vmatpush1.bf16.msra.mxu0 0
      %1626 = vmatprep.subr.bf16.mxu0 0
      %1627 = vmatpush1.bf16.msra.mxu0 0
      %1628 = vmatprep.subr.bf16.mxu0 0
      %1629 = vmatpush1.bf16.msra.mxu0 0
      %1630 = vmatprep.subr.bf16.mxu0 0
      %1631 = vmatpush1.bf16.msra.mxu0 0
      %1632 = vmatprep.subr.bf16.mxu0 0
      %1633 = vmatpush1.bf16.msra.mxu0 0
      %1634 = vmatprep.subr.bf16.mxu0 0
      %1635 = vmatpush1.bf16.msra.mxu0 0
      %1636 = vmatprep.subr.bf16.mxu0 0
      %1637 = vmatpush1.bf16.msra.mxu0 0
      %1638 = vmatprep.subr.bf16.mxu0 0
      %1639 = vmatpush1.bf16.msra.mxu0 0
      %1640 = vmatprep.subr.bf16.mxu0 0
      %1641 = vmatpush1.bf16.msra.mxu0 0
      %1642 = vmatprep.subr.bf16.mxu0 0
      %1643 = vmatpush1.bf16.msra.mxu0 0
      %1644 = vmatprep.subr.bf16.mxu0 0
      %1645 = vmatpush1.bf16.msra.mxu0 0
      %1646 = vmatprep.subr.bf16.mxu0 0
      %1647 = vmatpush1.bf16.msra.mxu0 0
      %1648 = vmatprep.subr.bf16.mxu0 0
      %1649 = vmatpush1.bf16.msra.mxu0 0
      %1650 = vmatprep.subr.bf16.mxu0 0
      %1651 = vmatpush1.bf16.msra.mxu0 0
      %1652 = vmatprep.subr.bf16.mxu0 0
      %1653 = vmatpush1.bf16.msra.mxu0 0
      %1654 = vmatprep.mubr.bf16.mxu0 0
      %1655 = vmatmul.mubr.bf16.gmra.mrb[0].mxu0 %v1617
      %v1656 = vpop.f32.mrb[0].mxu0
      %v1657 = vadd.f32 0.0, %v1656
      %v1658 = vpop.f32.mrb[0].mxu0
      %v1659 = vadd.f32 0.0, %v1658
      %v1660 = vpop.f32.mrb[0].mxu0
      %v1661 = vadd.f32 0.0, %v1660
      %v1662 = vpop.f32.mrb[0].mxu0
      %v1663 = vadd.f32 0.0, %v1662
      %1664 = vmatprep.mubr.bf16.mxu0 0
      %1665 = vmatmul.mubr.bf16.gmra.mrb[0].mxu0 %v1620
      %v1666 = vpop.f32.mrb[0].mxu0
      %v1667 = vadd.f32 0.0, %v1666
      %v1668 = vpop.f32.mrb[0].mxu0
      %v1669 = vadd.f32 0.0, %v1668
      %v1670 = vpop.f32.mrb[0].mxu0
      %v1671 = vadd.f32 0.0, %v1670
      %v1672 = vpop.f32.mrb[0].mxu0
      %v1673 = vadd.f32 0.0, %v1672
      %1674 = vdwg.mxu0
      %v1675 = vadd.f32 %v1575, %v1657
      %v1676 = vadd.f32 %v1576, %v1659
      %v1677 = vadd.f32 %v1577, %v1661
      %v1678 = vadd.f32 %v1578, %v1663
      %v1679 = vadd.f32 %v1579, %v1667
      %v1680 = vadd.f32 %v1580, %v1669
      %v1681 = vadd.f32 %v1581, %v1671
      %v1682 = vadd.f32 %v1582, %v1673
      %s1683 = scalar_lea.vmem %s3, 64
      %v1684 = vld [vmem:[%s1683] sm:$0xf]
      %v1685 = vld [vmem:[%s1683 + $0x4] sm:$0xf]
      %v1686 = vld [vmem:[%s1683 + $0x8] sm:$0xf]
      %v1687 = vld [vmem:[%s1683 + $0xc] sm:$0xf]
      %v1688 = vpack.c.bf16 %v1257, %v1255
      %v1689 = vpack.c.bf16 %v1258, %v1256
      %v1694 = vunpack.c.l.b16 %v1684
      %v1695 = vunpack.c.l.b16 %v1685
      %v1696 = vunpack.c.l.b16 %v1686
      %v1697 = vunpack.c.l.b16 %v1687
      %v1698 = vpack.c.b16 %v1695, %v1694
      %v1699 = vpack.c.b16 %v1697, %v1696
      %v1701 = vsel %vm1315, %v1698, 0
      %v1704 = vsel %vm1315, %v1699, 0
      %1706 = vmatprep.subr.bf16.mxu0 %v1689
      %1707 = vmatpush1.bf16.msra.mxu0 %v1688
      %1708 = vmatprep.subr.bf16.mxu0 0
      %1709 = vmatpush1.bf16.msra.mxu0 0
      %1710 = vmatprep.subr.bf16.mxu0 0
      %1711 = vmatpush1.bf16.msra.mxu0 0
      %1712 = vmatprep.subr.bf16.mxu0 0
      %1713 = vmatpush1.bf16.msra.mxu0 0
      %1714 = vmatprep.subr.bf16.mxu0 0
      %1715 = vmatpush1.bf16.msra.mxu0 0
      %1716 = vmatprep.subr.bf16.mxu0 0
      %1717 = vmatpush1.bf16.msra.mxu0 0
      %1718 = vmatprep.subr.bf16.mxu0 0
      %1719 = vmatpush1.bf16.msra.mxu0 0
      %1720 = vmatprep.subr.bf16.mxu0 0
      %1721 = vmatpush1.bf16.msra.mxu0 0
      %1722 = vmatprep.subr.bf16.mxu0 0
      %1723 = vmatpush1.bf16.msra.mxu0 0
      %1724 = vmatprep.subr.bf16.mxu0 0
      %1725 = vmatpush1.bf16.msra.mxu0 0
      %1726 = vmatprep.subr.bf16.mxu0 0
      %1727 = vmatpush1.bf16.msra.mxu0 0
      %1728 = vmatprep.subr.bf16.mxu0 0
      %1729 = vmatpush1.bf16.msra.mxu0 0
      %1730 = vmatprep.subr.bf16.mxu0 0
      %1731 = vmatpush1.bf16.msra.mxu0 0
      %1732 = vmatprep.subr.bf16.mxu0 0
      %1733 = vmatpush1.bf16.msra.mxu0 0
      %1734 = vmatprep.subr.bf16.mxu0 0
      %1735 = vmatpush1.bf16.msra.mxu0 0
      %1736 = vmatprep.subr.bf16.mxu0 0
      %1737 = vmatpush1.bf16.msra.mxu0 0
      %1738 = vmatprep.mubr.bf16.mxu0 0
      %1739 = vmatmul.mubr.bf16.gmra.mrb[0].mxu0 %v1701
      %v1740 = vpop.f32.mrb[0].mxu0
      %v1741 = vadd.f32 0.0, %v1740
      %v1742 = vpop.f32.mrb[0].mxu0
      %v1743 = vadd.f32 0.0, %v1742
      %v1744 = vpop.f32.mrb[0].mxu0
      %v1745 = vadd.f32 0.0, %v1744
      %v1746 = vpop.f32.mrb[0].mxu0
      %v1747 = vadd.f32 0.0, %v1746
      %1748 = vmatprep.mubr.bf16.mxu0 0
      %1749 = vmatmul.mubr.bf16.gmra.mrb[0].mxu0 %v1704
      %v1750 = vpop.f32.mrb[0].mxu0
      %v1751 = vadd.f32 0.0, %v1750
      %v1752 = vpop.f32.mrb[0].mxu0
      %v1753 = vadd.f32 0.0, %v1752
      %v1754 = vpop.f32.mrb[0].mxu0
      %v1755 = vadd.f32 0.0, %v1754
      %v1756 = vpop.f32.mrb[0].mxu0
      %v1757 = vadd.f32 0.0, %v1756
      %1758 = vdwg.mxu0
      %v1759 = vadd.f32 %v1675, %v1741
      %v1760 = vadd.f32 %v1676, %v1743
      %v1761 = vadd.f32 %v1677, %v1745
      %v1762 = vadd.f32 %v1678, %v1747
      %v1763 = vadd.f32 %v1679, %v1751
      %v1764 = vadd.f32 %v1680, %v1753
      %v1765 = vadd.f32 %v1681, %v1755
      %v1766 = vadd.f32 %v1682, %v1757
      %1767 = vrot.lane.b32.xlu0 %v1255, 127
      %v1768 = vpop.permute.xlu0 %1767
      %1769 = vrot.lane.b32.xlu0 %v1257, 127
      %v1770 = vpop.permute.xlu0 %1769
      %1771 = vrot.lane.b32.xlu0 %v1256, 127
      %v1772 = vpop.permute.xlu0 %1771
      %1773 = vrot.lane.b32.xlu0 %v1258, 127
      %v1774 = vpop.permute.xlu0 %1773
      %v1775 = vsel %vm907, %v1768, %v1772
      %v1776 = vsel %vm907, %v1770, %v1774
      %v1777 = vsel %vm907, %v1772, %v1768
      %v1778 = vsel %vm907, %v1774, %v1770
      %v1779 = vmul.f32 %v1775, %v916
      %v1780 = vmul.f32 %v1777, %v920
      %v1781 = vmul.f32 %v1776, %v916
      %v1782 = vmul.f32 %v1778, %v920
      %s1783 = scalar_lea.vmem %s3, 80
      %v1784 = vld [vmem:[%s1783] sm:$0xf]
      %v1785 = vld [vmem:[%s1783 + $0x4] sm:$0xf]
      %v1786 = vld [vmem:[%s1783 + $0x8] sm:$0xf]
      %v1787 = vld [vmem:[%s1783 + $0xc] sm:$0xf]
      %v1788 = vpack.c.bf16 %v1781, %v1779
      %v1789 = vpack.c.bf16 %v1782, %v1780
      %v1794 = vunpack.c.l.b16 %v1784
      %v1795 = vunpack.c.l.b16 %v1785
      %v1796 = vunpack.c.l.b16 %v1786
      %v1797 = vunpack.c.l.b16 %v1787
      %v1798 = vpack.c.b16 %v1795, %v1794
      %v1799 = vpack.c.b16 %v1797, %v1796
      %v1801 = vsel %vm1315, %v1798, 0
      %v1804 = vsel %vm1315, %v1799, 0
      %1806 = vmatprep.subr.bf16.mxu0 %v1789
      %1807 = vmatpush1.bf16.msra.mxu0 %v1788
      %1808 = vmatprep.subr.bf16.mxu0 0
      %1809 = vmatpush1.bf16.msra.mxu0 0
      %1810 = vmatprep.subr.bf16.mxu0 0
      %1811 = vmatpush1.bf16.msra.mxu0 0
      %1812 = vmatprep.subr.bf16.mxu0 0
      %1813 = vmatpush1.bf16.msra.mxu0 0
      %1814 = vmatprep.subr.bf16.mxu0 0
      %1815 = vmatpush1.bf16.msra.mxu0 0
      %1816 = vmatprep.subr.bf16.mxu0 0
      %1817 = vmatpush1.bf16.msra.mxu0 0
      %1818 = vmatprep.subr.bf16.mxu0 0
      %1819 = vmatpush1.bf16.msra.mxu0 0
      %1820 = vmatprep.subr.bf16.mxu0 0
      %1821 = vmatpush1.bf16.msra.mxu0 0
      %1822 = vmatprep.subr.bf16.mxu0 0
      %1823 = vmatpush1.bf16.msra.mxu0 0
      %1824 = vmatprep.subr.bf16.mxu0 0
      %1825 = vmatpush1.bf16.msra.mxu0 0
      %1826 = vmatprep.subr.bf16.mxu0 0
      %1827 = vmatpush1.bf16.msra.mxu0 0
      %1828 = vmatprep.subr.bf16.mxu0 0
      %1829 = vmatpush1.bf16.msra.mxu0 0
      %1830 = vmatprep.subr.bf16.mxu0 0
      %1831 = vmatpush1.bf16.msra.mxu0 0
      %1832 = vmatprep.subr.bf16.mxu0 0
      %1833 = vmatpush1.bf16.msra.mxu0 0
      %1834 = vmatprep.subr.bf16.mxu0 0
      %1835 = vmatpush1.bf16.msra.mxu0 0
      %1836 = vmatprep.subr.bf16.mxu0 0
      %1837 = vmatpush1.bf16.msra.mxu0 0
      %1838 = vmatprep.mubr.bf16.mxu0 0
      %1839 = vmatmul.mubr.bf16.gmra.mrb[0].mxu0 %v1801
      %v1840 = vpop.f32.mrb[0].mxu0
      %v1841 = vadd.f32 0.0, %v1840
      %v1842 = vpop.f32.mrb[0].mxu0
      %v1843 = vadd.f32 0.0, %v1842
      %v1844 = vpop.f32.mrb[0].mxu0
      %v1845 = vadd.f32 0.0, %v1844
      %v1846 = vpop.f32.mrb[0].mxu0
      %v1847 = vadd.f32 0.0, %v1846
      %1848 = vmatprep.mubr.bf16.mxu0 0
      %1849 = vmatmul.mubr.bf16.gmra.mrb[0].mxu0 %v1804
      %v1850 = vpop.f32.mrb[0].mxu0
      %v1851 = vadd.f32 0.0, %v1850
      %v1852 = vpop.f32.mrb[0].mxu0
      %v1853 = vadd.f32 0.0, %v1852
      %v1854 = vpop.f32.mrb[0].mxu0
      %v1855 = vadd.f32 0.0, %v1854
      %v1856 = vpop.f32.mrb[0].mxu0
      %v1857 = vadd.f32 0.0, %v1856
      %1858 = vdwg.mxu0
      %v1859 = vadd.f32 %v1759, %v1841
      %v1860 = vadd.f32 %v1760, %v1843
      %v1861 = vadd.f32 %v1761, %v1845
      %v1862 = vadd.f32 %v1762, %v1847
      %v1863 = vadd.f32 %v1763, %v1851
      %v1864 = vadd.f32 %v1764, %v1853
      %v1865 = vadd.f32 %v1765, %v1855
      %v1866 = vadd.f32 %v1766, %v1857
      %1867 = vrot.lane.b32.xlu0 %v1255, 113
      %v1868 = vpop.permute.xlu0 %1867
      %1869 = vrot.lane.b32.xlu0 %v1257, 113
      %v1870 = vpop.permute.xlu0 %1869
      %1871 = vrot.lane.b32.xlu0 %v1256, 113
      %v1872 = vpop.permute.xlu0 %1871
      %1873 = vrot.lane.b32.xlu0 %v1258, 113
      %v1874 = vpop.permute.xlu0 %1873
      %v1875 = vsel %vm995, %v1868, %v1872
      %v1876 = vsel %vm995, %v1870, %v1874
      %v1877 = vsel %vm995, %v1872, %v1868
      %v1878 = vsel %vm995, %v1874, %v1870
      %v1879 = vmul.f32 %v1875, %v1004
      %v1880 = vmul.f32 %v1877, %v1008
      %v1881 = vmul.f32 %v1876, %v1004
      %v1882 = vmul.f32 %v1878, %v1008
      %s1883 = scalar_lea.vmem %s3, 96
      %v1884 = vld [vmem:[%s1883] sm:$0xf]
      %v1885 = vld [vmem:[%s1883 + $0x4] sm:$0xf]
      %v1886 = vld [vmem:[%s1883 + $0x8] sm:$0xf]
      %v1887 = vld [vmem:[%s1883 + $0xc] sm:$0xf]
      %v1888 = vpack.c.bf16 %v1881, %v1879
      %v1889 = vpack.c.bf16 %v1882, %v1880
      %v1894 = vunpack.c.l.b16 %v1884
      %v1895 = vunpack.c.l.b16 %v1885
      %v1896 = vunpack.c.l.b16 %v1886
      %v1897 = vunpack.c.l.b16 %v1887
      %v1898 = vpack.c.b16 %v1895, %v1894
      %v1899 = vpack.c.b16 %v1897, %v1896
      %v1901 = vsel %vm1315, %v1898, 0
      %v1904 = vsel %vm1315, %v1899, 0
      %1906 = vmatprep.subr.bf16.mxu0 %v1889
      %1907 = vmatpush1.bf16.msra.mxu0 %v1888
      %1908 = vmatprep.subr.bf16.mxu0 0
      %1909 = vmatpush1.bf16.msra.mxu0 0
      %1910 = vmatprep.subr.bf16.mxu0 0
      %1911 = vmatpush1.bf16.msra.mxu0 0
      %1912 = vmatprep.subr.bf16.mxu0 0
      %1913 = vmatpush1.bf16.msra.mxu0 0
      %1914 = vmatprep.subr.bf16.mxu0 0
      %1915 = vmatpush1.bf16.msra.mxu0 0
      %1916 = vmatprep.subr.bf16.mxu0 0
      %1917 = vmatpush1.bf16.msra.mxu0 0
      %1918 = vmatprep.subr.bf16.mxu0 0
      %1919 = vmatpush1.bf16.msra.mxu0 0
      %1920 = vmatprep.subr.bf16.mxu0 0
      %1921 = vmatpush1.bf16.msra.mxu0 0
      %1922 = vmatprep.subr.bf16.mxu0 0
      %1923 = vmatpush1.bf16.msra.mxu0 0
      %1924 = vmatprep.subr.bf16.mxu0 0
      %1925 = vmatpush1.bf16.msra.mxu0 0
      %1926 = vmatprep.subr.bf16.mxu0 0
      %1927 = vmatpush1.bf16.msra.mxu0 0
      %1928 = vmatprep.subr.bf16.mxu0 0
      %1929 = vmatpush1.bf16.msra.mxu0 0
      %1930 = vmatprep.subr.bf16.mxu0 0
      %1931 = vmatpush1.bf16.msra.mxu0 0
      %1932 = vmatprep.subr.bf16.mxu0 0
      %1933 = vmatpush1.bf16.msra.mxu0 0
      %1934 = vmatprep.subr.bf16.mxu0 0
      %1935 = vmatpush1.bf16.msra.mxu0 0
      %1936 = vmatprep.subr.bf16.mxu0 0
      %1937 = vmatpush1.bf16.msra.mxu0 0
      %1938 = vmatprep.mubr.bf16.mxu0 0
      %1939 = vmatmul.mubr.bf16.gmra.mrb[0].mxu0 %v1901
      %v1940 = vpop.f32.mrb[0].mxu0
      %v1941 = vadd.f32 0.0, %v1940
      %v1942 = vpop.f32.mrb[0].mxu0
      %v1943 = vadd.f32 0.0, %v1942
      %v1944 = vpop.f32.mrb[0].mxu0
      %v1945 = vadd.f32 0.0, %v1944
      %v1946 = vpop.f32.mrb[0].mxu0
      %v1947 = vadd.f32 0.0, %v1946
      %1948 = vmatprep.mubr.bf16.mxu0 0
      %1949 = vmatmul.mubr.bf16.gmra.mrb[0].mxu0 %v1904
      %v1950 = vpop.f32.mrb[0].mxu0
      %v1951 = vadd.f32 0.0, %v1950
      %v1952 = vpop.f32.mrb[0].mxu0
      %v1953 = vadd.f32 0.0, %v1952
      %v1954 = vpop.f32.mrb[0].mxu0
      %v1955 = vadd.f32 0.0, %v1954
      %v1956 = vpop.f32.mrb[0].mxu0
      %v1957 = vadd.f32 0.0, %v1956
      %1958 = vdwg.mxu0
      %v1959 = vadd.f32 %v1859, %v1941
      %v1960 = vadd.f32 %v1860, %v1943
      %v1961 = vadd.f32 %v1861, %v1945
      %v1962 = vadd.f32 %v1862, %v1947
      %v1963 = vadd.f32 %v1863, %v1951
      %v1964 = vadd.f32 %v1864, %v1953
      %v1965 = vadd.f32 %v1865, %v1955
      %v1966 = vadd.f32 %v1866, %v1957
      %1967 = vrot.lane.b32.xlu0 %v1255, 112
      %v1968 = vpop.permute.xlu0 %1967
      %1969 = vrot.lane.b32.xlu0 %v1257, 112
      %v1970 = vpop.permute.xlu0 %1969
      %1971 = vrot.lane.b32.xlu0 %v1256, 112
      %v1972 = vpop.permute.xlu0 %1971
      %1973 = vrot.lane.b32.xlu0 %v1258, 112
      %v1974 = vpop.permute.xlu0 %1973
      %v1975 = vsel %vm1083, %v1968, %v1972
      %v1976 = vsel %vm1083, %v1970, %v1974
      %v1977 = vsel %vm1083, %v1972, %v1968
      %v1978 = vsel %vm1083, %v1974, %v1970
      %v1979 = vmul.f32 %v1975, %v1092
      %v1980 = vmul.f32 %v1977, %v1096
      %v1981 = vmul.f32 %v1976, %v1092
      %v1982 = vmul.f32 %v1978, %v1096
      %s1983 = scalar_lea.vmem %s3, 112
      %v1984 = vld [vmem:[%s1983] sm:$0xf]
      %v1985 = vld [vmem:[%s1983 + $0x4] sm:$0xf]
      %v1986 = vld [vmem:[%s1983 + $0x8] sm:$0xf]
      %v1987 = vld [vmem:[%s1983 + $0xc] sm:$0xf]
      %v1988 = vpack.c.bf16 %v1981, %v1979
      %v1989 = vpack.c.bf16 %v1982, %v1980
      %v1994 = vunpack.c.l.b16 %v1984
      %v1995 = vunpack.c.l.b16 %v1985
      %v1996 = vunpack.c.l.b16 %v1986
      %v1997 = vunpack.c.l.b16 %v1987
      %v1998 = vpack.c.b16 %v1995, %v1994
      %v1999 = vpack.c.b16 %v1997, %v1996
      %v2001 = vsel %vm1315, %v1998, 0
      %v2004 = vsel %vm1315, %v1999, 0
      %2006 = vmatprep.subr.bf16.mxu0 %v1989
      %2007 = vmatpush1.bf16.msra.mxu0 %v1988
      %2008 = vmatprep.subr.bf16.mxu0 0
      %2009 = vmatpush1.bf16.msra.mxu0 0
      %2010 = vmatprep.subr.bf16.mxu0 0
      %2011 = vmatpush1.bf16.msra.mxu0 0
      %2012 = vmatprep.subr.bf16.mxu0 0
      %2013 = vmatpush1.bf16.msra.mxu0 0
      %2014 = vmatprep.subr.bf16.mxu0 0
      %2015 = vmatpush1.bf16.msra.mxu0 0
      %2016 = vmatprep.subr.bf16.mxu0 0
      %2017 = vmatpush1.bf16.msra.mxu0 0
      %2018 = vmatprep.subr.bf16.mxu0 0
      %2019 = vmatpush1.bf16.msra.mxu0 0
      %2020 = vmatprep.subr.bf16.mxu0 0
      %2021 = vmatpush1.bf16.msra.mxu0 0
      %2022 = vmatprep.subr.bf16.mxu0 0
      %2023 = vmatpush1.bf16.msra.mxu0 0
      %2024 = vmatprep.subr.bf16.mxu0 0
      %2025 = vmatpush1.bf16.msra.mxu0 0
      %2026 = vmatprep.subr.bf16.mxu0 0
      %2027 = vmatpush1.bf16.msra.mxu0 0
      %2028 = vmatprep.subr.bf16.mxu0 0
      %2029 = vmatpush1.bf16.msra.mxu0 0
      %2030 = vmatprep.subr.bf16.mxu0 0
      %2031 = vmatpush1.bf16.msra.mxu0 0
      %2032 = vmatprep.subr.bf16.mxu0 0
      %2033 = vmatpush1.bf16.msra.mxu0 0
      %2034 = vmatprep.subr.bf16.mxu0 0
      %2035 = vmatpush1.bf16.msra.mxu0 0
      %2036 = vmatprep.subr.bf16.mxu0 0
      %2037 = vmatpush1.bf16.msra.mxu0 0
      %2038 = vmatprep.mubr.bf16.mxu0 0
      %2039 = vmatmul.mubr.bf16.gmra.mrb[0].mxu0 %v2001
      %v2040 = vpop.f32.mrb[0].mxu0
      %v2041 = vadd.f32 0.0, %v2040
      %v2042 = vpop.f32.mrb[0].mxu0
      %v2043 = vadd.f32 0.0, %v2042
      %v2044 = vpop.f32.mrb[0].mxu0
      %v2045 = vadd.f32 0.0, %v2044
      %v2046 = vpop.f32.mrb[0].mxu0
      %v2047 = vadd.f32 0.0, %v2046
      %2048 = vmatprep.mubr.bf16.mxu0 0
      %2049 = vmatmul.mubr.bf16.gmra.mrb[0].mxu0 %v2004
      %v2050 = vpop.f32.mrb[0].mxu0
      %v2051 = vadd.f32 0.0, %v2050
      %v2052 = vpop.f32.mrb[0].mxu0
      %v2053 = vadd.f32 0.0, %v2052
      %v2054 = vpop.f32.mrb[0].mxu0
      %v2055 = vadd.f32 0.0, %v2054
      %v2056 = vpop.f32.mrb[0].mxu0
      %v2057 = vadd.f32 0.0, %v2056
      %2058 = vdwg.mxu0
      %v2059 = vadd.f32 %v1959, %v2041
      %v2060 = vadd.f32 %v1960, %v2043
      %v2061 = vadd.f32 %v1961, %v2045
      %v2062 = vadd.f32 %v1962, %v2047
      %v2063 = vadd.f32 %v1963, %v2051
      %v2064 = vadd.f32 %v1964, %v2053
      %v2065 = vadd.f32 %v1965, %v2055
      %v2066 = vadd.f32 %v1966, %v2057
      %2067 = vrot.lane.b32.xlu0 %v1255, 111
      %v2068 = vpop.permute.xlu0 %2067
      %2069 = vrot.lane.b32.xlu0 %v1257, 111
      %v2070 = vpop.permute.xlu0 %2069
      %2071 = vrot.lane.b32.xlu0 %v1256, 111
      %v2072 = vpop.permute.xlu0 %2071
      %2073 = vrot.lane.b32.xlu0 %v1258, 111
      %v2074 = vpop.permute.xlu0 %2073
      %v2075 = vsel %vm1171, %v2068, %v2072
      %v2076 = vsel %vm1171, %v2070, %v2074
      %v2077 = vsel %vm1171, %v2072, %v2068
      %v2078 = vsel %vm1171, %v2074, %v2070
      %v2079 = vmul.f32 %v2075, %v1180
      %v2080 = vmul.f32 %v2077, %v1184
      %v2081 = vmul.f32 %v2076, %v1180
      %v2082 = vmul.f32 %v2078, %v1184
      %s2083 = scalar_lea.vmem %s3, 128
      %v2084 = vld [vmem:[%s2083] sm:$0xf]
      %v2085 = vld [vmem:[%s2083 + $0x4] sm:$0xf]
      %v2086 = vld [vmem:[%s2083 + $0x8] sm:$0xf]
      %v2087 = vld [vmem:[%s2083 + $0xc] sm:$0xf]
      %v2088 = vpack.c.bf16 %v2081, %v2079
      %v2089 = vpack.c.bf16 %v2082, %v2080
      %v2094 = vunpack.c.l.b16 %v2084
      %v2095 = vunpack.c.l.b16 %v2085
      %v2096 = vunpack.c.l.b16 %v2086
      %v2097 = vunpack.c.l.b16 %v2087
      %v2098 = vpack.c.b16 %v2095, %v2094
      %v2099 = vpack.c.b16 %v2097, %v2096
      %v2101 = vsel %vm1315, %v2098, 0
      %v2104 = vsel %vm1315, %v2099, 0
      %2106 = vmatprep.subr.bf16.mxu0 %v2089
      %2107 = vmatpush1.bf16.msra.mxu0 %v2088
      %2108 = vmatprep.subr.bf16.mxu0 0
      %2109 = vmatpush1.bf16.msra.mxu0 0
      %2110 = vmatprep.subr.bf16.mxu0 0
      %2111 = vmatpush1.bf16.msra.mxu0 0
      %2112 = vmatprep.subr.bf16.mxu0 0
      %2113 = vmatpush1.bf16.msra.mxu0 0
      %2114 = vmatprep.subr.bf16.mxu0 0
      %2115 = vmatpush1.bf16.msra.mxu0 0
      %2116 = vmatprep.subr.bf16.mxu0 0
      %2117 = vmatpush1.bf16.msra.mxu0 0
      %2118 = vmatprep.subr.bf16.mxu0 0
      %2119 = vmatpush1.bf16.msra.mxu0 0
      %2120 = vmatprep.subr.bf16.mxu0 0
      %2121 = vmatpush1.bf16.msra.mxu0 0
      %2122 = vmatprep.subr.bf16.mxu0 0
      %2123 = vmatpush1.bf16.msra.mxu0 0
      %2124 = vmatprep.subr.bf16.mxu0 0
      %2125 = vmatpush1.bf16.msra.mxu0 0
      %2126 = vmatprep.subr.bf16.mxu0 0
      %2127 = vmatpush1.bf16.msra.mxu0 0
      %2128 = vmatprep.subr.bf16.mxu0 0
      %2129 = vmatpush1.bf16.msra.mxu0 0
      %2130 = vmatprep.subr.bf16.mxu0 0
      %2131 = vmatpush1.bf16.msra.mxu0 0
      %2132 = vmatprep.subr.bf16.mxu0 0
      %2133 = vmatpush1.bf16.msra.mxu0 0
      %2134 = vmatprep.subr.bf16.mxu0 0
      %2135 = vmatpush1.bf16.msra.mxu0 0
      %2136 = vmatprep.subr.bf16.mxu0 0
      %2137 = vmatpush1.bf16.msra.mxu0 0
      %2138 = vmatprep.mubr.bf16.mxu0 0
      %2139 = vmatmul.mubr.bf16.gmra.mrb[0].mxu0 %v2101
      %v2140 = vpop.f32.mrb[0].mxu0
      %v2141 = vadd.f32 0.0, %v2140
      %v2142 = vpop.f32.mrb[0].mxu0
      %v2143 = vadd.f32 0.0, %v2142
      %v2144 = vpop.f32.mrb[0].mxu0
      %v2145 = vadd.f32 0.0, %v2144
      %v2146 = vpop.f32.mrb[0].mxu0
      %v2147 = vadd.f32 0.0, %v2146
      %2148 = vmatprep.mubr.bf16.mxu0 0
      %2149 = vmatmul.mubr.bf16.gmra.mrb[0].mxu0 %v2104
      %v2150 = vpop.f32.mrb[0].mxu0
      %v2151 = vadd.f32 0.0, %v2150
      %v2152 = vpop.f32.mrb[0].mxu0
      %v2153 = vadd.f32 0.0, %v2152
      %v2154 = vpop.f32.mrb[0].mxu0
      %v2155 = vadd.f32 0.0, %v2154
      %v2156 = vpop.f32.mrb[0].mxu0
      %v2157 = vadd.f32 0.0, %v2156
      %2158 = vdwg.mxu0
      %v2159 = vadd.f32 %v2059, %v2141
      %v2160 = vadd.f32 %v2060, %v2143
      %v2161 = vadd.f32 %v2061, %v2145
      %v2162 = vadd.f32 %v2062, %v2147
      %v2163 = vadd.f32 %v2063, %v2151
      %v2164 = vadd.f32 %v2064, %v2153
      %v2165 = vadd.f32 %v2065, %v2155
      %v2166 = vadd.f32 %v2066, %v2157
      %v2167 = vmax.f32 %v2159, 0.0
      %v2168 = vmax.f32 %v2160, 0.0
      %v2169 = vmax.f32 %v2161, 0.0
      %v2170 = vmax.f32 %v2162, 0.0
      %v2171 = vmax.f32 %v2163, 0.0
      %v2172 = vmax.f32 %v2164, 0.0
      %v2173 = vmax.f32 %v2165, 0.0
      %v2174 = vmax.f32 %v2166, 0.0
      %2175 = vrot.lane.b32.xlu0 %v2167, 127
      %v2176 = vpop.permute.xlu0 %2175
      %2177 = vrot.lane.b32.xlu0 %v2169, 127
      %v2178 = vpop.permute.xlu0 %2177
      %2179 = vrot.lane.b32.xlu0 %v2171, 127
      %v2180 = vpop.permute.xlu0 %2179
      %2181 = vrot.lane.b32.xlu0 %v2173, 127
      %v2182 = vpop.permute.xlu0 %2181
      %2183 = vrot.lane.b32.xlu0 %v2168, 127
      %v2184 = vpop.permute.xlu0 %2183
      %2185 = vrot.lane.b32.xlu0 %v2170, 127
      %v2186 = vpop.permute.xlu0 %2185
      %2187 = vrot.lane.b32.xlu0 %v2172, 127
      %v2188 = vpop.permute.xlu0 %2187
      %2189 = vrot.lane.b32.xlu0 %v2174, 127
      %v2190 = vpop.permute.xlu0 %2189
      %v2191 = vsel %vm907, %v2176, %v2184
      %v2192 = vsel %vm907, %v2178, %v2186
      %v2193 = vsel %vm907, %v2180, %v2188
      %v2194 = vsel %vm907, %v2182, %v2190
      %v2195 = vsel %vm907, %v2184, %v2176
      %v2196 = vsel %vm907, %v2186, %v2178
      %v2197 = vsel %vm907, %v2188, %v2180
      %v2198 = vsel %vm907, %v2190, %v2182
      %v2199 = vmax.f32 %v2167, %v2191
      %v2200 = vmax.f32 %v2168, %v2195
      %v2201 = vmax.f32 %v2169, %v2192
      %v2202 = vmax.f32 %v2170, %v2196
      %v2203 = vmax.f32 %v2171, %v2193
      %v2204 = vmax.f32 %v2172, %v2197
      %v2205 = vmax.f32 %v2173, %v2194
      %v2206 = vmax.f32 %v2174, %v2198
      %2207 = vrot.lane.b32.xlu0 %v2167, 112
      %v2208 = vpop.permute.xlu0 %2207
      %2209 = vrot.lane.b32.xlu0 %v2169, 112
      %v2210 = vpop.permute.xlu0 %2209
      %2211 = vrot.lane.b32.xlu0 %v2171, 112
      %v2212 = vpop.permute.xlu0 %2211
      %2213 = vrot.lane.b32.xlu0 %v2173, 112
      %v2214 = vpop.permute.xlu0 %2213
      %2215 = vrot.lane.b32.xlu0 %v2168, 112
      %v2216 = vpop.permute.xlu0 %2215
      %2217 = vrot.lane.b32.xlu0 %v2170, 112
      %v2218 = vpop.permute.xlu0 %2217
      %2219 = vrot.lane.b32.xlu0 %v2172, 112
      %v2220 = vpop.permute.xlu0 %2219
      %2221 = vrot.lane.b32.xlu0 %v2174, 112
      %v2222 = vpop.permute.xlu0 %2221
      %v2223 = vsel %vm1083, %v2208, %v2216
      %v2224 = vsel %vm1083, %v2210, %v2218
      %v2225 = vsel %vm1083, %v2212, %v2220
      %v2226 = vsel %vm1083, %v2214, %v2222
      %v2227 = vsel %vm1083, %v2216, %v2208
      %v2228 = vsel %vm1083, %v2218, %v2210
      %v2229 = vsel %vm1083, %v2220, %v2212
      %v2230 = vsel %vm1083, %v2222, %v2214
      %2231 = vrot.lane.b32.xlu0 %v2167, 111
      %v2232 = vpop.permute.xlu0 %2231
      %2233 = vrot.lane.b32.xlu0 %v2169, 111
      %v2234 = vpop.permute.xlu0 %2233
      %2235 = vrot.lane.b32.xlu0 %v2171, 111
      %v2236 = vpop.permute.xlu0 %2235
      %2237 = vrot.lane.b32.xlu0 %v2173, 111
      %v2238 = vpop.permute.xlu0 %2237
      %2239 = vrot.lane.b32.xlu0 %v2168, 111
      %v2240 = vpop.permute.xlu0 %2239
      %2241 = vrot.lane.b32.xlu0 %v2170, 111
      %v2242 = vpop.permute.xlu0 %2241
      %2243 = vrot.lane.b32.xlu0 %v2172, 111
      %v2244 = vpop.permute.xlu0 %2243
      %2245 = vrot.lane.b32.xlu0 %v2174, 111
      %v2246 = vpop.permute.xlu0 %2245
      %v2247 = vsel %vm1171, %v2232, %v2240
      %v2248 = vsel %vm1171, %v2234, %v2242
      %v2249 = vsel %vm1171, %v2236, %v2244
      %v2250 = vsel %vm1171, %v2238, %v2246
      %v2251 = vsel %vm1171, %v2240, %v2232
      %v2252 = vsel %vm1171, %v2242, %v2234
      %v2253 = vsel %vm1171, %v2244, %v2236
      %v2254 = vsel %vm1171, %v2246, %v2238
      %v2255 = vmax.f32 %v2223, %v2247
      %v2256 = vmax.f32 %v2227, %v2251
      %v2257 = vmax.f32 %v2224, %v2248
      %v2258 = vmax.f32 %v2228, %v2252
      %v2259 = vmax.f32 %v2225, %v2249
      %v2260 = vmax.f32 %v2229, %v2253
      %v2261 = vmax.f32 %v2226, %v2250
      %v2262 = vmax.f32 %v2230, %v2254
      %v2263 = vmax.f32 %v2199, %v2255
      %v2264 = vmax.f32 %v2200, %v2256
      %v2265 = vmax.f32 %v2201, %v2257
      %v2266 = vmax.f32 %v2202, %v2258
      %v2267 = vmax.f32 %v2203, %v2259
      %v2268 = vmax.f32 %v2204, %v2260
      %v2269 = vmax.f32 %v2205, %v2261
      %v2270 = vmax.f32 %v2206, %v2262
      %v2271 = vpack.c.bf16 %v2265, %v2263
      %v2272 = vpack.c.bf16 %v2266, %v2264
      %v2273 = vpack.c.bf16 %v2269, %v2267
      %v2274 = vpack.c.bf16 %v2270, %v2268
      %v2275 = vld [vmem:[%s12] sm:$0xf]
      %v2276 = vld [vmem:[%s12 + $0x4] sm:$0xf]
      %v2277 = vld [vmem:[%s12 + $0x8] sm:$0xf]
      %v2278 = vld [vmem:[%s12 + $0xc] sm:$0xf]
      %v2279 = vld [vmem:[%s12 + $0x10] sm:$0xf]
      %v2280 = vld [vmem:[%s12 + $0x14] sm:$0xf]
      %v2281 = vld [vmem:[%s12 + $0x18] sm:$0xf]
      %v2282 = vld [vmem:[%s12 + $0x1c] sm:$0xf]
      %v2283 = vld [vmem:[%s12 + $0x20] sm:$0xf]
      %v2284 = vld [vmem:[%s12 + $0x24] sm:$0xf]
      %v2285 = vld [vmem:[%s12 + $0x28] sm:$0xf]
      %v2286 = vld [vmem:[%s12 + $0x2c] sm:$0xf]
      %v2287 = vld [vmem:[%s12 + $0x30] sm:$0xf]
      %v2288 = vld [vmem:[%s12 + $0x34] sm:$0xf]
      %v2289 = vld [vmem:[%s12 + $0x38] sm:$0xf]
      %v2290 = vld [vmem:[%s12 + $0x3c] sm:$0xf]
      %v2291 = vld [vmem:[%s12 + $0x40] sm:$0xf]
      %v2292 = vld [vmem:[%s12 + $0x44] sm:$0xf]
      %v2293 = vld [vmem:[%s12 + $0x48] sm:$0xf]
      %v2294 = vld [vmem:[%s12 + $0x4c] sm:$0xf]
      %v2295 = vld [vmem:[%s12 + $0x50] sm:$0xf]
      %v2296 = vld [vmem:[%s12 + $0x54] sm:$0xf]
      %v2297 = vld [vmem:[%s12 + $0x58] sm:$0xf]
      %v2298 = vld [vmem:[%s12 + $0x5c] sm:$0xf]
      %v2299 = vld [vmem:[%s12 + $0x60] sm:$0xf]
      %v2300 = vld [vmem:[%s12 + $0x64] sm:$0xf]
      %v2301 = vld [vmem:[%s12 + $0x68] sm:$0xf]
      %v2302 = vld [vmem:[%s12 + $0x6c] sm:$0xf]
      %v2303 = vld [vmem:[%s12 + $0x70] sm:$0xf]
      %v2304 = vld [vmem:[%s12 + $0x74] sm:$0xf]
      %v2305 = vld [vmem:[%s12 + $0x78] sm:$0xf]
      %v2306 = vld [vmem:[%s12 + $0x7c] sm:$0xf]
      %v2339 = vunpack.c.l.b16 %v2275
      %v2340 = vunpack.c.l.b16 %v2276
      %v2341 = vunpack.c.l.b16 %v2277
      %v2342 = vunpack.c.l.b16 %v2278
      %v2343 = vunpack.c.l.b16 %v2279
      %v2344 = vunpack.c.l.b16 %v2280
      %v2345 = vunpack.c.l.b16 %v2281
      %v2346 = vunpack.c.l.b16 %v2282
      %v2347 = vunpack.c.l.b16 %v2283
      %v2348 = vunpack.c.l.b16 %v2284
      %v2349 = vunpack.c.l.b16 %v2285
      %v2350 = vunpack.c.l.b16 %v2286
      %v2351 = vunpack.c.l.b16 %v2287
      %v2352 = vunpack.c.l.b16 %v2288
      %v2353 = vunpack.c.l.b16 %v2289
      %v2354 = vunpack.c.l.b16 %v2290
      %v2355 = vunpack.c.l.b16 %v2291
      %v2356 = vunpack.c.l.b16 %v2292
      %v2357 = vunpack.c.l.b16 %v2293
      %v2358 = vunpack.c.l.b16 %v2294
      %v2359 = vunpack.c.l.b16 %v2295
      %v2360 = vunpack.c.l.b16 %v2296
      %v2361 = vunpack.c.l.b16 %v2297
      %v2362 = vunpack.c.l.b16 %v2298
      %v2363 = vunpack.c.l.b16 %v2299
      %v2364 = vunpack.c.l.b16 %v2300
      %v2365 = vunpack.c.l.b16 %v2301
      %v2366 = vunpack.c.l.b16 %v2302
      %v2367 = vunpack.c.l.b16 %v2303
      %v2368 = vunpack.c.l.b16 %v2304
      %v2369 = vunpack.c.l.b16 %v2305
      %v2370 = vunpack.c.l.b16 %v2306
      %v2371 = vpack.c.b16 %v2340, %v2339
      %v2372 = vpack.c.b16 %v2342, %v2341
      %v2373 = vpack.c.b16 %v2344, %v2343
      %v2374 = vpack.c.b16 %v2346, %v2345
      %v2375 = vpack.c.b16 %v2348, %v2347
      %v2376 = vpack.c.b16 %v2350, %v2349
      %v2377 = vpack.c.b16 %v2352, %v2351
      %v2378 = vpack.c.b16 %v2354, %v2353
      %v2379 = vpack.c.b16 %v2356, %v2355
      %v2380 = vpack.c.b16 %v2358, %v2357
      %v2381 = vpack.c.b16 %v2360, %v2359
      %v2382 = vpack.c.b16 %v2362, %v2361
      %v2383 = vpack.c.b16 %v2364, %v2363
      %v2384 = vpack.c.b16 %v2366, %v2365
      %v2385 = vpack.c.b16 %v2368, %v2367
      %v2386 = vpack.c.b16 %v2370, %v2369
      %2403 = vmatprep.subr.bf16.mxu0 0
      %2404 = vmatpush1.bf16.msra.mxu0 %v2371
      %2405 = vmatprep.subr.bf16.mxu0 0
      %2406 = vmatpush1.bf16.msra.mxu0 %v2372
      %2407 = vmatprep.subr.bf16.mxu0 0
      %2408 = vmatpush1.bf16.msra.mxu0 %v2373
      %2409 = vmatprep.subr.bf16.mxu0 0
      %2410 = vmatpush1.bf16.msra.mxu0 %v2374
      %2411 = vmatprep.subr.bf16.mxu0 0
      %2412 = vmatpush1.bf16.msra.mxu0 %v2375
      %2413 = vmatprep.subr.bf16.mxu0 0
      %2414 = vmatpush1.bf16.msra.mxu0 %v2376
      %2415 = vmatprep.subr.bf16.mxu0 0
      %2416 = vmatpush1.bf16.msra.mxu0 %v2377
      %2417 = vmatprep.subr.bf16.mxu0 0
      %2418 = vmatpush1.bf16.msra.mxu0 %v2378
      %2419 = vmatprep.subr.bf16.mxu0 0
      %2420 = vmatpush1.bf16.msra.mxu0 %v2379
      %2421 = vmatprep.subr.bf16.mxu0 0
      %2422 = vmatpush1.bf16.msra.mxu0 %v2380
      %2423 = vmatprep.subr.bf16.mxu0 0
      %2424 = vmatpush1.bf16.msra.mxu0 %v2381
      %2425 = vmatprep.subr.bf16.mxu0 0
      %2426 = vmatpush1.bf16.msra.mxu0 %v2382
      %2427 = vmatprep.subr.bf16.mxu0 0
      %2428 = vmatpush1.bf16.msra.mxu0 %v2383
      %2429 = vmatprep.subr.bf16.mxu0 0
      %2430 = vmatpush1.bf16.msra.mxu0 %v2384
      %2431 = vmatprep.subr.bf16.mxu0 0
      %2432 = vmatpush1.bf16.msra.mxu0 %v2385
      %2433 = vmatprep.subr.bf16.mxu0 0
      %2434 = vmatpush1.bf16.msra.mxu0 %v2386
      %2435 = vmatprep.mubr.bf16.mxu0 %v2272
      %2436 = vmatmul.mubr.bf16.gmra.mrb[0].mxu0 %v2271
      %v2437 = vpop.f32.mrb[0].mxu0
      %v2438 = vadd.f32 0.0, %v2437
      %v2439 = vpop.f32.mrb[0].mxu0
      %v2440 = vpop.f32.mrb[0].mxu0
      %v2441 = vadd.f32 0.0, %v2440
      %v2442 = vpop.f32.mrb[0].mxu0
      %2443 = vmatprep.mubr.bf16.mxu0 %v2274
      %2444 = vmatmul.mubr.bf16.gmra.mrb[0].mxu0 %v2273
      %v2445 = vpop.f32.mrb[0].mxu0
      %v2446 = vadd.f32 0.0, %v2445
      %v2447 = vpop.f32.mrb[0].mxu0
      %v2448 = vpop.f32.mrb[0].mxu0
      %v2449 = vadd.f32 0.0, %v2448
      %v2450 = vpop.f32.mrb[0].mxu0
      %2451 = vdwg.mxu0
      %v2452 = vld [vmem:[%s6] sm:$0xff]
      %v2453 = vld [vmem:[%s6 + $0x8] sm:$0xff]
      %2455 = vset.pattern.permute.xlu0 0
      %2456 = vperm.xlu0 %2455, %v2452
      %v2457 = vpop.permute.xlu0 %2456
      %2460 = vset.pattern.permute.xlu0 0
      %2461 = vperm.xlu0 %2460, %v2453
      %v2462 = vpop.permute.xlu0 %2461
      %2468 = vrot.lane.b32.xlu0 %v2438, 73
      %v2469 = vpop.permute.xlu0 %2468
      %2470 = vrot.lane.b32.xlu0 %v2441, 73
      %v2471 = vpop.permute.xlu0 %2470
      %2472 = vrot.lane.b32.xlu0 %v2446, 73
      %v2473 = vpop.permute.xlu0 %2472
      %2474 = vrot.lane.b32.xlu0 %v2449, 73
      %v2475 = vpop.permute.xlu0 %2474
      %2480 = vrot.lane.b32.xlu0 %v2438, 9
      %v2481 = vpop.permute.xlu0 %2480
      %2482 = vrot.lane.b32.xlu0 %v2441, 9
      %v2483 = vpop.permute.xlu0 %2482
      %2484 = vrot.lane.b32.xlu0 %v2446, 9
      %v2485 = vpop.permute.xlu0 %2484
      %2486 = vrot.lane.b32.xlu0 %v2449, 9
      %v2487 = vpop.permute.xlu0 %2486
      %vm2492 = vcmask 72704
      %v2493 = vsel %vm2492, %v2469, %v2481
      %v2494 = vsel %vm2492, %v2471, %v2483
      %v2495 = vsel %vm2492, %v2473, %v2485
      %v2496 = vsel %vm2492, %v2475, %v2487
      %v2497 = vld [vmem:[%s10] sm:$0x1]
      %v2498 = vlaneseq
      %v2499 = vshrl.u32 %v2498, 7
      %v2500 = vsub.s32 0, %v2499
      %v2501 = vrot.slane %v2497, %v2500
      %v2502 = vmul.f32 %v2493, %v2501
      %v2503 = vmul.f32 %v2494, %v2501
      %v2504 = vmul.f32 %v2495, %v2501
      %v2505 = vmul.f32 %v2496, %v2501
      %v2506 = vld [vmem:[%s5] sm:$0xf]
      %v2507 = vld [vmem:[%s5 + $0x4] sm:$0xf]
      %v2508 = vpack.c.bf16 %v2503, %v2502
      %v2509 = vpack.c.bf16 %v2505, %v2504
      %v2512 = vunpack.c.l.b16 %v2506
      %v2513 = vunpack.c.l.b16 %v2507
      %v2514 = vpack.c.b16 %v2513, %v2512
      %vm2515 = vcmask 261120
      %v2517 = vsel %vm2515, %v2514, 0
      %2519 = vmatprep.subr.bf16.mxu0 0
      %2520 = vmatpush1.bf16.msra.mxu0 %v2508
      %2521 = vmatprep.subr.bf16.mxu0 0
      %2522 = vmatpush1.bf16.msra.mxu0 %v2509
      %2523 = vmatprep.subr.bf16.mxu0 0
      %2524 = vmatpush1.bf16.msra.mxu0 0
      %2525 = vmatprep.subr.bf16.mxu0 0
      %2526 = vmatpush1.bf16.msra.mxu0 0
      %2527 = vmatprep.subr.bf16.mxu0 0
      %2528 = vmatpush1.bf16.msra.mxu0 0
      %2529 = vmatprep.subr.bf16.mxu0 0
      %2530 = vmatpush1.bf16.msra.mxu0 0
      %2531 = vmatprep.subr.bf16.mxu0 0
      %2532 = vmatpush1.bf16.msra.mxu0 0
      %2533 = vmatprep.subr.bf16.mxu0 0
      %2534 = vmatpush1.bf16.msra.mxu0 0
      %2535 = vmatprep.subr.bf16.mxu0 0
      %2536 = vmatpush1.bf16.msra.mxu0 0
      %2537 = vmatprep.subr.bf16.mxu0 0
      %2538 = vmatpush1.bf16.msra.mxu0 0
      %2539 = vmatprep.subr.bf16.mxu0 0
      %2540 = vmatpush1.bf16.msra.mxu0 0
      %2541 = vmatprep.subr.bf16.mxu0 0
      %2542 = vmatpush1.bf16.msra.mxu0 0
      %2543 = vmatprep.subr.bf16.mxu0 0
      %2544 = vmatpush1.bf16.msra.mxu0 0
      %2545 = vmatprep.subr.bf16.mxu0 0
      %2546 = vmatpush1.bf16.msra.mxu0 0
      %2547 = vmatprep.subr.bf16.mxu0 0
      %2548 = vmatpush1.bf16.msra.mxu0 0
      %2549 = vmatprep.subr.bf16.mxu0 0
      %2550 = vmatpush1.bf16.msra.mxu0 0
      %2551 = vmatprep.mubr.bf16.mxu0 0
      %2552 = vmatmul.mubr.bf16.gmra.mrb[0].mxu0 %v2517
      %v2553 = vpop.f32.mrb[0].mxu0
      %v2554 = vadd.f32 0.0, %v2553
      %v2555 = vpop.f32.mrb[0].mxu0
      %v2556 = vpop.f32.mrb[0].mxu0
      %v2557 = vadd.f32 0.0, %v2556
      %v2558 = vpop.f32.mrb[0].mxu0
      %2559 = vdwg.mxu0
      %v2560 = vadd.f32 %v2457, %v2554
      %v2561 = vadd.f32 %v2462, %v2557
      %2562 = vrot.lane.b32.xlu0 %v2438, 72
      %v2563 = vpop.permute.xlu0 %2562
      %2564 = vrot.lane.b32.xlu0 %v2441, 72
      %v2565 = vpop.permute.xlu0 %2564
      %2566 = vrot.lane.b32.xlu0 %v2446, 72
      %v2567 = vpop.permute.xlu0 %2566
      %2568 = vrot.lane.b32.xlu0 %v2449, 72
      %v2569 = vpop.permute.xlu0 %2568
      %2574 = vrot.lane.b32.xlu0 %v2438, 8
      %v2575 = vpop.permute.xlu0 %2574
      %2576 = vrot.lane.b32.xlu0 %v2441, 8
      %v2577 = vpop.permute.xlu0 %2576
      %2578 = vrot.lane.b32.xlu0 %v2446, 8
      %v2579 = vpop.permute.xlu0 %2578
      %2580 = vrot.lane.b32.xlu0 %v2449, 8
      %v2581 = vpop.permute.xlu0 %2580
      %v2586 = vsel %vm515, %v2563, %v2575
      %v2587 = vsel %vm515, %v2565, %v2577
      %v2588 = vsel %vm515, %v2567, %v2579
      %v2589 = vsel %vm515, %v2569, %v2581
      %v2590 = vld [vmem:[%s10 + $0x1] sm:$0x1]
      %v2591 = vlaneseq
      %v2592 = vshrl.u32 %v2591, 7
      %v2593 = vsub.s32 0, %v2592
      %v2594 = vrot.slane %v2590, %v2593
      %v2595 = vmul.f32 %v2586, %v2594
      %v2596 = vmul.f32 %v2587, %v2594
      %v2597 = vmul.f32 %v2588, %v2594
      %v2598 = vmul.f32 %v2589, %v2594
      %s2599 = scalar_lea.vmem %s5, 8
      %v2600 = vld [vmem:[%s2599] sm:$0xf]
      %v2601 = vld [vmem:[%s2599 + $0x4] sm:$0xf]
      %v2602 = vpack.c.bf16 %v2596, %v2595
      %v2603 = vpack.c.bf16 %v2598, %v2597
      %v2606 = vunpack.c.l.b16 %v2600
      %v2607 = vunpack.c.l.b16 %v2601
      %v2608 = vpack.c.b16 %v2607, %v2606
      %v2610 = vsel %vm2515, %v2608, 0
      %2612 = vmatprep.subr.bf16.mxu0 0
      %2613 = vmatpush1.bf16.msra.mxu0 %v2602
      %2614 = vmatprep.subr.bf16.mxu0 0
      %2615 = vmatpush1.bf16.msra.mxu0 %v2603
      %2616 = vmatprep.subr.bf16.mxu0 0
      %2617 = vmatpush1.bf16.msra.mxu0 0
      %2618 = vmatprep.subr.bf16.mxu0 0
      %2619 = vmatpush1.bf16.msra.mxu0 0
      %2620 = vmatprep.subr.bf16.mxu0 0
      %2621 = vmatpush1.bf16.msra.mxu0 0
      %2622 = vmatprep.subr.bf16.mxu0 0
      %2623 = vmatpush1.bf16.msra.mxu0 0
      %2624 = vmatprep.subr.bf16.mxu0 0
      %2625 = vmatpush1.bf16.msra.mxu0 0
      %2626 = vmatprep.subr.bf16.mxu0 0
      %2627 = vmatpush1.bf16.msra.mxu0 0
      %2628 = vmatprep.subr.bf16.mxu0 0
      %2629 = vmatpush1.bf16.msra.mxu0 0
      %2630 = vmatprep.subr.bf16.mxu0 0
      %2631 = vmatpush1.bf16.msra.mxu0 0
      %2632 = vmatprep.subr.bf16.mxu0 0
      %2633 = vmatpush1.bf16.msra.mxu0 0
      %2634 = vmatprep.subr.bf16.mxu0 0
      %2635 = vmatpush1.bf16.msra.mxu0 0
      %2636 = vmatprep.subr.bf16.mxu0 0
      %2637 = vmatpush1.bf16.msra.mxu0 0
      %2638 = vmatprep.subr.bf16.mxu0 0
      %2639 = vmatpush1.bf16.msra.mxu0 0
      %2640 = vmatprep.subr.bf16.mxu0 0
      %2641 = vmatpush1.bf16.msra.mxu0 0
      %2642 = vmatprep.subr.bf16.mxu0 0
      %2643 = vmatpush1.bf16.msra.mxu0 0
      %2644 = vmatprep.mubr.bf16.mxu0 0
      %2645 = vmatmul.mubr.bf16.gmra.mrb[0].mxu0 %v2610
      %v2646 = vpop.f32.mrb[0].mxu0
      %v2647 = vadd.f32 0.0, %v2646
      %v2648 = vpop.f32.mrb[0].mxu0
      %v2649 = vpop.f32.mrb[0].mxu0
      %v2650 = vadd.f32 0.0, %v2649
      %v2651 = vpop.f32.mrb[0].mxu0
      %2652 = vdwg.mxu0
      %v2653 = vadd.f32 %v2560, %v2647
      %v2654 = vadd.f32 %v2561, %v2650
      %2655 = vrot.lane.b32.xlu0 %v2438, 71
      %v2656 = vpop.permute.xlu0 %2655
      %2657 = vrot.lane.b32.xlu0 %v2441, 71
      %v2658 = vpop.permute.xlu0 %2657
      %2659 = vrot.lane.b32.xlu0 %v2446, 71
      %v2660 = vpop.permute.xlu0 %2659
      %2661 = vrot.lane.b32.xlu0 %v2449, 71
      %v2662 = vpop.permute.xlu0 %2661
      %2667 = vrot.lane.b32.xlu0 %v2438, 7
      %v2668 = vpop.permute.xlu0 %2667
      %2669 = vrot.lane.b32.xlu0 %v2441, 7
      %v2670 = vpop.permute.xlu0 %2669
      %2671 = vrot.lane.b32.xlu0 %v2446, 7
      %v2672 = vpop.permute.xlu0 %2671
      %2673 = vrot.lane.b32.xlu0 %v2449, 7
      %v2674 = vpop.permute.xlu0 %2673
      %vm2679 = vcmask 56320
      %v2680 = vsel %vm2679, %v2656, %v2668
      %v2681 = vsel %vm2679, %v2658, %v2670
      %v2682 = vsel %vm2679, %v2660, %v2672
      %v2683 = vsel %vm2679, %v2662, %v2674
      %v2684 = vld [vmem:[%s10 + $0x2] sm:$0x1]
      %v2685 = vlaneseq
      %v2686 = vshrl.u32 %v2685, 7
      %v2687 = vsub.s32 0, %v2686
      %v2688 = vrot.slane %v2684, %v2687
      %v2689 = vmul.f32 %v2680, %v2688
      %v2690 = vmul.f32 %v2681, %v2688
      %v2691 = vmul.f32 %v2682, %v2688
      %v2692 = vmul.f32 %v2683, %v2688
      %s2693 = scalar_lea.vmem %s5, 16
      %v2694 = vld [vmem:[%s2693] sm:$0xf]
      %v2695 = vld [vmem:[%s2693 + $0x4] sm:$0xf]
      %v2696 = vpack.c.bf16 %v2690, %v2689
      %v2697 = vpack.c.bf16 %v2692, %v2691
      %v2700 = vunpack.c.l.b16 %v2694
      %v2701 = vunpack.c.l.b16 %v2695
      %v2702 = vpack.c.b16 %v2701, %v2700
      %v2704 = vsel %vm2515, %v2702, 0
      %2706 = vmatprep.subr.bf16.mxu0 0
      %2707 = vmatpush1.bf16.msra.mxu0 %v2696
      %2708 = vmatprep.subr.bf16.mxu0 0
      %2709 = vmatpush1.bf16.msra.mxu0 %v2697
      %2710 = vmatprep.subr.bf16.mxu0 0
      %2711 = vmatpush1.bf16.msra.mxu0 0
      %2712 = vmatprep.subr.bf16.mxu0 0
      %2713 = vmatpush1.bf16.msra.mxu0 0
      %2714 = vmatprep.subr.bf16.mxu0 0
      %2715 = vmatpush1.bf16.msra.mxu0 0
      %2716 = vmatprep.subr.bf16.mxu0 0
      %2717 = vmatpush1.bf16.msra.mxu0 0
      %2718 = vmatprep.subr.bf16.mxu0 0
      %2719 = vmatpush1.bf16.msra.mxu0 0
      %2720 = vmatprep.subr.bf16.mxu0 0
      %2721 = vmatpush1.bf16.msra.mxu0 0
      %2722 = vmatprep.subr.bf16.mxu0 0
      %2723 = vmatpush1.bf16.msra.mxu0 0
      %2724 = vmatprep.subr.bf16.mxu0 0
      %2725 = vmatpush1.bf16.msra.mxu0 0
      %2726 = vmatprep.subr.bf16.mxu0 0
      %2727 = vmatpush1.bf16.msra.mxu0 0
      %2728 = vmatprep.subr.bf16.mxu0 0
      %2729 = vmatpush1.bf16.msra.mxu0 0
      %2730 = vmatprep.subr.bf16.mxu0 0
      %2731 = vmatpush1.bf16.msra.mxu0 0
      %2732 = vmatprep.subr.bf16.mxu0 0
      %2733 = vmatpush1.bf16.msra.mxu0 0
      %2734 = vmatprep.subr.bf16.mxu0 0
      %2735 = vmatpush1.bf16.msra.mxu0 0
      %2736 = vmatprep.subr.bf16.mxu0 0
      %2737 = vmatpush1.bf16.msra.mxu0 0
      %2738 = vmatprep.mubr.bf16.mxu0 0
      %2739 = vmatmul.mubr.bf16.gmra.mrb[0].mxu0 %v2704
      %v2740 = vpop.f32.mrb[0].mxu0
      %v2741 = vadd.f32 0.0, %v2740
      %v2742 = vpop.f32.mrb[0].mxu0
      %v2743 = vpop.f32.mrb[0].mxu0
      %v2744 = vadd.f32 0.0, %v2743
      %v2745 = vpop.f32.mrb[0].mxu0
      %2746 = vdwg.mxu0
      %v2747 = vadd.f32 %v2653, %v2741
      %v2748 = vadd.f32 %v2654, %v2744
      %2749 = vrot.lane.b32.xlu0 %v2438, 65
      %v2750 = vpop.permute.xlu0 %2749
      %2751 = vrot.lane.b32.xlu0 %v2441, 65
      %v2752 = vpop.permute.xlu0 %2751
      %2753 = vrot.lane.b32.xlu0 %v2446, 65
      %v2754 = vpop.permute.xlu0 %2753
      %2755 = vrot.lane.b32.xlu0 %v2449, 65
      %v2756 = vpop.permute.xlu0 %2755
      %2761 = vrot.lane.b32.xlu0 %v2438, 1
      %v2762 = vpop.permute.xlu0 %2761
      %2763 = vrot.lane.b32.xlu0 %v2441, 1
      %v2764 = vpop.permute.xlu0 %2763
      %2765 = vrot.lane.b32.xlu0 %v2446, 1
      %v2766 = vpop.permute.xlu0 %2765
      %2767 = vrot.lane.b32.xlu0 %v2449, 1
      %v2768 = vpop.permute.xlu0 %2767
      %vm2773 = vcmask 7168
      %v2774 = vsel %vm2773, %v2750, %v2762
      %v2775 = vsel %vm2773, %v2752, %v2764
      %v2776 = vsel %vm2773, %v2754, %v2766
      %v2777 = vsel %vm2773, %v2756, %v2768
      %v2778 = vld [vmem:[%s10 + $0x3] sm:$0x1]
      %v2779 = vlaneseq
      %v2780 = vshrl.u32 %v2779, 7
      %v2781 = vsub.s32 0, %v2780
      %v2782 = vrot.slane %v2778, %v2781
      %v2783 = vmul.f32 %v2774, %v2782
      %v2784 = vmul.f32 %v2775, %v2782
      %v2785 = vmul.f32 %v2776, %v2782
      %v2786 = vmul.f32 %v2777, %v2782
      %s2787 = scalar_lea.vmem %s5, 24
      %v2788 = vld [vmem:[%s2787] sm:$0xf]
      %v2789 = vld [vmem:[%s2787 + $0x4] sm:$0xf]
      %v2790 = vpack.c.bf16 %v2784, %v2783
      %v2791 = vpack.c.bf16 %v2786, %v2785
      %v2794 = vunpack.c.l.b16 %v2788
      %v2795 = vunpack.c.l.b16 %v2789
      %v2796 = vpack.c.b16 %v2795, %v2794
      %v2798 = vsel %vm2515, %v2796, 0
      %2800 = vmatprep.subr.bf16.mxu0 0
      %2801 = vmatpush1.bf16.msra.mxu0 %v2790
      %2802 = vmatprep.subr.bf16.mxu0 0
      %2803 = vmatpush1.bf16.msra.mxu0 %v2791
      %2804 = vmatprep.subr.bf16.mxu0 0
      %2805 = vmatpush1.bf16.msra.mxu0 0
      %2806 = vmatprep.subr.bf16.mxu0 0
      %2807 = vmatpush1.bf16.msra.mxu0 0
      %2808 = vmatprep.subr.bf16.mxu0 0
      %2809 = vmatpush1.bf16.msra.mxu0 0
      %2810 = vmatprep.subr.bf16.mxu0 0
      %2811 = vmatpush1.bf16.msra.mxu0 0
      %2812 = vmatprep.subr.bf16.mxu0 0
      %2813 = vmatpush1.bf16.msra.mxu0 0
      %2814 = vmatprep.subr.bf16.mxu0 0
      %2815 = vmatpush1.bf16.msra.mxu0 0
      %2816 = vmatprep.subr.bf16.mxu0 0
      %2817 = vmatpush1.bf16.msra.mxu0 0
      %2818 = vmatprep.subr.bf16.mxu0 0
      %2819 = vmatpush1.bf16.msra.mxu0 0
      %2820 = vmatprep.subr.bf16.mxu0 0
      %2821 = vmatpush1.bf16.msra.mxu0 0
      %2822 = vmatprep.subr.bf16.mxu0 0
      %2823 = vmatpush1.bf16.msra.mxu0 0
      %2824 = vmatprep.subr.bf16.mxu0 0
      %2825 = vmatpush1.bf16.msra.mxu0 0
      %2826 = vmatprep.subr.bf16.mxu0 0
      %2827 = vmatpush1.bf16.msra.mxu0 0
      %2828 = vmatprep.subr.bf16.mxu0 0
      %2829 = vmatpush1.bf16.msra.mxu0 0
      %2830 = vmatprep.subr.bf16.mxu0 0
      %2831 = vmatpush1.bf16.msra.mxu0 0
      %2832 = vmatprep.mubr.bf16.mxu0 0
      %2833 = vmatmul.mubr.bf16.gmra.mrb[0].mxu0 %v2798
      %v2834 = vpop.f32.mrb[0].mxu0
      %v2835 = vadd.f32 0.0, %v2834
      %v2836 = vpop.f32.mrb[0].mxu0
      %v2837 = vpop.f32.mrb[0].mxu0
      %v2838 = vadd.f32 0.0, %v2837
      %v2839 = vpop.f32.mrb[0].mxu0
      %2840 = vdwg.mxu0
      %v2841 = vadd.f32 %v2747, %v2835
      %v2842 = vadd.f32 %v2748, %v2838
      %s2843 = scalar_lea.vmem %s5, 32
      %v2844 = vld [vmem:[%s2843] sm:$0xf]
      %v2845 = vld [vmem:[%s2843 + $0x4] sm:$0xf]
      %v2846 = vpack.c.bf16 %v2441, %v2438
      %v2847 = vpack.c.bf16 %v2449, %v2446
      %v2850 = vunpack.c.l.b16 %v2844
      %v2851 = vunpack.c.l.b16 %v2845
      %v2852 = vpack.c.b16 %v2851, %v2850
      %v2854 = vsel %vm2515, %v2852, 0
      %2856 = vmatprep.subr.bf16.mxu0 0
      %2857 = vmatpush1.bf16.msra.mxu0 %v2846
      %2858 = vmatprep.subr.bf16.mxu0 0
      %2859 = vmatpush1.bf16.msra.mxu0 %v2847
      %2860 = vmatprep.subr.bf16.mxu0 0
      %2861 = vmatpush1.bf16.msra.mxu0 0
      %2862 = vmatprep.subr.bf16.mxu0 0
      %2863 = vmatpush1.bf16.msra.mxu0 0
      %2864 = vmatprep.subr.bf16.mxu0 0
      %2865 = vmatpush1.bf16.msra.mxu0 0
      %2866 = vmatprep.subr.bf16.mxu0 0
      %2867 = vmatpush1.bf16.msra.mxu0 0
      %2868 = vmatprep.subr.bf16.mxu0 0
      %2869 = vmatpush1.bf16.msra.mxu0 0
      %2870 = vmatprep.subr.bf16.mxu0 0
      %2871 = vmatpush1.bf16.msra.mxu0 0
      %2872 = vmatprep.subr.bf16.mxu0 0
      %2873 = vmatpush1.bf16.msra.mxu0 0
      %2874 = vmatprep.subr.bf16.mxu0 0
      %2875 = vmatpush1.bf16.msra.mxu0 0
      %2876 = vmatprep.subr.bf16.mxu0 0
      %2877 = vmatpush1.bf16.msra.mxu0 0
      %2878 = vmatprep.subr.bf16.mxu0 0
      %2879 = vmatpush1.bf16.msra.mxu0 0
      %2880 = vmatprep.subr.bf16.mxu0 0
      %2881 = vmatpush1.bf16.msra.mxu0 0
      %2882 = vmatprep.subr.bf16.mxu0 0
      %2883 = vmatpush1.bf16.msra.mxu0 0
      %2884 = vmatprep.subr.bf16.mxu0 0
      %2885 = vmatpush1.bf16.msra.mxu0 0
      %2886 = vmatprep.subr.bf16.mxu0 0
      %2887 = vmatpush1.bf16.msra.mxu0 0
      %2888 = vmatprep.mubr.bf16.mxu0 0
      %2889 = vmatmul.mubr.bf16.gmra.mrb[0].mxu0 %v2854
      %v2890 = vpop.f32.mrb[0].mxu0
      %v2891 = vadd.f32 0.0, %v2890
      %v2892 = vpop.f32.mrb[0].mxu0
      %v2893 = vpop.f32.mrb[0].mxu0
      %v2894 = vadd.f32 0.0, %v2893
      %v2895 = vpop.f32.mrb[0].mxu0
      %2896 = vdwg.mxu0
      %v2897 = vadd.f32 %v2841, %v2891
      %v2898 = vadd.f32 %v2842, %v2894
      %2899 = vrot.lane.b32.xlu0 %v2438, 127
      %v2900 = vpop.permute.xlu0 %2899
      %2901 = vrot.lane.b32.xlu0 %v2441, 127
      %v2902 = vpop.permute.xlu0 %2901
      %2903 = vrot.lane.b32.xlu0 %v2446, 127
      %v2904 = vpop.permute.xlu0 %2903
      %2905 = vrot.lane.b32.xlu0 %v2449, 127
      %v2906 = vpop.permute.xlu0 %2905
      %2911 = vrot.lane.b32.xlu0 %v2438, 63
      %v2912 = vpop.permute.xlu0 %2911
      %2913 = vrot.lane.b32.xlu0 %v2441, 63
      %v2914 = vpop.permute.xlu0 %2913
      %2915 = vrot.lane.b32.xlu0 %v2446, 63
      %v2916 = vpop.permute.xlu0 %2915
      %2917 = vrot.lane.b32.xlu0 %v2449, 63
      %v2918 = vpop.permute.xlu0 %2917
      %vm2923 = vcmask 515072
      %v2924 = vsel %vm2923, %v2900, %v2912
      %v2925 = vsel %vm2923, %v2902, %v2914
      %v2926 = vsel %vm2923, %v2904, %v2916
      %v2927 = vsel %vm2923, %v2906, %v2918
      %v2928 = vld [vmem:[%s10 + $0x5] sm:$0x1]
      %v2929 = vlaneseq
      %v2930 = vshrl.u32 %v2929, 7
      %v2931 = vsub.s32 0, %v2930
      %v2932 = vrot.slane %v2928, %v2931
      %v2933 = vmul.f32 %v2924, %v2932
      %v2934 = vmul.f32 %v2925, %v2932
      %v2935 = vmul.f32 %v2926, %v2932
      %v2936 = vmul.f32 %v2927, %v2932
      %s2937 = scalar_lea.vmem %s5, 40
      %v2938 = vld [vmem:[%s2937] sm:$0xf]
      %v2939 = vld [vmem:[%s2937 + $0x4] sm:$0xf]
      %v2940 = vpack.c.bf16 %v2934, %v2933
      %v2941 = vpack.c.bf16 %v2936, %v2935
      %v2944 = vunpack.c.l.b16 %v2938
      %v2945 = vunpack.c.l.b16 %v2939
      %v2946 = vpack.c.b16 %v2945, %v2944
      %v2948 = vsel %vm2515, %v2946, 0
      %2950 = vmatprep.subr.bf16.mxu0 0
      %2951 = vmatpush1.bf16.msra.mxu0 %v2940
      %2952 = vmatprep.subr.bf16.mxu0 0
      %2953 = vmatpush1.bf16.msra.mxu0 %v2941
      %2954 = vmatprep.subr.bf16.mxu0 0
      %2955 = vmatpush1.bf16.msra.mxu0 0
      %2956 = vmatprep.subr.bf16.mxu0 0
      %2957 = vmatpush1.bf16.msra.mxu0 0
      %2958 = vmatprep.subr.bf16.mxu0 0
      %2959 = vmatpush1.bf16.msra.mxu0 0
      %2960 = vmatprep.subr.bf16.mxu0 0
      %2961 = vmatpush1.bf16.msra.mxu0 0
      %2962 = vmatprep.subr.bf16.mxu0 0
      %2963 = vmatpush1.bf16.msra.mxu0 0
      %2964 = vmatprep.subr.bf16.mxu0 0
      %2965 = vmatpush1.bf16.msra.mxu0 0
      %2966 = vmatprep.subr.bf16.mxu0 0
      %2967 = vmatpush1.bf16.msra.mxu0 0
      %2968 = vmatprep.subr.bf16.mxu0 0
      %2969 = vmatpush1.bf16.msra.mxu0 0
      %2970 = vmatprep.subr.bf16.mxu0 0
      %2971 = vmatpush1.bf16.msra.mxu0 0
      %2972 = vmatprep.subr.bf16.mxu0 0
      %2973 = vmatpush1.bf16.msra.mxu0 0
      %2974 = vmatprep.subr.bf16.mxu0 0
      %2975 = vmatpush1.bf16.msra.mxu0 0
      %2976 = vmatprep.subr.bf16.mxu0 0
      %2977 = vmatpush1.bf16.msra.mxu0 0
      %2978 = vmatprep.subr.bf16.mxu0 0
      %2979 = vmatpush1.bf16.msra.mxu0 0
      %2980 = vmatprep.subr.bf16.mxu0 0
      %2981 = vmatpush1.bf16.msra.mxu0 0
      %2982 = vmatprep.mubr.bf16.mxu0 0
      %2983 = vmatmul.mubr.bf16.gmra.mrb[0].mxu0 %v2948
      %v2984 = vpop.f32.mrb[0].mxu0
      %v2985 = vadd.f32 0.0, %v2984
      %v2986 = vpop.f32.mrb[0].mxu0
      %v2987 = vpop.f32.mrb[0].mxu0
      %v2988 = vadd.f32 0.0, %v2987
      %v2989 = vpop.f32.mrb[0].mxu0
      %2990 = vdwg.mxu0
      %v2991 = vadd.f32 %v2897, %v2985
      %v2992 = vadd.f32 %v2898, %v2988
      %2993 = vrot.lane.b32.xlu0 %v2438, 121
      %v2994 = vpop.permute.xlu0 %2993
      %2995 = vrot.lane.b32.xlu0 %v2441, 121
      %v2996 = vpop.permute.xlu0 %2995
      %2997 = vrot.lane.b32.xlu0 %v2446, 121
      %v2998 = vpop.permute.xlu0 %2997
      %2999 = vrot.lane.b32.xlu0 %v2449, 121
      %v3000 = vpop.permute.xlu0 %2999
      %3005 = vrot.lane.b32.xlu0 %v2438, 57
      %v3006 = vpop.permute.xlu0 %3005
      %3007 = vrot.lane.b32.xlu0 %v2441, 57
      %v3008 = vpop.permute.xlu0 %3007
      %3009 = vrot.lane.b32.xlu0 %v2446, 57
      %v3010 = vpop.permute.xlu0 %3009
      %3011 = vrot.lane.b32.xlu0 %v2449, 57
      %v3012 = vpop.permute.xlu0 %3011
      %vm3017 = vcmask 465920
      %v3018 = vsel %vm3017, %v2994, %v3006
      %v3019 = vsel %vm3017, %v2996, %v3008
      %v3020 = vsel %vm3017, %v2998, %v3010
      %v3021 = vsel %vm3017, %v3000, %v3012
      %v3022 = vld [vmem:[%s10 + $0x6] sm:$0x1]
      %v3023 = vlaneseq
      %v3024 = vshrl.u32 %v3023, 7
      %v3025 = vsub.s32 0, %v3024
      %v3026 = vrot.slane %v3022, %v3025
      %v3027 = vmul.f32 %v3018, %v3026
      %v3028 = vmul.f32 %v3019, %v3026
      %v3029 = vmul.f32 %v3020, %v3026
      %v3030 = vmul.f32 %v3021, %v3026
      %s3031 = scalar_lea.vmem %s5, 48
      %v3032 = vld [vmem:[%s3031] sm:$0xf]
      %v3033 = vld [vmem:[%s3031 + $0x4] sm:$0xf]
      %v3034 = vpack.c.bf16 %v3028, %v3027
      %v3035 = vpack.c.bf16 %v3030, %v3029
      %v3038 = vunpack.c.l.b16 %v3032
      %v3039 = vunpack.c.l.b16 %v3033
      %v3040 = vpack.c.b16 %v3039, %v3038
      %v3042 = vsel %vm2515, %v3040, 0
      %3044 = vmatprep.subr.bf16.mxu0 0
      %3045 = vmatpush1.bf16.msra.mxu0 %v3034
      %3046 = vmatprep.subr.bf16.mxu0 0
      %3047 = vmatpush1.bf16.msra.mxu0 %v3035
      %3048 = vmatprep.subr.bf16.mxu0 0
      %3049 = vmatpush1.bf16.msra.mxu0 0
      %3050 = vmatprep.subr.bf16.mxu0 0
      %3051 = vmatpush1.bf16.msra.mxu0 0
      %3052 = vmatprep.subr.bf16.mxu0 0
      %3053 = vmatpush1.bf16.msra.mxu0 0
      %3054 = vmatprep.subr.bf16.mxu0 0
      %3055 = vmatpush1.bf16.msra.mxu0 0
      %3056 = vmatprep.subr.bf16.mxu0 0
      %3057 = vmatpush1.bf16.msra.mxu0 0
      %3058 = vmatprep.subr.bf16.mxu0 0
      %3059 = vmatpush1.bf16.msra.mxu0 0
      %3060 = vmatprep.subr.bf16.mxu0 0
      %3061 = vmatpush1.bf16.msra.mxu0 0
      %3062 = vmatprep.subr.bf16.mxu0 0
      %3063 = vmatpush1.bf16.msra.mxu0 0
      %3064 = vmatprep.subr.bf16.mxu0 0
      %3065 = vmatpush1.bf16.msra.mxu0 0
      %3066 = vmatprep.subr.bf16.mxu0 0
      %3067 = vmatpush1.bf16.msra.mxu0 0
      %3068 = vmatprep.subr.bf16.mxu0 0
      %3069 = vmatpush1.bf16.msra.mxu0 0
      %3070 = vmatprep.subr.bf16.mxu0 0
      %3071 = vmatpush1.bf16.msra.mxu0 0
      %3072 = vmatprep.subr.bf16.mxu0 0
      %3073 = vmatpush1.bf16.msra.mxu0 0
      %3074 = vmatprep.subr.bf16.mxu0 0
      %3075 = vmatpush1.bf16.msra.mxu0 0
      %3076 = vmatprep.mubr.bf16.mxu0 0
      %3077 = vmatmul.mubr.bf16.gmra.mrb[0].mxu0 %v3042
      %v3078 = vpop.f32.mrb[0].mxu0
      %v3079 = vadd.f32 0.0, %v3078
      %v3080 = vpop.f32.mrb[0].mxu0
      %v3081 = vpop.f32.mrb[0].mxu0
      %v3082 = vadd.f32 0.0, %v3081
      %v3083 = vpop.f32.mrb[0].mxu0
      %3084 = vdwg.mxu0
      %v3085 = vadd.f32 %v2991, %v3079
      %v3086 = vadd.f32 %v2992, %v3082
      %3087 = vrot.lane.b32.xlu0 %v2438, 120
      %v3088 = vpop.permute.xlu0 %3087
      %3089 = vrot.lane.b32.xlu0 %v2441, 120
      %v3090 = vpop.permute.xlu0 %3089
      %3091 = vrot.lane.b32.xlu0 %v2446, 120
      %v3092 = vpop.permute.xlu0 %3091
      %3093 = vrot.lane.b32.xlu0 %v2449, 120
      %v3094 = vpop.permute.xlu0 %3093
      %3099 = vrot.lane.b32.xlu0 %v2438, 56
      %v3100 = vpop.permute.xlu0 %3099
      %3101 = vrot.lane.b32.xlu0 %v2441, 56
      %v3102 = vpop.permute.xlu0 %3101
      %3103 = vrot.lane.b32.xlu0 %v2446, 56
      %v3104 = vpop.permute.xlu0 %3103
      %3105 = vrot.lane.b32.xlu0 %v2449, 56
      %v3106 = vpop.permute.xlu0 %3105
      %vm3111 = vcmask 457728
      %v3112 = vsel %vm3111, %v3088, %v3100
      %v3113 = vsel %vm3111, %v3090, %v3102
      %v3114 = vsel %vm3111, %v3092, %v3104
      %v3115 = vsel %vm3111, %v3094, %v3106
      %v3116 = vld [vmem:[%s10 + $0x7] sm:$0x1]
      %v3117 = vlaneseq
      %v3118 = vshrl.u32 %v3117, 7
      %v3119 = vsub.s32 0, %v3118
      %v3120 = vrot.slane %v3116, %v3119
      %v3121 = vmul.f32 %v3112, %v3120
      %v3122 = vmul.f32 %v3113, %v3120
      %v3123 = vmul.f32 %v3114, %v3120
      %v3124 = vmul.f32 %v3115, %v3120
      %s3125 = scalar_lea.vmem %s5, 56
      %v3126 = vld [vmem:[%s3125] sm:$0xf]
      %v3127 = vld [vmem:[%s3125 + $0x4] sm:$0xf]
      %v3128 = vpack.c.bf16 %v3122, %v3121
      %v3129 = vpack.c.bf16 %v3124, %v3123
      %v3132 = vunpack.c.l.b16 %v3126
      %v3133 = vunpack.c.l.b16 %v3127
      %v3134 = vpack.c.b16 %v3133, %v3132
      %v3136 = vsel %vm2515, %v3134, 0
      %3138 = vmatprep.subr.bf16.mxu0 0
      %3139 = vmatpush1.bf16.msra.mxu0 %v3128
      %3140 = vmatprep.subr.bf16.mxu0 0
      %3141 = vmatpush1.bf16.msra.mxu0 %v3129
      %3142 = vmatprep.subr.bf16.mxu0 0
      %3143 = vmatpush1.bf16.msra.mxu0 0
      %3144 = vmatprep.subr.bf16.mxu0 0
      %3145 = vmatpush1.bf16.msra.mxu0 0
      %3146 = vmatprep.subr.bf16.mxu0 0
      %3147 = vmatpush1.bf16.msra.mxu0 0
      %3148 = vmatprep.subr.bf16.mxu0 0
      %3149 = vmatpush1.bf16.msra.mxu0 0
      %3150 = vmatprep.subr.bf16.mxu0 0
      %3151 = vmatpush1.bf16.msra.mxu0 0
      %3152 = vmatprep.subr.bf16.mxu0 0
      %3153 = vmatpush1.bf16.msra.mxu0 0
      %3154 = vmatprep.subr.bf16.mxu0 0
      %3155 = vmatpush1.bf16.msra.mxu0 0
      %3156 = vmatprep.subr.bf16.mxu0 0
      %3157 = vmatpush1.bf16.msra.mxu0 0
      %3158 = vmatprep.subr.bf16.mxu0 0
      %3159 = vmatpush1.bf16.msra.mxu0 0
      %3160 = vmatprep.subr.bf16.mxu0 0
      %3161 = vmatpush1.bf16.msra.mxu0 0
      %3162 = vmatprep.subr.bf16.mxu0 0
      %3163 = vmatpush1.bf16.msra.mxu0 0
      %3164 = vmatprep.subr.bf16.mxu0 0
      %3165 = vmatpush1.bf16.msra.mxu0 0
      %3166 = vmatprep.subr.bf16.mxu0 0
      %3167 = vmatpush1.bf16.msra.mxu0 0
      %3168 = vmatprep.subr.bf16.mxu0 0
      %3169 = vmatpush1.bf16.msra.mxu0 0
      %3170 = vmatprep.mubr.bf16.mxu0 0
      %3171 = vmatmul.mubr.bf16.gmra.mrb[0].mxu0 %v3136
      %v3172 = vpop.f32.mrb[0].mxu0
      %v3173 = vadd.f32 0.0, %v3172
      %v3174 = vpop.f32.mrb[0].mxu0
      %v3175 = vpop.f32.mrb[0].mxu0
      %v3176 = vadd.f32 0.0, %v3175
      %v3177 = vpop.f32.mrb[0].mxu0
      %3178 = vdwg.mxu0
      %v3179 = vadd.f32 %v3085, %v3173
      %v3180 = vadd.f32 %v3086, %v3176
      %3181 = vrot.lane.b32.xlu0 %v2438, 119
      %v3182 = vpop.permute.xlu0 %3181
      %3183 = vrot.lane.b32.xlu0 %v2441, 119
      %v3184 = vpop.permute.xlu0 %3183
      %3185 = vrot.lane.b32.xlu0 %v2446, 119
      %v3186 = vpop.permute.xlu0 %3185
      %3187 = vrot.lane.b32.xlu0 %v2449, 119
      %v3188 = vpop.permute.xlu0 %3187
      %3193 = vrot.lane.b32.xlu0 %v2438, 55
      %v3194 = vpop.permute.xlu0 %3193
      %3195 = vrot.lane.b32.xlu0 %v2441, 55
      %v3196 = vpop.permute.xlu0 %3195
      %3197 = vrot.lane.b32.xlu0 %v2446, 55
      %v3198 = vpop.permute.xlu0 %3197
      %3199 = vrot.lane.b32.xlu0 %v2449, 55
      %v3200 = vpop.permute.xlu0 %3199
      %vm3205 = vcmask 449536
      %v3206 = vsel %vm3205, %v3182, %v3194
      %v3207 = vsel %vm3205, %v3184, %v3196
      %v3208 = vsel %vm3205, %v3186, %v3198
      %v3209 = vsel %vm3205, %v3188, %v3200
      %v3210 = vld [vmem:[%s10 + $0x8] sm:$0x1]
      %v3211 = vlaneseq
      %v3212 = vshrl.u32 %v3211, 7
      %v3213 = vsub.s32 0, %v3212
      %v3214 = vrot.slane %v3210, %v3213
      %v3215 = vmul.f32 %v3206, %v3214
      %v3216 = vmul.f32 %v3207, %v3214
      %v3217 = vmul.f32 %v3208, %v3214
      %v3218 = vmul.f32 %v3209, %v3214
      %s3219 = scalar_lea.vmem %s5, 64
      %v3220 = vld [vmem:[%s3219] sm:$0xf]
      %v3221 = vld [vmem:[%s3219 + $0x4] sm:$0xf]
      %v3222 = vpack.c.bf16 %v3216, %v3215
      %v3223 = vpack.c.bf16 %v3218, %v3217
      %v3226 = vunpack.c.l.b16 %v3220
      %v3227 = vunpack.c.l.b16 %v3221
      %v3228 = vpack.c.b16 %v3227, %v3226
      %v3230 = vsel %vm2515, %v3228, 0
      %3232 = vmatprep.subr.bf16.mxu0 0
      %3233 = vmatpush1.bf16.msra.mxu0 %v3222
      %3234 = vmatprep.subr.bf16.mxu0 0
      %3235 = vmatpush1.bf16.msra.mxu0 %v3223
      %3236 = vmatprep.subr.bf16.mxu0 0
      %3237 = vmatpush1.bf16.msra.mxu0 0
      %3238 = vmatprep.subr.bf16.mxu0 0
      %3239 = vmatpush1.bf16.msra.mxu0 0
      %3240 = vmatprep.subr.bf16.mxu0 0
      %3241 = vmatpush1.bf16.msra.mxu0 0
      %3242 = vmatprep.subr.bf16.mxu0 0
      %3243 = vmatpush1.bf16.msra.mxu0 0
      %3244 = vmatprep.subr.bf16.mxu0 0
      %3245 = vmatpush1.bf16.msra.mxu0 0
      %3246 = vmatprep.subr.bf16.mxu0 0
      %3247 = vmatpush1.bf16.msra.mxu0 0
      %3248 = vmatprep.subr.bf16.mxu0 0
      %3249 = vmatpush1.bf16.msra.mxu0 0
      %3250 = vmatprep.subr.bf16.mxu0 0
      %3251 = vmatpush1.bf16.msra.mxu0 0
      %3252 = vmatprep.subr.bf16.mxu0 0
      %3253 = vmatpush1.bf16.msra.mxu0 0
      %3254 = vmatprep.subr.bf16.mxu0 0
      %3255 = vmatpush1.bf16.msra.mxu0 0
      %3256 = vmatprep.subr.bf16.mxu0 0
      %3257 = vmatpush1.bf16.msra.mxu0 0
      %3258 = vmatprep.subr.bf16.mxu0 0
      %3259 = vmatpush1.bf16.msra.mxu0 0
      %3260 = vmatprep.subr.bf16.mxu0 0
      %3261 = vmatpush1.bf16.msra.mxu0 0
      %3262 = vmatprep.subr.bf16.mxu0 0
      %3263 = vmatpush1.bf16.msra.mxu0 0
      %3264 = vmatprep.mubr.bf16.mxu0 0
      %3265 = vmatmul.mubr.bf16.gmra.mrb[0].mxu0 %v3230
      %v3266 = vpop.f32.mrb[0].mxu0
      %v3267 = vadd.f32 0.0, %v3266
      %v3268 = vpop.f32.mrb[0].mxu0
      %v3269 = vpop.f32.mrb[0].mxu0
      %v3270 = vadd.f32 0.0, %v3269
      %v3271 = vpop.f32.mrb[0].mxu0
      %3272 = vdwg.mxu0
      %v3273 = vadd.f32 %v3179, %v3267
      %v3274 = vadd.f32 %v3180, %v3270
      %v3275 = vmax.f32 %v3273, 0.0
      %v3276 = vmax.f32 %v3274, 0.0
      %v3277 = vpack.c.bf16 %v3276, %v3275
      %v3278 = vld [vmem:[%s13] sm:$0xff]
      %v3279 = vld [vmem:[%s13 + $0x8] sm:$0xff]
      %v3280 = vld [vmem:[%s13 + $0x10] sm:$0xff]
      %v3281 = vld [vmem:[%s13 + $0x18] sm:$0xff]
      %v3282 = vld [vmem:[%s13 + $0x20] sm:$0xff]
      %v3283 = vld [vmem:[%s13 + $0x28] sm:$0xff]
      %v3284 = vld [vmem:[%s13 + $0x30] sm:$0xff]
      %v3285 = vld [vmem:[%s13 + $0x38] sm:$0xff]
      %v3294 = vunpack.c.l.b16 %v3278
      %v3295 = vunpack.c.h.b16 %v3278
      %v3296 = vunpack.c.l.b16 %v3279
      %v3297 = vunpack.c.h.b16 %v3279
      %v3298 = vunpack.c.l.b16 %v3280
      %v3299 = vunpack.c.h.b16 %v3280
      %v3300 = vunpack.c.l.b16 %v3281
      %v3301 = vunpack.c.h.b16 %v3281
      %v3302 = vunpack.c.l.b16 %v3282
      %v3303 = vunpack.c.h.b16 %v3282
      %v3304 = vunpack.c.l.b16 %v3283
      %v3305 = vunpack.c.h.b16 %v3283
      %v3306 = vunpack.c.l.b16 %v3284
      %v3307 = vunpack.c.h.b16 %v3284
      %v3308 = vunpack.c.l.b16 %v3285
      %v3309 = vunpack.c.h.b16 %v3285
      %v3310 = vpack.c.b16 %v3296, %v3294
      %v3311 = vpack.c.b16 %v3297, %v3295
      %v3312 = vpack.c.b16 %v3300, %v3298
      %v3313 = vpack.c.b16 %v3301, %v3299
      %v3314 = vpack.c.b16 %v3304, %v3302
      %v3315 = vpack.c.b16 %v3305, %v3303
      %v3316 = vpack.c.b16 %v3308, %v3306
      %v3317 = vpack.c.b16 %v3309, %v3307
      %vm3326 = vcmask 523264
      %v3328 = vsel %vm3326, %v3277, 0
      %3330 = vmatprep.subr.bf16.mxu0 %v3311
      %3331 = vmatpush1.bf16.msra.mxu0 %v3310
      %3332 = vmatprep.subr.bf16.mxu0 %v3313
      %3333 = vmatpush1.bf16.msra.mxu0 %v3312
      %3334 = vmatprep.subr.bf16.mxu0 %v3315
      %3335 = vmatpush1.bf16.msra.mxu0 %v3314
      %3336 = vmatprep.subr.bf16.mxu0 %v3317
      %3337 = vmatpush1.bf16.msra.mxu0 %v3316
      %3338 = vmatprep.subr.bf16.mxu0 0
      %3339 = vmatpush1.bf16.msra.mxu0 0
      %3340 = vmatprep.subr.bf16.mxu0 0
      %3341 = vmatpush1.bf16.msra.mxu0 0
      %3342 = vmatprep.subr.bf16.mxu0 0
      %3343 = vmatpush1.bf16.msra.mxu0 0
      %3344 = vmatprep.subr.bf16.mxu0 0
      %3345 = vmatpush1.bf16.msra.mxu0 0
      %3346 = vmatprep.subr.bf16.mxu0 0
      %3347 = vmatpush1.bf16.msra.mxu0 0
      %3348 = vmatprep.subr.bf16.mxu0 0
      %3349 = vmatpush1.bf16.msra.mxu0 0
      %3350 = vmatprep.subr.bf16.mxu0 0
      %3351 = vmatpush1.bf16.msra.mxu0 0
      %3352 = vmatprep.subr.bf16.mxu0 0
      %3353 = vmatpush1.bf16.msra.mxu0 0
      %3354 = vmatprep.subr.bf16.mxu0 0
      %3355 = vmatpush1.bf16.msra.mxu0 0
      %3356 = vmatprep.subr.bf16.mxu0 0
      %3357 = vmatpush1.bf16.msra.mxu0 0
      %3358 = vmatprep.subr.bf16.mxu0 0
      %3359 = vmatpush1.bf16.msra.mxu0 0
      %3360 = vmatprep.subr.bf16.mxu0 0
      %3361 = vmatpush1.bf16.msra.mxu0 0
      %3362 = vmatprep.mubr.bf16.mxu0 0
      %3363 = vmatmul.mubr.bf16.gmra.mrb[0].mxu0 %v3328
      %v3364 = vpop.f32.mrb[0].mxu0
      %v3365 = vadd.f32 0.0, %v3364
      %v3366 = vpop.f32.mrb[0].mxu0
      %v3367 = vadd.f32 0.0, %v3366
      %v3368 = vpop.f32.mrb[0].mxu0
      %v3369 = vadd.f32 0.0, %v3368
      %v3370 = vpop.f32.mrb[0].mxu0
      %v3371 = vadd.f32 0.0, %v3370
      %3372 = vdwg.mxu0
      %v3373 = vld [vmem:[%s8] sm:$0x3]
      %3375 = vset.pattern.permute.xlu0 0
      %3376 = vperm.xlu0 %3375, %v3373
      %v3377 = vpop.permute.xlu0 %3376
      %3379 = vrot.lane.b32.xlu0 %v3365, 34
      %v3380 = vpop.permute.xlu0 %3379
      %3381 = vrot.lane.b32.xlu0 %v3369, 34
      %v3382 = vpop.permute.xlu0 %3381
      %3383 = vrot.lane.b32.xlu0 %v3367, 34
      %v3384 = vpop.permute.xlu0 %3383
      %3385 = vrot.lane.b32.xlu0 %v3371, 34
      %v3386 = vpop.permute.xlu0 %3385
      %vm3387 = vcmp.lt.s32.totalorder %v488, 34
      %v3388 = vsel %vm3387, %v3380, %v3384
      %v3389 = vsel %vm3387, %v3382, %v3386
      %v3390 = vsel %vm3387, %v3384, %v3380
      %v3391 = vsel %vm3387, %v3386, %v3382
      %v3392 = vld [vmem:[%s11] ss:$8 sm:$0x3]
      %v3394 = vlaneseq
      %v3395 = vshrl.u32 %v3394, 7
      %v3396 = vsub.s32 0, %v3395
      %v3397 = vrot.slane %v3392, %v3396
      %v3398 = vlaneseq
      %v3399 = vshrl.u32 %v3398, 7
      %v3400 = vsub.s32 1, %v3399
      %v3401 = vrot.slane %v3392, %v3400
      %v3404 = vmul.f32 %v3390, %v3397
      %v3405 = vmul.f32 %v3388, %v3401
      %v3406 = vmul.f32 %v3391, %v3397
      %v3407 = vmul.f32 %v3389, %v3401
      %v3408 = vld [vmem:[%s7] sm:$0x1]
      %v3409 = vpack.c.bf16 %v3406, %v3404
      %v3410 = vpack.c.bf16 %v3407, %v3405
      %v3412 = vsel %vm1315, %v3408, 0
      %3414 = vmatprep.subr.bf16.mxu0 %v3410
      %3415 = vmatpush1.bf16.msra.mxu0 %v3409
      %3416 = vmatprep.subr.bf16.mxu0 0
      %3417 = vmatpush1.bf16.msra.mxu0 0
      %3418 = vmatprep.subr.bf16.mxu0 0
      %3419 = vmatpush1.bf16.msra.mxu0 0
      %3420 = vmatprep.subr.bf16.mxu0 0
      %3421 = vmatpush1.bf16.msra.mxu0 0
      %3422 = vmatprep.subr.bf16.mxu0 0
      %3423 = vmatpush1.bf16.msra.mxu0 0
      %3424 = vmatprep.subr.bf16.mxu0 0
      %3425 = vmatpush1.bf16.msra.mxu0 0
      %3426 = vmatprep.subr.bf16.mxu0 0
      %3427 = vmatpush1.bf16.msra.mxu0 0
      %3428 = vmatprep.subr.bf16.mxu0 0
      %3429 = vmatpush1.bf16.msra.mxu0 0
      %3430 = vmatprep.subr.bf16.mxu0 0
      %3431 = vmatpush1.bf16.msra.mxu0 0
      %3432 = vmatprep.subr.bf16.mxu0 0
      %3433 = vmatpush1.bf16.msra.mxu0 0
      %3434 = vmatprep.subr.bf16.mxu0 0
      %3435 = vmatpush1.bf16.msra.mxu0 0
      %3436 = vmatprep.subr.bf16.mxu0 0
      %3437 = vmatpush1.bf16.msra.mxu0 0
      %3438 = vmatprep.subr.bf16.mxu0 0
      %3439 = vmatpush1.bf16.msra.mxu0 0
      %3440 = vmatprep.subr.bf16.mxu0 0
      %3441 = vmatpush1.bf16.msra.mxu0 0
      %3442 = vmatprep.subr.bf16.mxu0 0
      %3443 = vmatpush1.bf16.msra.mxu0 0
      %3444 = vmatprep.subr.bf16.mxu0 0
      %3445 = vmatpush1.bf16.msra.mxu0 0
      %3446 = vmatprep.mubr.bf16.mxu0 0
      %3447 = vmatmul.mubr.bf16.gmra.mrb[0].mxu0 %v3412
      %v3448 = vpop.f32.mrb[0].mxu0
      %v3449 = vadd.f32 0.0, %v3448
      %v3450 = vpop.f32.mrb[0].mxu0
      %v3451 = vadd.f32 0.0, %v3450
      %v3452 = vpop.f32.mrb[0].mxu0
      %v3453 = vpop.f32.mrb[0].mxu0
      %3454 = vdwg.mxu0
      %v3455 = vadd.f32 %v3377, %v3449
      %v3456 = vadd.f32 %v3377, %v3451
      %3457 = vrot.lane.b32.xlu0 %v3365, 33
      %v3458 = vpop.permute.xlu0 %3457
      %3459 = vrot.lane.b32.xlu0 %v3369, 33
      %v3460 = vpop.permute.xlu0 %3459
      %3461 = vrot.lane.b32.xlu0 %v3367, 33
      %v3462 = vpop.permute.xlu0 %3461
      %3463 = vrot.lane.b32.xlu0 %v3371, 33
      %v3464 = vpop.permute.xlu0 %3463
      %vm3465 = vcmp.lt.s32.totalorder %v488, 33
      %v3466 = vsel %vm3465, %v3458, %v3462
      %v3467 = vsel %vm3465, %v3460, %v3464
      %v3468 = vsel %vm3465, %v3462, %v3458
      %v3469 = vsel %vm3465, %v3464, %v3460
      %s3470 = scalar_lea.vmem %s11, 1
      %v3471 = vld [vmem:[%s3470] ss:$8 sm:$0x3]
      %v3473 = vlaneseq
      %v3474 = vshrl.u32 %v3473, 7
      %v3475 = vsub.s32 0, %v3474
      %v3476 = vrot.slane %v3471, %v3475
      %v3477 = vlaneseq
      %v3478 = vshrl.u32 %v3477, 7
      %v3479 = vsub.s32 1, %v3478
      %v3480 = vrot.slane %v3471, %v3479
      %v3483 = vmul.f32 %v3468, %v3476
      %v3484 = vmul.f32 %v3466, %v3480
      %v3485 = vmul.f32 %v3469, %v3476
      %v3486 = vmul.f32 %v3467, %v3480
      %s3487 = scalar_lea.vmem %s7, 1
      %v3488 = vld [vmem:[%s3487] sm:$0x1]
      %v3489 = vpack.c.bf16 %v3485, %v3483
      %v3490 = vpack.c.bf16 %v3486, %v3484
      %v3492 = vsel %vm1315, %v3488, 0
      %3494 = vmatprep.subr.bf16.mxu0 %v3490
      %3495 = vmatpush1.bf16.msra.mxu0 %v3489
      %3496 = vmatprep.subr.bf16.mxu0 0
      %3497 = vmatpush1.bf16.msra.mxu0 0
      %3498 = vmatprep.subr.bf16.mxu0 0
      %3499 = vmatpush1.bf16.msra.mxu0 0
      %3500 = vmatprep.subr.bf16.mxu0 0
      %3501 = vmatpush1.bf16.msra.mxu0 0
      %3502 = vmatprep.subr.bf16.mxu0 0
      %3503 = vmatpush1.bf16.msra.mxu0 0
      %3504 = vmatprep.subr.bf16.mxu0 0
      %3505 = vmatpush1.bf16.msra.mxu0 0
      %3506 = vmatprep.subr.bf16.mxu0 0
      %3507 = vmatpush1.bf16.msra.mxu0 0
      %3508 = vmatprep.subr.bf16.mxu0 0
      %3509 = vmatpush1.bf16.msra.mxu0 0
      %3510 = vmatprep.subr.bf16.mxu0 0
      %3511 = vmatpush1.bf16.msra.mxu0 0
      %3512 = vmatprep.subr.bf16.mxu0 0
      %3513 = vmatpush1.bf16.msra.mxu0 0
      %3514 = vmatprep.subr.bf16.mxu0 0
      %3515 = vmatpush1.bf16.msra.mxu0 0
      %3516 = vmatprep.subr.bf16.mxu0 0
      %3517 = vmatpush1.bf16.msra.mxu0 0
      %3518 = vmatprep.subr.bf16.mxu0 0
      %3519 = vmatpush1.bf16.msra.mxu0 0
      %3520 = vmatprep.subr.bf16.mxu0 0
      %3521 = vmatpush1.bf16.msra.mxu0 0
      %3522 = vmatprep.subr.bf16.mxu0 0
      %3523 = vmatpush1.bf16.msra.mxu0 0
      %3524 = vmatprep.subr.bf16.mxu0 0
      %3525 = vmatpush1.bf16.msra.mxu0 0
      %3526 = vmatprep.mubr.bf16.mxu0 0
      %3527 = vmatmul.mubr.bf16.gmra.mrb[0].mxu0 %v3492
      %v3528 = vpop.f32.mrb[0].mxu0
      %v3529 = vadd.f32 0.0, %v3528
      %v3530 = vpop.f32.mrb[0].mxu0
      %v3531 = vadd.f32 0.0, %v3530
      %v3532 = vpop.f32.mrb[0].mxu0
      %v3533 = vpop.f32.mrb[0].mxu0
      %3534 = vdwg.mxu0
      %v3535 = vadd.f32 %v3455, %v3529
      %v3536 = vadd.f32 %v3456, %v3531
      %3537 = vrot.lane.b32.xlu0 %v3365, 32
      %v3538 = vpop.permute.xlu0 %3537
      %3539 = vrot.lane.b32.xlu0 %v3369, 32
      %v3540 = vpop.permute.xlu0 %3539
      %3541 = vrot.lane.b32.xlu0 %v3367, 32
      %v3542 = vpop.permute.xlu0 %3541
      %3543 = vrot.lane.b32.xlu0 %v3371, 32
      %v3544 = vpop.permute.xlu0 %3543
      %vm3545 = vcmp.lt.s32.totalorder %v488, 32
      %v3546 = vsel %vm3545, %v3538, %v3542
      %v3547 = vsel %vm3545, %v3540, %v3544
      %v3548 = vsel %vm3545, %v3542, %v3538
      %v3549 = vsel %vm3545, %v3544, %v3540
      %s3550 = scalar_lea.vmem %s11, 2
      %v3551 = vld [vmem:[%s3550] ss:$8 sm:$0x3]
      %v3553 = vlaneseq
      %v3554 = vshrl.u32 %v3553, 7
      %v3555 = vsub.s32 0, %v3554
      %v3556 = vrot.slane %v3551, %v3555
      %v3557 = vlaneseq
      %v3558 = vshrl.u32 %v3557, 7
      %v3559 = vsub.s32 1, %v3558
      %v3560 = vrot.slane %v3551, %v3559
      %v3563 = vmul.f32 %v3548, %v3556
      %v3564 = vmul.f32 %v3546, %v3560
      %v3565 = vmul.f32 %v3549, %v3556
      %v3566 = vmul.f32 %v3547, %v3560
      %s3567 = scalar_lea.vmem %s7, 2
      %v3568 = vld [vmem:[%s3567] sm:$0x1]
      %v3569 = vpack.c.bf16 %v3565, %v3563
      %v3570 = vpack.c.bf16 %v3566, %v3564
      %v3572 = vsel %vm1315, %v3568, 0
      %3574 = vmatprep.subr.bf16.mxu0 %v3570
      %3575 = vmatpush1.bf16.msra.mxu0 %v3569
      %3576 = vmatprep.subr.bf16.mxu0 0
      %3577 = vmatpush1.bf16.msra.mxu0 0
      %3578 = vmatprep.subr.bf16.mxu0 0
      %3579 = vmatpush1.bf16.msra.mxu0 0
      %3580 = vmatprep.subr.bf16.mxu0 0
      %3581 = vmatpush1.bf16.msra.mxu0 0
      %3582 = vmatprep.subr.bf16.mxu0 0
      %3583 = vmatpush1.bf16.msra.mxu0 0
      %3584 = vmatprep.subr.bf16.mxu0 0
      %3585 = vmatpush1.bf16.msra.mxu0 0
      %3586 = vmatprep.subr.bf16.mxu0 0
      %3587 = vmatpush1.bf16.msra.mxu0 0
      %3588 = vmatprep.subr.bf16.mxu0 0
      %3589 = vmatpush1.bf16.msra.mxu0 0
      %3590 = vmatprep.subr.bf16.mxu0 0
      %3591 = vmatpush1.bf16.msra.mxu0 0
      %3592 = vmatprep.subr.bf16.mxu0 0
      %3593 = vmatpush1.bf16.msra.mxu0 0
      %3594 = vmatprep.subr.bf16.mxu0 0
      %3595 = vmatpush1.bf16.msra.mxu0 0
      %3596 = vmatprep.subr.bf16.mxu0 0
      %3597 = vmatpush1.bf16.msra.mxu0 0
      %3598 = vmatprep.subr.bf16.mxu0 0
      %3599 = vmatpush1.bf16.msra.mxu0 0
      %3600 = vmatprep.subr.bf16.mxu0 0
      %3601 = vmatpush1.bf16.msra.mxu0 0
      %3602 = vmatprep.subr.bf16.mxu0 0
      %3603 = vmatpush1.bf16.msra.mxu0 0
      %3604 = vmatprep.subr.bf16.mxu0 0
      %3605 = vmatpush1.bf16.msra.mxu0 0
      %3606 = vmatprep.mubr.bf16.mxu0 0
      %3607 = vmatmul.mubr.bf16.gmra.mrb[0].mxu0 %v3572
      %v3608 = vpop.f32.mrb[0].mxu0
      %v3609 = vadd.f32 0.0, %v3608
      %v3610 = vpop.f32.mrb[0].mxu0
      %v3611 = vadd.f32 0.0, %v3610
      %v3612 = vpop.f32.mrb[0].mxu0
      %v3613 = vpop.f32.mrb[0].mxu0
      %3614 = vdwg.mxu0
      %v3615 = vadd.f32 %v3535, %v3609
      %v3616 = vadd.f32 %v3536, %v3611
      %3617 = vrot.lane.b32.xlu0 %v3365, 31
      %v3618 = vpop.permute.xlu0 %3617
      %3619 = vrot.lane.b32.xlu0 %v3369, 31
      %v3620 = vpop.permute.xlu0 %3619
      %3621 = vrot.lane.b32.xlu0 %v3367, 31
      %v3622 = vpop.permute.xlu0 %3621
      %3623 = vrot.lane.b32.xlu0 %v3371, 31
      %v3624 = vpop.permute.xlu0 %3623
      %vm3625 = vcmp.lt.s32.totalorder %v488, 31
      %v3626 = vsel %vm3625, %v3618, %v3622
      %v3627 = vsel %vm3625, %v3620, %v3624
      %v3628 = vsel %vm3625, %v3622, %v3618
      %v3629 = vsel %vm3625, %v3624, %v3620
      %s3630 = scalar_lea.vmem %s11, 3
      %v3631 = vld [vmem:[%s3630] ss:$8 sm:$0x3]
      %v3633 = vlaneseq
      %v3634 = vshrl.u32 %v3633, 7
      %v3635 = vsub.s32 0, %v3634
      %v3636 = vrot.slane %v3631, %v3635
      %v3637 = vlaneseq
      %v3638 = vshrl.u32 %v3637, 7
      %v3639 = vsub.s32 1, %v3638
      %v3640 = vrot.slane %v3631, %v3639
      %v3643 = vmul.f32 %v3628, %v3636
      %v3644 = vmul.f32 %v3626, %v3640
      %v3645 = vmul.f32 %v3629, %v3636
      %v3646 = vmul.f32 %v3627, %v3640
      %s3647 = scalar_lea.vmem %s7, 3
      %v3648 = vld [vmem:[%s3647] sm:$0x1]
      %v3649 = vpack.c.bf16 %v3645, %v3643
      %v3650 = vpack.c.bf16 %v3646, %v3644
      %v3652 = vsel %vm1315, %v3648, 0
      %3654 = vmatprep.subr.bf16.mxu0 %v3650
      %3655 = vmatpush1.bf16.msra.mxu0 %v3649
      %3656 = vmatprep.subr.bf16.mxu0 0
      %3657 = vmatpush1.bf16.msra.mxu0 0
      %3658 = vmatprep.subr.bf16.mxu0 0
      %3659 = vmatpush1.bf16.msra.mxu0 0
      %3660 = vmatprep.subr.bf16.mxu0 0
      %3661 = vmatpush1.bf16.msra.mxu0 0
      %3662 = vmatprep.subr.bf16.mxu0 0
      %3663 = vmatpush1.bf16.msra.mxu0 0
      %3664 = vmatprep.subr.bf16.mxu0 0
      %3665 = vmatpush1.bf16.msra.mxu0 0
      %3666 = vmatprep.subr.bf16.mxu0 0
      %3667 = vmatpush1.bf16.msra.mxu0 0
      %3668 = vmatprep.subr.bf16.mxu0 0
      %3669 = vmatpush1.bf16.msra.mxu0 0
      %3670 = vmatprep.subr.bf16.mxu0 0
      %3671 = vmatpush1.bf16.msra.mxu0 0
      %3672 = vmatprep.subr.bf16.mxu0 0
      %3673 = vmatpush1.bf16.msra.mxu0 0
      %3674 = vmatprep.subr.bf16.mxu0 0
      %3675 = vmatpush1.bf16.msra.mxu0 0
      %3676 = vmatprep.subr.bf16.mxu0 0
      %3677 = vmatpush1.bf16.msra.mxu0 0
      %3678 = vmatprep.subr.bf16.mxu0 0
      %3679 = vmatpush1.bf16.msra.mxu0 0
      %3680 = vmatprep.subr.bf16.mxu0 0
      %3681 = vmatpush1.bf16.msra.mxu0 0
      %3682 = vmatprep.subr.bf16.mxu0 0
      %3683 = vmatpush1.bf16.msra.mxu0 0
      %3684 = vmatprep.subr.bf16.mxu0 0
      %3685 = vmatpush1.bf16.msra.mxu0 0
      %3686 = vmatprep.mubr.bf16.mxu0 0
      %3687 = vmatmul.mubr.bf16.gmra.mrb[0].mxu0 %v3652
      %v3688 = vpop.f32.mrb[0].mxu0
      %v3689 = vadd.f32 0.0, %v3688
      %v3690 = vpop.f32.mrb[0].mxu0
      %v3691 = vadd.f32 0.0, %v3690
      %v3692 = vpop.f32.mrb[0].mxu0
      %v3693 = vpop.f32.mrb[0].mxu0
      %3694 = vdwg.mxu0
      %v3695 = vadd.f32 %v3615, %v3689
      %v3696 = vadd.f32 %v3616, %v3691
      %3697 = vrot.lane.b32.xlu0 %v3365, 30
      %v3698 = vpop.permute.xlu0 %3697
      %3699 = vrot.lane.b32.xlu0 %v3369, 30
      %v3700 = vpop.permute.xlu0 %3699
      %3701 = vrot.lane.b32.xlu0 %v3367, 30
      %v3702 = vpop.permute.xlu0 %3701
      %3703 = vrot.lane.b32.xlu0 %v3371, 30
      %v3704 = vpop.permute.xlu0 %3703
      %vm3705 = vcmp.lt.s32.totalorder %v488, 30
      %v3706 = vsel %vm3705, %v3698, %v3702
      %v3707 = vsel %vm3705, %v3700, %v3704
      %v3708 = vsel %vm3705, %v3702, %v3698
      %v3709 = vsel %vm3705, %v3704, %v3700
      %s3710 = scalar_lea.vmem %s11, 4
      %v3711 = vld [vmem:[%s3710] ss:$8 sm:$0x3]
      %v3713 = vlaneseq
      %v3714 = vshrl.u32 %v3713, 7
      %v3715 = vsub.s32 0, %v3714
      %v3716 = vrot.slane %v3711, %v3715
      %v3717 = vlaneseq
      %v3718 = vshrl.u32 %v3717, 7
      %v3719 = vsub.s32 1, %v3718
      %v3720 = vrot.slane %v3711, %v3719
      %v3723 = vmul.f32 %v3708, %v3716
      %v3724 = vmul.f32 %v3706, %v3720
      %v3725 = vmul.f32 %v3709, %v3716
      %v3726 = vmul.f32 %v3707, %v3720
      %s3727 = scalar_lea.vmem %s7, 4
      %v3728 = vld [vmem:[%s3727] sm:$0x1]
      %v3729 = vpack.c.bf16 %v3725, %v3723
      %v3730 = vpack.c.bf16 %v3726, %v3724
      %v3732 = vsel %vm1315, %v3728, 0
      %3734 = vmatprep.subr.bf16.mxu0 %v3730
      %3735 = vmatpush1.bf16.msra.mxu0 %v3729
      %3736 = vmatprep.subr.bf16.mxu0 0
      %3737 = vmatpush1.bf16.msra.mxu0 0
      %3738 = vmatprep.subr.bf16.mxu0 0
      %3739 = vmatpush1.bf16.msra.mxu0 0
      %3740 = vmatprep.subr.bf16.mxu0 0
      %3741 = vmatpush1.bf16.msra.mxu0 0
      %3742 = vmatprep.subr.bf16.mxu0 0
      %3743 = vmatpush1.bf16.msra.mxu0 0
      %3744 = vmatprep.subr.bf16.mxu0 0
      %3745 = vmatpush1.bf16.msra.mxu0 0
      %3746 = vmatprep.subr.bf16.mxu0 0
      %3747 = vmatpush1.bf16.msra.mxu0 0
      %3748 = vmatprep.subr.bf16.mxu0 0
      %3749 = vmatpush1.bf16.msra.mxu0 0
      %3750 = vmatprep.subr.bf16.mxu0 0
      %3751 = vmatpush1.bf16.msra.mxu0 0
      %3752 = vmatprep.subr.bf16.mxu0 0
      %3753 = vmatpush1.bf16.msra.mxu0 0
      %3754 = vmatprep.subr.bf16.mxu0 0
      %3755 = vmatpush1.bf16.msra.mxu0 0
      %3756 = vmatprep.subr.bf16.mxu0 0
      %3757 = vmatpush1.bf16.msra.mxu0 0
      %3758 = vmatprep.subr.bf16.mxu0 0
      %3759 = vmatpush1.bf16.msra.mxu0 0
      %3760 = vmatprep.subr.bf16.mxu0 0
      %3761 = vmatpush1.bf16.msra.mxu0 0
      %3762 = vmatprep.subr.bf16.mxu0 0
      %3763 = vmatpush1.bf16.msra.mxu0 0
      %3764 = vmatprep.subr.bf16.mxu0 0
      %3765 = vmatpush1.bf16.msra.mxu0 0
      %3766 = vmatprep.mubr.bf16.mxu0 0
      %3767 = vmatmul.mubr.bf16.gmra.mrb[0].mxu0 %v3732
      %v3768 = vpop.f32.mrb[0].mxu0
      %v3769 = vadd.f32 0.0, %v3768
      %v3770 = vpop.f32.mrb[0].mxu0
      %v3771 = vadd.f32 0.0, %v3770
      %v3772 = vpop.f32.mrb[0].mxu0
      %v3773 = vpop.f32.mrb[0].mxu0
      %3774 = vdwg.mxu0
      %v3775 = vadd.f32 %v3695, %v3769
      %v3776 = vadd.f32 %v3696, %v3771
      %3777 = vrot.lane.b32.xlu0 %v3365, 18
      %v3778 = vpop.permute.xlu0 %3777
      %3779 = vrot.lane.b32.xlu0 %v3369, 18
      %v3780 = vpop.permute.xlu0 %3779
      %3781 = vrot.lane.b32.xlu0 %v3367, 18
      %v3782 = vpop.permute.xlu0 %3781
      %3783 = vrot.lane.b32.xlu0 %v3371, 18
      %v3784 = vpop.permute.xlu0 %3783
      %vm3785 = vcmp.lt.s32.totalorder %v488, 18
      %v3786 = vsel %vm3785, %v3778, %v3782
      %v3787 = vsel %vm3785, %v3780, %v3784
      %v3788 = vsel %vm3785, %v3782, %v3778
      %v3789 = vsel %vm3785, %v3784, %v3780
      %s3790 = scalar_lea.vmem %s11, 5
      %v3791 = vld [vmem:[%s3790] ss:$8 sm:$0x3]
      %v3793 = vlaneseq
      %v3794 = vshrl.u32 %v3793, 7
      %v3795 = vsub.s32 0, %v3794
      %v3796 = vrot.slane %v3791, %v3795
      %v3797 = vlaneseq
      %v3798 = vshrl.u32 %v3797, 7
      %v3799 = vsub.s32 1, %v3798
      %v3800 = vrot.slane %v3791, %v3799
      %v3803 = vmul.f32 %v3788, %v3796
      %v3804 = vmul.f32 %v3786, %v3800
      %v3805 = vmul.f32 %v3789, %v3796
      %v3806 = vmul.f32 %v3787, %v3800
      %s3807 = scalar_lea.vmem %s7, 5
      %v3808 = vld [vmem:[%s3807] sm:$0x1]
      %v3809 = vpack.c.bf16 %v3805, %v3803
      %v3810 = vpack.c.bf16 %v3806, %v3804
      %v3812 = vsel %vm1315, %v3808, 0
      %3814 = vmatprep.subr.bf16.mxu0 %v3810
      %3815 = vmatpush1.bf16.msra.mxu0 %v3809
      %3816 = vmatprep.subr.bf16.mxu0 0
      %3817 = vmatpush1.bf16.msra.mxu0 0
      %3818 = vmatprep.subr.bf16.mxu0 0
      %3819 = vmatpush1.bf16.msra.mxu0 0
      %3820 = vmatprep.subr.bf16.mxu0 0
      %3821 = vmatpush1.bf16.msra.mxu0 0
      %3822 = vmatprep.subr.bf16.mxu0 0
      %3823 = vmatpush1.bf16.msra.mxu0 0
      %3824 = vmatprep.subr.bf16.mxu0 0
      %3825 = vmatpush1.bf16.msra.mxu0 0
      %3826 = vmatprep.subr.bf16.mxu0 0
      %3827 = vmatpush1.bf16.msra.mxu0 0
      %3828 = vmatprep.subr.bf16.mxu0 0
      %3829 = vmatpush1.bf16.msra.mxu0 0
      %3830 = vmatprep.subr.bf16.mxu0 0
      %3831 = vmatpush1.bf16.msra.mxu0 0
      %3832 = vmatprep.subr.bf16.mxu0 0
      %3833 = vmatpush1.bf16.msra.mxu0 0
      %3834 = vmatprep.subr.bf16.mxu0 0
      %3835 = vmatpush1.bf16.msra.mxu0 0
      %3836 = vmatprep.subr.bf16.mxu0 0
      %3837 = vmatpush1.bf16.msra.mxu0 0
      %3838 = vmatprep.subr.bf16.mxu0 0
      %3839 = vmatpush1.bf16.msra.mxu0 0
      %3840 = vmatprep.subr.bf16.mxu0 0
      %3841 = vmatpush1.bf16.msra.mxu0 0
      %3842 = vmatprep.subr.bf16.mxu0 0
      %3843 = vmatpush1.bf16.msra.mxu0 0
      %3844 = vmatprep.subr.bf16.mxu0 0
      %3845 = vmatpush1.bf16.msra.mxu0 0
      %3846 = vmatprep.mubr.bf16.mxu0 0
      %3847 = vmatmul.mubr.bf16.gmra.mrb[0].mxu0 %v3812
      %v3848 = vpop.f32.mrb[0].mxu0
      %v3849 = vadd.f32 0.0, %v3848
      %v3850 = vpop.f32.mrb[0].mxu0
      %v3851 = vadd.f32 0.0, %v3850
      %v3852 = vpop.f32.mrb[0].mxu0
      %v3853 = vpop.f32.mrb[0].mxu0
      %3854 = vdwg.mxu0
      %v3855 = vadd.f32 %v3775, %v3849
      %v3856 = vadd.f32 %v3776, %v3851
      %3857 = vrot.lane.b32.xlu0 %v3365, 17
      %v3858 = vpop.permute.xlu0 %3857
      %3859 = vrot.lane.b32.xlu0 %v3369, 17
      %v3860 = vpop.permute.xlu0 %3859
      %3861 = vrot.lane.b32.xlu0 %v3367, 17
      %v3862 = vpop.permute.xlu0 %3861
      %3863 = vrot.lane.b32.xlu0 %v3371, 17
      %v3864 = vpop.permute.xlu0 %3863
      %v3865 = vsel %vm489, %v3858, %v3862
      %v3866 = vsel %vm489, %v3860, %v3864
      %v3867 = vsel %vm489, %v3862, %v3858
      %v3868 = vsel %vm489, %v3864, %v3860
      %s3869 = scalar_lea.vmem %s11, 6
      %v3870 = vld [vmem:[%s3869] ss:$8 sm:$0x3]
      %v3872 = vlaneseq
      %v3873 = vshrl.u32 %v3872, 7
      %v3874 = vsub.s32 0, %v3873
      %v3875 = vrot.slane %v3870, %v3874
      %v3876 = vlaneseq
      %v3877 = vshrl.u32 %v3876, 7
      %v3878 = vsub.s32 1, %v3877
      %v3879 = vrot.slane %v3870, %v3878
      %v3882 = vmul.f32 %v3867, %v3875
      %v3883 = vmul.f32 %v3865, %v3879
      %v3884 = vmul.f32 %v3868, %v3875
      %v3885 = vmul.f32 %v3866, %v3879
      %s3886 = scalar_lea.vmem %s7, 6
      %v3887 = vld [vmem:[%s3886] sm:$0x1]
      %v3888 = vpack.c.bf16 %v3884, %v3882
      %v3889 = vpack.c.bf16 %v3885, %v3883
      %v3891 = vsel %vm1315, %v3887, 0
      %3893 = vmatprep.subr.bf16.mxu0 %v3889
      %3894 = vmatpush1.bf16.msra.mxu0 %v3888
      %3895 = vmatprep.subr.bf16.mxu0 0
      %3896 = vmatpush1.bf16.msra.mxu0 0
      %3897 = vmatprep.subr.bf16.mxu0 0
      %3898 = vmatpush1.bf16.msra.mxu0 0
      %3899 = vmatprep.subr.bf16.mxu0 0
      %3900 = vmatpush1.bf16.msra.mxu0 0
      %3901 = vmatprep.subr.bf16.mxu0 0
      %3902 = vmatpush1.bf16.msra.mxu0 0
      %3903 = vmatprep.subr.bf16.mxu0 0
      %3904 = vmatpush1.bf16.msra.mxu0 0
      %3905 = vmatprep.subr.bf16.mxu0 0
      %3906 = vmatpush1.bf16.msra.mxu0 0
      %3907 = vmatprep.subr.bf16.mxu0 0
      %3908 = vmatpush1.bf16.msra.mxu0 0
      %3909 = vmatprep.subr.bf16.mxu0 0
      %3910 = vmatpush1.bf16.msra.mxu0 0
      %3911 = vmatprep.subr.bf16.mxu0 0
      %3912 = vmatpush1.bf16.msra.mxu0 0
      %3913 = vmatprep.subr.bf16.mxu0 0
      %3914 = vmatpush1.bf16.msra.mxu0 0
      %3915 = vmatprep.subr.bf16.mxu0 0
      %3916 = vmatpush1.bf16.msra.mxu0 0
      %3917 = vmatprep.subr.bf16.mxu0 0
      %3918 = vmatpush1.bf16.msra.mxu0 0
      %3919 = vmatprep.subr.bf16.mxu0 0
      %3920 = vmatpush1.bf16.msra.mxu0 0
      %3921 = vmatprep.subr.bf16.mxu0 0
      %3922 = vmatpush1.bf16.msra.mxu0 0
      %3923 = vmatprep.subr.bf16.mxu0 0
      %3924 = vmatpush1.bf16.msra.mxu0 0
      %3925 = vmatprep.mubr.bf16.mxu0 0
      %3926 = vmatmul.mubr.bf16.gmra.mrb[0].mxu0 %v3891
      %v3927 = vpop.f32.mrb[0].mxu0
      %v3928 = vadd.f32 0.0, %v3927
      %v3929 = vpop.f32.mrb[0].mxu0
      %v3930 = vadd.f32 0.0, %v3929
      %v3931 = vpop.f32.mrb[0].mxu0
      %v3932 = vpop.f32.mrb[0].mxu0
      %3933 = vdwg.mxu0
      %v3934 = vadd.f32 %v3855, %v3928
      %v3935 = vadd.f32 %v3856, %v3930
      %3936 = vrot.lane.b32.xlu0 %v3365, 16
      %v3937 = vpop.permute.xlu0 %3936
      %3938 = vrot.lane.b32.xlu0 %v3369, 16
      %v3939 = vpop.permute.xlu0 %3938
      %3940 = vrot.lane.b32.xlu0 %v3367, 16
      %v3941 = vpop.permute.xlu0 %3940
      %3942 = vrot.lane.b32.xlu0 %v3371, 16
      %v3943 = vpop.permute.xlu0 %3942
      %v3944 = vsel %vm577, %v3937, %v3941
      %v3945 = vsel %vm577, %v3939, %v3943
      %v3946 = vsel %vm577, %v3941, %v3937
      %v3947 = vsel %vm577, %v3943, %v3939
      %s3948 = scalar_lea.vmem %s11, 7
      %v3949 = vld [vmem:[%s3948] ss:$8 sm:$0x3]
      %v3951 = vlaneseq
      %v3952 = vshrl.u32 %v3951, 7
      %v3953 = vsub.s32 0, %v3952
      %v3954 = vrot.slane %v3949, %v3953
      %v3955 = vlaneseq
      %v3956 = vshrl.u32 %v3955, 7
      %v3957 = vsub.s32 1, %v3956
      %v3958 = vrot.slane %v3949, %v3957
      %v3961 = vmul.f32 %v3946, %v3954
      %v3962 = vmul.f32 %v3944, %v3958
      %v3963 = vmul.f32 %v3947, %v3954
      %v3964 = vmul.f32 %v3945, %v3958
      %s3965 = scalar_lea.vmem %s7, 7
      %v3966 = vld [vmem:[%s3965] sm:$0x1]
      %v3967 = vpack.c.bf16 %v3963, %v3961
      %v3968 = vpack.c.bf16 %v3964, %v3962
      %v3970 = vsel %vm1315, %v3966, 0
      %3972 = vmatprep.subr.bf16.mxu0 %v3968
      %3973 = vmatpush1.bf16.msra.mxu0 %v3967
      %3974 = vmatprep.subr.bf16.mxu0 0
      %3975 = vmatpush1.bf16.msra.mxu0 0
      %3976 = vmatprep.subr.bf16.mxu0 0
      %3977 = vmatpush1.bf16.msra.mxu0 0
      %3978 = vmatprep.subr.bf16.mxu0 0
      %3979 = vmatpush1.bf16.msra.mxu0 0
      %3980 = vmatprep.subr.bf16.mxu0 0
      %3981 = vmatpush1.bf16.msra.mxu0 0
      %3982 = vmatprep.subr.bf16.mxu0 0
      %3983 = vmatpush1.bf16.msra.mxu0 0
      %3984 = vmatprep.subr.bf16.mxu0 0
      %3985 = vmatpush1.bf16.msra.mxu0 0
      %3986 = vmatprep.subr.bf16.mxu0 0
      %3987 = vmatpush1.bf16.msra.mxu0 0
      %3988 = vmatprep.subr.bf16.mxu0 0
      %3989 = vmatpush1.bf16.msra.mxu0 0
      %3990 = vmatprep.subr.bf16.mxu0 0
      %3991 = vmatpush1.bf16.msra.mxu0 0
      %3992 = vmatprep.subr.bf16.mxu0 0
      %3993 = vmatpush1.bf16.msra.mxu0 0
      %3994 = vmatprep.subr.bf16.mxu0 0
      %3995 = vmatpush1.bf16.msra.mxu0 0
      %3996 = vmatprep.subr.bf16.mxu0 0
      %3997 = vmatpush1.bf16.msra.mxu0 0
      %3998 = vmatprep.subr.bf16.mxu0 0
      %3999 = vmatpush1.bf16.msra.mxu0 0
      %4000 = vmatprep.subr.bf16.mxu0 0
      %4001 = vmatpush1.bf16.msra.mxu0 0
      %4002 = vmatprep.subr.bf16.mxu0 0
      %4003 = vmatpush1.bf16.msra.mxu0 0
      %4004 = vmatprep.mubr.bf16.mxu0 0
      %4005 = vmatmul.mubr.bf16.gmra.mrb[0].mxu0 %v3970
      %v4006 = vpop.f32.mrb[0].mxu0
      %v4007 = vadd.f32 0.0, %v4006
      %v4008 = vpop.f32.mrb[0].mxu0
      %v4009 = vadd.f32 0.0, %v4008
      %v4010 = vpop.f32.mrb[0].mxu0
      %v4011 = vpop.f32.mrb[0].mxu0
      %4012 = vdwg.mxu0
      %v4013 = vadd.f32 %v3934, %v4007
      %v4014 = vadd.f32 %v3935, %v4009
      %4015 = vrot.lane.b32.xlu0 %v3365, 15
      %v4016 = vpop.permute.xlu0 %4015
      %4017 = vrot.lane.b32.xlu0 %v3369, 15
      %v4018 = vpop.permute.xlu0 %4017
      %4019 = vrot.lane.b32.xlu0 %v3367, 15
      %v4020 = vpop.permute.xlu0 %4019
      %4021 = vrot.lane.b32.xlu0 %v3371, 15
      %v4022 = vpop.permute.xlu0 %4021
      %v4023 = vsel %vm665, %v4016, %v4020
      %v4024 = vsel %vm665, %v4018, %v4022
      %v4025 = vsel %vm665, %v4020, %v4016
      %v4026 = vsel %vm665, %v4022, %v4018
      %s4027 = scalar_lea.vmem %s11, 16
      %v4028 = vld [vmem:[%s4027] ss:$8 sm:$0x3]
      %v4030 = vlaneseq
      %v4031 = vshrl.u32 %v4030, 7
      %v4032 = vsub.s32 0, %v4031
      %v4033 = vrot.slane %v4028, %v4032
      %v4034 = vlaneseq
      %v4035 = vshrl.u32 %v4034, 7
      %v4036 = vsub.s32 1, %v4035
      %v4037 = vrot.slane %v4028, %v4036
      %v4040 = vmul.f32 %v4025, %v4033
      %v4041 = vmul.f32 %v4023, %v4037
      %v4042 = vmul.f32 %v4026, %v4033
      %v4043 = vmul.f32 %v4024, %v4037
      %s4044 = scalar_lea.vmem %s7, 8
      %v4045 = vld [vmem:[%s4044] sm:$0x1]
      %v4046 = vpack.c.bf16 %v4042, %v4040
      %v4047 = vpack.c.bf16 %v4043, %v4041
      %v4049 = vsel %vm1315, %v4045, 0
      %4051 = vmatprep.subr.bf16.mxu0 %v4047
      %4052 = vmatpush1.bf16.msra.mxu0 %v4046
      %4053 = vmatprep.subr.bf16.mxu0 0
      %4054 = vmatpush1.bf16.msra.mxu0 0
      %4055 = vmatprep.subr.bf16.mxu0 0
      %4056 = vmatpush1.bf16.msra.mxu0 0
      %4057 = vmatprep.subr.bf16.mxu0 0
      %4058 = vmatpush1.bf16.msra.mxu0 0
      %4059 = vmatprep.subr.bf16.mxu0 0
      %4060 = vmatpush1.bf16.msra.mxu0 0
      %4061 = vmatprep.subr.bf16.mxu0 0
      %4062 = vmatpush1.bf16.msra.mxu0 0
      %4063 = vmatprep.subr.bf16.mxu0 0
      %4064 = vmatpush1.bf16.msra.mxu0 0
      %4065 = vmatprep.subr.bf16.mxu0 0
      %4066 = vmatpush1.bf16.msra.mxu0 0
      %4067 = vmatprep.subr.bf16.mxu0 0
      %4068 = vmatpush1.bf16.msra.mxu0 0
      %4069 = vmatprep.subr.bf16.mxu0 0
      %4070 = vmatpush1.bf16.msra.mxu0 0
      %4071 = vmatprep.subr.bf16.mxu0 0
      %4072 = vmatpush1.bf16.msra.mxu0 0
      %4073 = vmatprep.subr.bf16.mxu0 0
      %4074 = vmatpush1.bf16.msra.mxu0 0
      %4075 = vmatprep.subr.bf16.mxu0 0
      %4076 = vmatpush1.bf16.msra.mxu0 0
      %4077 = vmatprep.subr.bf16.mxu0 0
      %4078 = vmatpush1.bf16.msra.mxu0 0
      %4079 = vmatprep.subr.bf16.mxu0 0
      %4080 = vmatpush1.bf16.msra.mxu0 0
      %4081 = vmatprep.subr.bf16.mxu0 0
      %4082 = vmatpush1.bf16.msra.mxu0 0
      %4083 = vmatprep.mubr.bf16.mxu0 0
      %4084 = vmatmul.mubr.bf16.gmra.mrb[0].mxu0 %v4049
      %v4085 = vpop.f32.mrb[0].mxu0
      %v4086 = vadd.f32 0.0, %v4085
      %v4087 = vpop.f32.mrb[0].mxu0
      %v4088 = vadd.f32 0.0, %v4087
      %v4089 = vpop.f32.mrb[0].mxu0
      %v4090 = vpop.f32.mrb[0].mxu0
      %4091 = vdwg.mxu0
      %v4092 = vadd.f32 %v4013, %v4086
      %v4093 = vadd.f32 %v4014, %v4088
      %4094 = vrot.lane.b32.xlu0 %v3365, 14
      %v4095 = vpop.permute.xlu0 %4094
      %4096 = vrot.lane.b32.xlu0 %v3369, 14
      %v4097 = vpop.permute.xlu0 %4096
      %4098 = vrot.lane.b32.xlu0 %v3367, 14
      %v4099 = vpop.permute.xlu0 %4098
      %4100 = vrot.lane.b32.xlu0 %v3371, 14
      %v4101 = vpop.permute.xlu0 %4100
      %vm4102 = vcmp.lt.s32.totalorder %v488, 14
      %v4103 = vsel %vm4102, %v4095, %v4099
      %v4104 = vsel %vm4102, %v4097, %v4101
      %v4105 = vsel %vm4102, %v4099, %v4095
      %v4106 = vsel %vm4102, %v4101, %v4097
      %s4107 = scalar_lea.vmem %s11, 17
      %v4108 = vld [vmem:[%s4107] ss:$8 sm:$0x3]
      %v4110 = vlaneseq
      %v4111 = vshrl.u32 %v4110, 7
      %v4112 = vsub.s32 0, %v4111
      %v4113 = vrot.slane %v4108, %v4112
      %v4114 = vlaneseq
      %v4115 = vshrl.u32 %v4114, 7
      %v4116 = vsub.s32 1, %v4115
      %v4117 = vrot.slane %v4108, %v4116
      %v4120 = vmul.f32 %v4105, %v4113
      %v4121 = vmul.f32 %v4103, %v4117
      %v4122 = vmul.f32 %v4106, %v4113
      %v4123 = vmul.f32 %v4104, %v4117
      %s4124 = scalar_lea.vmem %s7, 9
      %v4125 = vld [vmem:[%s4124] sm:$0x1]
      %v4126 = vpack.c.bf16 %v4122, %v4120
      %v4127 = vpack.c.bf16 %v4123, %v4121
      %v4129 = vsel %vm1315, %v4125, 0
      %4131 = vmatprep.subr.bf16.mxu0 %v4127
      %4132 = vmatpush1.bf16.msra.mxu0 %v4126
      %4133 = vmatprep.subr.bf16.mxu0 0
      %4134 = vmatpush1.bf16.msra.mxu0 0
      %4135 = vmatprep.subr.bf16.mxu0 0
      %4136 = vmatpush1.bf16.msra.mxu0 0
      %4137 = vmatprep.subr.bf16.mxu0 0
      %4138 = vmatpush1.bf16.msra.mxu0 0
      %4139 = vmatprep.subr.bf16.mxu0 0
      %4140 = vmatpush1.bf16.msra.mxu0 0
      %4141 = vmatprep.subr.bf16.mxu0 0
      %4142 = vmatpush1.bf16.msra.mxu0 0
      %4143 = vmatprep.subr.bf16.mxu0 0
      %4144 = vmatpush1.bf16.msra.mxu0 0
      %4145 = vmatprep.subr.bf16.mxu0 0
      %4146 = vmatpush1.bf16.msra.mxu0 0
      %4147 = vmatprep.subr.bf16.mxu0 0
      %4148 = vmatpush1.bf16.msra.mxu0 0
      %4149 = vmatprep.subr.bf16.mxu0 0
      %4150 = vmatpush1.bf16.msra.mxu0 0
      %4151 = vmatprep.subr.bf16.mxu0 0
      %4152 = vmatpush1.bf16.msra.mxu0 0
      %4153 = vmatprep.subr.bf16.mxu0 0
      %4154 = vmatpush1.bf16.msra.mxu0 0
      %4155 = vmatprep.subr.bf16.mxu0 0
      %4156 = vmatpush1.bf16.msra.mxu0 0
      %4157 = vmatprep.subr.bf16.mxu0 0
      %4158 = vmatpush1.bf16.msra.mxu0 0
      %4159 = vmatprep.subr.bf16.mxu0 0
      %4160 = vmatpush1.bf16.msra.mxu0 0
      %4161 = vmatprep.subr.bf16.mxu0 0
      %4162 = vmatpush1.bf16.msra.mxu0 0
      %4163 = vmatprep.mubr.bf16.mxu0 0
      %4164 = vmatmul.mubr.bf16.gmra.mrb[0].mxu0 %v4129
      %v4165 = vpop.f32.mrb[0].mxu0
      %v4166 = vadd.f32 0.0, %v4165
      %v4167 = vpop.f32.mrb[0].mxu0
      %v4168 = vadd.f32 0.0, %v4167
      %v4169 = vpop.f32.mrb[0].mxu0
      %v4170 = vpop.f32.mrb[0].mxu0
      %4171 = vdwg.mxu0
      %v4172 = vadd.f32 %v4092, %v4166
      %v4173 = vadd.f32 %v4093, %v4168
      %4174 = vrot.lane.b32.xlu0 %v3365, 2
      %v4175 = vpop.permute.xlu0 %4174
      %4176 = vrot.lane.b32.xlu0 %v3369, 2
      %v4177 = vpop.permute.xlu0 %4176
      %4178 = vrot.lane.b32.xlu0 %v3367, 2
      %v4179 = vpop.permute.xlu0 %4178
      %4180 = vrot.lane.b32.xlu0 %v3371, 2
      %v4181 = vpop.permute.xlu0 %4180
      %vm4182 = vcmp.lt.s32.totalorder %v488, 2
      %v4183 = vsel %vm4182, %v4175, %v4179
      %v4184 = vsel %vm4182, %v4177, %v4181
      %v4185 = vsel %vm4182, %v4179, %v4175
      %v4186 = vsel %vm4182, %v4181, %v4177
      %s4187 = scalar_lea.vmem %s11, 18
      %v4188 = vld [vmem:[%s4187] ss:$8 sm:$0x3]
      %v4190 = vlaneseq
      %v4191 = vshrl.u32 %v4190, 7
      %v4192 = vsub.s32 0, %v4191
      %v4193 = vrot.slane %v4188, %v4192
      %v4194 = vlaneseq
      %v4195 = vshrl.u32 %v4194, 7
      %v4196 = vsub.s32 1, %v4195
      %v4197 = vrot.slane %v4188, %v4196
      %v4200 = vmul.f32 %v4185, %v4193
      %v4201 = vmul.f32 %v4183, %v4197
      %v4202 = vmul.f32 %v4186, %v4193
      %v4203 = vmul.f32 %v4184, %v4197
      %s4204 = scalar_lea.vmem %s7, 10
      %v4205 = vld [vmem:[%s4204] sm:$0x1]
      %v4206 = vpack.c.bf16 %v4202, %v4200
      %v4207 = vpack.c.bf16 %v4203, %v4201
      %v4209 = vsel %vm1315, %v4205, 0
      %4211 = vmatprep.subr.bf16.mxu0 %v4207
      %4212 = vmatpush1.bf16.msra.mxu0 %v4206
      %4213 = vmatprep.subr.bf16.mxu0 0
      %4214 = vmatpush1.bf16.msra.mxu0 0
      %4215 = vmatprep.subr.bf16.mxu0 0
      %4216 = vmatpush1.bf16.msra.mxu0 0
      %4217 = vmatprep.subr.bf16.mxu0 0
      %4218 = vmatpush1.bf16.msra.mxu0 0
      %4219 = vmatprep.subr.bf16.mxu0 0
      %4220 = vmatpush1.bf16.msra.mxu0 0
      %4221 = vmatprep.subr.bf16.mxu0 0
      %4222 = vmatpush1.bf16.msra.mxu0 0
      %4223 = vmatprep.subr.bf16.mxu0 0
      %4224 = vmatpush1.bf16.msra.mxu0 0
      %4225 = vmatprep.subr.bf16.mxu0 0
      %4226 = vmatpush1.bf16.msra.mxu0 0
      %4227 = vmatprep.subr.bf16.mxu0 0
      %4228 = vmatpush1.bf16.msra.mxu0 0
      %4229 = vmatprep.subr.bf16.mxu0 0
      %4230 = vmatpush1.bf16.msra.mxu0 0
      %4231 = vmatprep.subr.bf16.mxu0 0
      %4232 = vmatpush1.bf16.msra.mxu0 0
      %4233 = vmatprep.subr.bf16.mxu0 0
      %4234 = vmatpush1.bf16.msra.mxu0 0
      %4235 = vmatprep.subr.bf16.mxu0 0
      %4236 = vmatpush1.bf16.msra.mxu0 0
      %4237 = vmatprep.subr.bf16.mxu0 0
      %4238 = vmatpush1.bf16.msra.mxu0 0
      %4239 = vmatprep.subr.bf16.mxu0 0
      %4240 = vmatpush1.bf16.msra.mxu0 0
      %4241 = vmatprep.subr.bf16.mxu0 0
      %4242 = vmatpush1.bf16.msra.mxu0 0
      %4243 = vmatprep.mubr.bf16.mxu0 0
      %4244 = vmatmul.mubr.bf16.gmra.mrb[0].mxu0 %v4209
      %v4245 = vpop.f32.mrb[0].mxu0
      %v4246 = vadd.f32 0.0, %v4245
      %v4247 = vpop.f32.mrb[0].mxu0
      %v4248 = vadd.f32 0.0, %v4247
      %v4249 = vpop.f32.mrb[0].mxu0
      %v4250 = vpop.f32.mrb[0].mxu0
      %4251 = vdwg.mxu0
      %v4252 = vadd.f32 %v4172, %v4246
      %v4253 = vadd.f32 %v4173, %v4248
      %4254 = vrot.lane.b32.xlu0 %v3365, 1
      %v4255 = vpop.permute.xlu0 %4254
      %4256 = vrot.lane.b32.xlu0 %v3369, 1
      %v4257 = vpop.permute.xlu0 %4256
      %4258 = vrot.lane.b32.xlu0 %v3367, 1
      %v4259 = vpop.permute.xlu0 %4258
      %4260 = vrot.lane.b32.xlu0 %v3371, 1
      %v4261 = vpop.permute.xlu0 %4260
      %v4262 = vsel %vm753, %v4255, %v4259
      %v4263 = vsel %vm753, %v4257, %v4261
      %v4264 = vsel %vm753, %v4259, %v4255
      %v4265 = vsel %vm753, %v4261, %v4257
      %s4266 = scalar_lea.vmem %s11, 19
      %v4267 = vld [vmem:[%s4266] ss:$8 sm:$0x3]
      %v4269 = vlaneseq
      %v4270 = vshrl.u32 %v4269, 7
      %v4271 = vsub.s32 0, %v4270
      %v4272 = vrot.slane %v4267, %v4271
      %v4273 = vlaneseq
      %v4274 = vshrl.u32 %v4273, 7
      %v4275 = vsub.s32 1, %v4274
      %v4276 = vrot.slane %v4267, %v4275
      %v4279 = vmul.f32 %v4264, %v4272
      %v4280 = vmul.f32 %v4262, %v4276
      %v4281 = vmul.f32 %v4265, %v4272
      %v4282 = vmul.f32 %v4263, %v4276
      %s4283 = scalar_lea.vmem %s7, 11
      %v4284 = vld [vmem:[%s4283] sm:$0x1]
      %v4285 = vpack.c.bf16 %v4281, %v4279
      %v4286 = vpack.c.bf16 %v4282, %v4280
      %v4288 = vsel %vm1315, %v4284, 0
      %4290 = vmatprep.subr.bf16.mxu0 %v4286
      %4291 = vmatpush1.bf16.msra.mxu0 %v4285
      %4292 = vmatprep.subr.bf16.mxu0 0
      %4293 = vmatpush1.bf16.msra.mxu0 0
      %4294 = vmatprep.subr.bf16.mxu0 0
      %4295 = vmatpush1.bf16.msra.mxu0 0
      %4296 = vmatprep.subr.bf16.mxu0 0
      %4297 = vmatpush1.bf16.msra.mxu0 0
      %4298 = vmatprep.subr.bf16.mxu0 0
      %4299 = vmatpush1.bf16.msra.mxu0 0
      %4300 = vmatprep.subr.bf16.mxu0 0
      %4301 = vmatpush1.bf16.msra.mxu0 0
      %4302 = vmatprep.subr.bf16.mxu0 0
      %4303 = vmatpush1.bf16.msra.mxu0 0
      %4304 = vmatprep.subr.bf16.mxu0 0
      %4305 = vmatpush1.bf16.msra.mxu0 0
      %4306 = vmatprep.subr.bf16.mxu0 0
      %4307 = vmatpush1.bf16.msra.mxu0 0
      %4308 = vmatprep.subr.bf16.mxu0 0
      %4309 = vmatpush1.bf16.msra.mxu0 0
      %4310 = vmatprep.subr.bf16.mxu0 0
      %4311 = vmatpush1.bf16.msra.mxu0 0
      %4312 = vmatprep.subr.bf16.mxu0 0
      %4313 = vmatpush1.bf16.msra.mxu0 0
      %4314 = vmatprep.subr.bf16.mxu0 0
      %4315 = vmatpush1.bf16.msra.mxu0 0
      %4316 = vmatprep.subr.bf16.mxu0 0
      %4317 = vmatpush1.bf16.msra.mxu0 0
      %4318 = vmatprep.subr.bf16.mxu0 0
      %4319 = vmatpush1.bf16.msra.mxu0 0
      %4320 = vmatprep.subr.bf16.mxu0 0
      %4321 = vmatpush1.bf16.msra.mxu0 0
      %4322 = vmatprep.mubr.bf16.mxu0 0
      %4323 = vmatmul.mubr.bf16.gmra.mrb[0].mxu0 %v4288
      %v4324 = vpop.f32.mrb[0].mxu0
      %v4325 = vadd.f32 0.0, %v4324
      %v4326 = vpop.f32.mrb[0].mxu0
      %v4327 = vadd.f32 0.0, %v4326
      %v4328 = vpop.f32.mrb[0].mxu0
      %v4329 = vpop.f32.mrb[0].mxu0
      %4330 = vdwg.mxu0
      %v4331 = vadd.f32 %v4252, %v4325
      %v4332 = vadd.f32 %v4253, %v4327
      %s4333 = scalar_lea.vmem %s7, 12
      %v4334 = vld [vmem:[%s4333] sm:$0x1]
      %v4335 = vpack.c.bf16 %v3369, %v3365
      %v4336 = vpack.c.bf16 %v3371, %v3367
      %v4338 = vsel %vm1315, %v4334, 0
      %4340 = vmatprep.subr.bf16.mxu0 %v4336
      %4341 = vmatpush1.bf16.msra.mxu0 %v4335
      %4342 = vmatprep.subr.bf16.mxu0 0
      %4343 = vmatpush1.bf16.msra.mxu0 0
      %4344 = vmatprep.subr.bf16.mxu0 0
      %4345 = vmatpush1.bf16.msra.mxu0 0
      %4346 = vmatprep.subr.bf16.mxu0 0
      %4347 = vmatpush1.bf16.msra.mxu0 0
      %4348 = vmatprep.subr.bf16.mxu0 0
      %4349 = vmatpush1.bf16.msra.mxu0 0
      %4350 = vmatprep.subr.bf16.mxu0 0
      %4351 = vmatpush1.bf16.msra.mxu0 0
      %4352 = vmatprep.subr.bf16.mxu0 0
      %4353 = vmatpush1.bf16.msra.mxu0 0
      %4354 = vmatprep.subr.bf16.mxu0 0
      %4355 = vmatpush1.bf16.msra.mxu0 0
      %4356 = vmatprep.subr.bf16.mxu0 0
      %4357 = vmatpush1.bf16.msra.mxu0 0
      %4358 = vmatprep.subr.bf16.mxu0 0
      %4359 = vmatpush1.bf16.msra.mxu0 0
      %4360 = vmatprep.subr.bf16.mxu0 0
      %4361 = vmatpush1.bf16.msra.mxu0 0
      %4362 = vmatprep.subr.bf16.mxu0 0
      %4363 = vmatpush1.bf16.msra.mxu0 0
      %4364 = vmatprep.subr.bf16.mxu0 0
      %4365 = vmatpush1.bf16.msra.mxu0 0
      %4366 = vmatprep.subr.bf16.mxu0 0
      %4367 = vmatpush1.bf16.msra.mxu0 0
      %4368 = vmatprep.subr.bf16.mxu0 0
      %4369 = vmatpush1.bf16.msra.mxu0 0
      %4370 = vmatprep.subr.bf16.mxu0 0
      %4371 = vmatpush1.bf16.msra.mxu0 0
      %4372 = vmatprep.mubr.bf16.mxu0 0
      %4373 = vmatmul.mubr.bf16.gmra.mrb[0].mxu0 %v4338
      %v4374 = vpop.f32.mrb[0].mxu0
      %v4375 = vadd.f32 0.0, %v4374
      %v4376 = vpop.f32.mrb[0].mxu0
      %v4377 = vadd.f32 0.0, %v4376
      %v4378 = vpop.f32.mrb[0].mxu0
      %v4379 = vpop.f32.mrb[0].mxu0
      %4380 = vdwg.mxu0
      %v4381 = vadd.f32 %v4331, %v4375
      %v4382 = vadd.f32 %v4332, %v4377
      %4383 = vrot.lane.b32.xlu0 %v3365, 127
      %v4384 = vpop.permute.xlu0 %4383
      %4385 = vrot.lane.b32.xlu0 %v3369, 127
      %v4386 = vpop.permute.xlu0 %4385
      %4387 = vrot.lane.b32.xlu0 %v3367, 127
      %v4388 = vpop.permute.xlu0 %4387
      %4389 = vrot.lane.b32.xlu0 %v3371, 127
      %v4390 = vpop.permute.xlu0 %4389
      %v4391 = vsel %vm907, %v4384, %v4388
      %v4392 = vsel %vm907, %v4386, %v4390
      %v4393 = vsel %vm907, %v4388, %v4384
      %v4394 = vsel %vm907, %v4390, %v4386
      %s4395 = scalar_lea.vmem %s11, 21
      %v4396 = vld [vmem:[%s4395] ss:$8 sm:$0x3]
      %v4398 = vlaneseq
      %v4399 = vshrl.u32 %v4398, 7
      %v4400 = vsub.s32 0, %v4399
      %v4401 = vrot.slane %v4396, %v4400
      %v4402 = vlaneseq
      %v4403 = vshrl.u32 %v4402, 7
      %v4404 = vsub.s32 1, %v4403
      %v4405 = vrot.slane %v4396, %v4404
      %v4408 = vmul.f32 %v4391, %v4401
      %v4409 = vmul.f32 %v4393, %v4405
      %v4410 = vmul.f32 %v4392, %v4401
      %v4411 = vmul.f32 %v4394, %v4405
      %s4412 = scalar_lea.vmem %s7, 13
      %v4413 = vld [vmem:[%s4412] sm:$0x1]
      %v4414 = vpack.c.bf16 %v4410, %v4408
      %v4415 = vpack.c.bf16 %v4411, %v4409
      %v4417 = vsel %vm1315, %v4413, 0
      %4419 = vmatprep.subr.bf16.mxu0 %v4415
      %4420 = vmatpush1.bf16.msra.mxu0 %v4414
      %4421 = vmatprep.subr.bf16.mxu0 0
      %4422 = vmatpush1.bf16.msra.mxu0 0
      %4423 = vmatprep.subr.bf16.mxu0 0
      %4424 = vmatpush1.bf16.msra.mxu0 0
      %4425 = vmatprep.subr.bf16.mxu0 0
      %4426 = vmatpush1.bf16.msra.mxu0 0
      %4427 = vmatprep.subr.bf16.mxu0 0
      %4428 = vmatpush1.bf16.msra.mxu0 0
      %4429 = vmatprep.subr.bf16.mxu0 0
      %4430 = vmatpush1.bf16.msra.mxu0 0
      %4431 = vmatprep.subr.bf16.mxu0 0
      %4432 = vmatpush1.bf16.msra.mxu0 0
      %4433 = vmatprep.subr.bf16.mxu0 0
      %4434 = vmatpush1.bf16.msra.mxu0 0
      %4435 = vmatprep.subr.bf16.mxu0 0
      %4436 = vmatpush1.bf16.msra.mxu0 0
      %4437 = vmatprep.subr.bf16.mxu0 0
      %4438 = vmatpush1.bf16.msra.mxu0 0
      %4439 = vmatprep.subr.bf16.mxu0 0
      %4440 = vmatpush1.bf16.msra.mxu0 0
      %4441 = vmatprep.subr.bf16.mxu0 0
      %4442 = vmatpush1.bf16.msra.mxu0 0
      %4443 = vmatprep.subr.bf16.mxu0 0
      %4444 = vmatpush1.bf16.msra.mxu0 0
      %4445 = vmatprep.subr.bf16.mxu0 0
      %4446 = vmatpush1.bf16.msra.mxu0 0
      %4447 = vmatprep.subr.bf16.mxu0 0
      %4448 = vmatpush1.bf16.msra.mxu0 0
      %4449 = vmatprep.subr.bf16.mxu0 0
      %4450 = vmatpush1.bf16.msra.mxu0 0
      %4451 = vmatprep.mubr.bf16.mxu0 0
      %4452 = vmatmul.mubr.bf16.gmra.mrb[0].mxu0 %v4417
      %v4453 = vpop.f32.mrb[0].mxu0
      %v4454 = vadd.f32 0.0, %v4453
      %v4455 = vpop.f32.mrb[0].mxu0
      %v4456 = vadd.f32 0.0, %v4455
      %v4457 = vpop.f32.mrb[0].mxu0
      %v4458 = vpop.f32.mrb[0].mxu0
      %4459 = vdwg.mxu0
      %v4460 = vadd.f32 %v4381, %v4454
      %v4461 = vadd.f32 %v4382, %v4456
      %4462 = vrot.lane.b32.xlu0 %v3365, 126
      %v4463 = vpop.permute.xlu0 %4462
      %4464 = vrot.lane.b32.xlu0 %v3369, 126
      %v4465 = vpop.permute.xlu0 %4464
      %4466 = vrot.lane.b32.xlu0 %v3367, 126
      %v4467 = vpop.permute.xlu0 %4466
      %4468 = vrot.lane.b32.xlu0 %v3371, 126
      %v4469 = vpop.permute.xlu0 %4468
      %vm4470 = vcmp.lt.s32.totalorder %v488, 126
      %v4471 = vsel %vm4470, %v4463, %v4467
      %v4472 = vsel %vm4470, %v4465, %v4469
      %v4473 = vsel %vm4470, %v4467, %v4463
      %v4474 = vsel %vm4470, %v4469, %v4465
      %s4475 = scalar_lea.vmem %s11, 22
      %v4476 = vld [vmem:[%s4475] ss:$8 sm:$0x3]
      %v4478 = vlaneseq
      %v4479 = vshrl.u32 %v4478, 7
      %v4480 = vsub.s32 0, %v4479
      %v4481 = vrot.slane %v4476, %v4480
      %v4482 = vlaneseq
      %v4483 = vshrl.u32 %v4482, 7
      %v4484 = vsub.s32 1, %v4483
      %v4485 = vrot.slane %v4476, %v4484
      %v4488 = vmul.f32 %v4471, %v4481
      %v4489 = vmul.f32 %v4473, %v4485
      %v4490 = vmul.f32 %v4472, %v4481
      %v4491 = vmul.f32 %v4474, %v4485
      %s4492 = scalar_lea.vmem %s7, 14
      %v4493 = vld [vmem:[%s4492] sm:$0x1]
      %v4494 = vpack.c.bf16 %v4490, %v4488
      %v4495 = vpack.c.bf16 %v4491, %v4489
      %v4497 = vsel %vm1315, %v4493, 0
      %4499 = vmatprep.subr.bf16.mxu0 %v4495
      %4500 = vmatpush1.bf16.msra.mxu0 %v4494
      %4501 = vmatprep.subr.bf16.mxu0 0
      %4502 = vmatpush1.bf16.msra.mxu0 0
      %4503 = vmatprep.subr.bf16.mxu0 0
      %4504 = vmatpush1.bf16.msra.mxu0 0
      %4505 = vmatprep.subr.bf16.mxu0 0
      %4506 = vmatpush1.bf16.msra.mxu0 0
      %4507 = vmatprep.subr.bf16.mxu0 0
      %4508 = vmatpush1.bf16.msra.mxu0 0
      %4509 = vmatprep.subr.bf16.mxu0 0
      %4510 = vmatpush1.bf16.msra.mxu0 0
      %4511 = vmatprep.subr.bf16.mxu0 0
      %4512 = vmatpush1.bf16.msra.mxu0 0
      %4513 = vmatprep.subr.bf16.mxu0 0
      %4514 = vmatpush1.bf16.msra.mxu0 0
      %4515 = vmatprep.subr.bf16.mxu0 0
      %4516 = vmatpush1.bf16.msra.mxu0 0
      %4517 = vmatprep.subr.bf16.mxu0 0
      %4518 = vmatpush1.bf16.msra.mxu0 0
      %4519 = vmatprep.subr.bf16.mxu0 0
      %4520 = vmatpush1.bf16.msra.mxu0 0
      %4521 = vmatprep.subr.bf16.mxu0 0
      %4522 = vmatpush1.bf16.msra.mxu0 0
      %4523 = vmatprep.subr.bf16.mxu0 0
      %4524 = vmatpush1.bf16.msra.mxu0 0
      %4525 = vmatprep.subr.bf16.mxu0 0
      %4526 = vmatpush1.bf16.msra.mxu0 0
      %4527 = vmatprep.subr.bf16.mxu0 0
      %4528 = vmatpush1.bf16.msra.mxu0 0
      %4529 = vmatprep.subr.bf16.mxu0 0
      %4530 = vmatpush1.bf16.msra.mxu0 0
      %4531 = vmatprep.mubr.bf16.mxu0 0
      %4532 = vmatmul.mubr.bf16.gmra.mrb[0].mxu0 %v4497
      %v4533 = vpop.f32.mrb[0].mxu0
      %v4534 = vadd.f32 0.0, %v4533
      %v4535 = vpop.f32.mrb[0].mxu0
      %v4536 = vadd.f32 0.0, %v4535
      %v4537 = vpop.f32.mrb[0].mxu0
      %v4538 = vpop.f32.mrb[0].mxu0
      %4539 = vdwg.mxu0
      %v4540 = vadd.f32 %v4460, %v4534
      %v4541 = vadd.f32 %v4461, %v4536
      %4542 = vrot.lane.b32.xlu0 %v3365, 114
      %v4543 = vpop.permute.xlu0 %4542
      %4544 = vrot.lane.b32.xlu0 %v3369, 114
      %v4545 = vpop.permute.xlu0 %4544
      %4546 = vrot.lane.b32.xlu0 %v3367, 114
      %v4547 = vpop.permute.xlu0 %4546
      %4548 = vrot.lane.b32.xlu0 %v3371, 114
      %v4549 = vpop.permute.xlu0 %4548
      %vm4550 = vcmp.lt.s32.totalorder %v488, 114
      %v4551 = vsel %vm4550, %v4543, %v4547
      %v4552 = vsel %vm4550, %v4545, %v4549
      %v4553 = vsel %vm4550, %v4547, %v4543
      %v4554 = vsel %vm4550, %v4549, %v4545
      %s4555 = scalar_lea.vmem %s11, 23
      %v4556 = vld [vmem:[%s4555] ss:$8 sm:$0x3]
      %v4558 = vlaneseq
      %v4559 = vshrl.u32 %v4558, 7
      %v4560 = vsub.s32 0, %v4559
      %v4561 = vrot.slane %v4556, %v4560
      %v4562 = vlaneseq
      %v4563 = vshrl.u32 %v4562, 7
      %v4564 = vsub.s32 1, %v4563
      %v4565 = vrot.slane %v4556, %v4564
      %v4568 = vmul.f32 %v4551, %v4561
      %v4569 = vmul.f32 %v4553, %v4565
      %v4570 = vmul.f32 %v4552, %v4561
      %v4571 = vmul.f32 %v4554, %v4565
      %s4572 = scalar_lea.vmem %s7, 15
      %v4573 = vld [vmem:[%s4572] sm:$0x1]
      %v4574 = vpack.c.bf16 %v4570, %v4568
      %v4575 = vpack.c.bf16 %v4571, %v4569
      %v4577 = vsel %vm1315, %v4573, 0
      %4579 = vmatprep.subr.bf16.mxu0 %v4575
      %4580 = vmatpush1.bf16.msra.mxu0 %v4574
      %4581 = vmatprep.subr.bf16.mxu0 0
      %4582 = vmatpush1.bf16.msra.mxu0 0
      %4583 = vmatprep.subr.bf16.mxu0 0
      %4584 = vmatpush1.bf16.msra.mxu0 0
      %4585 = vmatprep.subr.bf16.mxu0 0
      %4586 = vmatpush1.bf16.msra.mxu0 0
      %4587 = vmatprep.subr.bf16.mxu0 0
      %4588 = vmatpush1.bf16.msra.mxu0 0
      %4589 = vmatprep.subr.bf16.mxu0 0
      %4590 = vmatpush1.bf16.msra.mxu0 0
      %4591 = vmatprep.subr.bf16.mxu0 0
      %4592 = vmatpush1.bf16.msra.mxu0 0
      %4593 = vmatprep.subr.bf16.mxu0 0
      %4594 = vmatpush1.bf16.msra.mxu0 0
      %4595 = vmatprep.subr.bf16.mxu0 0
      %4596 = vmatpush1.bf16.msra.mxu0 0
      %4597 = vmatprep.subr.bf16.mxu0 0
      %4598 = vmatpush1.bf16.msra.mxu0 0
      %4599 = vmatprep.subr.bf16.mxu0 0
      %4600 = vmatpush1.bf16.msra.mxu0 0
      %4601 = vmatprep.subr.bf16.mxu0 0
      %4602 = vmatpush1.bf16.msra.mxu0 0
      %4603 = vmatprep.subr.bf16.mxu0 0
      %4604 = vmatpush1.bf16.msra.mxu0 0
      %4605 = vmatprep.subr.bf16.mxu0 0
      %4606 = vmatpush1.bf16.msra.mxu0 0
      %4607 = vmatprep.subr.bf16.mxu0 0
      %4608 = vmatpush1.bf16.msra.mxu0 0
      %4609 = vmatprep.subr.bf16.mxu0 0
      %4610 = vmatpush1.bf16.msra.mxu0 0
      %4611 = vmatprep.mubr.bf16.mxu0 0
      %4612 = vmatmul.mubr.bf16.gmra.mrb[0].mxu0 %v4577
      %v4613 = vpop.f32.mrb[0].mxu0
      %v4614 = vadd.f32 0.0, %v4613
      %v4615 = vpop.f32.mrb[0].mxu0
      %v4616 = vadd.f32 0.0, %v4615
      %v4617 = vpop.f32.mrb[0].mxu0
      %v4618 = vpop.f32.mrb[0].mxu0
      %4619 = vdwg.mxu0
      %v4620 = vadd.f32 %v4540, %v4614
      %v4621 = vadd.f32 %v4541, %v4616
      %4622 = vrot.lane.b32.xlu0 %v3365, 113
      %v4623 = vpop.permute.xlu0 %4622
      %4624 = vrot.lane.b32.xlu0 %v3369, 113
      %v4625 = vpop.permute.xlu0 %4624
      %4626 = vrot.lane.b32.xlu0 %v3367, 113
      %v4627 = vpop.permute.xlu0 %4626
      %4628 = vrot.lane.b32.xlu0 %v3371, 113
      %v4629 = vpop.permute.xlu0 %4628
      %v4630 = vsel %vm995, %v4623, %v4627
      %v4631 = vsel %vm995, %v4625, %v4629
      %v4632 = vsel %vm995, %v4627, %v4623
      %v4633 = vsel %vm995, %v4629, %v4625
      %s4634 = scalar_lea.vmem %s11, 32
      %v4635 = vld [vmem:[%s4634] ss:$8 sm:$0x3]
      %v4637 = vlaneseq
      %v4638 = vshrl.u32 %v4637, 7
      %v4639 = vsub.s32 0, %v4638
      %v4640 = vrot.slane %v4635, %v4639
      %v4641 = vlaneseq
      %v4642 = vshrl.u32 %v4641, 7
      %v4643 = vsub.s32 1, %v4642
      %v4644 = vrot.slane %v4635, %v4643
      %v4647 = vmul.f32 %v4630, %v4640
      %v4648 = vmul.f32 %v4632, %v4644
      %v4649 = vmul.f32 %v4631, %v4640
      %v4650 = vmul.f32 %v4633, %v4644
      %s4651 = scalar_lea.vmem %s7, 16
      %v4652 = vld [vmem:[%s4651] sm:$0x1]
      %v4653 = vpack.c.bf16 %v4649, %v4647
      %v4654 = vpack.c.bf16 %v4650, %v4648
      %v4656 = vsel %vm1315, %v4652, 0
      %4658 = vmatprep.subr.bf16.mxu0 %v4654
      %4659 = vmatpush1.bf16.msra.mxu0 %v4653
      %4660 = vmatprep.subr.bf16.mxu0 0
      %4661 = vmatpush1.bf16.msra.mxu0 0
      %4662 = vmatprep.subr.bf16.mxu0 0
      %4663 = vmatpush1.bf16.msra.mxu0 0
      %4664 = vmatprep.subr.bf16.mxu0 0
      %4665 = vmatpush1.bf16.msra.mxu0 0
      %4666 = vmatprep.subr.bf16.mxu0 0
      %4667 = vmatpush1.bf16.msra.mxu0 0
      %4668 = vmatprep.subr.bf16.mxu0 0
      %4669 = vmatpush1.bf16.msra.mxu0 0
      %4670 = vmatprep.subr.bf16.mxu0 0
      %4671 = vmatpush1.bf16.msra.mxu0 0
      %4672 = vmatprep.subr.bf16.mxu0 0
      %4673 = vmatpush1.bf16.msra.mxu0 0
      %4674 = vmatprep.subr.bf16.mxu0 0
      %4675 = vmatpush1.bf16.msra.mxu0 0
      %4676 = vmatprep.subr.bf16.mxu0 0
      %4677 = vmatpush1.bf16.msra.mxu0 0
      %4678 = vmatprep.subr.bf16.mxu0 0
      %4679 = vmatpush1.bf16.msra.mxu0 0
      %4680 = vmatprep.subr.bf16.mxu0 0
      %4681 = vmatpush1.bf16.msra.mxu0 0
      %4682 = vmatprep.subr.bf16.mxu0 0
      %4683 = vmatpush1.bf16.msra.mxu0 0
      %4684 = vmatprep.subr.bf16.mxu0 0
      %4685 = vmatpush1.bf16.msra.mxu0 0
      %4686 = vmatprep.subr.bf16.mxu0 0
      %4687 = vmatpush1.bf16.msra.mxu0 0
      %4688 = vmatprep.subr.bf16.mxu0 0
      %4689 = vmatpush1.bf16.msra.mxu0 0
      %4690 = vmatprep.mubr.bf16.mxu0 0
      %4691 = vmatmul.mubr.bf16.gmra.mrb[0].mxu0 %v4656
      %v4692 = vpop.f32.mrb[0].mxu0
      %v4693 = vadd.f32 0.0, %v4692
      %v4694 = vpop.f32.mrb[0].mxu0
      %v4695 = vadd.f32 0.0, %v4694
      %v4696 = vpop.f32.mrb[0].mxu0
      %v4697 = vpop.f32.mrb[0].mxu0
      %4698 = vdwg.mxu0
      %v4699 = vadd.f32 %v4620, %v4693
      %v4700 = vadd.f32 %v4621, %v4695
      %4701 = vrot.lane.b32.xlu0 %v3365, 112
      %v4702 = vpop.permute.xlu0 %4701
      %4703 = vrot.lane.b32.xlu0 %v3369, 112
      %v4704 = vpop.permute.xlu0 %4703
      %4705 = vrot.lane.b32.xlu0 %v3367, 112
      %v4706 = vpop.permute.xlu0 %4705
      %4707 = vrot.lane.b32.xlu0 %v3371, 112
      %v4708 = vpop.permute.xlu0 %4707
      %v4709 = vsel %vm1083, %v4702, %v4706
      %v4710 = vsel %vm1083, %v4704, %v4708
      %v4711 = vsel %vm1083, %v4706, %v4702
      %v4712 = vsel %vm1083, %v4708, %v4704
      %s4713 = scalar_lea.vmem %s11, 33
      %v4714 = vld [vmem:[%s4713] ss:$8 sm:$0x3]
      %v4716 = vlaneseq
      %v4717 = vshrl.u32 %v4716, 7
      %v4718 = vsub.s32 0, %v4717
      %v4719 = vrot.slane %v4714, %v4718
      %v4720 = vlaneseq
      %v4721 = vshrl.u32 %v4720, 7
      %v4722 = vsub.s32 1, %v4721
      %v4723 = vrot.slane %v4714, %v4722
      %v4726 = vmul.f32 %v4709, %v4719
      %v4727 = vmul.f32 %v4711, %v4723
      %v4728 = vmul.f32 %v4710, %v4719
      %v4729 = vmul.f32 %v4712, %v4723
      %s4730 = scalar_lea.vmem %s7, 17
      %v4731 = vld [vmem:[%s4730] sm:$0x1]
      %v4732 = vpack.c.bf16 %v4728, %v4726
      %v4733 = vpack.c.bf16 %v4729, %v4727
      %v4735 = vsel %vm1315, %v4731, 0
      %4737 = vmatprep.subr.bf16.mxu0 %v4733
      %4738 = vmatpush1.bf16.msra.mxu0 %v4732
      %4739 = vmatprep.subr.bf16.mxu0 0
      %4740 = vmatpush1.bf16.msra.mxu0 0
      %4741 = vmatprep.subr.bf16.mxu0 0
      %4742 = vmatpush1.bf16.msra.mxu0 0
      %4743 = vmatprep.subr.bf16.mxu0 0
      %4744 = vmatpush1.bf16.msra.mxu0 0
      %4745 = vmatprep.subr.bf16.mxu0 0
      %4746 = vmatpush1.bf16.msra.mxu0 0
      %4747 = vmatprep.subr.bf16.mxu0 0
      %4748 = vmatpush1.bf16.msra.mxu0 0
      %4749 = vmatprep.subr.bf16.mxu0 0
      %4750 = vmatpush1.bf16.msra.mxu0 0
      %4751 = vmatprep.subr.bf16.mxu0 0
      %4752 = vmatpush1.bf16.msra.mxu0 0
      %4753 = vmatprep.subr.bf16.mxu0 0
      %4754 = vmatpush1.bf16.msra.mxu0 0
      %4755 = vmatprep.subr.bf16.mxu0 0
      %4756 = vmatpush1.bf16.msra.mxu0 0
      %4757 = vmatprep.subr.bf16.mxu0 0
      %4758 = vmatpush1.bf16.msra.mxu0 0
      %4759 = vmatprep.subr.bf16.mxu0 0
      %4760 = vmatpush1.bf16.msra.mxu0 0
      %4761 = vmatprep.subr.bf16.mxu0 0
      %4762 = vmatpush1.bf16.msra.mxu0 0
      %4763 = vmatprep.subr.bf16.mxu0 0
      %4764 = vmatpush1.bf16.msra.mxu0 0
      %4765 = vmatprep.subr.bf16.mxu0 0
      %4766 = vmatpush1.bf16.msra.mxu0 0
      %4767 = vmatprep.subr.bf16.mxu0 0
      %4768 = vmatpush1.bf16.msra.mxu0 0
      %4769 = vmatprep.mubr.bf16.mxu0 0
      %4770 = vmatmul.mubr.bf16.gmra.mrb[0].mxu0 %v4735
      %v4771 = vpop.f32.mrb[0].mxu0
      %v4772 = vadd.f32 0.0, %v4771
      %v4773 = vpop.f32.mrb[0].mxu0
      %v4774 = vadd.f32 0.0, %v4773
      %v4775 = vpop.f32.mrb[0].mxu0
      %v4776 = vpop.f32.mrb[0].mxu0
      %4777 = vdwg.mxu0
      %v4778 = vadd.f32 %v4699, %v4772
      %v4779 = vadd.f32 %v4700, %v4774
      %4780 = vrot.lane.b32.xlu0 %v3365, 111
      %v4781 = vpop.permute.xlu0 %4780
      %4782 = vrot.lane.b32.xlu0 %v3369, 111
      %v4783 = vpop.permute.xlu0 %4782
      %4784 = vrot.lane.b32.xlu0 %v3367, 111
      %v4785 = vpop.permute.xlu0 %4784
      %4786 = vrot.lane.b32.xlu0 %v3371, 111
      %v4787 = vpop.permute.xlu0 %4786
      %v4788 = vsel %vm1171, %v4781, %v4785
      %v4789 = vsel %vm1171, %v4783, %v4787
      %v4790 = vsel %vm1171, %v4785, %v4781
      %v4791 = vsel %vm1171, %v4787, %v4783
      %s4792 = scalar_lea.vmem %s11, 34
      %v4793 = vld [vmem:[%s4792] ss:$8 sm:$0x3]
      %v4795 = vlaneseq
      %v4796 = vshrl.u32 %v4795, 7
      %v4797 = vsub.s32 0, %v4796
      %v4798 = vrot.slane %v4793, %v4797
      %v4799 = vlaneseq
      %v4800 = vshrl.u32 %v4799, 7
      %v4801 = vsub.s32 1, %v4800
      %v4802 = vrot.slane %v4793, %v4801
      %v4805 = vmul.f32 %v4788, %v4798
      %v4806 = vmul.f32 %v4790, %v4802
      %v4807 = vmul.f32 %v4789, %v4798
      %v4808 = vmul.f32 %v4791, %v4802
      %s4809 = scalar_lea.vmem %s7, 18
      %v4810 = vld [vmem:[%s4809] sm:$0x1]
      %v4811 = vpack.c.bf16 %v4807, %v4805
      %v4812 = vpack.c.bf16 %v4808, %v4806
      %v4814 = vsel %vm1315, %v4810, 0
      %4816 = vmatprep.subr.bf16.mxu0 %v4812
      %4817 = vmatpush1.bf16.msra.mxu0 %v4811
      %4818 = vmatprep.subr.bf16.mxu0 0
      %4819 = vmatpush1.bf16.msra.mxu0 0
      %4820 = vmatprep.subr.bf16.mxu0 0
      %4821 = vmatpush1.bf16.msra.mxu0 0
      %4822 = vmatprep.subr.bf16.mxu0 0
      %4823 = vmatpush1.bf16.msra.mxu0 0
      %4824 = vmatprep.subr.bf16.mxu0 0
      %4825 = vmatpush1.bf16.msra.mxu0 0
      %4826 = vmatprep.subr.bf16.mxu0 0
      %4827 = vmatpush1.bf16.msra.mxu0 0
      %4828 = vmatprep.subr.bf16.mxu0 0
      %4829 = vmatpush1.bf16.msra.mxu0 0
      %4830 = vmatprep.subr.bf16.mxu0 0
      %4831 = vmatpush1.bf16.msra.mxu0 0
      %4832 = vmatprep.subr.bf16.mxu0 0
      %4833 = vmatpush1.bf16.msra.mxu0 0
      %4834 = vmatprep.subr.bf16.mxu0 0
      %4835 = vmatpush1.bf16.msra.mxu0 0
      %4836 = vmatprep.subr.bf16.mxu0 0
      %4837 = vmatpush1.bf16.msra.mxu0 0
      %4838 = vmatprep.subr.bf16.mxu0 0
      %4839 = vmatpush1.bf16.msra.mxu0 0
      %4840 = vmatprep.subr.bf16.mxu0 0
      %4841 = vmatpush1.bf16.msra.mxu0 0
      %4842 = vmatprep.subr.bf16.mxu0 0
      %4843 = vmatpush1.bf16.msra.mxu0 0
      %4844 = vmatprep.subr.bf16.mxu0 0
      %4845 = vmatpush1.bf16.msra.mxu0 0
      %4846 = vmatprep.subr.bf16.mxu0 0
      %4847 = vmatpush1.bf16.msra.mxu0 0
      %4848 = vmatprep.mubr.bf16.mxu0 0
      %4849 = vmatmul.mubr.bf16.gmra.mrb[0].mxu0 %v4814
      %v4850 = vpop.f32.mrb[0].mxu0
      %v4851 = vadd.f32 0.0, %v4850
      %v4852 = vpop.f32.mrb[0].mxu0
      %v4853 = vadd.f32 0.0, %v4852
      %v4854 = vpop.f32.mrb[0].mxu0
      %v4855 = vpop.f32.mrb[0].mxu0
      %4856 = vdwg.mxu0
      %v4857 = vadd.f32 %v4778, %v4851
      %v4858 = vadd.f32 %v4779, %v4853
      %4859 = vrot.lane.b32.xlu0 %v3365, 110
      %v4860 = vpop.permute.xlu0 %4859
      %4861 = vrot.lane.b32.xlu0 %v3369, 110
      %v4862 = vpop.permute.xlu0 %4861
      %4863 = vrot.lane.b32.xlu0 %v3367, 110
      %v4864 = vpop.permute.xlu0 %4863
      %4865 = vrot.lane.b32.xlu0 %v3371, 110
      %v4866 = vpop.permute.xlu0 %4865
      %vm4867 = vcmp.lt.s32.totalorder %v488, 110
      %v4868 = vsel %vm4867, %v4860, %v4864
      %v4869 = vsel %vm4867, %v4862, %v4866
      %v4870 = vsel %vm4867, %v4864, %v4860
      %v4871 = vsel %vm4867, %v4866, %v4862
      %s4872 = scalar_lea.vmem %s11, 35
      %v4873 = vld [vmem:[%s4872] ss:$8 sm:$0x3]
      %v4875 = vlaneseq
      %v4876 = vshrl.u32 %v4875, 7
      %v4877 = vsub.s32 0, %v4876
      %v4878 = vrot.slane %v4873, %v4877
      %v4879 = vlaneseq
      %v4880 = vshrl.u32 %v4879, 7
      %v4881 = vsub.s32 1, %v4880
      %v4882 = vrot.slane %v4873, %v4881
      %v4885 = vmul.f32 %v4868, %v4878
      %v4886 = vmul.f32 %v4870, %v4882
      %v4887 = vmul.f32 %v4869, %v4878
      %v4888 = vmul.f32 %v4871, %v4882
      %s4889 = scalar_lea.vmem %s7, 19
      %v4890 = vld [vmem:[%s4889] sm:$0x1]
      %v4891 = vpack.c.bf16 %v4887, %v4885
      %v4892 = vpack.c.bf16 %v4888, %v4886
      %v4894 = vsel %vm1315, %v4890, 0
      %4896 = vmatprep.subr.bf16.mxu0 %v4892
      %4897 = vmatpush1.bf16.msra.mxu0 %v4891
      %4898 = vmatprep.subr.bf16.mxu0 0
      %4899 = vmatpush1.bf16.msra.mxu0 0
      %4900 = vmatprep.subr.bf16.mxu0 0
      %4901 = vmatpush1.bf16.msra.mxu0 0
      %4902 = vmatprep.subr.bf16.mxu0 0
      %4903 = vmatpush1.bf16.msra.mxu0 0
      %4904 = vmatprep.subr.bf16.mxu0 0
      %4905 = vmatpush1.bf16.msra.mxu0 0
      %4906 = vmatprep.subr.bf16.mxu0 0
      %4907 = vmatpush1.bf16.msra.mxu0 0
      %4908 = vmatprep.subr.bf16.mxu0 0
      %4909 = vmatpush1.bf16.msra.mxu0 0
      %4910 = vmatprep.subr.bf16.mxu0 0
      %4911 = vmatpush1.bf16.msra.mxu0 0
      %4912 = vmatprep.subr.bf16.mxu0 0
      %4913 = vmatpush1.bf16.msra.mxu0 0
      %4914 = vmatprep.subr.bf16.mxu0 0
      %4915 = vmatpush1.bf16.msra.mxu0 0
      %4916 = vmatprep.subr.bf16.mxu0 0
      %4917 = vmatpush1.bf16.msra.mxu0 0
      %4918 = vmatprep.subr.bf16.mxu0 0
      %4919 = vmatpush1.bf16.msra.mxu0 0
      %4920 = vmatprep.subr.bf16.mxu0 0
      %4921 = vmatpush1.bf16.msra.mxu0 0
      %4922 = vmatprep.subr.bf16.mxu0 0
      %4923 = vmatpush1.bf16.msra.mxu0 0
      %4924 = vmatprep.subr.bf16.mxu0 0
      %4925 = vmatpush1.bf16.msra.mxu0 0
      %4926 = vmatprep.subr.bf16.mxu0 0
      %4927 = vmatpush1.bf16.msra.mxu0 0
      %4928 = vmatprep.mubr.bf16.mxu0 0
      %4929 = vmatmul.mubr.bf16.gmra.mrb[0].mxu0 %v4894
      %v4930 = vpop.f32.mrb[0].mxu0
      %v4931 = vadd.f32 0.0, %v4930
      %v4932 = vpop.f32.mrb[0].mxu0
      %v4933 = vadd.f32 0.0, %v4932
      %v4934 = vpop.f32.mrb[0].mxu0
      %v4935 = vpop.f32.mrb[0].mxu0
      %4936 = vdwg.mxu0
      %v4937 = vadd.f32 %v4857, %v4931
      %v4938 = vadd.f32 %v4858, %v4933
      %4939 = vrot.lane.b32.xlu0 %v3365, 98
      %v4940 = vpop.permute.xlu0 %4939
      %4941 = vrot.lane.b32.xlu0 %v3369, 98
      %v4942 = vpop.permute.xlu0 %4941
      %4943 = vrot.lane.b32.xlu0 %v3367, 98
      %v4944 = vpop.permute.xlu0 %4943
      %4945 = vrot.lane.b32.xlu0 %v3371, 98
      %v4946 = vpop.permute.xlu0 %4945
      %vm4947 = vcmp.lt.s32.totalorder %v488, 98
      %v4948 = vsel %vm4947, %v4940, %v4944
      %v4949 = vsel %vm4947, %v4942, %v4946
      %v4950 = vsel %vm4947, %v4944, %v4940
      %v4951 = vsel %vm4947, %v4946, %v4942
      %s4952 = scalar_lea.vmem %s11, 36
      %v4953 = vld [vmem:[%s4952] ss:$8 sm:$0x3]
      %v4955 = vlaneseq
      %v4956 = vshrl.u32 %v4955, 7
      %v4957 = vsub.s32 0, %v4956
      %v4958 = vrot.slane %v4953, %v4957
      %v4959 = vlaneseq
      %v4960 = vshrl.u32 %v4959, 7
      %v4961 = vsub.s32 1, %v4960
      %v4962 = vrot.slane %v4953, %v4961
      %v4965 = vmul.f32 %v4948, %v4958
      %v4966 = vmul.f32 %v4950, %v4962
      %v4967 = vmul.f32 %v4949, %v4958
      %v4968 = vmul.f32 %v4951, %v4962
      %s4969 = scalar_lea.vmem %s7, 20
      %v4970 = vld [vmem:[%s4969] sm:$0x1]
      %v4971 = vpack.c.bf16 %v4967, %v4965
      %v4972 = vpack.c.bf16 %v4968, %v4966
      %v4974 = vsel %vm1315, %v4970, 0
      %4976 = vmatprep.subr.bf16.mxu0 %v4972
      %4977 = vmatpush1.bf16.msra.mxu0 %v4971
      %4978 = vmatprep.subr.bf16.mxu0 0
      %4979 = vmatpush1.bf16.msra.mxu0 0
      %4980 = vmatprep.subr.bf16.mxu0 0
      %4981 = vmatpush1.bf16.msra.mxu0 0
      %4982 = vmatprep.subr.bf16.mxu0 0
      %4983 = vmatpush1.bf16.msra.mxu0 0
      %4984 = vmatprep.subr.bf16.mxu0 0
      %4985 = vmatpush1.bf16.msra.mxu0 0
      %4986 = vmatprep.subr.bf16.mxu0 0
      %4987 = vmatpush1.bf16.msra.mxu0 0
      %4988 = vmatprep.subr.bf16.mxu0 0
      %4989 = vmatpush1.bf16.msra.mxu0 0
      %4990 = vmatprep.subr.bf16.mxu0 0
      %4991 = vmatpush1.bf16.msra.mxu0 0
      %4992 = vmatprep.subr.bf16.mxu0 0
      %4993 = vmatpush1.bf16.msra.mxu0 0
      %4994 = vmatprep.subr.bf16.mxu0 0
      %4995 = vmatpush1.bf16.msra.mxu0 0
      %4996 = vmatprep.subr.bf16.mxu0 0
      %4997 = vmatpush1.bf16.msra.mxu0 0
      %4998 = vmatprep.subr.bf16.mxu0 0
      %4999 = vmatpush1.bf16.msra.mxu0 0
      %5000 = vmatprep.subr.bf16.mxu0 0
      %5001 = vmatpush1.bf16.msra.mxu0 0
      %5002 = vmatprep.subr.bf16.mxu0 0
      %5003 = vmatpush1.bf16.msra.mxu0 0
      %5004 = vmatprep.subr.bf16.mxu0 0
      %5005 = vmatpush1.bf16.msra.mxu0 0
      %5006 = vmatprep.subr.bf16.mxu0 0
      %5007 = vmatpush1.bf16.msra.mxu0 0
      %5008 = vmatprep.mubr.bf16.mxu0 0
      %5009 = vmatmul.mubr.bf16.gmra.mrb[0].mxu0 %v4974
      %v5010 = vpop.f32.mrb[0].mxu0
      %v5011 = vadd.f32 0.0, %v5010
      %v5012 = vpop.f32.mrb[0].mxu0
      %v5013 = vadd.f32 0.0, %v5012
      %v5014 = vpop.f32.mrb[0].mxu0
      %v5015 = vpop.f32.mrb[0].mxu0
      %5016 = vdwg.mxu0
      %v5017 = vadd.f32 %v4937, %v5011
      %v5018 = vadd.f32 %v4938, %v5013
      %5019 = vrot.lane.b32.xlu0 %v3365, 97
      %v5020 = vpop.permute.xlu0 %5019
      %5021 = vrot.lane.b32.xlu0 %v3369, 97
      %v5022 = vpop.permute.xlu0 %5021
      %5023 = vrot.lane.b32.xlu0 %v3367, 97
      %v5024 = vpop.permute.xlu0 %5023
      %5025 = vrot.lane.b32.xlu0 %v3371, 97
      %v5026 = vpop.permute.xlu0 %5025
      %vm5027 = vcmp.lt.s32.totalorder %v488, 97
      %v5028 = vsel %vm5027, %v5020, %v5024
      %v5029 = vsel %vm5027, %v5022, %v5026
      %v5030 = vsel %vm5027, %v5024, %v5020
      %v5031 = vsel %vm5027, %v5026, %v5022
      %s5032 = scalar_lea.vmem %s11, 37
      %v5033 = vld [vmem:[%s5032] ss:$8 sm:$0x3]
      %v5035 = vlaneseq
      %v5036 = vshrl.u32 %v5035, 7
      %v5037 = vsub.s32 0, %v5036
      %v5038 = vrot.slane %v5033, %v5037
      %v5039 = vlaneseq
      %v5040 = vshrl.u32 %v5039, 7
      %v5041 = vsub.s32 1, %v5040
      %v5042 = vrot.slane %v5033, %v5041
      %v5045 = vmul.f32 %v5028, %v5038
      %v5046 = vmul.f32 %v5030, %v5042
      %v5047 = vmul.f32 %v5029, %v5038
      %v5048 = vmul.f32 %v5031, %v5042
      %s5049 = scalar_lea.vmem %s7, 21
      %v5050 = vld [vmem:[%s5049] sm:$0x1]
      %v5051 = vpack.c.bf16 %v5047, %v5045
      %v5052 = vpack.c.bf16 %v5048, %v5046
      %v5054 = vsel %vm1315, %v5050, 0
      %5056 = vmatprep.subr.bf16.mxu0 %v5052
      %5057 = vmatpush1.bf16.msra.mxu0 %v5051
      %5058 = vmatprep.subr.bf16.mxu0 0
      %5059 = vmatpush1.bf16.msra.mxu0 0
      %5060 = vmatprep.subr.bf16.mxu0 0
      %5061 = vmatpush1.bf16.msra.mxu0 0
      %5062 = vmatprep.subr.bf16.mxu0 0
      %5063 = vmatpush1.bf16.msra.mxu0 0
      %5064 = vmatprep.subr.bf16.mxu0 0
      %5065 = vmatpush1.bf16.msra.mxu0 0
      %5066 = vmatprep.subr.bf16.mxu0 0
      %5067 = vmatpush1.bf16.msra.mxu0 0
      %5068 = vmatprep.subr.bf16.mxu0 0
      %5069 = vmatpush1.bf16.msra.mxu0 0
      %5070 = vmatprep.subr.bf16.mxu0 0
      %5071 = vmatpush1.bf16.msra.mxu0 0
      %5072 = vmatprep.subr.bf16.mxu0 0
      %5073 = vmatpush1.bf16.msra.mxu0 0
      %5074 = vmatprep.subr.bf16.mxu0 0
      %5075 = vmatpush1.bf16.msra.mxu0 0
      %5076 = vmatprep.subr.bf16.mxu0 0
      %5077 = vmatpush1.bf16.msra.mxu0 0
      %5078 = vmatprep.subr.bf16.mxu0 0
      %5079 = vmatpush1.bf16.msra.mxu0 0
      %5080 = vmatprep.subr.bf16.mxu0 0
      %5081 = vmatpush1.bf16.msra.mxu0 0
      %5082 = vmatprep.subr.bf16.mxu0 0
      %5083 = vmatpush1.bf16.msra.mxu0 0
      %5084 = vmatprep.subr.bf16.mxu0 0
      %5085 = vmatpush1.bf16.msra.mxu0 0
      %5086 = vmatprep.subr.bf16.mxu0 0
      %5087 = vmatpush1.bf16.msra.mxu0 0
      %5088 = vmatprep.mubr.bf16.mxu0 0
      %5089 = vmatmul.mubr.bf16.gmra.mrb[0].mxu0 %v5054
      %v5090 = vpop.f32.mrb[0].mxu0
      %v5091 = vadd.f32 0.0, %v5090
      %v5092 = vpop.f32.mrb[0].mxu0
      %v5093 = vadd.f32 0.0, %v5092
      %v5094 = vpop.f32.mrb[0].mxu0
      %v5095 = vpop.f32.mrb[0].mxu0
      %5096 = vdwg.mxu0
      %v5097 = vadd.f32 %v5017, %v5091
      %v5098 = vadd.f32 %v5018, %v5093
      %5099 = vrot.lane.b32.xlu0 %v3365, 96
      %v5100 = vpop.permute.xlu0 %5099
      %5101 = vrot.lane.b32.xlu0 %v3369, 96
      %v5102 = vpop.permute.xlu0 %5101
      %5103 = vrot.lane.b32.xlu0 %v3367, 96
      %v5104 = vpop.permute.xlu0 %5103
      %5105 = vrot.lane.b32.xlu0 %v3371, 96
      %v5106 = vpop.permute.xlu0 %5105
      %vm5107 = vcmp.lt.s32.totalorder %v488, 96
      %v5108 = vsel %vm5107, %v5100, %v5104
      %v5109 = vsel %vm5107, %v5102, %v5106
      %v5110 = vsel %vm5107, %v5104, %v5100
      %v5111 = vsel %vm5107, %v5106, %v5102
      %s5112 = scalar_lea.vmem %s11, 38
      %v5113 = vld [vmem:[%s5112] ss:$8 sm:$0x3]
      %v5115 = vlaneseq
      %v5116 = vshrl.u32 %v5115, 7
      %v5117 = vsub.s32 0, %v5116
      %v5118 = vrot.slane %v5113, %v5117
      %v5119 = vlaneseq
      %v5120 = vshrl.u32 %v5119, 7
      %v5121 = vsub.s32 1, %v5120
      %v5122 = vrot.slane %v5113, %v5121
      %v5125 = vmul.f32 %v5108, %v5118
      %v5126 = vmul.f32 %v5110, %v5122
      %v5127 = vmul.f32 %v5109, %v5118
      %v5128 = vmul.f32 %v5111, %v5122
      %s5129 = scalar_lea.vmem %s7, 22
      %v5130 = vld [vmem:[%s5129] sm:$0x1]
      %v5131 = vpack.c.bf16 %v5127, %v5125
      %v5132 = vpack.c.bf16 %v5128, %v5126
      %v5134 = vsel %vm1315, %v5130, 0
      %5136 = vmatprep.subr.bf16.mxu0 %v5132
      %5137 = vmatpush1.bf16.msra.mxu0 %v5131
      %5138 = vmatprep.subr.bf16.mxu0 0
      %5139 = vmatpush1.bf16.msra.mxu0 0
      %5140 = vmatprep.subr.bf16.mxu0 0
      %5141 = vmatpush1.bf16.msra.mxu0 0
      %5142 = vmatprep.subr.bf16.mxu0 0
      %5143 = vmatpush1.bf16.msra.mxu0 0
      %5144 = vmatprep.subr.bf16.mxu0 0
      %5145 = vmatpush1.bf16.msra.mxu0 0
      %5146 = vmatprep.subr.bf16.mxu0 0
      %5147 = vmatpush1.bf16.msra.mxu0 0
      %5148 = vmatprep.subr.bf16.mxu0 0
      %5149 = vmatpush1.bf16.msra.mxu0 0
      %5150 = vmatprep.subr.bf16.mxu0 0
      %5151 = vmatpush1.bf16.msra.mxu0 0
      %5152 = vmatprep.subr.bf16.mxu0 0
      %5153 = vmatpush1.bf16.msra.mxu0 0
      %5154 = vmatprep.subr.bf16.mxu0 0
      %5155 = vmatpush1.bf16.msra.mxu0 0
      %5156 = vmatprep.subr.bf16.mxu0 0
      %5157 = vmatpush1.bf16.msra.mxu0 0
      %5158 = vmatprep.subr.bf16.mxu0 0
      %5159 = vmatpush1.bf16.msra.mxu0 0
      %5160 = vmatprep.subr.bf16.mxu0 0
      %5161 = vmatpush1.bf16.msra.mxu0 0
      %5162 = vmatprep.subr.bf16.mxu0 0
      %5163 = vmatpush1.bf16.msra.mxu0 0
      %5164 = vmatprep.subr.bf16.mxu0 0
      %5165 = vmatpush1.bf16.msra.mxu0 0
      %5166 = vmatprep.subr.bf16.mxu0 0
      %5167 = vmatpush1.bf16.msra.mxu0 0
      %5168 = vmatprep.mubr.bf16.mxu0 0
      %5169 = vmatmul.mubr.bf16.gmra.mrb[0].mxu0 %v5134
      %v5170 = vpop.f32.mrb[0].mxu0
      %v5171 = vadd.f32 0.0, %v5170
      %v5172 = vpop.f32.mrb[0].mxu0
      %v5173 = vadd.f32 0.0, %v5172
      %v5174 = vpop.f32.mrb[0].mxu0
      %v5175 = vpop.f32.mrb[0].mxu0
      %5176 = vdwg.mxu0
      %v5177 = vadd.f32 %v5097, %v5171
      %v5178 = vadd.f32 %v5098, %v5173
      %5179 = vrot.lane.b32.xlu0 %v3365, 95
      %v5180 = vpop.permute.xlu0 %5179
      %5181 = vrot.lane.b32.xlu0 %v3369, 95
      %v5182 = vpop.permute.xlu0 %5181
      %5183 = vrot.lane.b32.xlu0 %v3367, 95
      %v5184 = vpop.permute.xlu0 %5183
      %5185 = vrot.lane.b32.xlu0 %v3371, 95
      %v5186 = vpop.permute.xlu0 %5185
      %vm5187 = vcmp.lt.s32.totalorder %v488, 95
      %v5188 = vsel %vm5187, %v5180, %v5184
      %v5189 = vsel %vm5187, %v5182, %v5186
      %v5190 = vsel %vm5187, %v5184, %v5180
      %v5191 = vsel %vm5187, %v5186, %v5182
      %s5192 = scalar_lea.vmem %s11, 39
      %v5193 = vld [vmem:[%s5192] ss:$8 sm:$0x3]
      %v5195 = vlaneseq
      %v5196 = vshrl.u32 %v5195, 7
      %v5197 = vsub.s32 0, %v5196
      %v5198 = vrot.slane %v5193, %v5197
      %v5199 = vlaneseq
      %v5200 = vshrl.u32 %v5199, 7
      %v5201 = vsub.s32 1, %v5200
      %v5202 = vrot.slane %v5193, %v5201
      %v5205 = vmul.f32 %v5188, %v5198
      %v5206 = vmul.f32 %v5190, %v5202
      %v5207 = vmul.f32 %v5189, %v5198
      %v5208 = vmul.f32 %v5191, %v5202
      %s5209 = scalar_lea.vmem %s7, 23
      %v5210 = vld [vmem:[%s5209] sm:$0x1]
      %v5211 = vpack.c.bf16 %v5207, %v5205
      %v5212 = vpack.c.bf16 %v5208, %v5206
      %v5214 = vsel %vm1315, %v5210, 0
      %5216 = vmatprep.subr.bf16.mxu0 %v5212
      %5217 = vmatpush1.bf16.msra.mxu0 %v5211
      %5218 = vmatprep.subr.bf16.mxu0 0
      %5219 = vmatpush1.bf16.msra.mxu0 0
      %5220 = vmatprep.subr.bf16.mxu0 0
      %5221 = vmatpush1.bf16.msra.mxu0 0
      %5222 = vmatprep.subr.bf16.mxu0 0
      %5223 = vmatpush1.bf16.msra.mxu0 0
      %5224 = vmatprep.subr.bf16.mxu0 0
      %5225 = vmatpush1.bf16.msra.mxu0 0
      %5226 = vmatprep.subr.bf16.mxu0 0
      %5227 = vmatpush1.bf16.msra.mxu0 0
      %5228 = vmatprep.subr.bf16.mxu0 0
      %5229 = vmatpush1.bf16.msra.mxu0 0
      %5230 = vmatprep.subr.bf16.mxu0 0
      %5231 = vmatpush1.bf16.msra.mxu0 0
      %5232 = vmatprep.subr.bf16.mxu0 0
      %5233 = vmatpush1.bf16.msra.mxu0 0
      %5234 = vmatprep.subr.bf16.mxu0 0
      %5235 = vmatpush1.bf16.msra.mxu0 0
      %5236 = vmatprep.subr.bf16.mxu0 0
      %5237 = vmatpush1.bf16.msra.mxu0 0
      %5238 = vmatprep.subr.bf16.mxu0 0
      %5239 = vmatpush1.bf16.msra.mxu0 0
      %5240 = vmatprep.subr.bf16.mxu0 0
      %5241 = vmatpush1.bf16.msra.mxu0 0
      %5242 = vmatprep.subr.bf16.mxu0 0
      %5243 = vmatpush1.bf16.msra.mxu0 0
      %5244 = vmatprep.subr.bf16.mxu0 0
      %5245 = vmatpush1.bf16.msra.mxu0 0
      %5246 = vmatprep.subr.bf16.mxu0 0
      %5247 = vmatpush1.bf16.msra.mxu0 0
      %5248 = vmatprep.mubr.bf16.mxu0 0
      %5249 = vmatmul.mubr.bf16.gmra.mrb[0].mxu0 %v5214
      %v5250 = vpop.f32.mrb[0].mxu0
      %v5251 = vadd.f32 0.0, %v5250
      %v5252 = vpop.f32.mrb[0].mxu0
      %v5253 = vadd.f32 0.0, %v5252
      %v5254 = vpop.f32.mrb[0].mxu0
      %v5255 = vpop.f32.mrb[0].mxu0
      %5256 = vdwg.mxu0
      %v5257 = vadd.f32 %v5177, %v5251
      %v5258 = vadd.f32 %v5178, %v5253
      %5259 = vrot.lane.b32.xlu0 %v3365, 94
      %v5260 = vpop.permute.xlu0 %5259
      %5261 = vrot.lane.b32.xlu0 %v3369, 94
      %v5262 = vpop.permute.xlu0 %5261
      %5263 = vrot.lane.b32.xlu0 %v3367, 94
      %v5264 = vpop.permute.xlu0 %5263
      %5265 = vrot.lane.b32.xlu0 %v3371, 94
      %v5266 = vpop.permute.xlu0 %5265
      %vm5267 = vcmp.lt.s32.totalorder %v488, 94
      %v5268 = vsel %vm5267, %v5260, %v5264
      %v5269 = vsel %vm5267, %v5262, %v5266
      %v5270 = vsel %vm5267, %v5264, %v5260
      %v5271 = vsel %vm5267, %v5266, %v5262
      %s5272 = scalar_lea.vmem %s11, 48
      %v5273 = vld [vmem:[%s5272] ss:$8 sm:$0x3]
      %v5275 = vlaneseq
      %v5276 = vshrl.u32 %v5275, 7
      %v5277 = vsub.s32 0, %v5276
      %v5278 = vrot.slane %v5273, %v5277
      %v5279 = vlaneseq
      %v5280 = vshrl.u32 %v5279, 7
      %v5281 = vsub.s32 1, %v5280
      %v5282 = vrot.slane %v5273, %v5281
      %v5285 = vmul.f32 %v5268, %v5278
      %v5286 = vmul.f32 %v5270, %v5282
      %v5287 = vmul.f32 %v5269, %v5278
      %v5288 = vmul.f32 %v5271, %v5282
      %s5289 = scalar_lea.vmem %s7, 24
      %v5290 = vld [vmem:[%s5289] sm:$0x1]
      %v5291 = vpack.c.bf16 %v5287, %v5285
      %v5292 = vpack.c.bf16 %v5288, %v5286
      %v5294 = vsel %vm1315, %v5290, 0
      %5296 = vmatprep.subr.bf16.mxu0 %v5292
      %5297 = vmatpush1.bf16.msra.mxu0 %v5291
      %5298 = vmatprep.subr.bf16.mxu0 0
      %5299 = vmatpush1.bf16.msra.mxu0 0
      %5300 = vmatprep.subr.bf16.mxu0 0
      %5301 = vmatpush1.bf16.msra.mxu0 0
      %5302 = vmatprep.subr.bf16.mxu0 0
      %5303 = vmatpush1.bf16.msra.mxu0 0
      %5304 = vmatprep.subr.bf16.mxu0 0
      %5305 = vmatpush1.bf16.msra.mxu0 0
      %5306 = vmatprep.subr.bf16.mxu0 0
      %5307 = vmatpush1.bf16.msra.mxu0 0
      %5308 = vmatprep.subr.bf16.mxu0 0
      %5309 = vmatpush1.bf16.msra.mxu0 0
      %5310 = vmatprep.subr.bf16.mxu0 0
      %5311 = vmatpush1.bf16.msra.mxu0 0
      %5312 = vmatprep.subr.bf16.mxu0 0
      %5313 = vmatpush1.bf16.msra.mxu0 0
      %5314 = vmatprep.subr.bf16.mxu0 0
      %5315 = vmatpush1.bf16.msra.mxu0 0
      %5316 = vmatprep.subr.bf16.mxu0 0
      %5317 = vmatpush1.bf16.msra.mxu0 0
      %5318 = vmatprep.subr.bf16.mxu0 0
      %5319 = vmatpush1.bf16.msra.mxu0 0
      %5320 = vmatprep.subr.bf16.mxu0 0
      %5321 = vmatpush1.bf16.msra.mxu0 0
      %5322 = vmatprep.subr.bf16.mxu0 0
      %5323 = vmatpush1.bf16.msra.mxu0 0
      %5324 = vmatprep.subr.bf16.mxu0 0
      %5325 = vmatpush1.bf16.msra.mxu0 0
      %5326 = vmatprep.subr.bf16.mxu0 0
      %5327 = vmatpush1.bf16.msra.mxu0 0
      %5328 = vmatprep.mubr.bf16.mxu0 0
      %5329 = vmatmul.mubr.bf16.gmra.mrb[0].mxu0 %v5294
      %v5330 = vpop.f32.mrb[0].mxu0
      %v5331 = vadd.f32 0.0, %v5330
      %v5332 = vpop.f32.mrb[0].mxu0
      %v5333 = vadd.f32 0.0, %v5332
      %v5334 = vpop.f32.mrb[0].mxu0
      %v5335 = vpop.f32.mrb[0].mxu0
      %5336 = vdwg.mxu0
      %v5337 = vadd.f32 %v5257, %v5331
      %v5338 = vadd.f32 %v5258, %v5333
      %v5341 = vrot.slane %v5337, 1
      %v5342 = vrot.slane %v5338, 1
      %v5345 = vsub.f32 %v5337, %v5341
      %v5346 = vsub.f32 %v5338, %v5342
      %v5347 = vsub.f32 0.0, %v5345
      %v5348 = vsub.f32 0.0, %v5346
      %v5349 = vmul.f32 %v5347, 1.442695
      %v5350 = vpow.pop %v5349
      %v5351 = vmul.f32 %v5348, 1.442695
      %v5352 = vpow.pop %v5351
      %v5353 = vadd.f32 %v5350, 1.0
      %v5354 = vadd.f32 %v5352, 1.0
      %v5355 = vrcp.pop %v5353
      %v5356 = vrcp.pop %v5354
      %v5357 = vsub.f32 1.0, %v5355
      %v5358 = vsub.f32 1.0, %v5356
      %v5361 = vrot.slane %v5357, 7
      %v5362 = vrot.slane %v5358, 7
      %vm5365 = vcmask 1040384
      %v5366 = vsel %vm5365, %v5355, %v5361
      %v5367 = vsel %vm5365, %v5356, %v5362
      %v5370 = vcombine.low %v5366, %v5367
      %v5372 = vunpack.c.l.s4 1983009808
      %v5373 = vunpack.c.0.s8 %v5372
      %v5374 = vlaneseq
      %v5375 = vshrl.u32 %v5374, 7
      %v5376 = vsub.s32 %v5373, %v5375
      %v5377 = vrot.slane %v5370, %v5376
      %5379 = vst [vmem:[%s467] sm:$0xf] %v5377
      %p5380 = scmp.lt.s32.totalorder %s25, 1
      %s5381 = scalar_select %p5380, %s25, 1
      %s5382 = smul.addr %s5381, 2
      %s5383 = smul.addr %s5382, 2
      %s5384 = scalar_lea.vmem %s14, %s5383
      // Predicated region
      $region77: #{net_forward.1} parent=75 // pred_check
        %p5385 = pneg %p342
      $region78: #{net_forward.1} parent=75 // pred_check_branch
        %5387 = sbr.rel (%p5385) target = $region80
      $region79: #{net_forward.1} parent=75 // pred_region
        _
      $region80: #{net_forward.1} parent=75 // pred_fallthru
        _
    $region76: #{net_forward.1} parent=5 // pred_fallthru
      _
    %p5388 = scmp.le.s32.totalorder 2, %s20
    // Predicated region
    $region81: #{net_forward.1} parent=5 // pred_check
      %p5389 = pneg %p5388
    $region82: #{net_forward.1} parent=5 // pred_check_branch
      %5391 = sbr.rel (%p5389) target = $region84
    $region83: #{net_forward.1} parent=5 // pred_region
      %s5392 = ssub.s32 %s20, 2
      // Predicated region
      $region85: #{net_forward.1} parent=83 // pred_check
        %p5393 = pneg %p348
      $region86: #{net_forward.1} parent=83 // pred_check_branch
        %5395 = sbr.rel (%p5393) target = $region88
      $region87: #{net_forward.1} parent=83 // pred_region
        %p5396 = scmp.lt.s32.totalorder %s26, 1
        %s5397 = scalar_select %p5396, %s26, 1
        %s5398 = smul.addr %s5397, 2
        %s5399 = smul.addr %s5398, 2
        %s5400 = scalar_lea.vmem %s14, %s5399
      $region88: #{net_forward.1} parent=83 // pred_fallthru
        _
    $region84: #{net_forward.1} parent=5 // pred_fallthru
      _
  $region6: #{net_forward.1} parent=0 // loop_footer
    %s24 = sadd.s32 1, %s20
  $region7: #{net_forward.1} parent=0 // loop_footer_branch
    %19 = sbr.rel target = $region3
  $region8: #{net_forward.1} parent=0 // loop_exit
    _

</llo_original>
